<compile_context>
chip_gen: v5e
topology: v5e:2x2
jax: 0.10.0
libtpu: 0.0.40
codegen_flags: <defaults>
</compile_context>

<pallas_src>
import functools

import numpy as np
import jax
import jax.numpy as jnp
from jax.experimental import pallas as pl
from jax.experimental.pallas import tpu as pltpu

BN_EPS = 1e-5


# ----------------------------------------------------------------------------
# In-kernel building blocks
# ----------------------------------------------------------------------------
def _roll_conv(a, w_ref, m_ref, k, pad, grid_w):
    """'same' stride-1 kxk conv on a flattened [C_in, M] activation.

    a      : [C_in, M] f32, M = N*H*W flattened row-major (n, h, w)
    w_ref  : [k*k, C_out, C_in] bf16 per-tap weights (tap order = (kh, kw))
    m_ref  : [k*k, 1, M] f32 validity masks (0 where the tap would read padding
             or cross a row / image boundary)

    Per tap the needed input for output position m is position m + d, which is
    realised as pltpu.roll(a, shift=-d) (np.roll semantics: out[m] = a[m + d]).
    """
    c_out = w_ref.shape[1]
    m = a.shape[1]
    acc = jnp.zeros((c_out, m), jnp.float32)
    t = 0
    for i in range(k):
        for j in range(k):
            di, dj = i - pad, j - pad
            d = di * grid_w + dj
            shifted = a if d == 0 else pltpu.roll(a, shift=(-d) % m, axis=1)
            if di == 0 and dj == 0:
                tap = shifted.astype(jnp.bfloat16)          # mask is all ones
            else:
                tap = (shifted * m_ref[t]).astype(jnp.bfloat16)
            acc = acc + jnp.dot(w_ref[t], tap,
                                preferred_element_type=jnp.float32)
            t += 1
    return acc


def _bn_relu(y, g_ref, b_ref):
    """BatchNorm2d (training-mode batch stats over axis 1 = N*H*W) folded into
    one affine (single-pass sum / sum-of-squares), then ReLU."""
    inv_m = 1.0 / y.shape[1]
    s1 = jnp.sum(y, axis=1, keepdims=True)
    s2 = jnp.sum(y * y, axis=1, keepdims=True)
    mean = s1 * inv_m
    var = jnp.maximum(s2 * inv_m - mean * mean, 0.0)
    scale = g_ref[...] * jax.lax.rsqrt(var + BN_EPS)
    shift = b_ref[...] - mean * scale
    return jnp.maximum(y * scale + shift, 0.0)


# ----------------------------------------------------------------------------
# The fused whole-network kernel
# ----------------------------------------------------------------------------
def _shading_kernel(x_ref,
                    sm0_ref, sm1_ref,          # 3x3 'same' conv masks (16x16 / 8x8)
                    tm0_ref, tm1_ref,          # 4x4 (pad 2/1) convT masks (16x16 / 8x8)
                    sub0_ref, sub1_ref,        # 2x subsample matrices
                    up1_ref, up0_ref,          # 2x zero-stuff upsample matrices
                    e1w_ref, e1g_ref, e1b_ref,
                    e2w_ref, e2g_ref, e2b_ref,
                    g1w_ref, g1g_ref, g1b_ref,
                    g2w_ref, g2g_ref, g2b_ref,
                    ow_ref, ob_ref,
                    o_ref,
                    cat_ref,                   # VMEM scratch for the gen2 concat
                    *, h0, w0):
    h1, w1 = h0 // 2, w0 // 2

    x = x_ref[...]                                                   # [4, m0]

    # enc1: SNConv(4->16, k3, s2, p1) + BN + ReLU
    #   (stride-1 'same' conv via roll taps, then 2x subsample matmul)
    y = _roll_conv(x, e1w_ref, sm0_ref, 3, 1, w0)                    # [16, m0]
    y = jnp.dot(y.astype(jnp.bfloat16), sub0_ref[...],
                preferred_element_type=jnp.float32)                  # [16, m1]
    enc1 = _bn_relu(y, e1g_ref, e1b_ref)

    # enc2: SNConv(16->64, k3, s2, p1) + BN + ReLU
    y = _roll_conv(enc1, e2w_ref, sm1_ref, 3, 1, w1)                 # [64, m1]
    y = jnp.dot(y.astype(jnp.bfloat16), sub1_ref[...],
                preferred_element_type=jnp.float32)                  # [64, m2]
    enc2 = _bn_relu(y, e2g_ref, e2b_ref)

    # gen1: SNConvT(64->16, k4, s2, p1) + BN + ReLU : 4x4 -> 8x8
    #   zero-stuff upsample (0/1 matmul) + 4x4 roll-conv with flipped weights
    u = jnp.dot(enc2.astype(jnp.bfloat16), up1_ref[...],
                preferred_element_type=jnp.float32)                  # [64, m1]
    y = _roll_conv(u, g1w_ref, tm1_ref, 4, 2, w1)                    # [16, m1]
    gen1 = _bn_relu(y, g1g_ref, g1b_ref)

    # gen2: SNConvT(32->16, k4, s2, p1) on cat([gen1, enc1], ch) : 8x8 -> 16x16
    #   channel concat via aligned VMEM scratch (16 + 16 sublanes)
    cat_ref[0:16, :] = gen1
    cat_ref[16:32, :] = enc1
    cat = cat_ref[...]                                               # [32, m1]
    u = jnp.dot(cat.astype(jnp.bfloat16), up0_ref[...],
                preferred_element_type=jnp.float32)                  # [32, m0]
    y = _roll_conv(u, g2w_ref, tm0_ref, 4, 2, w0)                    # [16, m0]
    gen2 = _bn_relu(y, g2g_ref, g2b_ref)

    # out: SNConv(16->3, k3, s1, p1) + bias + tanh  (no BN -> keep the bias)
    y = _roll_conv(gen2, ow_ref, sm0_ref, 3, 1, w0)                  # [3, m0]
    o_ref[...] = jnp.tanh(y + ob_ref[...])


# ----------------------------------------------------------------------------
# Host-side packing of weights / geometry constants (done once at init)
# ----------------------------------------------------------------------------
def _tap_weights_conv(w):
    """Conv2d weight [C_out, C_in, k, k] -> [k*k, C_out, C_in]."""
    c_out, c_in, k, _ = w.shape
    return jnp.transpose(w, (2, 3, 0, 1)).reshape(k * k, c_out, c_in)


def _tap_weights_convT(w):
    """ConvTranspose2d weight [C_in, C_out, k, k] -> [k*k, C_out, C_in] with the
    spatial kernel FLIPPED, so the transposed conv becomes a plain roll-conv on
    the zero-stuffed (upsampled) activation."""
    w = w[:, :, ::-1, ::-1]
    c_in, c_out, k, _ = w.shape
    return jnp.transpose(w, (2, 3, 1, 0)).reshape(k * k, c_out, c_in)


def _same_conv_masks(n, h, w, k, pad):
    """[k*k, 1, n*h*w] validity masks for a stride-1 conv with tap offsets
    (i - pad, j - pad) on the flattened (n, h, w) grid (zeros where the tap
    would read outside the image)."""
    hh, ww = np.meshgrid(np.arange(h), np.arange(w), indexing="ij")
    hh = np.tile(hh.reshape(-1), n)
    ww = np.tile(ww.reshape(-1), n)
    masks = np.zeros((k * k, 1, n * h * w), np.float32)
    t = 0
    for i in range(k):
        for j in range(k):
            di, dj = i - pad, j - pad
            ok = ((hh + di >= 0) & (hh + di < h) &
                  (ww + dj >= 0) & (ww + dj < w))
            masks[t, 0, :] = ok.astype(np.float32)
            t += 1
    return masks


def _subsample_matrix(n, h, w, s):
    """0/1 matrix [n*h*w, n*(h//s)*(w//s)] selecting positions (s*oh, s*ow).
    Its transpose is the zero-stuffing upsample matrix used for ConvTranspose."""
    oh, ow = h // s, w // s
    sel = np.zeros((n * h * w, n * oh * ow), np.float32)
    for b in range(n):
        for r in range(oh):
            for c in range(ow):
                sel[(b * h + r * s) * w + c * s, (b * oh + r) * ow + c] = 1.0
    return sel


def pack_params(p, *, n=2, h=16, w=16):
    bf = lambda a: jnp.asarray(a, jnp.bfloat16)
    f32 = lambda a: jnp.asarray(a, jnp.float32)
    col = lambda a: jnp.asarray(a, jnp.float32).reshape(-1, 1)

    h1, w1 = h // 2, w // 2

    sub0 = _subsample_matrix(n, h, w, 2)     # [n*h*w,   n*h1*w1]
    sub1 = _subsample_matrix(n, h1, w1, 2)   # [n*h1*w1, n*h2*w2]

    # Conv biases of the BN'd layers are intentionally NOT packed:
    # BatchNorm's batch-mean subtraction cancels them exactly.
    packed = (
        # shared geometry constants
        f32(_same_conv_masks(n, h, w, 3, 1)),        # sm0  [9,1,512]
        f32(_same_conv_masks(n, h1, w1, 3, 1)),      # sm1  [9,1,128]
        f32(_same_conv_masks(n, h, w, 4, 2)),        # tm0  [16,1,512]
        f32(_same_conv_masks(n, h1, w1, 4, 2)),      # tm1  [16,1,128]
        bf(sub0),                                    # sub0 [512,128]
        bf(sub1),                                    # sub1 [128,32]
        bf(sub1.T),                                  # up1  [32,128]  4x4 -> 8x8
        bf(sub0.T),                                  # up0  [128,512] 8x8 -> 16x16
        # enc1
        bf(_tap_weights_conv(p["enc1_w"])), col(p["enc1_g"]), col(p["enc1_be"]),
        # enc2
        bf(_tap_weights_conv(p["enc2_w"])), col(p["enc2_g"]), col(p["enc2_be"]),
        # gen1 (ConvT weights, spatially flipped)
        bf(_tap_weights_convT(p["gen1_w"])), col(p["gen1_g"]), col(p["gen1_be"]),
        # gen2 (full 32-in-channel ConvT weight; cat order = [gen1, enc1])
        bf(_tap_weights_convT(p["gen2_w"])), col(p["gen2_g"]), col(p["gen2_be"]),
        # out
        bf(_tap_weights_conv(p["out_w"])), col(p["out_b"]),
    )
    return packed


# ----------------------------------------------------------------------------
# Forward pass (single fused pallas_call)
# ----------------------------------------------------------------------------
def shading_forward(x_nchw, packed):
    n, c, h, w = x_nchw.shape
    m0 = n * h * w
    m1 = n * (h // 2) * (w // 2)
    x2 = jnp.transpose(x_nchw, (1, 0, 2, 3)).reshape(c, m0).astype(jnp.float32)

    vmem = pl.BlockSpec(memory_space=pltpu.MemorySpace.VMEM)
    kernel = functools.partial(_shading_kernel, h0=h, w0=w)
    y = pl.pallas_call(
        kernel,
        out_shape=jax.ShapeDtypeStruct((3, m0), jnp.float32),
        in_specs=[vmem] * (1 + len(packed)),
        out_specs=vmem,
        scratch_shapes=[pltpu.VMEM((32, m1), jnp.float32)],   # gen2 concat buffer
    )(x2, *packed)

    return jnp.transpose(y.reshape(3, n, h, w), (1, 0, 2, 3))  # -> NCHW


# ----------------------------------------------------------------------------
# Parameters (deterministic synthetic init, same as previous version)
# ----------------------------------------------------------------------------
def spectral_normalize(w, dim=0):
    """Divide by the largest singular value of the dim-major 2D reshape
    (power iteration) — stands in for torch.nn.utils.spectral_norm."""
    w2 = jnp.moveaxis(w, dim, 0).reshape(w.shape[dim], -1)
    v = jnp.ones((w2.shape[1],), jnp.float32) / jnp.sqrt(float(w2.shape[1]))
    for _ in range(30):
        u = w2 @ v
        u = u / (jnp.linalg.norm(u) + 1e-12)
        v = w2.T @ u
        v = v / (jnp.linalg.norm(v) + 1e-12)
    sigma = jnp.dot(u, w2 @ v)
    return w / sigma


def init_params(key):
    def conv_p(key, cout, cin, k):
        k1, k2 = jax.random.split(key)
        w = jax.random.normal(k1, (cout, cin, k, k), jnp.float32) * 0.1
        b = jax.random.normal(k2, (cout,), jnp.float32) * 0.01
        return spectral_normalize(w, dim=0), b

    def convT_p(key, cin, cout, k):
        k1, k2 = jax.random.split(key)
        w = jax.random.normal(k1, (cin, cout, k, k), jnp.float32) * 0.1
        b = jax.random.normal(k2, (cout,), jnp.float32) * 0.01
        return spectral_normalize(w, dim=1), b

    def bn_p(key, c):
        k1, k2 = jax.random.split(key)
        gamma = 1.0 + 0.05 * jax.random.normal(k1, (c,), jnp.float32)
        beta = 0.05 * jax.random.normal(k2, (c,), jnp.float32)
        return gamma, beta

    keys = jax.random.split(key, 9)
    p = {}
    p["enc1_w"], p["enc1_b"] = conv_p(keys[0], 16, 4, 3)
    p["enc1_g"], p["enc1_be"] = bn_p(keys[1], 16)
    p["enc2_w"], p["enc2_b"] = conv_p(keys[2], 64, 16, 3)
    p["enc2_g"], p["enc2_be"] = bn_p(keys[3], 64)
    p["gen1_w"], p["gen1_b"] = convT_p(keys[4], 64, 16, 4)
    p["gen1_g"], p["gen1_be"] = bn_p(keys[5], 16)
    p["gen2_w"], p["gen2_b"] = convT_p(keys[6], 32, 16, 4)
    p["gen2_g"], p["gen2_be"] = bn_p(keys[7], 16)
    p["out_w"], p["out_b"] = conv_p(keys[8], 3, 16, 3)
    return p


if __name__ == "__main__":
    key = jax.random.PRNGKey(0)
    k_x, k_p = jax.random.split(key)

    x = jax.random.normal(k_x, (2, 4, 16, 16), jnp.float32)  # NCHW, like PyTorch
    params = init_params(k_p)
    packed = pack_params(params, n=2, h=16, w=16)

    fwd = jax.jit(shading_forward)
    out = jax.block_until_ready(fwd(x, packed))

    assert out.shape == (2, 3, 16, 16), out.shape
    assert bool(jnp.all(jnp.isfinite(out)))
    assert bool(jnp.all(jnp.abs(out) <= 1.0 + 1e-6))  # tanh output range
    print("KERNEL_OK")
</pallas_src>

<mosaic_0001>
module attributes {stable_mosaic.version = 11 : i64} {
  func.func @_shading_kernel(%arg0: memref<4x512xf32, #tpu.memory_space<vmem>>, %arg1: memref<9x1x512xf32, #tpu.memory_space<vmem>>, %arg2: memref<9x1x128xf32, #tpu.memory_space<vmem>>, %arg3: memref<16x1x512xf32, #tpu.memory_space<vmem>>, %arg4: memref<16x1x128xf32, #tpu.memory_space<vmem>>, %arg5: memref<512x128xbf16, #tpu.memory_space<vmem>>, %arg6: memref<128x32xbf16, #tpu.memory_space<vmem>>, %arg7: memref<32x128xbf16, #tpu.memory_space<vmem>>, %arg8: memref<128x512xbf16, #tpu.memory_space<vmem>>, %arg9: memref<9x16x4xbf16, #tpu.memory_space<vmem>>, %arg10: memref<16x1xf32, #tpu.memory_space<vmem>>, %arg11: memref<16x1xf32, #tpu.memory_space<vmem>>, %arg12: memref<9x64x16xbf16, #tpu.memory_space<vmem>>, %arg13: memref<64x1xf32, #tpu.memory_space<vmem>>, %arg14: memref<64x1xf32, #tpu.memory_space<vmem>>, %arg15: memref<16x16x64xbf16, #tpu.memory_space<vmem>>, %arg16: memref<16x1xf32, #tpu.memory_space<vmem>>, %arg17: memref<16x1xf32, #tpu.memory_space<vmem>>, %arg18: memref<16x16x32xbf16, #tpu.memory_space<vmem>>, %arg19: memref<16x1xf32, #tpu.memory_space<vmem>>, %arg20: memref<16x1xf32, #tpu.memory_space<vmem>>, %arg21: memref<9x3x16xbf16, #tpu.memory_space<vmem>>, %arg22: memref<3x1xf32, #tpu.memory_space<vmem>>, %arg23: memref<3x512xf32, #tpu.memory_space<vmem>>, %arg24: memref<32x128xf32, #tpu.memory_space<vmem>>) attributes {dimension_semantics = [], scalar_prefetch = 0 : i64, scratch_operands = 1 : i64, tpu.core_type = #tpu.core_type<tc>} {
    %c0 = arith.constant 0 : index
    %c0_0 = arith.constant 0 : index
    %0 = vector.load %arg0[%c0, %c0_0] : memref<4x512xf32, #tpu.memory_space<vmem>>, vector<4x512xf32>
    %cst = arith.constant 0.000000e+00 : f32
    %1 = vector.broadcast %cst : f32 to vector<16x512xf32>
    %c17_i32 = arith.constant 17 : i32
    %2 = tpu.dynamic_rotate %0 by %c17_i32 dim 1 : vector<4x512xf32>, i32 -> vector<4x512xf32>
    %c0_1 = arith.constant 0 : index
    %c0_2 = arith.constant 0 : index
    %c0_3 = arith.constant 0 : index
    %3 = vector.load %arg1[%c0_1, %c0_2, %c0_3] : memref<9x1x512xf32, #tpu.memory_space<vmem>>, vector<1x1x512xf32>
    %4 = vector.shape_cast %3 : vector<1x1x512xf32> to vector<1x512xf32>
    %5 = vector.broadcast %4 : vector<1x512xf32> to vector<4x512xf32>
    %6 = arith.mulf %2, %5 : vector<4x512xf32>
    %7 = arith.truncf %6 : vector<4x512xf32> to vector<4x512xbf16>
    %c0_4 = arith.constant 0 : index
    %c0_5 = arith.constant 0 : index
    %c0_6 = arith.constant 0 : index
    %8 = vector.load %arg9[%c0_4, %c0_5, %c0_6] : memref<9x16x4xbf16, #tpu.memory_space<vmem>>, vector<1x16x4xbf16>
    %9 = vector.shape_cast %8 : vector<1x16x4xbf16> to vector<16x4xbf16>
    %cst_7 = arith.constant dense<0.000000e+00> : vector<16x512xf32>
    %10 = tpu.matmul %9, %7, %cst_7 {dimension_numbers = #tpu.dot_dimension_numbers<[1], [0], [0], [1], [0, 0, 1, 1], [], []>} : vector<16x4xbf16>, vector<4x512xbf16>, vector<16x512xf32> -> vector<16x512xf32>
    %11 = arith.addf %1, %10 : vector<16x512xf32>
    %c16_i32 = arith.constant 16 : i32
    %12 = tpu.dynamic_rotate %0 by %c16_i32 dim 1 : vector<4x512xf32>, i32 -> vector<4x512xf32>
    %c1 = arith.constant 1 : index
    %c0_8 = arith.constant 0 : index
    %c0_9 = arith.constant 0 : index
    %13 = vector.load %arg1[%c1, %c0_8, %c0_9] : memref<9x1x512xf32, #tpu.memory_space<vmem>>, vector<1x1x512xf32>
    %14 = vector.shape_cast %13 : vector<1x1x512xf32> to vector<1x512xf32>
    %15 = vector.broadcast %14 : vector<1x512xf32> to vector<4x512xf32>
    %16 = arith.mulf %12, %15 : vector<4x512xf32>
    %17 = arith.truncf %16 : vector<4x512xf32> to vector<4x512xbf16>
    %c1_10 = arith.constant 1 : index
    %c0_11 = arith.constant 0 : index
    %c0_12 = arith.constant 0 : index
    %18 = vector.load %arg9[%c1_10, %c0_11, %c0_12] : memref<9x16x4xbf16, #tpu.memory_space<vmem>>, vector<1x16x4xbf16>
    %19 = vector.shape_cast %18 : vector<1x16x4xbf16> to vector<16x4xbf16>
    %cst_13 = arith.constant dense<0.000000e+00> : vector<16x512xf32>
    %20 = tpu.matmul %19, %17, %cst_13 {dimension_numbers = #tpu.dot_dimension_numbers<[1], [0], [0], [1], [0, 0, 1, 1], [], []>} : vector<16x4xbf16>, vector<4x512xbf16>, vector<16x512xf32> -> vector<16x512xf32>
    %21 = arith.addf %11, %20 : vector<16x512xf32>
    %c15_i32 = arith.constant 15 : i32
    %22 = tpu.dynamic_rotate %0 by %c15_i32 dim 1 : vector<4x512xf32>, i32 -> vector<4x512xf32>
    %c2 = arith.constant 2 : index
    %c0_14 = arith.constant 0 : index
    %c0_15 = arith.constant 0 : index
    %23 = vector.load %arg1[%c2, %c0_14, %c0_15] : memref<9x1x512xf32, #tpu.memory_space<vmem>>, vector<1x1x512xf32>
    %24 = vector.shape_cast %23 : vector<1x1x512xf32> to vector<1x512xf32>
    %25 = vector.broadcast %24 : vector<1x512xf32> to vector<4x512xf32>
    %26 = arith.mulf %22, %25 : vector<4x512xf32>
    %27 = arith.truncf %26 : vector<4x512xf32> to vector<4x512xbf16>
    %c2_16 = arith.constant 2 : index
    %c0_17 = arith.constant 0 : index
    %c0_18 = arith.constant 0 : index
    %28 = vector.load %arg9[%c2_16, %c0_17, %c0_18] : memref<9x16x4xbf16, #tpu.memory_space<vmem>>, vector<1x16x4xbf16>
    %29 = vector.shape_cast %28 : vector<1x16x4xbf16> to vector<16x4xbf16>
    %cst_19 = arith.constant dense<0.000000e+00> : vector<16x512xf32>
    %30 = tpu.matmul %29, %27, %cst_19 {dimension_numbers = #tpu.dot_dimension_numbers<[1], [0], [0], [1], [0, 0, 1, 1], [], []>} : vector<16x4xbf16>, vector<4x512xbf16>, vector<16x512xf32> -> vector<16x512xf32>
    %31 = arith.addf %21, %30 : vector<16x512xf32>
    %c1_i32 = arith.constant 1 : i32
    %32 = tpu.dynamic_rotate %0 by %c1_i32 dim 1 : vector<4x512xf32>, i32 -> vector<4x512xf32>
    %c3 = arith.constant 3 : index
    %c0_20 = arith.constant 0 : index
    %c0_21 = arith.constant 0 : index
    %33 = vector.load %arg1[%c3, %c0_20, %c0_21] : memref<9x1x512xf32, #tpu.memory_space<vmem>>, vector<1x1x512xf32>
    %34 = vector.shape_cast %33 : vector<1x1x512xf32> to vector<1x512xf32>
    %35 = vector.broadcast %34 : vector<1x512xf32> to vector<4x512xf32>
    %36 = arith.mulf %32, %35 : vector<4x512xf32>
    %37 = arith.truncf %36 : vector<4x512xf32> to vector<4x512xbf16>
    %c3_22 = arith.constant 3 : index
    %c0_23 = arith.constant 0 : index
    %c0_24 = arith.constant 0 : index
    %38 = vector.load %arg9[%c3_22, %c0_23, %c0_24] : memref<9x16x4xbf16, #tpu.memory_space<vmem>>, vector<1x16x4xbf16>
    %39 = vector.shape_cast %38 : vector<1x16x4xbf16> to vector<16x4xbf16>
    %cst_25 = arith.constant dense<0.000000e+00> : vector<16x512xf32>
    %40 = tpu.matmul %39, %37, %cst_25 {dimension_numbers = #tpu.dot_dimension_numbers<[1], [0], [0], [1], [0, 0, 1, 1], [], []>} : vector<16x4xbf16>, vector<4x512xbf16>, vector<16x512xf32> -> vector<16x512xf32>
    %41 = arith.addf %31, %40 : vector<16x512xf32>
    %42 = arith.truncf %0 : vector<4x512xf32> to vector<4x512xbf16>
    %c4 = arith.constant 4 : index
    %c0_26 = arith.constant 0 : index
    %c0_27 = arith.constant 0 : index
    %43 = vector.load %arg9[%c4, %c0_26, %c0_27] : memref<9x16x4xbf16, #tpu.memory_space<vmem>>, vector<1x16x4xbf16>
    %44 = vector.shape_cast %43 : vector<1x16x4xbf16> to vector<16x4xbf16>
    %cst_28 = arith.constant dense<0.000000e+00> : vector<16x512xf32>
    %45 = tpu.matmul %44, %42, %cst_28 {dimension_numbers = #tpu.dot_dimension_numbers<[1], [0], [0], [1], [0, 0, 1, 1], [], []>} : vector<16x4xbf16>, vector<4x512xbf16>, vector<16x512xf32> -> vector<16x512xf32>
    %46 = arith.addf %41, %45 : vector<16x512xf32>
    %c511_i32 = arith.constant 511 : i32
    %47 = tpu.dynamic_rotate %0 by %c511_i32 dim 1 : vector<4x512xf32>, i32 -> vector<4x512xf32>
    %c5 = arith.constant 5 : index
    %c0_29 = arith.constant 0 : index
    %c0_30 = arith.constant 0 : index
    %48 = vector.load %arg1[%c5, %c0_29, %c0_30] : memref<9x1x512xf32, #tpu.memory_space<vmem>>, vector<1x1x512xf32>
    %49 = vector.shape_cast %48 : vector<1x1x512xf32> to vector<1x512xf32>
    %50 = vector.broadcast %49 : vector<1x512xf32> to vector<4x512xf32>
    %51 = arith.mulf %47, %50 : vector<4x512xf32>
    %52 = arith.truncf %51 : vector<4x512xf32> to vector<4x512xbf16>
    %c5_31 = arith.constant 5 : index
    %c0_32 = arith.constant 0 : index
    %c0_33 = arith.constant 0 : index
    %53 = vector.load %arg9[%c5_31, %c0_32, %c0_33] : memref<9x16x4xbf16, #tpu.memory_space<vmem>>, vector<1x16x4xbf16>
    %54 = vector.shape_cast %53 : vector<1x16x4xbf16> to vector<16x4xbf16>
    %cst_34 = arith.constant dense<0.000000e+00> : vector<16x512xf32>
    %55 = tpu.matmul %54, %52, %cst_34 {dimension_numbers = #tpu.dot_dimension_numbers<[1], [0], [0], [1], [0, 0, 1, 1], [], []>} : vector<16x4xbf16>, vector<4x512xbf16>, vector<16x512xf32> -> vector<16x512xf32>
    %56 = arith.addf %46, %55 : vector<16x512xf32>
    %c497_i32 = arith.constant 497 : i32
    %57 = tpu.dynamic_rotate %0 by %c497_i32 dim 1 : vector<4x512xf32>, i32 -> vector<4x512xf32>
    %c6 = arith.constant 6 : index
    %c0_35 = arith.constant 0 : index
    %c0_36 = arith.constant 0 : index
    %58 = vector.load %arg1[%c6, %c0_35, %c0_36] : memref<9x1x512xf32, #tpu.memory_space<vmem>>, vector<1x1x512xf32>
    %59 = vector.shape_cast %58 : vector<1x1x512xf32> to vector<1x512xf32>
    %60 = vector.broadcast %59 : vector<1x512xf32> to vector<4x512xf32>
    %61 = arith.mulf %57, %60 : vector<4x512xf32>
    %62 = arith.truncf %61 : vector<4x512xf32> to vector<4x512xbf16>
    %c6_37 = arith.constant 6 : index
    %c0_38 = arith.constant 0 : index
    %c0_39 = arith.constant 0 : index
    %63 = vector.load %arg9[%c6_37, %c0_38, %c0_39] : memref<9x16x4xbf16, #tpu.memory_space<vmem>>, vector<1x16x4xbf16>
    %64 = vector.shape_cast %63 : vector<1x16x4xbf16> to vector<16x4xbf16>
    %cst_40 = arith.constant dense<0.000000e+00> : vector<16x512xf32>
    %65 = tpu.matmul %64, %62, %cst_40 {dimension_numbers = #tpu.dot_dimension_numbers<[1], [0], [0], [1], [0, 0, 1, 1], [], []>} : vector<16x4xbf16>, vector<4x512xbf16>, vector<16x512xf32> -> vector<16x512xf32>
    %66 = arith.addf %56, %65 : vector<16x512xf32>
    %c496_i32 = arith.constant 496 : i32
    %67 = tpu.dynamic_rotate %0 by %c496_i32 dim 1 : vector<4x512xf32>, i32 -> vector<4x512xf32>
    %c7 = arith.constant 7 : index
    %c0_41 = arith.constant 0 : index
    %c0_42 = arith.constant 0 : index
    %68 = vector.load %arg1[%c7, %c0_41, %c0_42] : memref<9x1x512xf32, #tpu.memory_space<vmem>>, vector<1x1x512xf32>
    %69 = vector.shape_cast %68 : vector<1x1x512xf32> to vector<1x512xf32>
    %70 = vector.broadcast %69 : vector<1x512xf32> to vector<4x512xf32>
    %71 = arith.mulf %67, %70 : vector<4x512xf32>
    %72 = arith.truncf %71 : vector<4x512xf32> to vector<4x512xbf16>
    %c7_43 = arith.constant 7 : index
    %c0_44 = arith.constant 0 : index
    %c0_45 = arith.constant 0 : index
    %73 = vector.load %arg9[%c7_43, %c0_44, %c0_45] : memref<9x16x4xbf16, #tpu.memory_space<vmem>>, vector<1x16x4xbf16>
    %74 = vector.shape_cast %73 : vector<1x16x4xbf16> to vector<16x4xbf16>
    %cst_46 = arith.constant dense<0.000000e+00> : vector<16x512xf32>
    %75 = tpu.matmul %74, %72, %cst_46 {dimension_numbers = #tpu.dot_dimension_numbers<[1], [0], [0], [1], [0, 0, 1, 1], [], []>} : vector<16x4xbf16>, vector<4x512xbf16>, vector<16x512xf32> -> vector<16x512xf32>
    %76 = arith.addf %66, %75 : vector<16x512xf32>
    %c495_i32 = arith.constant 495 : i32
    %77 = tpu.dynamic_rotate %0 by %c495_i32 dim 1 : vector<4x512xf32>, i32 -> vector<4x512xf32>
    %c8 = arith.constant 8 : index
    %c0_47 = arith.constant 0 : index
    %c0_48 = arith.constant 0 : index
    %78 = vector.load %arg1[%c8, %c0_47, %c0_48] : memref<9x1x512xf32, #tpu.memory_space<vmem>>, vector<1x1x512xf32>
    %79 = vector.shape_cast %78 : vector<1x1x512xf32> to vector<1x512xf32>
    %80 = vector.broadcast %79 : vector<1x512xf32> to vector<4x512xf32>
    %81 = arith.mulf %77, %80 : vector<4x512xf32>
    %82 = arith.truncf %81 : vector<4x512xf32> to vector<4x512xbf16>
    %c8_49 = arith.constant 8 : index
    %c0_50 = arith.constant 0 : index
    %c0_51 = arith.constant 0 : index
    %83 = vector.load %arg9[%c8_49, %c0_50, %c0_51] : memref<9x16x4xbf16, #tpu.memory_space<vmem>>, vector<1x16x4xbf16>
    %84 = vector.shape_cast %83 : vector<1x16x4xbf16> to vector<16x4xbf16>
    %cst_52 = arith.constant dense<0.000000e+00> : vector<16x512xf32>
    %85 = tpu.matmul %84, %82, %cst_52 {dimension_numbers = #tpu.dot_dimension_numbers<[1], [0], [0], [1], [0, 0, 1, 1], [], []>} : vector<16x4xbf16>, vector<4x512xbf16>, vector<16x512xf32> -> vector<16x512xf32>
    %86 = arith.addf %76, %85 : vector<16x512xf32>
    %87 = arith.truncf %86 : vector<16x512xf32> to vector<16x512xbf16>
    %c0_53 = arith.constant 0 : index
    %c0_54 = arith.constant 0 : index
    %88 = vector.load %arg5[%c0_53, %c0_54] : memref<512x128xbf16, #tpu.memory_space<vmem>>, vector<512x128xbf16>
    %cst_55 = arith.constant dense<0.000000e+00> : vector<16x128xf32>
    %89 = tpu.matmul %87, %88, %cst_55 {dimension_numbers = #tpu.dot_dimension_numbers<[1], [0], [0], [1], [0, 0, 1, 1], [], []>} : vector<16x512xbf16>, vector<512x128xbf16>, vector<16x128xf32> -> vector<16x128xf32>
    %cst_56 = arith.constant dense<0.000000e+00> : vector<16xf32>
    %90 = vector.multi_reduction <add>, %89, %cst_56 [1] : vector<16x128xf32> to vector<16xf32>
    %91 = vector.shape_cast %90 : vector<16xf32> to vector<16x1xf32>
    %92 = arith.mulf %89, %89 : vector<16x128xf32>
    %cst_57 = arith.constant dense<0.000000e+00> : vector<16xf32>
    %93 = vector.multi_reduction <add>, %92, %cst_57 [1] : vector<16x128xf32> to vector<16xf32>
    %94 = vector.shape_cast %93 : vector<16xf32> to vector<16x1xf32>
    %cst_58 = arith.constant 7.812500e-03 : f32
    %95 = vector.broadcast %cst_58 : f32 to vector<16x1xf32>
    %96 = arith.mulf %91, %95 : vector<16x1xf32>
    %cst_59 = arith.constant 7.812500e-03 : f32
    %97 = vector.broadcast %cst_59 : f32 to vector<16x1xf32>
    %98 = arith.mulf %94, %97 : vector<16x1xf32>
    %99 = arith.mulf %96, %96 : vector<16x1xf32>
    %100 = arith.subf %98, %99 : vector<16x1xf32>
    %cst_60 = arith.constant 0.000000e+00 : f32
    %101 = vector.broadcast %cst_60 : f32 to vector<16x1xf32>
    %102 = arith.maximumf %100, %101 : vector<16x1xf32>
    %c0_61 = arith.constant 0 : index
    %c0_62 = arith.constant 0 : index
    %103 = vector.load %arg10[%c0_61, %c0_62] : memref<16x1xf32, #tpu.memory_space<vmem>>, vector<16x1xf32>
    %cst_63 = arith.constant 9.99999974E-6 : f32
    %104 = vector.broadcast %cst_63 : f32 to vector<16x1xf32>
    %105 = arith.addf %102, %104 : vector<16x1xf32>
    %106 = math.rsqrt %105 : vector<16x1xf32>
    %107 = arith.mulf %103, %106 : vector<16x1xf32>
    %c0_64 = arith.constant 0 : index
    %c0_65 = arith.constant 0 : index
    %108 = vector.load %arg11[%c0_64, %c0_65] : memref<16x1xf32, #tpu.memory_space<vmem>>, vector<16x1xf32>
    %109 = arith.mulf %96, %107 : vector<16x1xf32>
    %110 = arith.subf %108, %109 : vector<16x1xf32>
    %111 = vector.broadcast %107 : vector<16x1xf32> to vector<16x128xf32>
    %112 = arith.mulf %89, %111 : vector<16x128xf32>
    %113 = vector.broadcast %110 : vector<16x1xf32> to vector<16x128xf32>
    %114 = arith.addf %112, %113 : vector<16x128xf32>
    %cst_66 = arith.constant 0.000000e+00 : f32
    %115 = vector.broadcast %cst_66 : f32 to vector<16x128xf32>
    %116 = arith.maximumf %114, %115 : vector<16x128xf32>
    %cst_67 = arith.constant 0.000000e+00 : f32
    %117 = vector.broadcast %cst_67 : f32 to vector<64x128xf32>
    %c9_i32 = arith.constant 9 : i32
    %118 = tpu.dynamic_rotate %116 by %c9_i32 dim 1 : vector<16x128xf32>, i32 -> vector<16x128xf32>
    %c0_68 = arith.constant 0 : index
    %c0_69 = arith.constant 0 : index
    %c0_70 = arith.constant 0 : index
    %119 = vector.load %arg2[%c0_68, %c0_69, %c0_70] : memref<9x1x128xf32, #tpu.memory_space<vmem>>, vector<1x1x128xf32>
    %120 = vector.shape_cast %119 : vector<1x1x128xf32> to vector<1x128xf32>
    %121 = vector.broadcast %120 : vector<1x128xf32> to vector<16x128xf32>
    %122 = arith.mulf %118, %121 : vector<16x128xf32>
    %123 = arith.truncf %122 : vector<16x128xf32> to vector<16x128xbf16>
    %c0_71 = arith.constant 0 : index
    %c0_72 = arith.constant 0 : index
    %c0_73 = arith.constant 0 : index
    %124 = vector.load %arg12[%c0_71, %c0_72, %c0_73] : memref<9x64x16xbf16, #tpu.memory_space<vmem>>, vector<1x64x16xbf16>
    %125 = vector.shape_cast %124 : vector<1x64x16xbf16> to vector<64x16xbf16>
    %cst_74 = arith.constant dense<0.000000e+00> : vector<64x128xf32>
    %126 = tpu.matmul %125, %123, %cst_74 {dimension_numbers = #tpu.dot_dimension_numbers<[1], [0], [0], [1], [0, 0, 1, 1], [], []>} : vector<64x16xbf16>, vector<16x128xbf16>, vector<64x128xf32> -> vector<64x128xf32>
    %127 = arith.addf %117, %126 : vector<64x128xf32>
    %c8_i32 = arith.constant 8 : i32
    %128 = tpu.dynamic_rotate %116 by %c8_i32 dim 1 : vector<16x128xf32>, i32 -> vector<16x128xf32>
    %c1_75 = arith.constant 1 : index
    %c0_76 = arith.constant 0 : index
    %c0_77 = arith.constant 0 : index
    %129 = vector.load %arg2[%c1_75, %c0_76, %c0_77] : memref<9x1x128xf32, #tpu.memory_space<vmem>>, vector<1x1x128xf32>
    %130 = vector.shape_cast %129 : vector<1x1x128xf32> to vector<1x128xf32>
    %131 = vector.broadcast %130 : vector<1x128xf32> to vector<16x128xf32>
    %132 = arith.mulf %128, %131 : vector<16x128xf32>
    %133 = arith.truncf %132 : vector<16x128xf32> to vector<16x128xbf16>
    %c1_78 = arith.constant 1 : index
    %c0_79 = arith.constant 0 : index
    %c0_80 = arith.constant 0 : index
    %134 = vector.load %arg12[%c1_78, %c0_79, %c0_80] : memref<9x64x16xbf16, #tpu.memory_space<vmem>>, vector<1x64x16xbf16>
    %135 = vector.shape_cast %134 : vector<1x64x16xbf16> to vector<64x16xbf16>
    %cst_81 = arith.constant dense<0.000000e+00> : vector<64x128xf32>
    %136 = tpu.matmul %135, %133, %cst_81 {dimension_numbers = #tpu.dot_dimension_numbers<[1], [0], [0], [1], [0, 0, 1, 1], [], []>} : vector<64x16xbf16>, vector<16x128xbf16>, vector<64x128xf32> -> vector<64x128xf32>
    %137 = arith.addf %127, %136 : vector<64x128xf32>
    %c7_i32 = arith.constant 7 : i32
    %138 = tpu.dynamic_rotate %116 by %c7_i32 dim 1 : vector<16x128xf32>, i32 -> vector<16x128xf32>
    %c2_82 = arith.constant 2 : index
    %c0_83 = arith.constant 0 : index
    %c0_84 = arith.constant 0 : index
    %139 = vector.load %arg2[%c2_82, %c0_83, %c0_84] : memref<9x1x128xf32, #tpu.memory_space<vmem>>, vector<1x1x128xf32>
    %140 = vector.shape_cast %139 : vector<1x1x128xf32> to vector<1x128xf32>
    %141 = vector.broadcast %140 : vector<1x128xf32> to vector<16x128xf32>
    %142 = arith.mulf %138, %141 : vector<16x128xf32>
    %143 = arith.truncf %142 : vector<16x128xf32> to vector<16x128xbf16>
    %c2_85 = arith.constant 2 : index
    %c0_86 = arith.constant 0 : index
    %c0_87 = arith.constant 0 : index
    %144 = vector.load %arg12[%c2_85, %c0_86, %c0_87] : memref<9x64x16xbf16, #tpu.memory_space<vmem>>, vector<1x64x16xbf16>
    %145 = vector.shape_cast %144 : vector<1x64x16xbf16> to vector<64x16xbf16>
    %cst_88 = arith.constant dense<0.000000e+00> : vector<64x128xf32>
    %146 = tpu.matmul %145, %143, %cst_88 {dimension_numbers = #tpu.dot_dimension_numbers<[1], [0], [0], [1], [0, 0, 1, 1], [], []>} : vector<64x16xbf16>, vector<16x128xbf16>, vector<64x128xf32> -> vector<64x128xf32>
    %147 = arith.addf %137, %146 : vector<64x128xf32>
    %c1_i32_89 = arith.constant 1 : i32
    %148 = tpu.dynamic_rotate %116 by %c1_i32_89 dim 1 : vector<16x128xf32>, i32 -> vector<16x128xf32>
    %c3_90 = arith.constant 3 : index
    %c0_91 = arith.constant 0 : index
    %c0_92 = arith.constant 0 : index
    %149 = vector.load %arg2[%c3_90, %c0_91, %c0_92] : memref<9x1x128xf32, #tpu.memory_space<vmem>>, vector<1x1x128xf32>
    %150 = vector.shape_cast %149 : vector<1x1x128xf32> to vector<1x128xf32>
    %151 = vector.broadcast %150 : vector<1x128xf32> to vector<16x128xf32>
    %152 = arith.mulf %148, %151 : vector<16x128xf32>
    %153 = arith.truncf %152 : vector<16x128xf32> to vector<16x128xbf16>
    %c3_93 = arith.constant 3 : index
    %c0_94 = arith.constant 0 : index
    %c0_95 = arith.constant 0 : index
    %154 = vector.load %arg12[%c3_93, %c0_94, %c0_95] : memref<9x64x16xbf16, #tpu.memory_space<vmem>>, vector<1x64x16xbf16>
    %155 = vector.shape_cast %154 : vector<1x64x16xbf16> to vector<64x16xbf16>
    %cst_96 = arith.constant dense<0.000000e+00> : vector<64x128xf32>
    %156 = tpu.matmul %155, %153, %cst_96 {dimension_numbers = #tpu.dot_dimension_numbers<[1], [0], [0], [1], [0, 0, 1, 1], [], []>} : vector<64x16xbf16>, vector<16x128xbf16>, vector<64x128xf32> -> vector<64x128xf32>
    %157 = arith.addf %147, %156 : vector<64x128xf32>
    %158 = arith.truncf %116 : vector<16x128xf32> to vector<16x128xbf16>
    %c4_97 = arith.constant 4 : index
    %c0_98 = arith.constant 0 : index
    %c0_99 = arith.constant 0 : index
    %159 = vector.load %arg12[%c4_97, %c0_98, %c0_99] : memref<9x64x16xbf16, #tpu.memory_space<vmem>>, vector<1x64x16xbf16>
    %160 = vector.shape_cast %159 : vector<1x64x16xbf16> to vector<64x16xbf16>
    %cst_100 = arith.constant dense<0.000000e+00> : vector<64x128xf32>
    %161 = tpu.matmul %160, %158, %cst_100 {dimension_numbers = #tpu.dot_dimension_numbers<[1], [0], [0], [1], [0, 0, 1, 1], [], []>} : vector<64x16xbf16>, vector<16x128xbf16>, vector<64x128xf32> -> vector<64x128xf32>
    %162 = arith.addf %157, %161 : vector<64x128xf32>
    %c127_i32 = arith.constant 127 : i32
    %163 = tpu.dynamic_rotate %116 by %c127_i32 dim 1 : vector<16x128xf32>, i32 -> vector<16x128xf32>
    %c5_101 = arith.constant 5 : index
    %c0_102 = arith.constant 0 : index
    %c0_103 = arith.constant 0 : index
    %164 = vector.load %arg2[%c5_101, %c0_102, %c0_103] : memref<9x1x128xf32, #tpu.memory_space<vmem>>, vector<1x1x128xf32>
    %165 = vector.shape_cast %164 : vector<1x1x128xf32> to vector<1x128xf32>
    %166 = vector.broadcast %165 : vector<1x128xf32> to vector<16x128xf32>
    %167 = arith.mulf %163, %166 : vector<16x128xf32>
    %168 = arith.truncf %167 : vector<16x128xf32> to vector<16x128xbf16>
    %c5_104 = arith.constant 5 : index
    %c0_105 = arith.constant 0 : index
    %c0_106 = arith.constant 0 : index
    %169 = vector.load %arg12[%c5_104, %c0_105, %c0_106] : memref<9x64x16xbf16, #tpu.memory_space<vmem>>, vector<1x64x16xbf16>
    %170 = vector.shape_cast %169 : vector<1x64x16xbf16> to vector<64x16xbf16>
    %cst_107 = arith.constant dense<0.000000e+00> : vector<64x128xf32>
    %171 = tpu.matmul %170, %168, %cst_107 {dimension_numbers = #tpu.dot_dimension_numbers<[1], [0], [0], [1], [0, 0, 1, 1], [], []>} : vector<64x16xbf16>, vector<16x128xbf16>, vector<64x128xf32> -> vector<64x128xf32>
    %172 = arith.addf %162, %171 : vector<64x128xf32>
    %c121_i32 = arith.constant 121 : i32
    %173 = tpu.dynamic_rotate %116 by %c121_i32 dim 1 : vector<16x128xf32>, i32 -> vector<16x128xf32>
    %c6_108 = arith.constant 6 : index
    %c0_109 = arith.constant 0 : index
    %c0_110 = arith.constant 0 : index
    %174 = vector.load %arg2[%c6_108, %c0_109, %c0_110] : memref<9x1x128xf32, #tpu.memory_space<vmem>>, vector<1x1x128xf32>
    %175 = vector.shape_cast %174 : vector<1x1x128xf32> to vector<1x128xf32>
    %176 = vector.broadcast %175 : vector<1x128xf32> to vector<16x128xf32>
    %177 = arith.mulf %173, %176 : vector<16x128xf32>
    %178 = arith.truncf %177 : vector<16x128xf32> to vector<16x128xbf16>
    %c6_111 = arith.constant 6 : index
    %c0_112 = arith.constant 0 : index
    %c0_113 = arith.constant 0 : index
    %179 = vector.load %arg12[%c6_111, %c0_112, %c0_113] : memref<9x64x16xbf16, #tpu.memory_space<vmem>>, vector<1x64x16xbf16>
    %180 = vector.shape_cast %179 : vector<1x64x16xbf16> to vector<64x16xbf16>
    %cst_114 = arith.constant dense<0.000000e+00> : vector<64x128xf32>
    %181 = tpu.matmul %180, %178, %cst_114 {dimension_numbers = #tpu.dot_dimension_numbers<[1], [0], [0], [1], [0, 0, 1, 1], [], []>} : vector<64x16xbf16>, vector<16x128xbf16>, vector<64x128xf32> -> vector<64x128xf32>
    %182 = arith.addf %172, %181 : vector<64x128xf32>
    %c120_i32 = arith.constant 120 : i32
    %183 = tpu.dynamic_rotate %116 by %c120_i32 dim 1 : vector<16x128xf32>, i32 -> vector<16x128xf32>
    %c7_115 = arith.constant 7 : index
    %c0_116 = arith.constant 0 : index
    %c0_117 = arith.constant 0 : index
    %184 = vector.load %arg2[%c7_115, %c0_116, %c0_117] : memref<9x1x128xf32, #tpu.memory_space<vmem>>, vector<1x1x128xf32>
    %185 = vector.shape_cast %184 : vector<1x1x128xf32> to vector<1x128xf32>
    %186 = vector.broadcast %185 : vector<1x128xf32> to vector<16x128xf32>
    %187 = arith.mulf %183, %186 : vector<16x128xf32>
    %188 = arith.truncf %187 : vector<16x128xf32> to vector<16x128xbf16>
    %c7_118 = arith.constant 7 : index
    %c0_119 = arith.constant 0 : index
    %c0_120 = arith.constant 0 : index
    %189 = vector.load %arg12[%c7_118, %c0_119, %c0_120] : memref<9x64x16xbf16, #tpu.memory_space<vmem>>, vector<1x64x16xbf16>
    %190 = vector.shape_cast %189 : vector<1x64x16xbf16> to vector<64x16xbf16>
    %cst_121 = arith.constant dense<0.000000e+00> : vector<64x128xf32>
    %191 = tpu.matmul %190, %188, %cst_121 {dimension_numbers = #tpu.dot_dimension_numbers<[1], [0], [0], [1], [0, 0, 1, 1], [], []>} : vector<64x16xbf16>, vector<16x128xbf16>, vector<64x128xf32> -> vector<64x128xf32>
    %192 = arith.addf %182, %191 : vector<64x128xf32>
    %c119_i32 = arith.constant 119 : i32
    %193 = tpu.dynamic_rotate %116 by %c119_i32 dim 1 : vector<16x128xf32>, i32 -> vector<16x128xf32>
    %c8_122 = arith.constant 8 : index
    %c0_123 = arith.constant 0 : index
    %c0_124 = arith.constant 0 : index
    %194 = vector.load %arg2[%c8_122, %c0_123, %c0_124] : memref<9x1x128xf32, #tpu.memory_space<vmem>>, vector<1x1x128xf32>
    %195 = vector.shape_cast %194 : vector<1x1x128xf32> to vector<1x128xf32>
    %196 = vector.broadcast %195 : vector<1x128xf32> to vector<16x128xf32>
    %197 = arith.mulf %193, %196 : vector<16x128xf32>
    %198 = arith.truncf %197 : vector<16x128xf32> to vector<16x128xbf16>
    %c8_125 = arith.constant 8 : index
    %c0_126 = arith.constant 0 : index
    %c0_127 = arith.constant 0 : index
    %199 = vector.load %arg12[%c8_125, %c0_126, %c0_127] : memref<9x64x16xbf16, #tpu.memory_space<vmem>>, vector<1x64x16xbf16>
    %200 = vector.shape_cast %199 : vector<1x64x16xbf16> to vector<64x16xbf16>
    %cst_128 = arith.constant dense<0.000000e+00> : vector<64x128xf32>
    %201 = tpu.matmul %200, %198, %cst_128 {dimension_numbers = #tpu.dot_dimension_numbers<[1], [0], [0], [1], [0, 0, 1, 1], [], []>} : vector<64x16xbf16>, vector<16x128xbf16>, vector<64x128xf32> -> vector<64x128xf32>
    %202 = arith.addf %192, %201 : vector<64x128xf32>
    %203 = arith.truncf %202 : vector<64x128xf32> to vector<64x128xbf16>
    %c0_129 = arith.constant 0 : index
    %c0_130 = arith.constant 0 : index
    %204 = vector.load %arg6[%c0_129, %c0_130] : memref<128x32xbf16, #tpu.memory_space<vmem>>, vector<128x32xbf16>
    %cst_131 = arith.constant dense<0.000000e+00> : vector<64x32xf32>
    %205 = tpu.matmul %203, %204, %cst_131 {dimension_numbers = #tpu.dot_dimension_numbers<[1], [0], [0], [1], [0, 0, 1, 1], [], []>} : vector<64x128xbf16>, vector<128x32xbf16>, vector<64x32xf32> -> vector<64x32xf32>
    %cst_132 = arith.constant dense<0.000000e+00> : vector<64xf32>
    %206 = vector.multi_reduction <add>, %205, %cst_132 [1] : vector<64x32xf32> to vector<64xf32>
    %207 = vector.shape_cast %206 : vector<64xf32> to vector<64x1xf32>
    %208 = arith.mulf %205, %205 : vector<64x32xf32>
    %cst_133 = arith.constant dense<0.000000e+00> : vector<64xf32>
    %209 = vector.multi_reduction <add>, %208, %cst_133 [1] : vector<64x32xf32> to vector<64xf32>
    %210 = vector.shape_cast %209 : vector<64xf32> to vector<64x1xf32>
    %cst_134 = arith.constant 3.125000e-02 : f32
    %211 = vector.broadcast %cst_134 : f32 to vector<64x1xf32>
    %212 = arith.mulf %207, %211 : vector<64x1xf32>
    %cst_135 = arith.constant 3.125000e-02 : f32
    %213 = vector.broadcast %cst_135 : f32 to vector<64x1xf32>
    %214 = arith.mulf %210, %213 : vector<64x1xf32>
    %215 = arith.mulf %212, %212 : vector<64x1xf32>
    %216 = arith.subf %214, %215 : vector<64x1xf32>
    %cst_136 = arith.constant 0.000000e+00 : f32
    %217 = vector.broadcast %cst_136 : f32 to vector<64x1xf32>
    %218 = arith.maximumf %216, %217 : vector<64x1xf32>
    %c0_137 = arith.constant 0 : index
    %c0_138 = arith.constant 0 : index
    %219 = vector.load %arg13[%c0_137, %c0_138] : memref<64x1xf32, #tpu.memory_space<vmem>>, vector<64x1xf32>
    %cst_139 = arith.constant 9.99999974E-6 : f32
    %220 = vector.broadcast %cst_139 : f32 to vector<64x1xf32>
    %221 = arith.addf %218, %220 : vector<64x1xf32>
    %222 = math.rsqrt %221 : vector<64x1xf32>
    %223 = arith.mulf %219, %222 : vector<64x1xf32>
    %c0_140 = arith.constant 0 : index
    %c0_141 = arith.constant 0 : index
    %224 = vector.load %arg14[%c0_140, %c0_141] : memref<64x1xf32, #tpu.memory_space<vmem>>, vector<64x1xf32>
    %225 = arith.mulf %212, %223 : vector<64x1xf32>
    %226 = arith.subf %224, %225 : vector<64x1xf32>
    %227 = vector.broadcast %223 : vector<64x1xf32> to vector<64x32xf32>
    %228 = arith.mulf %205, %227 : vector<64x32xf32>
    %229 = vector.broadcast %226 : vector<64x1xf32> to vector<64x32xf32>
    %230 = arith.addf %228, %229 : vector<64x32xf32>
    %cst_142 = arith.constant 0.000000e+00 : f32
    %231 = vector.broadcast %cst_142 : f32 to vector<64x32xf32>
    %232 = arith.maximumf %230, %231 : vector<64x32xf32>
    %233 = arith.truncf %232 : vector<64x32xf32> to vector<64x32xbf16>
    %c0_143 = arith.constant 0 : index
    %c0_144 = arith.constant 0 : index
    %234 = vector.load %arg7[%c0_143, %c0_144] : memref<32x128xbf16, #tpu.memory_space<vmem>>, vector<32x128xbf16>
    %cst_145 = arith.constant dense<0.000000e+00> : vector<64x128xf32>
    %235 = tpu.matmul %233, %234, %cst_145 {dimension_numbers = #tpu.dot_dimension_numbers<[1], [0], [0], [1], [0, 0, 1, 1], [], []>} : vector<64x32xbf16>, vector<32x128xbf16>, vector<64x128xf32> -> vector<64x128xf32>
    %cst_146 = arith.constant 0.000000e+00 : f32
    %236 = vector.broadcast %cst_146 : f32 to vector<16x128xf32>
    %c18_i32 = arith.constant 18 : i32
    %237 = tpu.dynamic_rotate %235 by %c18_i32 dim 1 : vector<64x128xf32>, i32 -> vector<64x128xf32>
    %c0_147 = arith.constant 0 : index
    %c0_148 = arith.constant 0 : index
    %c0_149 = arith.constant 0 : index
    %238 = vector.load %arg4[%c0_147, %c0_148, %c0_149] : memref<16x1x128xf32, #tpu.memory_space<vmem>>, vector<1x1x128xf32>
    %239 = vector.shape_cast %238 : vector<1x1x128xf32> to vector<1x128xf32>
    %240 = vector.broadcast %239 : vector<1x128xf32> to vector<64x128xf32>
    %241 = arith.mulf %237, %240 : vector<64x128xf32>
    %242 = arith.truncf %241 : vector<64x128xf32> to vector<64x128xbf16>
    %c0_150 = arith.constant 0 : index
    %c0_151 = arith.constant 0 : index
    %c0_152 = arith.constant 0 : index
    %243 = vector.load %arg15[%c0_150, %c0_151, %c0_152] : memref<16x16x64xbf16, #tpu.memory_space<vmem>>, vector<1x16x64xbf16>
    %244 = vector.shape_cast %243 : vector<1x16x64xbf16> to vector<16x64xbf16>
    %cst_153 = arith.constant dense<0.000000e+00> : vector<16x128xf32>
    %245 = tpu.matmul %244, %242, %cst_153 {dimension_numbers = #tpu.dot_dimension_numbers<[1], [0], [0], [1], [0, 0, 1, 1], [], []>} : vector<16x64xbf16>, vector<64x128xbf16>, vector<16x128xf32> -> vector<16x128xf32>
    %246 = arith.addf %236, %245 : vector<16x128xf32>
    %c17_i32_154 = arith.constant 17 : i32
    %247 = tpu.dynamic_rotate %235 by %c17_i32_154 dim 1 : vector<64x128xf32>, i32 -> vector<64x128xf32>
    %c1_155 = arith.constant 1 : index
    %c0_156 = arith.constant 0 : index
    %c0_157 = arith.constant 0 : index
    %248 = vector.load %arg4[%c1_155, %c0_156, %c0_157] : memref<16x1x128xf32, #tpu.memory_space<vmem>>, vector<1x1x128xf32>
    %249 = vector.shape_cast %248 : vector<1x1x128xf32> to vector<1x128xf32>
    %250 = vector.broadcast %249 : vector<1x128xf32> to vector<64x128xf32>
    %251 = arith.mulf %247, %250 : vector<64x128xf32>
    %252 = arith.truncf %251 : vector<64x128xf32> to vector<64x128xbf16>
    %c1_158 = arith.constant 1 : index
    %c0_159 = arith.constant 0 : index
    %c0_160 = arith.constant 0 : index
    %253 = vector.load %arg15[%c1_158, %c0_159, %c0_160] : memref<16x16x64xbf16, #tpu.memory_space<vmem>>, vector<1x16x64xbf16>
    %254 = vector.shape_cast %253 : vector<1x16x64xbf16> to vector<16x64xbf16>
    %cst_161 = arith.constant dense<0.000000e+00> : vector<16x128xf32>
    %255 = tpu.matmul %254, %252, %cst_161 {dimension_numbers = #tpu.dot_dimension_numbers<[1], [0], [0], [1], [0, 0, 1, 1], [], []>} : vector<16x64xbf16>, vector<64x128xbf16>, vector<16x128xf32> -> vector<16x128xf32>
    %256 = arith.addf %246, %255 : vector<16x128xf32>
    %c16_i32_162 = arith.constant 16 : i32
    %257 = tpu.dynamic_rotate %235 by %c16_i32_162 dim 1 : vector<64x128xf32>, i32 -> vector<64x128xf32>
    %c2_163 = arith.constant 2 : index
    %c0_164 = arith.constant 0 : index
    %c0_165 = arith.constant 0 : index
    %258 = vector.load %arg4[%c2_163, %c0_164, %c0_165] : memref<16x1x128xf32, #tpu.memory_space<vmem>>, vector<1x1x128xf32>
    %259 = vector.shape_cast %258 : vector<1x1x128xf32> to vector<1x128xf32>
    %260 = vector.broadcast %259 : vector<1x128xf32> to vector<64x128xf32>
    %261 = arith.mulf %257, %260 : vector<64x128xf32>
    %262 = arith.truncf %261 : vector<64x128xf32> to vector<64x128xbf16>
    %c2_166 = arith.constant 2 : index
    %c0_167 = arith.constant 0 : index
    %c0_168 = arith.constant 0 : index
    %263 = vector.load %arg15[%c2_166, %c0_167, %c0_168] : memref<16x16x64xbf16, #tpu.memory_space<vmem>>, vector<1x16x64xbf16>
    %264 = vector.shape_cast %263 : vector<1x16x64xbf16> to vector<16x64xbf16>
    %cst_169 = arith.constant dense<0.000000e+00> : vector<16x128xf32>
    %265 = tpu.matmul %264, %262, %cst_169 {dimension_numbers = #tpu.dot_dimension_numbers<[1], [0], [0], [1], [0, 0, 1, 1], [], []>} : vector<16x64xbf16>, vector<64x128xbf16>, vector<16x128xf32> -> vector<16x128xf32>
    %266 = arith.addf %256, %265 : vector<16x128xf32>
    %c15_i32_170 = arith.constant 15 : i32
    %267 = tpu.dynamic_rotate %235 by %c15_i32_170 dim 1 : vector<64x128xf32>, i32 -> vector<64x128xf32>
    %c3_171 = arith.constant 3 : index
    %c0_172 = arith.constant 0 : index
    %c0_173 = arith.constant 0 : index
    %268 = vector.load %arg4[%c3_171, %c0_172, %c0_173] : memref<16x1x128xf32, #tpu.memory_space<vmem>>, vector<1x1x128xf32>
    %269 = vector.shape_cast %268 : vector<1x1x128xf32> to vector<1x128xf32>
    %270 = vector.broadcast %269 : vector<1x128xf32> to vector<64x128xf32>
    %271 = arith.mulf %267, %270 : vector<64x128xf32>
    %272 = arith.truncf %271 : vector<64x128xf32> to vector<64x128xbf16>
    %c3_174 = arith.constant 3 : index
    %c0_175 = arith.constant 0 : index
    %c0_176 = arith.constant 0 : index
    %273 = vector.load %arg15[%c3_174, %c0_175, %c0_176] : memref<16x16x64xbf16, #tpu.memory_space<vmem>>, vector<1x16x64xbf16>
    %274 = vector.shape_cast %273 : vector<1x16x64xbf16> to vector<16x64xbf16>
    %cst_177 = arith.constant dense<0.000000e+00> : vector<16x128xf32>
    %275 = tpu.matmul %274, %272, %cst_177 {dimension_numbers = #tpu.dot_dimension_numbers<[1], [0], [0], [1], [0, 0, 1, 1], [], []>} : vector<16x64xbf16>, vector<64x128xbf16>, vector<16x128xf32> -> vector<16x128xf32>
    %276 = arith.addf %266, %275 : vector<16x128xf32>
    %c10_i32 = arith.constant 10 : i32
    %277 = tpu.dynamic_rotate %235 by %c10_i32 dim 1 : vector<64x128xf32>, i32 -> vector<64x128xf32>
    %c4_178 = arith.constant 4 : index
    %c0_179 = arith.constant 0 : index
    %c0_180 = arith.constant 0 : index
    %278 = vector.load %arg4[%c4_178, %c0_179, %c0_180] : memref<16x1x128xf32, #tpu.memory_space<vmem>>, vector<1x1x128xf32>
    %279 = vector.shape_cast %278 : vector<1x1x128xf32> to vector<1x128xf32>
    %280 = vector.broadcast %279 : vector<1x128xf32> to vector<64x128xf32>
    %281 = arith.mulf %277, %280 : vector<64x128xf32>
    %282 = arith.truncf %281 : vector<64x128xf32> to vector<64x128xbf16>
    %c4_181 = arith.constant 4 : index
    %c0_182 = arith.constant 0 : index
    %c0_183 = arith.constant 0 : index
    %283 = vector.load %arg15[%c4_181, %c0_182, %c0_183] : memref<16x16x64xbf16, #tpu.memory_space<vmem>>, vector<1x16x64xbf16>
    %284 = vector.shape_cast %283 : vector<1x16x64xbf16> to vector<16x64xbf16>
    %cst_184 = arith.constant dense<0.000000e+00> : vector<16x128xf32>
    %285 = tpu.matmul %284, %282, %cst_184 {dimension_numbers = #tpu.dot_dimension_numbers<[1], [0], [0], [1], [0, 0, 1, 1], [], []>} : vector<16x64xbf16>, vector<64x128xbf16>, vector<16x128xf32> -> vector<16x128xf32>
    %286 = arith.addf %276, %285 : vector<16x128xf32>
    %c9_i32_185 = arith.constant 9 : i32
    %287 = tpu.dynamic_rotate %235 by %c9_i32_185 dim 1 : vector<64x128xf32>, i32 -> vector<64x128xf32>
    %c5_186 = arith.constant 5 : index
    %c0_187 = arith.constant 0 : index
    %c0_188 = arith.constant 0 : index
    %288 = vector.load %arg4[%c5_186, %c0_187, %c0_188] : memref<16x1x128xf32, #tpu.memory_space<vmem>>, vector<1x1x128xf32>
    %289 = vector.shape_cast %288 : vector<1x1x128xf32> to vector<1x128xf32>
    %290 = vector.broadcast %289 : vector<1x128xf32> to vector<64x128xf32>
    %291 = arith.mulf %287, %290 : vector<64x128xf32>
    %292 = arith.truncf %291 : vector<64x128xf32> to vector<64x128xbf16>
    %c5_189 = arith.constant 5 : index
    %c0_190 = arith.constant 0 : index
    %c0_191 = arith.constant 0 : index
    %293 = vector.load %arg15[%c5_189, %c0_190, %c0_191] : memref<16x16x64xbf16, #tpu.memory_space<vmem>>, vector<1x16x64xbf16>
    %294 = vector.shape_cast %293 : vector<1x16x64xbf16> to vector<16x64xbf16>
    %cst_192 = arith.constant dense<0.000000e+00> : vector<16x128xf32>
    %295 = tpu.matmul %294, %292, %cst_192 {dimension_numbers = #tpu.dot_dimension_numbers<[1], [0], [0], [1], [0, 0, 1, 1], [], []>} : vector<16x64xbf16>, vector<64x128xbf16>, vector<16x128xf32> -> vector<16x128xf32>
    %296 = arith.addf %286, %295 : vector<16x128xf32>
    %c8_i32_193 = arith.constant 8 : i32
    %297 = tpu.dynamic_rotate %235 by %c8_i32_193 dim 1 : vector<64x128xf32>, i32 -> vector<64x128xf32>
    %c6_194 = arith.constant 6 : index
    %c0_195 = arith.constant 0 : index
    %c0_196 = arith.constant 0 : index
    %298 = vector.load %arg4[%c6_194, %c0_195, %c0_196] : memref<16x1x128xf32, #tpu.memory_space<vmem>>, vector<1x1x128xf32>
    %299 = vector.shape_cast %298 : vector<1x1x128xf32> to vector<1x128xf32>
    %300 = vector.broadcast %299 : vector<1x128xf32> to vector<64x128xf32>
    %301 = arith.mulf %297, %300 : vector<64x128xf32>
    %302 = arith.truncf %301 : vector<64x128xf32> to vector<64x128xbf16>
    %c6_197 = arith.constant 6 : index
    %c0_198 = arith.constant 0 : index
    %c0_199 = arith.constant 0 : index
    %303 = vector.load %arg15[%c6_197, %c0_198, %c0_199] : memref<16x16x64xbf16, #tpu.memory_space<vmem>>, vector<1x16x64xbf16>
    %304 = vector.shape_cast %303 : vector<1x16x64xbf16> to vector<16x64xbf16>
    %cst_200 = arith.constant dense<0.000000e+00> : vector<16x128xf32>
    %305 = tpu.matmul %304, %302, %cst_200 {dimension_numbers = #tpu.dot_dimension_numbers<[1], [0], [0], [1], [0, 0, 1, 1], [], []>} : vector<16x64xbf16>, vector<64x128xbf16>, vector<16x128xf32> -> vector<16x128xf32>
    %306 = arith.addf %296, %305 : vector<16x128xf32>
    %c7_i32_201 = arith.constant 7 : i32
    %307 = tpu.dynamic_rotate %235 by %c7_i32_201 dim 1 : vector<64x128xf32>, i32 -> vector<64x128xf32>
    %c7_202 = arith.constant 7 : index
    %c0_203 = arith.constant 0 : index
    %c0_204 = arith.constant 0 : index
    %308 = vector.load %arg4[%c7_202, %c0_203, %c0_204] : memref<16x1x128xf32, #tpu.memory_space<vmem>>, vector<1x1x128xf32>
    %309 = vector.shape_cast %308 : vector<1x1x128xf32> to vector<1x128xf32>
    %310 = vector.broadcast %309 : vector<1x128xf32> to vector<64x128xf32>
    %311 = arith.mulf %307, %310 : vector<64x128xf32>
    %312 = arith.truncf %311 : vector<64x128xf32> to vector<64x128xbf16>
    %c7_205 = arith.constant 7 : index
    %c0_206 = arith.constant 0 : index
    %c0_207 = arith.constant 0 : index
    %313 = vector.load %arg15[%c7_205, %c0_206, %c0_207] : memref<16x16x64xbf16, #tpu.memory_space<vmem>>, vector<1x16x64xbf16>
    %314 = vector.shape_cast %313 : vector<1x16x64xbf16> to vector<16x64xbf16>
    %cst_208 = arith.constant dense<0.000000e+00> : vector<16x128xf32>
    %315 = tpu.matmul %314, %312, %cst_208 {dimension_numbers = #tpu.dot_dimension_numbers<[1], [0], [0], [1], [0, 0, 1, 1], [], []>} : vector<16x64xbf16>, vector<64x128xbf16>, vector<16x128xf32> -> vector<16x128xf32>
    %316 = arith.addf %306, %315 : vector<16x128xf32>
    %c2_i32 = arith.constant 2 : i32
    %317 = tpu.dynamic_rotate %235 by %c2_i32 dim 1 : vector<64x128xf32>, i32 -> vector<64x128xf32>
    %c8_209 = arith.constant 8 : index
    %c0_210 = arith.constant 0 : index
    %c0_211 = arith.constant 0 : index
    %318 = vector.load %arg4[%c8_209, %c0_210, %c0_211] : memref<16x1x128xf32, #tpu.memory_space<vmem>>, vector<1x1x128xf32>
    %319 = vector.shape_cast %318 : vector<1x1x128xf32> to vector<1x128xf32>
    %320 = vector.broadcast %319 : vector<1x128xf32> to vector<64x128xf32>
    %321 = arith.mulf %317, %320 : vector<64x128xf32>
    %322 = arith.truncf %321 : vector<64x128xf32> to vector<64x128xbf16>
    %c8_212 = arith.constant 8 : index
    %c0_213 = arith.constant 0 : index
    %c0_214 = arith.constant 0 : index
    %323 = vector.load %arg15[%c8_212, %c0_213, %c0_214] : memref<16x16x64xbf16, #tpu.memory_space<vmem>>, vector<1x16x64xbf16>
    %324 = vector.shape_cast %323 : vector<1x16x64xbf16> to vector<16x64xbf16>
    %cst_215 = arith.constant dense<0.000000e+00> : vector<16x128xf32>
    %325 = tpu.matmul %324, %322, %cst_215 {dimension_numbers = #tpu.dot_dimension_numbers<[1], [0], [0], [1], [0, 0, 1, 1], [], []>} : vector<16x64xbf16>, vector<64x128xbf16>, vector<16x128xf32> -> vector<16x128xf32>
    %326 = arith.addf %316, %325 : vector<16x128xf32>
    %c1_i32_216 = arith.constant 1 : i32
    %327 = tpu.dynamic_rotate %235 by %c1_i32_216 dim 1 : vector<64x128xf32>, i32 -> vector<64x128xf32>
    %c9 = arith.constant 9 : index
    %c0_217 = arith.constant 0 : index
    %c0_218 = arith.constant 0 : index
    %328 = vector.load %arg4[%c9, %c0_217, %c0_218] : memref<16x1x128xf32, #tpu.memory_space<vmem>>, vector<1x1x128xf32>
    %329 = vector.shape_cast %328 : vector<1x1x128xf32> to vector<1x128xf32>
    %330 = vector.broadcast %329 : vector<1x128xf32> to vector<64x128xf32>
    %331 = arith.mulf %327, %330 : vector<64x128xf32>
    %332 = arith.truncf %331 : vector<64x128xf32> to vector<64x128xbf16>
    %c9_219 = arith.constant 9 : index
    %c0_220 = arith.constant 0 : index
    %c0_221 = arith.constant 0 : index
    %333 = vector.load %arg15[%c9_219, %c0_220, %c0_221] : memref<16x16x64xbf16, #tpu.memory_space<vmem>>, vector<1x16x64xbf16>
    %334 = vector.shape_cast %333 : vector<1x16x64xbf16> to vector<16x64xbf16>
    %cst_222 = arith.constant dense<0.000000e+00> : vector<16x128xf32>
    %335 = tpu.matmul %334, %332, %cst_222 {dimension_numbers = #tpu.dot_dimension_numbers<[1], [0], [0], [1], [0, 0, 1, 1], [], []>} : vector<16x64xbf16>, vector<64x128xbf16>, vector<16x128xf32> -> vector<16x128xf32>
    %336 = arith.addf %326, %335 : vector<16x128xf32>
    %337 = arith.truncf %235 : vector<64x128xf32> to vector<64x128xbf16>
    %c10 = arith.constant 10 : index
    %c0_223 = arith.constant 0 : index
    %c0_224 = arith.constant 0 : index
    %338 = vector.load %arg15[%c10, %c0_223, %c0_224] : memref<16x16x64xbf16, #tpu.memory_space<vmem>>, vector<1x16x64xbf16>
    %339 = vector.shape_cast %338 : vector<1x16x64xbf16> to vector<16x64xbf16>
    %cst_225 = arith.constant dense<0.000000e+00> : vector<16x128xf32>
    %340 = tpu.matmul %339, %337, %cst_225 {dimension_numbers = #tpu.dot_dimension_numbers<[1], [0], [0], [1], [0, 0, 1, 1], [], []>} : vector<16x64xbf16>, vector<64x128xbf16>, vector<16x128xf32> -> vector<16x128xf32>
    %341 = arith.addf %336, %340 : vector<16x128xf32>
    %c127_i32_226 = arith.constant 127 : i32
    %342 = tpu.dynamic_rotate %235 by %c127_i32_226 dim 1 : vector<64x128xf32>, i32 -> vector<64x128xf32>
    %c11 = arith.constant 11 : index
    %c0_227 = arith.constant 0 : index
    %c0_228 = arith.constant 0 : index
    %343 = vector.load %arg4[%c11, %c0_227, %c0_228] : memref<16x1x128xf32, #tpu.memory_space<vmem>>, vector<1x1x128xf32>
    %344 = vector.shape_cast %343 : vector<1x1x128xf32> to vector<1x128xf32>
    %345 = vector.broadcast %344 : vector<1x128xf32> to vector<64x128xf32>
    %346 = arith.mulf %342, %345 : vector<64x128xf32>
    %347 = arith.truncf %346 : vector<64x128xf32> to vector<64x128xbf16>
    %c11_229 = arith.constant 11 : index
    %c0_230 = arith.constant 0 : index
    %c0_231 = arith.constant 0 : index
    %348 = vector.load %arg15[%c11_229, %c0_230, %c0_231] : memref<16x16x64xbf16, #tpu.memory_space<vmem>>, vector<1x16x64xbf16>
    %349 = vector.shape_cast %348 : vector<1x16x64xbf16> to vector<16x64xbf16>
    %cst_232 = arith.constant dense<0.000000e+00> : vector<16x128xf32>
    %350 = tpu.matmul %349, %347, %cst_232 {dimension_numbers = #tpu.dot_dimension_numbers<[1], [0], [0], [1], [0, 0, 1, 1], [], []>} : vector<16x64xbf16>, vector<64x128xbf16>, vector<16x128xf32> -> vector<16x128xf32>
    %351 = arith.addf %341, %350 : vector<16x128xf32>
    %c122_i32 = arith.constant 122 : i32
    %352 = tpu.dynamic_rotate %235 by %c122_i32 dim 1 : vector<64x128xf32>, i32 -> vector<64x128xf32>
    %c12 = arith.constant 12 : index
    %c0_233 = arith.constant 0 : index
    %c0_234 = arith.constant 0 : index
    %353 = vector.load %arg4[%c12, %c0_233, %c0_234] : memref<16x1x128xf32, #tpu.memory_space<vmem>>, vector<1x1x128xf32>
    %354 = vector.shape_cast %353 : vector<1x1x128xf32> to vector<1x128xf32>
    %355 = vector.broadcast %354 : vector<1x128xf32> to vector<64x128xf32>
    %356 = arith.mulf %352, %355 : vector<64x128xf32>
    %357 = arith.truncf %356 : vector<64x128xf32> to vector<64x128xbf16>
    %c12_235 = arith.constant 12 : index
    %c0_236 = arith.constant 0 : index
    %c0_237 = arith.constant 0 : index
    %358 = vector.load %arg15[%c12_235, %c0_236, %c0_237] : memref<16x16x64xbf16, #tpu.memory_space<vmem>>, vector<1x16x64xbf16>
    %359 = vector.shape_cast %358 : vector<1x16x64xbf16> to vector<16x64xbf16>
    %cst_238 = arith.constant dense<0.000000e+00> : vector<16x128xf32>
    %360 = tpu.matmul %359, %357, %cst_238 {dimension_numbers = #tpu.dot_dimension_numbers<[1], [0], [0], [1], [0, 0, 1, 1], [], []>} : vector<16x64xbf16>, vector<64x128xbf16>, vector<16x128xf32> -> vector<16x128xf32>
    %361 = arith.addf %351, %360 : vector<16x128xf32>
    %c121_i32_239 = arith.constant 121 : i32
    %362 = tpu.dynamic_rotate %235 by %c121_i32_239 dim 1 : vector<64x128xf32>, i32 -> vector<64x128xf32>
    %c13 = arith.constant 13 : index
    %c0_240 = arith.constant 0 : index
    %c0_241 = arith.constant 0 : index
    %363 = vector.load %arg4[%c13, %c0_240, %c0_241] : memref<16x1x128xf32, #tpu.memory_space<vmem>>, vector<1x1x128xf32>
    %364 = vector.shape_cast %363 : vector<1x1x128xf32> to vector<1x128xf32>
    %365 = vector.broadcast %364 : vector<1x128xf32> to vector<64x128xf32>
    %366 = arith.mulf %362, %365 : vector<64x128xf32>
    %367 = arith.truncf %366 : vector<64x128xf32> to vector<64x128xbf16>
    %c13_242 = arith.constant 13 : index
    %c0_243 = arith.constant 0 : index
    %c0_244 = arith.constant 0 : index
    %368 = vector.load %arg15[%c13_242, %c0_243, %c0_244] : memref<16x16x64xbf16, #tpu.memory_space<vmem>>, vector<1x16x64xbf16>
    %369 = vector.shape_cast %368 : vector<1x16x64xbf16> to vector<16x64xbf16>
    %cst_245 = arith.constant dense<0.000000e+00> : vector<16x128xf32>
    %370 = tpu.matmul %369, %367, %cst_245 {dimension_numbers = #tpu.dot_dimension_numbers<[1], [0], [0], [1], [0, 0, 1, 1], [], []>} : vector<16x64xbf16>, vector<64x128xbf16>, vector<16x128xf32> -> vector<16x128xf32>
    %371 = arith.addf %361, %370 : vector<16x128xf32>
    %c120_i32_246 = arith.constant 120 : i32
    %372 = tpu.dynamic_rotate %235 by %c120_i32_246 dim 1 : vector<64x128xf32>, i32 -> vector<64x128xf32>
    %c14 = arith.constant 14 : index
    %c0_247 = arith.constant 0 : index
    %c0_248 = arith.constant 0 : index
    %373 = vector.load %arg4[%c14, %c0_247, %c0_248] : memref<16x1x128xf32, #tpu.memory_space<vmem>>, vector<1x1x128xf32>
    %374 = vector.shape_cast %373 : vector<1x1x128xf32> to vector<1x128xf32>
    %375 = vector.broadcast %374 : vector<1x128xf32> to vector<64x128xf32>
    %376 = arith.mulf %372, %375 : vector<64x128xf32>
    %377 = arith.truncf %376 : vector<64x128xf32> to vector<64x128xbf16>
    %c14_249 = arith.constant 14 : index
    %c0_250 = arith.constant 0 : index
    %c0_251 = arith.constant 0 : index
    %378 = vector.load %arg15[%c14_249, %c0_250, %c0_251] : memref<16x16x64xbf16, #tpu.memory_space<vmem>>, vector<1x16x64xbf16>
    %379 = vector.shape_cast %378 : vector<1x16x64xbf16> to vector<16x64xbf16>
    %cst_252 = arith.constant dense<0.000000e+00> : vector<16x128xf32>
    %380 = tpu.matmul %379, %377, %cst_252 {dimension_numbers = #tpu.dot_dimension_numbers<[1], [0], [0], [1], [0, 0, 1, 1], [], []>} : vector<16x64xbf16>, vector<64x128xbf16>, vector<16x128xf32> -> vector<16x128xf32>
    %381 = arith.addf %371, %380 : vector<16x128xf32>
    %c119_i32_253 = arith.constant 119 : i32
    %382 = tpu.dynamic_rotate %235 by %c119_i32_253 dim 1 : vector<64x128xf32>, i32 -> vector<64x128xf32>
    %c15 = arith.constant 15 : index
    %c0_254 = arith.constant 0 : index
    %c0_255 = arith.constant 0 : index
    %383 = vector.load %arg4[%c15, %c0_254, %c0_255] : memref<16x1x128xf32, #tpu.memory_space<vmem>>, vector<1x1x128xf32>
    %384 = vector.shape_cast %383 : vector<1x1x128xf32> to vector<1x128xf32>
    %385 = vector.broadcast %384 : vector<1x128xf32> to vector<64x128xf32>
    %386 = arith.mulf %382, %385 : vector<64x128xf32>
    %387 = arith.truncf %386 : vector<64x128xf32> to vector<64x128xbf16>
    %c15_256 = arith.constant 15 : index
    %c0_257 = arith.constant 0 : index
    %c0_258 = arith.constant 0 : index
    %388 = vector.load %arg15[%c15_256, %c0_257, %c0_258] : memref<16x16x64xbf16, #tpu.memory_space<vmem>>, vector<1x16x64xbf16>
    %389 = vector.shape_cast %388 : vector<1x16x64xbf16> to vector<16x64xbf16>
    %cst_259 = arith.constant dense<0.000000e+00> : vector<16x128xf32>
    %390 = tpu.matmul %389, %387, %cst_259 {dimension_numbers = #tpu.dot_dimension_numbers<[1], [0], [0], [1], [0, 0, 1, 1], [], []>} : vector<16x64xbf16>, vector<64x128xbf16>, vector<16x128xf32> -> vector<16x128xf32>
    %391 = arith.addf %381, %390 : vector<16x128xf32>
    %cst_260 = arith.constant dense<0.000000e+00> : vector<16xf32>
    %392 = vector.multi_reduction <add>, %391, %cst_260 [1] : vector<16x128xf32> to vector<16xf32>
    %393 = vector.shape_cast %392 : vector<16xf32> to vector<16x1xf32>
    %394 = arith.mulf %391, %391 : vector<16x128xf32>
    %cst_261 = arith.constant dense<0.000000e+00> : vector<16xf32>
    %395 = vector.multi_reduction <add>, %394, %cst_261 [1] : vector<16x128xf32> to vector<16xf32>
    %396 = vector.shape_cast %395 : vector<16xf32> to vector<16x1xf32>
    %cst_262 = arith.constant 7.812500e-03 : f32
    %397 = vector.broadcast %cst_262 : f32 to vector<16x1xf32>
    %398 = arith.mulf %393, %397 : vector<16x1xf32>
    %cst_263 = arith.constant 7.812500e-03 : f32
    %399 = vector.broadcast %cst_263 : f32 to vector<16x1xf32>
    %400 = arith.mulf %396, %399 : vector<16x1xf32>
    %401 = arith.mulf %398, %398 : vector<16x1xf32>
    %402 = arith.subf %400, %401 : vector<16x1xf32>
    %cst_264 = arith.constant 0.000000e+00 : f32
    %403 = vector.broadcast %cst_264 : f32 to vector<16x1xf32>
    %404 = arith.maximumf %402, %403 : vector<16x1xf32>
    %c0_265 = arith.constant 0 : index
    %c0_266 = arith.constant 0 : index
    %405 = vector.load %arg16[%c0_265, %c0_266] : memref<16x1xf32, #tpu.memory_space<vmem>>, vector<16x1xf32>
    %cst_267 = arith.constant 9.99999974E-6 : f32
    %406 = vector.broadcast %cst_267 : f32 to vector<16x1xf32>
    %407 = arith.addf %404, %406 : vector<16x1xf32>
    %408 = math.rsqrt %407 : vector<16x1xf32>
    %409 = arith.mulf %405, %408 : vector<16x1xf32>
    %c0_268 = arith.constant 0 : index
    %c0_269 = arith.constant 0 : index
    %410 = vector.load %arg17[%c0_268, %c0_269] : memref<16x1xf32, #tpu.memory_space<vmem>>, vector<16x1xf32>
    %411 = arith.mulf %398, %409 : vector<16x1xf32>
    %412 = arith.subf %410, %411 : vector<16x1xf32>
    %413 = vector.broadcast %409 : vector<16x1xf32> to vector<16x128xf32>
    %414 = arith.mulf %391, %413 : vector<16x128xf32>
    %415 = vector.broadcast %412 : vector<16x1xf32> to vector<16x128xf32>
    %416 = arith.addf %414, %415 : vector<16x128xf32>
    %cst_270 = arith.constant 0.000000e+00 : f32
    %417 = vector.broadcast %cst_270 : f32 to vector<16x128xf32>
    %418 = arith.maximumf %416, %417 : vector<16x128xf32>
    %c0_271 = arith.constant 0 : index
    %c0_272 = arith.constant 0 : index
    %419 = vector.load %arg24[%c0_271, %c0_272] : memref<32x128xf32, #tpu.memory_space<vmem>>, vector<16x128xf32>
    tpu.vector_store %arg24[%c0_271, %c0_272], %418 {strides = array<i32>} : memref<32x128xf32, #tpu.memory_space<vmem>>, vector<16x128xf32>,
    %c16 = arith.constant 16 : index
    %c0_273 = arith.constant 0 : index
    %420 = vector.load %arg24[%c16, %c0_273] : memref<32x128xf32, #tpu.memory_space<vmem>>, vector<16x128xf32>
    tpu.vector_store %arg24[%c16, %c0_273], %116 {strides = array<i32>} : memref<32x128xf32, #tpu.memory_space<vmem>>, vector<16x128xf32>,
    %c0_274 = arith.constant 0 : index
    %c0_275 = arith.constant 0 : index
    %421 = vector.load %arg24[%c0_274, %c0_275] : memref<32x128xf32, #tpu.memory_space<vmem>>, vector<32x128xf32>
    %422 = arith.truncf %421 : vector<32x128xf32> to vector<32x128xbf16>
    %c0_276 = arith.constant 0 : index
    %c0_277 = arith.constant 0 : index
    %423 = vector.load %arg8[%c0_276, %c0_277] : memref<128x512xbf16, #tpu.memory_space<vmem>>, vector<128x512xbf16>
    %cst_278 = arith.constant dense<0.000000e+00> : vector<32x512xf32>
    %424 = tpu.matmul %422, %423, %cst_278 {dimension_numbers = #tpu.dot_dimension_numbers<[1], [0], [0], [1], [0, 0, 1, 1], [], []>} : vector<32x128xbf16>, vector<128x512xbf16>, vector<32x512xf32> -> vector<32x512xf32>
    %cst_279 = arith.constant 0.000000e+00 : f32
    %425 = vector.broadcast %cst_279 : f32 to vector<16x512xf32>
    %c34_i32 = arith.constant 34 : i32
    %426 = tpu.dynamic_rotate %424 by %c34_i32 dim 1 : vector<32x512xf32>, i32 -> vector<32x512xf32>
    %c0_280 = arith.constant 0 : index
    %c0_281 = arith.constant 0 : index
    %c0_282 = arith.constant 0 : index
    %427 = vector.load %arg3[%c0_280, %c0_281, %c0_282] : memref<16x1x512xf32, #tpu.memory_space<vmem>>, vector<1x1x512xf32>
    %428 = vector.shape_cast %427 : vector<1x1x512xf32> to vector<1x512xf32>
    %429 = vector.broadcast %428 : vector<1x512xf32> to vector<32x512xf32>
    %430 = arith.mulf %426, %429 : vector<32x512xf32>
    %431 = arith.truncf %430 : vector<32x512xf32> to vector<32x512xbf16>
    %c0_283 = arith.constant 0 : index
    %c0_284 = arith.constant 0 : index
    %c0_285 = arith.constant 0 : index
    %432 = vector.load %arg18[%c0_283, %c0_284, %c0_285] : memref<16x16x32xbf16, #tpu.memory_space<vmem>>, vector<1x16x32xbf16>
    %433 = vector.shape_cast %432 : vector<1x16x32xbf16> to vector<16x32xbf16>
    %cst_286 = arith.constant dense<0.000000e+00> : vector<16x512xf32>
    %434 = tpu.matmul %433, %431, %cst_286 {dimension_numbers = #tpu.dot_dimension_numbers<[1], [0], [0], [1], [0, 0, 1, 1], [], []>} : vector<16x32xbf16>, vector<32x512xbf16>, vector<16x512xf32> -> vector<16x512xf32>
    %435 = arith.addf %425, %434 : vector<16x512xf32>
    %c33_i32 = arith.constant 33 : i32
    %436 = tpu.dynamic_rotate %424 by %c33_i32 dim 1 : vector<32x512xf32>, i32 -> vector<32x512xf32>
    %c1_287 = arith.constant 1 : index
    %c0_288 = arith.constant 0 : index
    %c0_289 = arith.constant 0 : index
    %437 = vector.load %arg3[%c1_287, %c0_288, %c0_289] : memref<16x1x512xf32, #tpu.memory_space<vmem>>, vector<1x1x512xf32>
    %438 = vector.shape_cast %437 : vector<1x1x512xf32> to vector<1x512xf32>
    %439 = vector.broadcast %438 : vector<1x512xf32> to vector<32x512xf32>
    %440 = arith.mulf %436, %439 : vector<32x512xf32>
    %441 = arith.truncf %440 : vector<32x512xf32> to vector<32x512xbf16>
    %c1_290 = arith.constant 1 : index
    %c0_291 = arith.constant 0 : index
    %c0_292 = arith.constant 0 : index
    %442 = vector.load %arg18[%c1_290, %c0_291, %c0_292] : memref<16x16x32xbf16, #tpu.memory_space<vmem>>, vector<1x16x32xbf16>
    %443 = vector.shape_cast %442 : vector<1x16x32xbf16> to vector<16x32xbf16>
    %cst_293 = arith.constant dense<0.000000e+00> : vector<16x512xf32>
    %444 = tpu.matmul %443, %441, %cst_293 {dimension_numbers = #tpu.dot_dimension_numbers<[1], [0], [0], [1], [0, 0, 1, 1], [], []>} : vector<16x32xbf16>, vector<32x512xbf16>, vector<16x512xf32> -> vector<16x512xf32>
    %445 = arith.addf %435, %444 : vector<16x512xf32>
    %c32_i32 = arith.constant 32 : i32
    %446 = tpu.dynamic_rotate %424 by %c32_i32 dim 1 : vector<32x512xf32>, i32 -> vector<32x512xf32>
    %c2_294 = arith.constant 2 : index
    %c0_295 = arith.constant 0 : index
    %c0_296 = arith.constant 0 : index
    %447 = vector.load %arg3[%c2_294, %c0_295, %c0_296] : memref<16x1x512xf32, #tpu.memory_space<vmem>>, vector<1x1x512xf32>
    %448 = vector.shape_cast %447 : vector<1x1x512xf32> to vector<1x512xf32>
    %449 = vector.broadcast %448 : vector<1x512xf32> to vector<32x512xf32>
    %450 = arith.mulf %446, %449 : vector<32x512xf32>
    %451 = arith.truncf %450 : vector<32x512xf32> to vector<32x512xbf16>
    %c2_297 = arith.constant 2 : index
    %c0_298 = arith.constant 0 : index
    %c0_299 = arith.constant 0 : index
    %452 = vector.load %arg18[%c2_297, %c0_298, %c0_299] : memref<16x16x32xbf16, #tpu.memory_space<vmem>>, vector<1x16x32xbf16>
    %453 = vector.shape_cast %452 : vector<1x16x32xbf16> to vector<16x32xbf16>
    %cst_300 = arith.constant dense<0.000000e+00> : vector<16x512xf32>
    %454 = tpu.matmul %453, %451, %cst_300 {dimension_numbers = #tpu.dot_dimension_numbers<[1], [0], [0], [1], [0, 0, 1, 1], [], []>} : vector<16x32xbf16>, vector<32x512xbf16>, vector<16x512xf32> -> vector<16x512xf32>
    %455 = arith.addf %445, %454 : vector<16x512xf32>
    %c31_i32 = arith.constant 31 : i32
    %456 = tpu.dynamic_rotate %424 by %c31_i32 dim 1 : vector<32x512xf32>, i32 -> vector<32x512xf32>
    %c3_301 = arith.constant 3 : index
    %c0_302 = arith.constant 0 : index
    %c0_303 = arith.constant 0 : index
    %457 = vector.load %arg3[%c3_301, %c0_302, %c0_303] : memref<16x1x512xf32, #tpu.memory_space<vmem>>, vector<1x1x512xf32>
    %458 = vector.shape_cast %457 : vector<1x1x512xf32> to vector<1x512xf32>
    %459 = vector.broadcast %458 : vector<1x512xf32> to vector<32x512xf32>
    %460 = arith.mulf %456, %459 : vector<32x512xf32>
    %461 = arith.truncf %460 : vector<32x512xf32> to vector<32x512xbf16>
    %c3_304 = arith.constant 3 : index
    %c0_305 = arith.constant 0 : index
    %c0_306 = arith.constant 0 : index
    %462 = vector.load %arg18[%c3_304, %c0_305, %c0_306] : memref<16x16x32xbf16, #tpu.memory_space<vmem>>, vector<1x16x32xbf16>
    %463 = vector.shape_cast %462 : vector<1x16x32xbf16> to vector<16x32xbf16>
    %cst_307 = arith.constant dense<0.000000e+00> : vector<16x512xf32>
    %464 = tpu.matmul %463, %461, %cst_307 {dimension_numbers = #tpu.dot_dimension_numbers<[1], [0], [0], [1], [0, 0, 1, 1], [], []>} : vector<16x32xbf16>, vector<32x512xbf16>, vector<16x512xf32> -> vector<16x512xf32>
    %465 = arith.addf %455, %464 : vector<16x512xf32>
    %c18_i32_308 = arith.constant 18 : i32
    %466 = tpu.dynamic_rotate %424 by %c18_i32_308 dim 1 : vector<32x512xf32>, i32 -> vector<32x512xf32>
    %c4_309 = arith.constant 4 : index
    %c0_310 = arith.constant 0 : index
    %c0_311 = arith.constant 0 : index
    %467 = vector.load %arg3[%c4_309, %c0_310, %c0_311] : memref<16x1x512xf32, #tpu.memory_space<vmem>>, vector<1x1x512xf32>
    %468 = vector.shape_cast %467 : vector<1x1x512xf32> to vector<1x512xf32>
    %469 = vector.broadcast %468 : vector<1x512xf32> to vector<32x512xf32>
    %470 = arith.mulf %466, %469 : vector<32x512xf32>
    %471 = arith.truncf %470 : vector<32x512xf32> to vector<32x512xbf16>
    %c4_312 = arith.constant 4 : index
    %c0_313 = arith.constant 0 : index
    %c0_314 = arith.constant 0 : index
    %472 = vector.load %arg18[%c4_312, %c0_313, %c0_314] : memref<16x16x32xbf16, #tpu.memory_space<vmem>>, vector<1x16x32xbf16>
    %473 = vector.shape_cast %472 : vector<1x16x32xbf16> to vector<16x32xbf16>
    %cst_315 = arith.constant dense<0.000000e+00> : vector<16x512xf32>
    %474 = tpu.matmul %473, %471, %cst_315 {dimension_numbers = #tpu.dot_dimension_numbers<[1], [0], [0], [1], [0, 0, 1, 1], [], []>} : vector<16x32xbf16>, vector<32x512xbf16>, vector<16x512xf32> -> vector<16x512xf32>
    %475 = arith.addf %465, %474 : vector<16x512xf32>
    %c17_i32_316 = arith.constant 17 : i32
    %476 = tpu.dynamic_rotate %424 by %c17_i32_316 dim 1 : vector<32x512xf32>, i32 -> vector<32x512xf32>
    %c5_317 = arith.constant 5 : index
    %c0_318 = arith.constant 0 : index
    %c0_319 = arith.constant 0 : index
    %477 = vector.load %arg3[%c5_317, %c0_318, %c0_319] : memref<16x1x512xf32, #tpu.memory_space<vmem>>, vector<1x1x512xf32>
    %478 = vector.shape_cast %477 : vector<1x1x512xf32> to vector<1x512xf32>
    %479 = vector.broadcast %478 : vector<1x512xf32> to vector<32x512xf32>
    %480 = arith.mulf %476, %479 : vector<32x512xf32>
    %481 = arith.truncf %480 : vector<32x512xf32> to vector<32x512xbf16>
    %c5_320 = arith.constant 5 : index
    %c0_321 = arith.constant 0 : index
    %c0_322 = arith.constant 0 : index
    %482 = vector.load %arg18[%c5_320, %c0_321, %c0_322] : memref<16x16x32xbf16, #tpu.memory_space<vmem>>, vector<1x16x32xbf16>
    %483 = vector.shape_cast %482 : vector<1x16x32xbf16> to vector<16x32xbf16>
    %cst_323 = arith.constant dense<0.000000e+00> : vector<16x512xf32>
    %484 = tpu.matmul %483, %481, %cst_323 {dimension_numbers = #tpu.dot_dimension_numbers<[1], [0], [0], [1], [0, 0, 1, 1], [], []>} : vector<16x32xbf16>, vector<32x512xbf16>, vector<16x512xf32> -> vector<16x512xf32>
    %485 = arith.addf %475, %484 : vector<16x512xf32>
    %c16_i32_324 = arith.constant 16 : i32
    %486 = tpu.dynamic_rotate %424 by %c16_i32_324 dim 1 : vector<32x512xf32>, i32 -> vector<32x512xf32>
    %c6_325 = arith.constant 6 : index
    %c0_326 = arith.constant 0 : index
    %c0_327 = arith.constant 0 : index
    %487 = vector.load %arg3[%c6_325, %c0_326, %c0_327] : memref<16x1x512xf32, #tpu.memory_space<vmem>>, vector<1x1x512xf32>
    %488 = vector.shape_cast %487 : vector<1x1x512xf32> to vector<1x512xf32>
    %489 = vector.broadcast %488 : vector<1x512xf32> to vector<32x512xf32>
    %490 = arith.mulf %486, %489 : vector<32x512xf32>
    %491 = arith.truncf %490 : vector<32x512xf32> to vector<32x512xbf16>
    %c6_328 = arith.constant 6 : index
    %c0_329 = arith.constant 0 : index
    %c0_330 = arith.constant 0 : index
    %492 = vector.load %arg18[%c6_328, %c0_329, %c0_330] : memref<16x16x32xbf16, #tpu.memory_space<vmem>>, vector<1x16x32xbf16>
    %493 = vector.shape_cast %492 : vector<1x16x32xbf16> to vector<16x32xbf16>
    %cst_331 = arith.constant dense<0.000000e+00> : vector<16x512xf32>
    %494 = tpu.matmul %493, %491, %cst_331 {dimension_numbers = #tpu.dot_dimension_numbers<[1], [0], [0], [1], [0, 0, 1, 1], [], []>} : vector<16x32xbf16>, vector<32x512xbf16>, vector<16x512xf32> -> vector<16x512xf32>
    %495 = arith.addf %485, %494 : vector<16x512xf32>
    %c15_i32_332 = arith.constant 15 : i32
    %496 = tpu.dynamic_rotate %424 by %c15_i32_332 dim 1 : vector<32x512xf32>, i32 -> vector<32x512xf32>
    %c7_333 = arith.constant 7 : index
    %c0_334 = arith.constant 0 : index
    %c0_335 = arith.constant 0 : index
    %497 = vector.load %arg3[%c7_333, %c0_334, %c0_335] : memref<16x1x512xf32, #tpu.memory_space<vmem>>, vector<1x1x512xf32>
    %498 = vector.shape_cast %497 : vector<1x1x512xf32> to vector<1x512xf32>
    %499 = vector.broadcast %498 : vector<1x512xf32> to vector<32x512xf32>
    %500 = arith.mulf %496, %499 : vector<32x512xf32>
    %501 = arith.truncf %500 : vector<32x512xf32> to vector<32x512xbf16>
    %c7_336 = arith.constant 7 : index
    %c0_337 = arith.constant 0 : index
    %c0_338 = arith.constant 0 : index
    %502 = vector.load %arg18[%c7_336, %c0_337, %c0_338] : memref<16x16x32xbf16, #tpu.memory_space<vmem>>, vector<1x16x32xbf16>
    %503 = vector.shape_cast %502 : vector<1x16x32xbf16> to vector<16x32xbf16>
    %cst_339 = arith.constant dense<0.000000e+00> : vector<16x512xf32>
    %504 = tpu.matmul %503, %501, %cst_339 {dimension_numbers = #tpu.dot_dimension_numbers<[1], [0], [0], [1], [0, 0, 1, 1], [], []>} : vector<16x32xbf16>, vector<32x512xbf16>, vector<16x512xf32> -> vector<16x512xf32>
    %505 = arith.addf %495, %504 : vector<16x512xf32>
    %c2_i32_340 = arith.constant 2 : i32
    %506 = tpu.dynamic_rotate %424 by %c2_i32_340 dim 1 : vector<32x512xf32>, i32 -> vector<32x512xf32>
    %c8_341 = arith.constant 8 : index
    %c0_342 = arith.constant 0 : index
    %c0_343 = arith.constant 0 : index
    %507 = vector.load %arg3[%c8_341, %c0_342, %c0_343] : memref<16x1x512xf32, #tpu.memory_space<vmem>>, vector<1x1x512xf32>
    %508 = vector.shape_cast %507 : vector<1x1x512xf32> to vector<1x512xf32>
    %509 = vector.broadcast %508 : vector<1x512xf32> to vector<32x512xf32>
    %510 = arith.mulf %506, %509 : vector<32x512xf32>
    %511 = arith.truncf %510 : vector<32x512xf32> to vector<32x512xbf16>
    %c8_344 = arith.constant 8 : index
    %c0_345 = arith.constant 0 : index
    %c0_346 = arith.constant 0 : index
    %512 = vector.load %arg18[%c8_344, %c0_345, %c0_346] : memref<16x16x32xbf16, #tpu.memory_space<vmem>>, vector<1x16x32xbf16>
    %513 = vector.shape_cast %512 : vector<1x16x32xbf16> to vector<16x32xbf16>
    %cst_347 = arith.constant dense<0.000000e+00> : vector<16x512xf32>
    %514 = tpu.matmul %513, %511, %cst_347 {dimension_numbers = #tpu.dot_dimension_numbers<[1], [0], [0], [1], [0, 0, 1, 1], [], []>} : vector<16x32xbf16>, vector<32x512xbf16>, vector<16x512xf32> -> vector<16x512xf32>
    %515 = arith.addf %505, %514 : vector<16x512xf32>
    %c1_i32_348 = arith.constant 1 : i32
    %516 = tpu.dynamic_rotate %424 by %c1_i32_348 dim 1 : vector<32x512xf32>, i32 -> vector<32x512xf32>
    %c9_349 = arith.constant 9 : index
    %c0_350 = arith.constant 0 : index
    %c0_351 = arith.constant 0 : index
    %517 = vector.load %arg3[%c9_349, %c0_350, %c0_351] : memref<16x1x512xf32, #tpu.memory_space<vmem>>, vector<1x1x512xf32>
    %518 = vector.shape_cast %517 : vector<1x1x512xf32> to vector<1x512xf32>
    %519 = vector.broadcast %518 : vector<1x512xf32> to vector<32x512xf32>
    %520 = arith.mulf %516, %519 : vector<32x512xf32>
    %521 = arith.truncf %520 : vector<32x512xf32> to vector<32x512xbf16>
    %c9_352 = arith.constant 9 : index
    %c0_353 = arith.constant 0 : index
    %c0_354 = arith.constant 0 : index
    %522 = vector.load %arg18[%c9_352, %c0_353, %c0_354] : memref<16x16x32xbf16, #tpu.memory_space<vmem>>, vector<1x16x32xbf16>
    %523 = vector.shape_cast %522 : vector<1x16x32xbf16> to vector<16x32xbf16>
    %cst_355 = arith.constant dense<0.000000e+00> : vector<16x512xf32>
    %524 = tpu.matmul %523, %521, %cst_355 {dimension_numbers = #tpu.dot_dimension_numbers<[1], [0], [0], [1], [0, 0, 1, 1], [], []>} : vector<16x32xbf16>, vector<32x512xbf16>, vector<16x512xf32> -> vector<16x512xf32>
    %525 = arith.addf %515, %524 : vector<16x512xf32>
    %526 = arith.truncf %424 : vector<32x512xf32> to vector<32x512xbf16>
    %c10_356 = arith.constant 10 : index
    %c0_357 = arith.constant 0 : index
    %c0_358 = arith.constant 0 : index
    %527 = vector.load %arg18[%c10_356, %c0_357, %c0_358] : memref<16x16x32xbf16, #tpu.memory_space<vmem>>, vector<1x16x32xbf16>
    %528 = vector.shape_cast %527 : vector<1x16x32xbf16> to vector<16x32xbf16>
    %cst_359 = arith.constant dense<0.000000e+00> : vector<16x512xf32>
    %529 = tpu.matmul %528, %526, %cst_359 {dimension_numbers = #tpu.dot_dimension_numbers<[1], [0], [0], [1], [0, 0, 1, 1], [], []>} : vector<16x32xbf16>, vector<32x512xbf16>, vector<16x512xf32> -> vector<16x512xf32>
    %530 = arith.addf %525, %529 : vector<16x512xf32>
    %c511_i32_360 = arith.constant 511 : i32
    %531 = tpu.dynamic_rotate %424 by %c511_i32_360 dim 1 : vector<32x512xf32>, i32 -> vector<32x512xf32>
    %c11_361 = arith.constant 11 : index
    %c0_362 = arith.constant 0 : index
    %c0_363 = arith.constant 0 : index
    %532 = vector.load %arg3[%c11_361, %c0_362, %c0_363] : memref<16x1x512xf32, #tpu.memory_space<vmem>>, vector<1x1x512xf32>
    %533 = vector.shape_cast %532 : vector<1x1x512xf32> to vector<1x512xf32>
    %534 = vector.broadcast %533 : vector<1x512xf32> to vector<32x512xf32>
    %535 = arith.mulf %531, %534 : vector<32x512xf32>
    %536 = arith.truncf %535 : vector<32x512xf32> to vector<32x512xbf16>
    %c11_364 = arith.constant 11 : index
    %c0_365 = arith.constant 0 : index
    %c0_366 = arith.constant 0 : index
    %537 = vector.load %arg18[%c11_364, %c0_365, %c0_366] : memref<16x16x32xbf16, #tpu.memory_space<vmem>>, vector<1x16x32xbf16>
    %538 = vector.shape_cast %537 : vector<1x16x32xbf16> to vector<16x32xbf16>
    %cst_367 = arith.constant dense<0.000000e+00> : vector<16x512xf32>
    %539 = tpu.matmul %538, %536, %cst_367 {dimension_numbers = #tpu.dot_dimension_numbers<[1], [0], [0], [1], [0, 0, 1, 1], [], []>} : vector<16x32xbf16>, vector<32x512xbf16>, vector<16x512xf32> -> vector<16x512xf32>
    %540 = arith.addf %530, %539 : vector<16x512xf32>
    %c498_i32 = arith.constant 498 : i32
    %541 = tpu.dynamic_rotate %424 by %c498_i32 dim 1 : vector<32x512xf32>, i32 -> vector<32x512xf32>
    %c12_368 = arith.constant 12 : index
    %c0_369 = arith.constant 0 : index
    %c0_370 = arith.constant 0 : index
    %542 = vector.load %arg3[%c12_368, %c0_369, %c0_370] : memref<16x1x512xf32, #tpu.memory_space<vmem>>, vector<1x1x512xf32>
    %543 = vector.shape_cast %542 : vector<1x1x512xf32> to vector<1x512xf32>
    %544 = vector.broadcast %543 : vector<1x512xf32> to vector<32x512xf32>
    %545 = arith.mulf %541, %544 : vector<32x512xf32>
    %546 = arith.truncf %545 : vector<32x512xf32> to vector<32x512xbf16>
    %c12_371 = arith.constant 12 : index
    %c0_372 = arith.constant 0 : index
    %c0_373 = arith.constant 0 : index
    %547 = vector.load %arg18[%c12_371, %c0_372, %c0_373] : memref<16x16x32xbf16, #tpu.memory_space<vmem>>, vector<1x16x32xbf16>
    %548 = vector.shape_cast %547 : vector<1x16x32xbf16> to vector<16x32xbf16>
    %cst_374 = arith.constant dense<0.000000e+00> : vector<16x512xf32>
    %549 = tpu.matmul %548, %546, %cst_374 {dimension_numbers = #tpu.dot_dimension_numbers<[1], [0], [0], [1], [0, 0, 1, 1], [], []>} : vector<16x32xbf16>, vector<32x512xbf16>, vector<16x512xf32> -> vector<16x512xf32>
    %550 = arith.addf %540, %549 : vector<16x512xf32>
    %c497_i32_375 = arith.constant 497 : i32
    %551 = tpu.dynamic_rotate %424 by %c497_i32_375 dim 1 : vector<32x512xf32>, i32 -> vector<32x512xf32>
    %c13_376 = arith.constant 13 : index
    %c0_377 = arith.constant 0 : index
    %c0_378 = arith.constant 0 : index
    %552 = vector.load %arg3[%c13_376, %c0_377, %c0_378] : memref<16x1x512xf32, #tpu.memory_space<vmem>>, vector<1x1x512xf32>
    %553 = vector.shape_cast %552 : vector<1x1x512xf32> to vector<1x512xf32>
    %554 = vector.broadcast %553 : vector<1x512xf32> to vector<32x512xf32>
    %555 = arith.mulf %551, %554 : vector<32x512xf32>
    %556 = arith.truncf %555 : vector<32x512xf32> to vector<32x512xbf16>
    %c13_379 = arith.constant 13 : index
    %c0_380 = arith.constant 0 : index
    %c0_381 = arith.constant 0 : index
    %557 = vector.load %arg18[%c13_379, %c0_380, %c0_381] : memref<16x16x32xbf16, #tpu.memory_space<vmem>>, vector<1x16x32xbf16>
    %558 = vector.shape_cast %557 : vector<1x16x32xbf16> to vector<16x32xbf16>
    %cst_382 = arith.constant dense<0.000000e+00> : vector<16x512xf32>
    %559 = tpu.matmul %558, %556, %cst_382 {dimension_numbers = #tpu.dot_dimension_numbers<[1], [0], [0], [1], [0, 0, 1, 1], [], []>} : vector<16x32xbf16>, vector<32x512xbf16>, vector<16x512xf32> -> vector<16x512xf32>
    %560 = arith.addf %550, %559 : vector<16x512xf32>
    %c496_i32_383 = arith.constant 496 : i32
    %561 = tpu.dynamic_rotate %424 by %c496_i32_383 dim 1 : vector<32x512xf32>, i32 -> vector<32x512xf32>
    %c14_384 = arith.constant 14 : index
    %c0_385 = arith.constant 0 : index
    %c0_386 = arith.constant 0 : index
    %562 = vector.load %arg3[%c14_384, %c0_385, %c0_386] : memref<16x1x512xf32, #tpu.memory_space<vmem>>, vector<1x1x512xf32>
    %563 = vector.shape_cast %562 : vector<1x1x512xf32> to vector<1x512xf32>
    %564 = vector.broadcast %563 : vector<1x512xf32> to vector<32x512xf32>
    %565 = arith.mulf %561, %564 : vector<32x512xf32>
    %566 = arith.truncf %565 : vector<32x512xf32> to vector<32x512xbf16>
    %c14_387 = arith.constant 14 : index
    %c0_388 = arith.constant 0 : index
    %c0_389 = arith.constant 0 : index
    %567 = vector.load %arg18[%c14_387, %c0_388, %c0_389] : memref<16x16x32xbf16, #tpu.memory_space<vmem>>, vector<1x16x32xbf16>
    %568 = vector.shape_cast %567 : vector<1x16x32xbf16> to vector<16x32xbf16>
    %cst_390 = arith.constant dense<0.000000e+00> : vector<16x512xf32>
    %569 = tpu.matmul %568, %566, %cst_390 {dimension_numbers = #tpu.dot_dimension_numbers<[1], [0], [0], [1], [0, 0, 1, 1], [], []>} : vector<16x32xbf16>, vector<32x512xbf16>, vector<16x512xf32> -> vector<16x512xf32>
    %570 = arith.addf %560, %569 : vector<16x512xf32>
    %c495_i32_391 = arith.constant 495 : i32
    %571 = tpu.dynamic_rotate %424 by %c495_i32_391 dim 1 : vector<32x512xf32>, i32 -> vector<32x512xf32>
    %c15_392 = arith.constant 15 : index
    %c0_393 = arith.constant 0 : index
    %c0_394 = arith.constant 0 : index
    %572 = vector.load %arg3[%c15_392, %c0_393, %c0_394] : memref<16x1x512xf32, #tpu.memory_space<vmem>>, vector<1x1x512xf32>
    %573 = vector.shape_cast %572 : vector<1x1x512xf32> to vector<1x512xf32>
    %574 = vector.broadcast %573 : vector<1x512xf32> to vector<32x512xf32>
    %575 = arith.mulf %571, %574 : vector<32x512xf32>
    %576 = arith.truncf %575 : vector<32x512xf32> to vector<32x512xbf16>
    %c15_395 = arith.constant 15 : index
    %c0_396 = arith.constant 0 : index
    %c0_397 = arith.constant 0 : index
    %577 = vector.load %arg18[%c15_395, %c0_396, %c0_397] : memref<16x16x32xbf16, #tpu.memory_space<vmem>>, vector<1x16x32xbf16>
    %578 = vector.shape_cast %577 : vector<1x16x32xbf16> to vector<16x32xbf16>
    %cst_398 = arith.constant dense<0.000000e+00> : vector<16x512xf32>
    %579 = tpu.matmul %578, %576, %cst_398 {dimension_numbers = #tpu.dot_dimension_numbers<[1], [0], [0], [1], [0, 0, 1, 1], [], []>} : vector<16x32xbf16>, vector<32x512xbf16>, vector<16x512xf32> -> vector<16x512xf32>
    %580 = arith.addf %570, %579 : vector<16x512xf32>
    %cst_399 = arith.constant dense<0.000000e+00> : vector<16xf32>
    %581 = vector.multi_reduction <add>, %580, %cst_399 [1] : vector<16x512xf32> to vector<16xf32>
    %582 = vector.shape_cast %581 : vector<16xf32> to vector<16x1xf32>
    %583 = arith.mulf %580, %580 : vector<16x512xf32>
    %cst_400 = arith.constant dense<0.000000e+00> : vector<16xf32>
    %584 = vector.multi_reduction <add>, %583, %cst_400 [1] : vector<16x512xf32> to vector<16xf32>
    %585 = vector.shape_cast %584 : vector<16xf32> to vector<16x1xf32>
    %cst_401 = arith.constant 0.001953125 : f32
    %586 = vector.broadcast %cst_401 : f32 to vector<16x1xf32>
    %587 = arith.mulf %582, %586 : vector<16x1xf32>
    %cst_402 = arith.constant 0.001953125 : f32
    %588 = vector.broadcast %cst_402 : f32 to vector<16x1xf32>
    %589 = arith.mulf %585, %588 : vector<16x1xf32>
    %590 = arith.mulf %587, %587 : vector<16x1xf32>
    %591 = arith.subf %589, %590 : vector<16x1xf32>
    %cst_403 = arith.constant 0.000000e+00 : f32
    %592 = vector.broadcast %cst_403 : f32 to vector<16x1xf32>
    %593 = arith.maximumf %591, %592 : vector<16x1xf32>
    %c0_404 = arith.constant 0 : index
    %c0_405 = arith.constant 0 : index
    %594 = vector.load %arg19[%c0_404, %c0_405] : memref<16x1xf32, #tpu.memory_space<vmem>>, vector<16x1xf32>
    %cst_406 = arith.constant 9.99999974E-6 : f32
    %595 = vector.broadcast %cst_406 : f32 to vector<16x1xf32>
    %596 = arith.addf %593, %595 : vector<16x1xf32>
    %597 = math.rsqrt %596 : vector<16x1xf32>
    %598 = arith.mulf %594, %597 : vector<16x1xf32>
    %c0_407 = arith.constant 0 : index
    %c0_408 = arith.constant 0 : index
    %599 = vector.load %arg20[%c0_407, %c0_408] : memref<16x1xf32, #tpu.memory_space<vmem>>, vector<16x1xf32>
    %600 = arith.mulf %587, %598 : vector<16x1xf32>
    %601 = arith.subf %599, %600 : vector<16x1xf32>
    %602 = vector.broadcast %598 : vector<16x1xf32> to vector<16x512xf32>
    %603 = arith.mulf %580, %602 : vector<16x512xf32>
    %604 = vector.broadcast %601 : vector<16x1xf32> to vector<16x512xf32>
    %605 = arith.addf %603, %604 : vector<16x512xf32>
    %cst_409 = arith.constant 0.000000e+00 : f32
    %606 = vector.broadcast %cst_409 : f32 to vector<16x512xf32>
    %607 = arith.maximumf %605, %606 : vector<16x512xf32>
    %cst_410 = arith.constant 0.000000e+00 : f32
    %608 = vector.broadcast %cst_410 : f32 to vector<3x512xf32>
    %c17_i32_411 = arith.constant 17 : i32
    %609 = tpu.dynamic_rotate %607 by %c17_i32_411 dim 1 : vector<16x512xf32>, i32 -> vector<16x512xf32>
    %c0_412 = arith.constant 0 : index
    %c0_413 = arith.constant 0 : index
    %c0_414 = arith.constant 0 : index
    %610 = vector.load %arg1[%c0_412, %c0_413, %c0_414] : memref<9x1x512xf32, #tpu.memory_space<vmem>>, vector<1x1x512xf32>
    %611 = vector.shape_cast %610 : vector<1x1x512xf32> to vector<1x512xf32>
    %612 = vector.broadcast %611 : vector<1x512xf32> to vector<16x512xf32>
    %613 = arith.mulf %609, %612 : vector<16x512xf32>
    %614 = arith.truncf %613 : vector<16x512xf32> to vector<16x512xbf16>
    %c0_415 = arith.constant 0 : index
    %c0_416 = arith.constant 0 : index
    %c0_417 = arith.constant 0 : index
    %615 = vector.load %arg21[%c0_415, %c0_416, %c0_417] : memref<9x3x16xbf16, #tpu.memory_space<vmem>>, vector<1x3x16xbf16>
    %616 = vector.shape_cast %615 : vector<1x3x16xbf16> to vector<3x16xbf16>
    %cst_418 = arith.constant dense<0.000000e+00> : vector<3x512xf32>
    %617 = tpu.matmul %616, %614, %cst_418 {dimension_numbers = #tpu.dot_dimension_numbers<[1], [0], [0], [1], [0, 0, 1, 1], [], []>} : vector<3x16xbf16>, vector<16x512xbf16>, vector<3x512xf32> -> vector<3x512xf32>
    %618 = arith.addf %608, %617 : vector<3x512xf32>
    %c16_i32_419 = arith.constant 16 : i32
    %619 = tpu.dynamic_rotate %607 by %c16_i32_419 dim 1 : vector<16x512xf32>, i32 -> vector<16x512xf32>
    %c1_420 = arith.constant 1 : index
    %c0_421 = arith.constant 0 : index
    %c0_422 = arith.constant 0 : index
    %620 = vector.load %arg1[%c1_420, %c0_421, %c0_422] : memref<9x1x512xf32, #tpu.memory_space<vmem>>, vector<1x1x512xf32>
    %621 = vector.shape_cast %620 : vector<1x1x512xf32> to vector<1x512xf32>
    %622 = vector.broadcast %621 : vector<1x512xf32> to vector<16x512xf32>
    %623 = arith.mulf %619, %622 : vector<16x512xf32>
    %624 = arith.truncf %623 : vector<16x512xf32> to vector<16x512xbf16>
    %c1_423 = arith.constant 1 : index
    %c0_424 = arith.constant 0 : index
    %c0_425 = arith.constant 0 : index
    %625 = vector.load %arg21[%c1_423, %c0_424, %c0_425] : memref<9x3x16xbf16, #tpu.memory_space<vmem>>, vector<1x3x16xbf16>
    %626 = vector.shape_cast %625 : vector<1x3x16xbf16> to vector<3x16xbf16>
    %cst_426 = arith.constant dense<0.000000e+00> : vector<3x512xf32>
    %627 = tpu.matmul %626, %624, %cst_426 {dimension_numbers = #tpu.dot_dimension_numbers<[1], [0], [0], [1], [0, 0, 1, 1], [], []>} : vector<3x16xbf16>, vector<16x512xbf16>, vector<3x512xf32> -> vector<3x512xf32>
    %628 = arith.addf %618, %627 : vector<3x512xf32>
    %c15_i32_427 = arith.constant 15 : i32
    %629 = tpu.dynamic_rotate %607 by %c15_i32_427 dim 1 : vector<16x512xf32>, i32 -> vector<16x512xf32>
    %c2_428 = arith.constant 2 : index
    %c0_429 = arith.constant 0 : index
    %c0_430 = arith.constant 0 : index
    %630 = vector.load %arg1[%c2_428, %c0_429, %c0_430] : memref<9x1x512xf32, #tpu.memory_space<vmem>>, vector<1x1x512xf32>
    %631 = vector.shape_cast %630 : vector<1x1x512xf32> to vector<1x512xf32>
    %632 = vector.broadcast %631 : vector<1x512xf32> to vector<16x512xf32>
    %633 = arith.mulf %629, %632 : vector<16x512xf32>
    %634 = arith.truncf %633 : vector<16x512xf32> to vector<16x512xbf16>
    %c2_431 = arith.constant 2 : index
    %c0_432 = arith.constant 0 : index
    %c0_433 = arith.constant 0 : index
    %635 = vector.load %arg21[%c2_431, %c0_432, %c0_433] : memref<9x3x16xbf16, #tpu.memory_space<vmem>>, vector<1x3x16xbf16>
    %636 = vector.shape_cast %635 : vector<1x3x16xbf16> to vector<3x16xbf16>
    %cst_434 = arith.constant dense<0.000000e+00> : vector<3x512xf32>
    %637 = tpu.matmul %636, %634, %cst_434 {dimension_numbers = #tpu.dot_dimension_numbers<[1], [0], [0], [1], [0, 0, 1, 1], [], []>} : vector<3x16xbf16>, vector<16x512xbf16>, vector<3x512xf32> -> vector<3x512xf32>
    %638 = arith.addf %628, %637 : vector<3x512xf32>
    %c1_i32_435 = arith.constant 1 : i32
    %639 = tpu.dynamic_rotate %607 by %c1_i32_435 dim 1 : vector<16x512xf32>, i32 -> vector<16x512xf32>
    %c3_436 = arith.constant 3 : index
    %c0_437 = arith.constant 0 : index
    %c0_438 = arith.constant 0 : index
    %640 = vector.load %arg1[%c3_436, %c0_437, %c0_438] : memref<9x1x512xf32, #tpu.memory_space<vmem>>, vector<1x1x512xf32>
    %641 = vector.shape_cast %640 : vector<1x1x512xf32> to vector<1x512xf32>
    %642 = vector.broadcast %641 : vector<1x512xf32> to vector<16x512xf32>
    %643 = arith.mulf %639, %642 : vector<16x512xf32>
    %644 = arith.truncf %643 : vector<16x512xf32> to vector<16x512xbf16>
    %c3_439 = arith.constant 3 : index
    %c0_440 = arith.constant 0 : index
    %c0_441 = arith.constant 0 : index
    %645 = vector.load %arg21[%c3_439, %c0_440, %c0_441] : memref<9x3x16xbf16, #tpu.memory_space<vmem>>, vector<1x3x16xbf16>
    %646 = vector.shape_cast %645 : vector<1x3x16xbf16> to vector<3x16xbf16>
    %cst_442 = arith.constant dense<0.000000e+00> : vector<3x512xf32>
    %647 = tpu.matmul %646, %644, %cst_442 {dimension_numbers = #tpu.dot_dimension_numbers<[1], [0], [0], [1], [0, 0, 1, 1], [], []>} : vector<3x16xbf16>, vector<16x512xbf16>, vector<3x512xf32> -> vector<3x512xf32>
    %648 = arith.addf %638, %647 : vector<3x512xf32>
    %649 = arith.truncf %607 : vector<16x512xf32> to vector<16x512xbf16>
    %c4_443 = arith.constant 4 : index
    %c0_444 = arith.constant 0 : index
    %c0_445 = arith.constant 0 : index
    %650 = vector.load %arg21[%c4_443, %c0_444, %c0_445] : memref<9x3x16xbf16, #tpu.memory_space<vmem>>, vector<1x3x16xbf16>
    %651 = vector.shape_cast %650 : vector<1x3x16xbf16> to vector<3x16xbf16>
    %cst_446 = arith.constant dense<0.000000e+00> : vector<3x512xf32>
    %652 = tpu.matmul %651, %649, %cst_446 {dimension_numbers = #tpu.dot_dimension_numbers<[1], [0], [0], [1], [0, 0, 1, 1], [], []>} : vector<3x16xbf16>, vector<16x512xbf16>, vector<3x512xf32> -> vector<3x512xf32>
    %653 = arith.addf %648, %652 : vector<3x512xf32>
    %c511_i32_447 = arith.constant 511 : i32
    %654 = tpu.dynamic_rotate %607 by %c511_i32_447 dim 1 : vector<16x512xf32>, i32 -> vector<16x512xf32>
    %c5_448 = arith.constant 5 : index
    %c0_449 = arith.constant 0 : index
    %c0_450 = arith.constant 0 : index
    %655 = vector.load %arg1[%c5_448, %c0_449, %c0_450] : memref<9x1x512xf32, #tpu.memory_space<vmem>>, vector<1x1x512xf32>
    %656 = vector.shape_cast %655 : vector<1x1x512xf32> to vector<1x512xf32>
    %657 = vector.broadcast %656 : vector<1x512xf32> to vector<16x512xf32>
    %658 = arith.mulf %654, %657 : vector<16x512xf32>
    %659 = arith.truncf %658 : vector<16x512xf32> to vector<16x512xbf16>
    %c5_451 = arith.constant 5 : index
    %c0_452 = arith.constant 0 : index
    %c0_453 = arith.constant 0 : index
    %660 = vector.load %arg21[%c5_451, %c0_452, %c0_453] : memref<9x3x16xbf16, #tpu.memory_space<vmem>>, vector<1x3x16xbf16>
    %661 = vector.shape_cast %660 : vector<1x3x16xbf16> to vector<3x16xbf16>
    %cst_454 = arith.constant dense<0.000000e+00> : vector<3x512xf32>
    %662 = tpu.matmul %661, %659, %cst_454 {dimension_numbers = #tpu.dot_dimension_numbers<[1], [0], [0], [1], [0, 0, 1, 1], [], []>} : vector<3x16xbf16>, vector<16x512xbf16>, vector<3x512xf32> -> vector<3x512xf32>
    %663 = arith.addf %653, %662 : vector<3x512xf32>
    %c497_i32_455 = arith.constant 497 : i32
    %664 = tpu.dynamic_rotate %607 by %c497_i32_455 dim 1 : vector<16x512xf32>, i32 -> vector<16x512xf32>
    %c6_456 = arith.constant 6 : index
    %c0_457 = arith.constant 0 : index
    %c0_458 = arith.constant 0 : index
    %665 = vector.load %arg1[%c6_456, %c0_457, %c0_458] : memref<9x1x512xf32, #tpu.memory_space<vmem>>, vector<1x1x512xf32>
    %666 = vector.shape_cast %665 : vector<1x1x512xf32> to vector<1x512xf32>
    %667 = vector.broadcast %666 : vector<1x512xf32> to vector<16x512xf32>
    %668 = arith.mulf %664, %667 : vector<16x512xf32>
    %669 = arith.truncf %668 : vector<16x512xf32> to vector<16x512xbf16>
    %c6_459 = arith.constant 6 : index
    %c0_460 = arith.constant 0 : index
    %c0_461 = arith.constant 0 : index
    %670 = vector.load %arg21[%c6_459, %c0_460, %c0_461] : memref<9x3x16xbf16, #tpu.memory_space<vmem>>, vector<1x3x16xbf16>
    %671 = vector.shape_cast %670 : vector<1x3x16xbf16> to vector<3x16xbf16>
    %cst_462 = arith.constant dense<0.000000e+00> : vector<3x512xf32>
    %672 = tpu.matmul %671, %669, %cst_462 {dimension_numbers = #tpu.dot_dimension_numbers<[1], [0], [0], [1], [0, 0, 1, 1], [], []>} : vector<3x16xbf16>, vector<16x512xbf16>, vector<3x512xf32> -> vector<3x512xf32>
    %673 = arith.addf %663, %672 : vector<3x512xf32>
    %c496_i32_463 = arith.constant 496 : i32
    %674 = tpu.dynamic_rotate %607 by %c496_i32_463 dim 1 : vector<16x512xf32>, i32 -> vector<16x512xf32>
    %c7_464 = arith.constant 7 : index
    %c0_465 = arith.constant 0 : index
    %c0_466 = arith.constant 0 : index
    %675 = vector.load %arg1[%c7_464, %c0_465, %c0_466] : memref<9x1x512xf32, #tpu.memory_space<vmem>>, vector<1x1x512xf32>
    %676 = vector.shape_cast %675 : vector<1x1x512xf32> to vector<1x512xf32>
    %677 = vector.broadcast %676 : vector<1x512xf32> to vector<16x512xf32>
    %678 = arith.mulf %674, %677 : vector<16x512xf32>
    %679 = arith.truncf %678 : vector<16x512xf32> to vector<16x512xbf16>
    %c7_467 = arith.constant 7 : index
    %c0_468 = arith.constant 0 : index
    %c0_469 = arith.constant 0 : index
    %680 = vector.load %arg21[%c7_467, %c0_468, %c0_469] : memref<9x3x16xbf16, #tpu.memory_space<vmem>>, vector<1x3x16xbf16>
    %681 = vector.shape_cast %680 : vector<1x3x16xbf16> to vector<3x16xbf16>
    %cst_470 = arith.constant dense<0.000000e+00> : vector<3x512xf32>
    %682 = tpu.matmul %681, %679, %cst_470 {dimension_numbers = #tpu.dot_dimension_numbers<[1], [0], [0], [1], [0, 0, 1, 1], [], []>} : vector<3x16xbf16>, vector<16x512xbf16>, vector<3x512xf32> -> vector<3x512xf32>
    %683 = arith.addf %673, %682 : vector<3x512xf32>
    %c495_i32_471 = arith.constant 495 : i32
    %684 = tpu.dynamic_rotate %607 by %c495_i32_471 dim 1 : vector<16x512xf32>, i32 -> vector<16x512xf32>
    %c8_472 = arith.constant 8 : index
    %c0_473 = arith.constant 0 : index
    %c0_474 = arith.constant 0 : index
    %685 = vector.load %arg1[%c8_472, %c0_473, %c0_474] : memref<9x1x512xf32, #tpu.memory_space<vmem>>, vector<1x1x512xf32>
    %686 = vector.shape_cast %685 : vector<1x1x512xf32> to vector<1x512xf32>
    %687 = vector.broadcast %686 : vector<1x512xf32> to vector<16x512xf32>
    %688 = arith.mulf %684, %687 : vector<16x512xf32>
    %689 = arith.truncf %688 : vector<16x512xf32> to vector<16x512xbf16>
    %c8_475 = arith.constant 8 : index
    %c0_476 = arith.constant 0 : index
    %c0_477 = arith.constant 0 : index
    %690 = vector.load %arg21[%c8_475, %c0_476, %c0_477] : memref<9x3x16xbf16, #tpu.memory_space<vmem>>, vector<1x3x16xbf16>
    %691 = vector.shape_cast %690 : vector<1x3x16xbf16> to vector<3x16xbf16>
    %cst_478 = arith.constant dense<0.000000e+00> : vector<3x512xf32>
    %692 = tpu.matmul %691, %689, %cst_478 {dimension_numbers = #tpu.dot_dimension_numbers<[1], [0], [0], [1], [0, 0, 1, 1], [], []>} : vector<3x16xbf16>, vector<16x512xbf16>, vector<3x512xf32> -> vector<3x512xf32>
    %693 = arith.addf %683, %692 : vector<3x512xf32>
    %c0_479 = arith.constant 0 : index
    %c0_480 = arith.constant 0 : index
    %694 = vector.load %arg22[%c0_479, %c0_480] : memref<3x1xf32, #tpu.memory_space<vmem>>, vector<3x1xf32>
    %695 = vector.broadcast %694 : vector<3x1xf32> to vector<3x512xf32>
    %696 = arith.addf %693, %695 : vector<3x512xf32>
    %697 = math.tanh %696 : vector<3x512xf32>
    %c0_481 = arith.constant 0 : index
    %c0_482 = arith.constant 0 : index
    %698 = vector.load %arg23[%c0_481, %c0_482] : memref<3x512xf32, #tpu.memory_space<vmem>>, vector<3x512xf32>
    tpu.vector_store %arg23[%c0_481, %c0_482], %697 {strides = array<i32>} : memref<3x512xf32, #tpu.memory_space<vmem>>, vector<3x512xf32>,
    return
  }
}

</mosaic_0001>

<llo_original>
// kernel: shading_forward.1
$region0: #{shading_forward.1}
  #allocation0 [shape = 'u32[]', space=smem, size = 0x4, offset = 0x4, fixed_abs, tag = 'smem constant byte address 0x4 - core index']
  #allocation1 [shape = 'u32[72,128]{1,0:T(1,128)}', space=vmem, size = 0x9000, scoped, tag = 'internal scratch']
  #allocation2 [shape = 'f32[32,128]{1,0:T(8,128)}', space=vmem, size = 0x4000, scoped, tag = 'scratch operand']
  %s0 = inlined_call_operand.vmem [shape: f32[4,512], index: 0, kind: input, shape index: {}]
  %s1 = inlined_call_operand.hbm [shape: f32[9,1,512], index: 1, kind: input, shape index: {}]
  %s2 = inlined_call_operand.vmem [shape: f32[9,1,128], index: 2, kind: input, shape index: {}]
  %s3 = inlined_call_operand.vmem [shape: f32[16,1,512], index: 3, kind: input, shape index: {}]
  %s4 = inlined_call_operand.vmem [shape: f32[16,1,128], index: 4, kind: input, shape index: {}]
  %s5 = inlined_call_operand.vmem [shape: bf16[512,128], index: 5, kind: input, shape index: {}]
  %s6 = inlined_call_operand.vmem [shape: bf16[128,32], index: 6, kind: input, shape index: {}]
  %s7 = inlined_call_operand.vmem [shape: bf16[32,128], index: 7, kind: input, shape index: {}]
  %s8 = inlined_call_operand.vmem [shape: bf16[128,512], index: 8, kind: input, shape index: {}]
  %s9 = inlined_call_operand.vmem [shape: bf16[9,16,4], index: 9, kind: input, shape index: {}]
  %s10 = inlined_call_operand.vmem [shape: f32[16,1], index: 10, kind: input, shape index: {}]
  %s11 = inlined_call_operand.vmem [shape: f32[16,1], index: 11, kind: input, shape index: {}]
  %s12 = inlined_call_operand.vmem [shape: bf16[9,64,16], index: 12, kind: input, shape index: {}]
  %s13 = inlined_call_operand.vmem [shape: f32[64,1], index: 13, kind: input, shape index: {}]
  %s14 = inlined_call_operand.vmem [shape: f32[64,1], index: 14, kind: input, shape index: {}]
  %s15 = inlined_call_operand.vmem [shape: bf16[16,16,64], index: 15, kind: input, shape index: {}]
  %s16 = inlined_call_operand.vmem [shape: f32[16,1], index: 16, kind: input, shape index: {}]
  %s17 = inlined_call_operand.vmem [shape: f32[16,1], index: 17, kind: input, shape index: {}]
  %s18 = inlined_call_operand.vmem [shape: bf16[16,16,32], index: 18, kind: input, shape index: {}]
  %s19 = inlined_call_operand.vmem [shape: f32[16,1], index: 19, kind: input, shape index: {}]
  %s20 = inlined_call_operand.vmem [shape: f32[16,1], index: 20, kind: input, shape index: {}]
  %s21 = inlined_call_operand.vmem [shape: bf16[9,3,16], index: 21, kind: input, shape index: {}]
  %s22 = inlined_call_operand.vmem [shape: f32[3,1], index: 22, kind: input, shape index: {}]
  %s23 = inlined_call_operand.vmem [shape: f32[3,512], index: 23, kind: output, shape index: {}]
  %s24 = sld [smem:[#allocation0]]
  $region106: #{shading_forward.1} parent=0
    _
  %s26 = ssub.s32 1, %s24
  %s27 = scalar_select 0, %s26, %s24
  $region1: #{shading_forward.1} parent=0
    #allocation3 [shape = 'u8[18432]{0}', space=vmem, size = 0x4800, scoped, tag = 'input window, operand 1, single buffered']
    #allocation4 [shape = 's32[1]{0}', space=sflag, size = 0x4, scoped, tag = 'scoped memory for shading_forward.1']
    %28 = vsyncpa [#allocation4], 0
    // Predicated region
    $region2: #{shading_forward.1} parent=1 // pred_check
      _
    $region3: #{shading_forward.1} parent=1 // pred_check_branch
      %30 = sbr.rel (0) target = $region5
    $region4: #{shading_forward.1} parent=1 // pred_region
      _
    $region5: #{shading_forward.1} parent=1 // pred_fallthru
      _
    // Predicated region
    $region6: #{shading_forward.1} parent=1 // pred_check
      _
    $region7: #{shading_forward.1} parent=1 // pred_check_branch
      %32 = sbr.rel (0) target = $region9
    $region8: #{shading_forward.1} parent=1 // pred_region
      %34 = vsyncadd [#allocation4], 0
      %s35 = sshll.u32 %s1, 4
      %s36 = int_to_ptr.hbm [resolvable:$true] %s35
      %s37 = sshll.u32 [#allocation3], 4
      %s38 = int_to_ptr.vmem [resolvable:$true] %s37
      %43 = dma.hbm_to_vmem [thread:$0]  %s36, 576, %s38, [#allocation4], 64, 64, 4
    $region9: #{shading_forward.1} parent=1 // pred_fallthru
      _
    // Predicated region
    $region10: #{shading_forward.1} parent=1 // pred_check
      _
    $region11: #{shading_forward.1} parent=1 // pred_check_branch
      %45 = sbr.rel (0) target = $region13
    $region12: #{shading_forward.1} parent=1 // pred_region
      _
    $region13: #{shading_forward.1} parent=1 // pred_fallthru
      _
    // Predicated region
    $region14: #{shading_forward.1} parent=1 // pred_check
      _
    $region15: #{shading_forward.1} parent=1 // pred_check_branch
      %47 = sbr.rel (0) target = $region17
    $region16: #{shading_forward.1} parent=1 // pred_region
      _
    $region17: #{shading_forward.1} parent=1 // pred_fallthru
      _
    // Predicated region
    $region18: #{shading_forward.1} parent=1 // pred_check
      _
    $region19: #{shading_forward.1} parent=1 // pred_check_branch
      %49 = sbr.rel (0) target = $region21
    $region20: #{shading_forward.1} parent=1 // pred_region
      _
    $region21: #{shading_forward.1} parent=1 // pred_fallthru
      _
    // Predicated region
    $region22: #{shading_forward.1} parent=1 // pred_check
      _
    $region23: #{shading_forward.1} parent=1 // pred_check_branch
      %51 = sbr.rel (0) target = $region25
    $region24: #{shading_forward.1} parent=1 // pred_region
      _
    $region25: #{shading_forward.1} parent=1 // pred_fallthru
      _
    // Predicated region
    $region26: #{shading_forward.1} parent=1 // pred_check
      _
    $region27: #{shading_forward.1} parent=1 // pred_check_branch
      %53 = sbr.rel (0) target = $region29
    $region28: #{shading_forward.1} parent=1 // pred_region
      _
    $region29: #{shading_forward.1} parent=1 // pred_fallthru
      _
    // Predicated region
    $region30: #{shading_forward.1} parent=1 // pred_check
      _
    $region31: #{shading_forward.1} parent=1 // pred_check_branch
      %55 = sbr.rel (0) target = $region33
    $region32: #{shading_forward.1} parent=1 // pred_region
      _
    $region33: #{shading_forward.1} parent=1 // pred_fallthru
      _
    // Predicated region
    $region34: #{shading_forward.1} parent=1 // pred_check
      _
    $region35: #{shading_forward.1} parent=1 // pred_check_branch
      %57 = sbr.rel (0) target = $region37
    $region36: #{shading_forward.1} parent=1 // pred_region
      _
    $region37: #{shading_forward.1} parent=1 // pred_fallthru
      _
    // Predicated region
    $region38: #{shading_forward.1} parent=1 // pred_check
      _
    $region39: #{shading_forward.1} parent=1 // pred_check_branch
      %59 = sbr.rel (0) target = $region41
    $region40: #{shading_forward.1} parent=1 // pred_region
      _
    $region41: #{shading_forward.1} parent=1 // pred_fallthru
      _
    // Predicated region
    $region42: #{shading_forward.1} parent=1 // pred_check
      _
    $region43: #{shading_forward.1} parent=1 // pred_check_branch
      %61 = sbr.rel (0) target = $region45
    $region44: #{shading_forward.1} parent=1 // pred_region
      _
    $region45: #{shading_forward.1} parent=1 // pred_fallthru
      _
    // Predicated region
    $region46: #{shading_forward.1} parent=1 // pred_check
      _
    $region47: #{shading_forward.1} parent=1 // pred_check_branch
      %63 = sbr.rel (0) target = $region49
    $region48: #{shading_forward.1} parent=1 // pred_region
      _
    $region49: #{shading_forward.1} parent=1 // pred_fallthru
      _
    // Predicated region
    $region50: #{shading_forward.1} parent=1 // pred_check
      _
    $region51: #{shading_forward.1} parent=1 // pred_check_branch
      %65 = sbr.rel (0) target = $region53
    $region52: #{shading_forward.1} parent=1 // pred_region
      _
    $region53: #{shading_forward.1} parent=1 // pred_fallthru
      _
    // Predicated region
    $region54: #{shading_forward.1} parent=1 // pred_check
      _
    $region55: #{shading_forward.1} parent=1 // pred_check_branch
      %67 = sbr.rel (0) target = $region57
    $region56: #{shading_forward.1} parent=1 // pred_region
      _
    $region57: #{shading_forward.1} parent=1 // pred_fallthru
      _
    // Predicated region
    $region58: #{shading_forward.1} parent=1 // pred_check
      _
    $region59: #{shading_forward.1} parent=1 // pred_check_branch
      %69 = sbr.rel (0) target = $region61
    $region60: #{shading_forward.1} parent=1 // pred_region
      _
    $region61: #{shading_forward.1} parent=1 // pred_fallthru
      _
    // Predicated region
    $region62: #{shading_forward.1} parent=1 // pred_check
      _
    $region63: #{shading_forward.1} parent=1 // pred_check_branch
      %71 = sbr.rel (0) target = $region65
    $region64: #{shading_forward.1} parent=1 // pred_region
      _
    $region65: #{shading_forward.1} parent=1 // pred_fallthru
      _
    // Predicated region
    $region66: #{shading_forward.1} parent=1 // pred_check
      _
    $region67: #{shading_forward.1} parent=1 // pred_check_branch
      %73 = sbr.rel (0) target = $region69
    $region68: #{shading_forward.1} parent=1 // pred_region
      _
    $region69: #{shading_forward.1} parent=1 // pred_fallthru
      _
    // Predicated region
    $region70: #{shading_forward.1} parent=1 // pred_check
      _
    $region71: #{shading_forward.1} parent=1 // pred_check_branch
      %75 = sbr.rel (0) target = $region73
    $region72: #{shading_forward.1} parent=1 // pred_region
      _
    $region73: #{shading_forward.1} parent=1 // pred_fallthru
      _
    // Predicated region
    $region74: #{shading_forward.1} parent=1 // pred_check
      _
    $region75: #{shading_forward.1} parent=1 // pred_check_branch
      %77 = sbr.rel (0) target = $region77
    $region76: #{shading_forward.1} parent=1 // pred_region
      _
    $region77: #{shading_forward.1} parent=1 // pred_fallthru
      _
    // Predicated region
    $region78: #{shading_forward.1} parent=1 // pred_check
      _
    $region79: #{shading_forward.1} parent=1 // pred_check_branch
      %79 = sbr.rel (0) target = $region81
    $region80: #{shading_forward.1} parent=1 // pred_region
      _
    $region81: #{shading_forward.1} parent=1 // pred_fallthru
      _
    // Predicated region
    $region82: #{shading_forward.1} parent=1 // pred_check
      _
    $region83: #{shading_forward.1} parent=1 // pred_check_branch
      %81 = sbr.rel (0) target = $region85
    $region84: #{shading_forward.1} parent=1 // pred_region
      _
    $region85: #{shading_forward.1} parent=1 // pred_fallthru
      _
    // Predicated region
    $region86: #{shading_forward.1} parent=1 // pred_check
      _
    $region87: #{shading_forward.1} parent=1 // pred_check_branch
      %83 = sbr.rel (0) target = $region89
    $region88: #{shading_forward.1} parent=1 // pred_region
      _
    $region89: #{shading_forward.1} parent=1 // pred_fallthru
      _
    // Predicated region
    $region90: #{shading_forward.1} parent=1 // pred_check
      _
    $region91: #{shading_forward.1} parent=1 // pred_check_branch
      %85 = sbr.rel (0) target = $region93
    $region92: #{shading_forward.1} parent=1 // pred_region
      _
    $region93: #{shading_forward.1} parent=1 // pred_fallthru
      _
    // Predicated region
    $region94: #{shading_forward.1} parent=1 // pred_check
      _
    $region95: #{shading_forward.1} parent=1 // pred_check_branch
      %87 = sbr.rel (0) target = $region97
    $region96: #{shading_forward.1} parent=1 // pred_region
      %89 = dma.done [#allocation4], 576
    $region97: #{shading_forward.1} parent=1 // pred_fallthru
      _
    %v91 = vld [vmem:[%s0] sm:$0xff]
    %v92 = vld [vmem:[%s0 + $0x8] sm:$0xff]
    %95 = vst [vmem:[#allocation1] ss:$2 sm:$0xff] %v91
    %s96 = scalar_lea.vmem [#allocation1], 16
    %97 = vst [vmem:[%s96] ss:$2 sm:$0xff] %v92
    %v98 = vld.sshfl [vmem:[#allocation1] sm:$0xff pattern:$0x75316420]
    %v99 = vld.sshfl [vmem:[#allocation1 + $0x8] sm:$0xff pattern:$0x75316420]
    %v100 = vld.sshfl [vmem:[#allocation1 + $0x10] sm:$0xff pattern:$0x75316420]
    %v101 = vld.sshfl [vmem:[#allocation1 + $0x18] sm:$0xff pattern:$0x75316420]
    %106 = vrot.lane.b32.xlu0 %v98, 17
    %v107 = vpop.permute.xlu0 %106
    %108 = vrot.lane.b32.xlu0 %v99, 17
    %v109 = vpop.permute.xlu0 %108
    %110 = vrot.lane.b32.xlu0 %v100, 17
    %v111 = vpop.permute.xlu0 %110
    %112 = vrot.lane.b32.xlu0 %v101, 17
    %v113 = vpop.permute.xlu0 %112
    %v114 = vlaneseq
    %v115 = vand.u32 %v114, 127
    %vm116 = vcmp.lt.s32.totalorder %v115, 17
    %v117 = vsel %vm116, %v111, %v113
    %v118 = vsel %vm116, %v109, %v111
    %v119 = vsel %vm116, %v107, %v109
    %v120 = vsel %vm116, %v113, %v107
    %v121 = vld [vmem:[#allocation3] sm:$0xf]
    %v123 = vperm.slane %v121, 0
    %v124 = vperm.slane %v121, 1
    %v125 = vperm.slane %v121, 2
    %v126 = vperm.slane %v121, 3
    %v131 = vmul.f32 %v120, %v123
    %v132 = vmul.f32 %v119, %v124
    %v133 = vmul.f32 %v118, %v125
    %v134 = vmul.f32 %v117, %v126
    %v135 = vpack.c.bf16 %v131, %v131
    %v136 = vpack.c.bf16 %v132, %v132
    %v137 = vpack.c.bf16 %v133, %v133
    %v138 = vpack.c.bf16 %v134, %v134
    %v139 = vld [vmem:[%s9] sm:$0xf]
    %v140 = vld [vmem:[%s9 + $0x4] sm:$0xf]
    %141 = vst [vmem:[#allocation1] ss:$2 sm:$0xff] %v91
    %s142 = scalar_lea.vmem [#allocation1], 16
    %143 = vst [vmem:[%s142] ss:$2 sm:$0xff] %v92
    %v144 = vld.sshfl [vmem:[#allocation1] sm:$0xff pattern:$0x75316420]
    %v145 = vld.sshfl [vmem:[#allocation1 + $0x8] sm:$0xff pattern:$0x75316420]
    %v146 = vld.sshfl [vmem:[#allocation1 + $0x10] sm:$0xff pattern:$0x75316420]
    %v147 = vld.sshfl [vmem:[#allocation1 + $0x18] sm:$0xff pattern:$0x75316420]
    %152 = vrot.lane.b32.xlu0 %v144, 16
    %v153 = vpop.permute.xlu0 %152
    %154 = vrot.lane.b32.xlu0 %v145, 16
    %v155 = vpop.permute.xlu0 %154
    %156 = vrot.lane.b32.xlu0 %v146, 16
    %v157 = vpop.permute.xlu0 %156
    %158 = vrot.lane.b32.xlu0 %v147, 16
    %v159 = vpop.permute.xlu0 %158
    %vm160 = vcmp.lt.s32.totalorder %v115, 16
    %v161 = vsel %vm160, %v157, %v159
    %v162 = vsel %vm160, %v155, %v157
    %v163 = vsel %vm160, %v153, %v155
    %v164 = vsel %vm160, %v159, %v153
    %s165 = scalar_lea.vmem [#allocation3], 4
    %v166 = vld [vmem:[%s165] sm:$0xf]
    %v168 = vperm.slane %v166, 0
    %v169 = vperm.slane %v166, 1
    %v170 = vperm.slane %v166, 2
    %v171 = vperm.slane %v166, 3
    %v176 = vmul.f32 %v164, %v168
    %v177 = vmul.f32 %v163, %v169
    %v178 = vmul.f32 %v162, %v170
    %v179 = vmul.f32 %v161, %v171
    %v180 = vpack.c.bf16 %v176, %v176
    %v181 = vpack.c.bf16 %v177, %v177
    %v182 = vpack.c.bf16 %v178, %v178
    %v183 = vpack.c.bf16 %v179, %v179
    %s184 = scalar_lea.vmem %s9, 8
    %v185 = vld [vmem:[%s184] sm:$0xf]
    %v186 = vld [vmem:[%s184 + $0x4] sm:$0xf]
    %v189 = vunpack.c.l.b16 %v185
    %v190 = vunpack.c.l.b16 %v186
    %v191 = vpack.c.b16 %v190, %v189
    %vm192 = vcmask 31744
    %v194 = vsel %vm192, %v191, 0
    %vm196 = vcmask 1041408
    %v198 = vsel %vm196, %v180, 0
    %v201 = vsel %vm196, %v181, 0
    %v204 = vsel %vm196, %v182, 0
    %v207 = vsel %vm196, %v183, 0
    %209 = vmatpush.bf16.msra.mxu0 0
    %210 = vmatpush.bf16.msra.mxu0 0
    %211 = vmatpush.bf16.msra.mxu0 0
    %212 = vmatpush.bf16.msra.mxu0 0
    %213 = vmatpush.bf16.msra.mxu0 0
    %214 = vmatpush.bf16.msra.mxu0 0
    %215 = vmatpush.bf16.msra.mxu0 0
    %216 = vmatpush.bf16.msra.mxu0 %v198
    %217 = vmatmul.bf16.gmra.mxu0 %v194
    %v218 = vpop.f32.mrf.mxu0
    %v219 = vadd.f32 0.0, %v218
    %v220 = vpop.f32.mrf.mxu0
    %v221 = vadd.f32 0.0, %v220
    %222 = vdwg.mxu0
    %223 = vmatpush.bf16.msra.mxu0 0
    %224 = vmatpush.bf16.msra.mxu0 0
    %225 = vmatpush.bf16.msra.mxu0 0
    %226 = vmatpush.bf16.msra.mxu0 0
    %227 = vmatpush.bf16.msra.mxu0 0
    %228 = vmatpush.bf16.msra.mxu0 0
    %229 = vmatpush.bf16.msra.mxu0 0
    %230 = vmatpush.bf16.msra.mxu0 %v201
    %231 = vmatmul.bf16.gmra.mxu0 %v194
    %v232 = vpop.f32.mrf.mxu0
    %v233 = vadd.f32 0.0, %v232
    %v234 = vpop.f32.mrf.mxu0
    %v235 = vadd.f32 0.0, %v234
    %236 = vdwg.mxu0
    %237 = vmatpush.bf16.msra.mxu0 0
    %238 = vmatpush.bf16.msra.mxu0 0
    %239 = vmatpush.bf16.msra.mxu0 0
    %240 = vmatpush.bf16.msra.mxu0 0
    %241 = vmatpush.bf16.msra.mxu0 0
    %242 = vmatpush.bf16.msra.mxu0 0
    %243 = vmatpush.bf16.msra.mxu0 0
    %244 = vmatpush.bf16.msra.mxu0 %v204
    %245 = vmatmul.bf16.gmra.mxu0 %v194
    %v246 = vpop.f32.mrf.mxu0
    %v247 = vadd.f32 0.0, %v246
    %v248 = vpop.f32.mrf.mxu0
    %v249 = vadd.f32 0.0, %v248
    %250 = vdwg.mxu0
    %251 = vmatpush.bf16.msra.mxu0 0
    %252 = vmatpush.bf16.msra.mxu0 0
    %253 = vmatpush.bf16.msra.mxu0 0
    %254 = vmatpush.bf16.msra.mxu0 0
    %255 = vmatpush.bf16.msra.mxu0 0
    %256 = vmatpush.bf16.msra.mxu0 0
    %257 = vmatpush.bf16.msra.mxu0 0
    %258 = vmatpush.bf16.msra.mxu0 %v207
    %259 = vmatmul.bf16.gmra.mxu0 %v194
    %v260 = vpop.f32.mrf.mxu0
    %v261 = vadd.f32 0.0, %v260
    %v262 = vpop.f32.mrf.mxu0
    %v263 = vadd.f32 0.0, %v262
    %264 = vdwg.mxu0
    %v267 = vunpack.c.l.b16 %v139
    %v268 = vunpack.c.l.b16 %v140
    %v269 = vpack.c.b16 %v268, %v267
    %v271 = vsel %vm192, %v269, 0
    %v274 = vsel %vm196, %v135, 0
    %v277 = vsel %vm196, %v136, 0
    %v280 = vsel %vm196, %v137, 0
    %v283 = vsel %vm196, %v138, 0
    %285 = vmatpush.bf16.msra.mxu0 0
    %286 = vmatpush.bf16.msra.mxu0 0
    %287 = vmatpush.bf16.msra.mxu0 0
    %288 = vmatpush.bf16.msra.mxu0 0
    %289 = vmatpush.bf16.msra.mxu0 0
    %290 = vmatpush.bf16.msra.mxu0 0
    %291 = vmatpush.bf16.msra.mxu0 0
    %292 = vmatpush.bf16.msra.mxu0 %v274
    %293 = vmatmul.bf16.gmra.mxu0 %v271
    %v294 = vpop.f32.mrf.mxu0
    %v295 = vadd.f32 %v219, %v294
    %v296 = vpop.f32.mrf.mxu0
    %v297 = vadd.f32 %v221, %v296
    %298 = vdwg.mxu0
    %299 = vmatpush.bf16.msra.mxu0 0
    %300 = vmatpush.bf16.msra.mxu0 0
    %301 = vmatpush.bf16.msra.mxu0 0
    %302 = vmatpush.bf16.msra.mxu0 0
    %303 = vmatpush.bf16.msra.mxu0 0
    %304 = vmatpush.bf16.msra.mxu0 0
    %305 = vmatpush.bf16.msra.mxu0 0
    %306 = vmatpush.bf16.msra.mxu0 %v277
    %307 = vmatmul.bf16.gmra.mxu0 %v271
    %v308 = vpop.f32.mrf.mxu0
    %v309 = vadd.f32 %v233, %v308
    %v310 = vpop.f32.mrf.mxu0
    %v311 = vadd.f32 %v235, %v310
    %312 = vdwg.mxu0
    %313 = vmatpush.bf16.msra.mxu0 0
    %314 = vmatpush.bf16.msra.mxu0 0
    %315 = vmatpush.bf16.msra.mxu0 0
    %316 = vmatpush.bf16.msra.mxu0 0
    %317 = vmatpush.bf16.msra.mxu0 0
    %318 = vmatpush.bf16.msra.mxu0 0
    %319 = vmatpush.bf16.msra.mxu0 0
    %320 = vmatpush.bf16.msra.mxu0 %v280
    %321 = vmatmul.bf16.gmra.mxu0 %v271
    %v322 = vpop.f32.mrf.mxu0
    %v323 = vadd.f32 %v247, %v322
    %v324 = vpop.f32.mrf.mxu0
    %v325 = vadd.f32 %v249, %v324
    %326 = vdwg.mxu0
    %327 = vmatpush.bf16.msra.mxu0 0
    %328 = vmatpush.bf16.msra.mxu0 0
    %329 = vmatpush.bf16.msra.mxu0 0
    %330 = vmatpush.bf16.msra.mxu0 0
    %331 = vmatpush.bf16.msra.mxu0 0
    %332 = vmatpush.bf16.msra.mxu0 0
    %333 = vmatpush.bf16.msra.mxu0 0
    %334 = vmatpush.bf16.msra.mxu0 %v283
    %335 = vmatmul.bf16.gmra.mxu0 %v271
    %v336 = vpop.f32.mrf.mxu0
    %v337 = vadd.f32 %v261, %v336
    %v338 = vpop.f32.mrf.mxu0
    %v339 = vadd.f32 %v263, %v338
    %340 = vdwg.mxu0
    %341 = vst [vmem:[#allocation1] ss:$2 sm:$0xff] %v91
    %s342 = scalar_lea.vmem [#allocation1], 16
    %343 = vst [vmem:[%s342] ss:$2 sm:$0xff] %v92
    %v344 = vld.sshfl [vmem:[#allocation1] sm:$0xff pattern:$0x75316420]
    %v345 = vld.sshfl [vmem:[#allocation1 + $0x8] sm:$0xff pattern:$0x75316420]
    %v346 = vld.sshfl [vmem:[#allocation1 + $0x10] sm:$0xff pattern:$0x75316420]
    %v347 = vld.sshfl [vmem:[#allocation1 + $0x18] sm:$0xff pattern:$0x75316420]
    %352 = vrot.lane.b32.xlu0 %v344, 15
    %v353 = vpop.permute.xlu0 %352
    %354 = vrot.lane.b32.xlu0 %v345, 15
    %v355 = vpop.permute.xlu0 %354
    %356 = vrot.lane.b32.xlu0 %v346, 15
    %v357 = vpop.permute.xlu0 %356
    %358 = vrot.lane.b32.xlu0 %v347, 15
    %v359 = vpop.permute.xlu0 %358
    %vm360 = vcmp.lt.s32.totalorder %v115, 15
    %v361 = vsel %vm360, %v357, %v359
    %v362 = vsel %vm360, %v355, %v357
    %v363 = vsel %vm360, %v353, %v355
    %v364 = vsel %vm360, %v359, %v353
    %s365 = scalar_lea.vmem [#allocation3], 8
    %v366 = vld [vmem:[%s365] sm:$0xf]
    %v368 = vperm.slane %v366, 0
    %v369 = vperm.slane %v366, 1
    %v370 = vperm.slane %v366, 2
    %v371 = vperm.slane %v366, 3
    %v376 = vmul.f32 %v364, %v368
    %v377 = vmul.f32 %v363, %v369
    %v378 = vmul.f32 %v362, %v370
    %v379 = vmul.f32 %v361, %v371
    %v380 = vpack.c.bf16 %v376, %v376
    %v381 = vpack.c.bf16 %v377, %v377
    %v382 = vpack.c.bf16 %v378, %v378
    %v383 = vpack.c.bf16 %v379, %v379
    %s384 = scalar_lea.vmem %s9, 16
    %v385 = vld [vmem:[%s384] sm:$0xf]
    %v386 = vld [vmem:[%s384 + $0x4] sm:$0xf]
    %v389 = vunpack.c.l.b16 %v385
    %v390 = vunpack.c.l.b16 %v386
    %v391 = vpack.c.b16 %v390, %v389
    %v393 = vsel %vm192, %v391, 0
    %v396 = vsel %vm196, %v380, 0
    %v399 = vsel %vm196, %v381, 0
    %v402 = vsel %vm196, %v382, 0
    %v405 = vsel %vm196, %v383, 0
    %407 = vmatpush.bf16.msra.mxu0 0
    %408 = vmatpush.bf16.msra.mxu0 0
    %409 = vmatpush.bf16.msra.mxu0 0
    %410 = vmatpush.bf16.msra.mxu0 0
    %411 = vmatpush.bf16.msra.mxu0 0
    %412 = vmatpush.bf16.msra.mxu0 0
    %413 = vmatpush.bf16.msra.mxu0 0
    %414 = vmatpush.bf16.msra.mxu0 %v396
    %415 = vmatmul.bf16.gmra.mxu0 %v393
    %v416 = vpop.f32.mrf.mxu0
    %v417 = vadd.f32 0.0, %v416
    %v418 = vpop.f32.mrf.mxu0
    %v419 = vadd.f32 0.0, %v418
    %420 = vdwg.mxu0
    %421 = vmatpush.bf16.msra.mxu0 0
    %422 = vmatpush.bf16.msra.mxu0 0
    %423 = vmatpush.bf16.msra.mxu0 0
    %424 = vmatpush.bf16.msra.mxu0 0
    %425 = vmatpush.bf16.msra.mxu0 0
    %426 = vmatpush.bf16.msra.mxu0 0
    %427 = vmatpush.bf16.msra.mxu0 0
    %428 = vmatpush.bf16.msra.mxu0 %v399
    %429 = vmatmul.bf16.gmra.mxu0 %v393
    %v430 = vpop.f32.mrf.mxu0
    %v431 = vadd.f32 0.0, %v430
    %v432 = vpop.f32.mrf.mxu0
    %v433 = vadd.f32 0.0, %v432
    %434 = vdwg.mxu0
    %435 = vmatpush.bf16.msra.mxu0 0
    %436 = vmatpush.bf16.msra.mxu0 0
    %437 = vmatpush.bf16.msra.mxu0 0
    %438 = vmatpush.bf16.msra.mxu0 0
    %439 = vmatpush.bf16.msra.mxu0 0
    %440 = vmatpush.bf16.msra.mxu0 0
    %441 = vmatpush.bf16.msra.mxu0 0
    %442 = vmatpush.bf16.msra.mxu0 %v402
    %443 = vmatmul.bf16.gmra.mxu0 %v393
    %v444 = vpop.f32.mrf.mxu0
    %v445 = vadd.f32 0.0, %v444
    %v446 = vpop.f32.mrf.mxu0
    %v447 = vadd.f32 0.0, %v446
    %448 = vdwg.mxu0
    %449 = vmatpush.bf16.msra.mxu0 0
    %450 = vmatpush.bf16.msra.mxu0 0
    %451 = vmatpush.bf16.msra.mxu0 0
    %452 = vmatpush.bf16.msra.mxu0 0
    %453 = vmatpush.bf16.msra.mxu0 0
    %454 = vmatpush.bf16.msra.mxu0 0
    %455 = vmatpush.bf16.msra.mxu0 0
    %456 = vmatpush.bf16.msra.mxu0 %v405
    %457 = vmatmul.bf16.gmra.mxu0 %v393
    %v458 = vpop.f32.mrf.mxu0
    %v459 = vadd.f32 0.0, %v458
    %v460 = vpop.f32.mrf.mxu0
    %v461 = vadd.f32 0.0, %v460
    %462 = vdwg.mxu0
    %v463 = vadd.f32 %v295, %v417
    %v464 = vadd.f32 %v309, %v431
    %v465 = vadd.f32 %v323, %v445
    %v466 = vadd.f32 %v337, %v459
    %v467 = vadd.f32 %v297, %v419
    %v468 = vadd.f32 %v311, %v433
    %v469 = vadd.f32 %v325, %v447
    %v470 = vadd.f32 %v339, %v461
    %471 = vst [vmem:[#allocation1] ss:$2 sm:$0xff] %v91
    %s472 = scalar_lea.vmem [#allocation1], 16
    %473 = vst [vmem:[%s472] ss:$2 sm:$0xff] %v92
    %v474 = vld.sshfl [vmem:[#allocation1] sm:$0xff pattern:$0x75316420]
    %v475 = vld.sshfl [vmem:[#allocation1 + $0x8] sm:$0xff pattern:$0x75316420]
    %v476 = vld.sshfl [vmem:[#allocation1 + $0x10] sm:$0xff pattern:$0x75316420]
    %v477 = vld.sshfl [vmem:[#allocation1 + $0x18] sm:$0xff pattern:$0x75316420]
    %482 = vrot.lane.b32.xlu0 %v474, 1
    %v483 = vpop.permute.xlu0 %482
    %484 = vrot.lane.b32.xlu0 %v475, 1
    %v485 = vpop.permute.xlu0 %484
    %486 = vrot.lane.b32.xlu0 %v476, 1
    %v487 = vpop.permute.xlu0 %486
    %488 = vrot.lane.b32.xlu0 %v477, 1
    %v489 = vpop.permute.xlu0 %488
    %vm490 = vcmp.lt.s32.totalorder %v115, 1
    %v491 = vsel %vm490, %v487, %v489
    %v492 = vsel %vm490, %v485, %v487
    %v493 = vsel %vm490, %v483, %v485
    %v494 = vsel %vm490, %v489, %v483
    %s495 = scalar_lea.vmem [#allocation3], 12
    %v496 = vld [vmem:[%s495] sm:$0xf]
    %v498 = vperm.slane %v496, 0
    %v499 = vperm.slane %v496, 1
    %v500 = vperm.slane %v496, 2
    %v501 = vperm.slane %v496, 3
    %v506 = vmul.f32 %v494, %v498
    %v507 = vmul.f32 %v493, %v499
    %v508 = vmul.f32 %v492, %v500
    %v509 = vmul.f32 %v491, %v501
    %v510 = vpack.c.bf16 %v506, %v506
    %v511 = vpack.c.bf16 %v507, %v507
    %v512 = vpack.c.bf16 %v508, %v508
    %v513 = vpack.c.bf16 %v509, %v509
    %s514 = scalar_lea.vmem %s9, 24
    %v515 = vld [vmem:[%s514] sm:$0xf]
    %v516 = vld [vmem:[%s514 + $0x4] sm:$0xf]
    %v519 = vunpack.c.l.b16 %v515
    %v520 = vunpack.c.l.b16 %v516
    %v521 = vpack.c.b16 %v520, %v519
    %v523 = vsel %vm192, %v521, 0
    %v526 = vsel %vm196, %v510, 0
    %v529 = vsel %vm196, %v511, 0
    %v532 = vsel %vm196, %v512, 0
    %v535 = vsel %vm196, %v513, 0
    %537 = vmatpush.bf16.msra.mxu0 0
    %538 = vmatpush.bf16.msra.mxu0 0
    %539 = vmatpush.bf16.msra.mxu0 0
    %540 = vmatpush.bf16.msra.mxu0 0
    %541 = vmatpush.bf16.msra.mxu0 0
    %542 = vmatpush.bf16.msra.mxu0 0
    %543 = vmatpush.bf16.msra.mxu0 0
    %544 = vmatpush.bf16.msra.mxu0 %v526
    %545 = vmatmul.bf16.gmra.mxu0 %v523
    %v546 = vpop.f32.mrf.mxu0
    %v547 = vadd.f32 0.0, %v546
    %v548 = vpop.f32.mrf.mxu0
    %v549 = vadd.f32 0.0, %v548
    %550 = vdwg.mxu0
    %551 = vmatpush.bf16.msra.mxu0 0
    %552 = vmatpush.bf16.msra.mxu0 0
    %553 = vmatpush.bf16.msra.mxu0 0
    %554 = vmatpush.bf16.msra.mxu0 0
    %555 = vmatpush.bf16.msra.mxu0 0
    %556 = vmatpush.bf16.msra.mxu0 0
    %557 = vmatpush.bf16.msra.mxu0 0
    %558 = vmatpush.bf16.msra.mxu0 %v529
    %559 = vmatmul.bf16.gmra.mxu0 %v523
    %v560 = vpop.f32.mrf.mxu0
    %v561 = vadd.f32 0.0, %v560
    %v562 = vpop.f32.mrf.mxu0
    %v563 = vadd.f32 0.0, %v562
    %564 = vdwg.mxu0
    %565 = vmatpush.bf16.msra.mxu0 0
    %566 = vmatpush.bf16.msra.mxu0 0
    %567 = vmatpush.bf16.msra.mxu0 0
    %568 = vmatpush.bf16.msra.mxu0 0
    %569 = vmatpush.bf16.msra.mxu0 0
    %570 = vmatpush.bf16.msra.mxu0 0
    %571 = vmatpush.bf16.msra.mxu0 0
    %572 = vmatpush.bf16.msra.mxu0 %v532
    %573 = vmatmul.bf16.gmra.mxu0 %v523
    %v574 = vpop.f32.mrf.mxu0
    %v575 = vadd.f32 0.0, %v574
    %v576 = vpop.f32.mrf.mxu0
    %v577 = vadd.f32 0.0, %v576
    %578 = vdwg.mxu0
    %579 = vmatpush.bf16.msra.mxu0 0
    %580 = vmatpush.bf16.msra.mxu0 0
    %581 = vmatpush.bf16.msra.mxu0 0
    %582 = vmatpush.bf16.msra.mxu0 0
    %583 = vmatpush.bf16.msra.mxu0 0
    %584 = vmatpush.bf16.msra.mxu0 0
    %585 = vmatpush.bf16.msra.mxu0 0
    %586 = vmatpush.bf16.msra.mxu0 %v535
    %587 = vmatmul.bf16.gmra.mxu0 %v523
    %v588 = vpop.f32.mrf.mxu0
    %v589 = vadd.f32 0.0, %v588
    %v590 = vpop.f32.mrf.mxu0
    %v591 = vadd.f32 0.0, %v590
    %592 = vdwg.mxu0
    %v593 = vadd.f32 %v463, %v547
    %v594 = vadd.f32 %v464, %v561
    %v595 = vadd.f32 %v465, %v575
    %v596 = vadd.f32 %v466, %v589
    %v597 = vadd.f32 %v467, %v549
    %v598 = vadd.f32 %v468, %v563
    %v599 = vadd.f32 %v469, %v577
    %v600 = vadd.f32 %v470, %v591
    %601 = vst [vmem:[#allocation1] ss:$2 sm:$0xff] %v91
    %s602 = scalar_lea.vmem [#allocation1], 16
    %603 = vst [vmem:[%s602] ss:$2 sm:$0xff] %v92
    %v604 = vld.sshfl [vmem:[#allocation1] sm:$0xff pattern:$0x75316420]
    %v605 = vld.sshfl [vmem:[#allocation1 + $0x8] sm:$0xff pattern:$0x75316420]
    %v606 = vld.sshfl [vmem:[#allocation1 + $0x10] sm:$0xff pattern:$0x75316420]
    %v607 = vld.sshfl [vmem:[#allocation1 + $0x18] sm:$0xff pattern:$0x75316420]
    %v612 = vpack.c.bf16 %v604, %v604
    %v613 = vpack.c.bf16 %v605, %v605
    %v614 = vpack.c.bf16 %v606, %v606
    %v615 = vpack.c.bf16 %v607, %v607
    %s616 = scalar_lea.vmem %s9, 32
    %v617 = vld [vmem:[%s616] sm:$0xf]
    %v618 = vld [vmem:[%s616 + $0x4] sm:$0xf]
    %v621 = vunpack.c.l.b16 %v617
    %v622 = vunpack.c.l.b16 %v618
    %v623 = vpack.c.b16 %v622, %v621
    %v625 = vsel %vm192, %v623, 0
    %v628 = vsel %vm196, %v612, 0
    %v631 = vsel %vm196, %v613, 0
    %v634 = vsel %vm196, %v614, 0
    %v637 = vsel %vm196, %v615, 0
    %639 = vmatpush.bf16.msra.mxu0 0
    %640 = vmatpush.bf16.msra.mxu0 0
    %641 = vmatpush.bf16.msra.mxu0 0
    %642 = vmatpush.bf16.msra.mxu0 0
    %643 = vmatpush.bf16.msra.mxu0 0
    %644 = vmatpush.bf16.msra.mxu0 0
    %645 = vmatpush.bf16.msra.mxu0 0
    %646 = vmatpush.bf16.msra.mxu0 %v628
    %647 = vmatmul.bf16.gmra.mxu0 %v625
    %v648 = vpop.f32.mrf.mxu0
    %v649 = vadd.f32 0.0, %v648
    %v650 = vpop.f32.mrf.mxu0
    %v651 = vadd.f32 0.0, %v650
    %652 = vdwg.mxu0
    %653 = vmatpush.bf16.msra.mxu0 0
    %654 = vmatpush.bf16.msra.mxu0 0
    %655 = vmatpush.bf16.msra.mxu0 0
    %656 = vmatpush.bf16.msra.mxu0 0
    %657 = vmatpush.bf16.msra.mxu0 0
    %658 = vmatpush.bf16.msra.mxu0 0
    %659 = vmatpush.bf16.msra.mxu0 0
    %660 = vmatpush.bf16.msra.mxu0 %v631
    %661 = vmatmul.bf16.gmra.mxu0 %v625
    %v662 = vpop.f32.mrf.mxu0
    %v663 = vadd.f32 0.0, %v662
    %v664 = vpop.f32.mrf.mxu0
    %v665 = vadd.f32 0.0, %v664
    %666 = vdwg.mxu0
    %667 = vmatpush.bf16.msra.mxu0 0
    %668 = vmatpush.bf16.msra.mxu0 0
    %669 = vmatpush.bf16.msra.mxu0 0
    %670 = vmatpush.bf16.msra.mxu0 0
    %671 = vmatpush.bf16.msra.mxu0 0
    %672 = vmatpush.bf16.msra.mxu0 0
    %673 = vmatpush.bf16.msra.mxu0 0
    %674 = vmatpush.bf16.msra.mxu0 %v634
    %675 = vmatmul.bf16.gmra.mxu0 %v625
    %v676 = vpop.f32.mrf.mxu0
    %v677 = vadd.f32 0.0, %v676
    %v678 = vpop.f32.mrf.mxu0
    %v679 = vadd.f32 0.0, %v678
    %680 = vdwg.mxu0
    %681 = vmatpush.bf16.msra.mxu0 0
    %682 = vmatpush.bf16.msra.mxu0 0
    %683 = vmatpush.bf16.msra.mxu0 0
    %684 = vmatpush.bf16.msra.mxu0 0
    %685 = vmatpush.bf16.msra.mxu0 0
    %686 = vmatpush.bf16.msra.mxu0 0
    %687 = vmatpush.bf16.msra.mxu0 0
    %688 = vmatpush.bf16.msra.mxu0 %v637
    %689 = vmatmul.bf16.gmra.mxu0 %v625
    %v690 = vpop.f32.mrf.mxu0
    %v691 = vadd.f32 0.0, %v690
    %v692 = vpop.f32.mrf.mxu0
    %v693 = vadd.f32 0.0, %v692
    %694 = vdwg.mxu0
    %v695 = vadd.f32 %v593, %v649
    %v696 = vadd.f32 %v594, %v663
    %v697 = vadd.f32 %v595, %v677
    %v698 = vadd.f32 %v596, %v691
    %v699 = vadd.f32 %v597, %v651
    %v700 = vadd.f32 %v598, %v665
    %v701 = vadd.f32 %v599, %v679
    %v702 = vadd.f32 %v600, %v693
    %703 = vst [vmem:[#allocation1] ss:$2 sm:$0xff] %v91
    %s704 = scalar_lea.vmem [#allocation1], 16
    %705 = vst [vmem:[%s704] ss:$2 sm:$0xff] %v92
    %v706 = vld.sshfl [vmem:[#allocation1] sm:$0xff pattern:$0x75316420]
    %v707 = vld.sshfl [vmem:[#allocation1 + $0x8] sm:$0xff pattern:$0x75316420]
    %v708 = vld.sshfl [vmem:[#allocation1 + $0x10] sm:$0xff pattern:$0x75316420]
    %v709 = vld.sshfl [vmem:[#allocation1 + $0x18] sm:$0xff pattern:$0x75316420]
    %714 = vrot.lane.b32.xlu0 %v706, 127
    %v715 = vpop.permute.xlu0 %714
    %716 = vrot.lane.b32.xlu0 %v707, 127
    %v717 = vpop.permute.xlu0 %716
    %718 = vrot.lane.b32.xlu0 %v708, 127
    %v719 = vpop.permute.xlu0 %718
    %720 = vrot.lane.b32.xlu0 %v709, 127
    %v721 = vpop.permute.xlu0 %720
    %vm722 = vcmp.lt.s32.totalorder %v115, 127
    %v723 = vsel %vm722, %v719, %v721
    %v724 = vsel %vm722, %v717, %v719
    %v725 = vsel %vm722, %v715, %v717
    %v726 = vsel %vm722, %v721, %v715
    %s727 = scalar_lea.vmem [#allocation3], 20
    %v728 = vld [vmem:[%s727] sm:$0xf]
    %v730 = vperm.slane %v728, 0
    %v731 = vperm.slane %v728, 1
    %v732 = vperm.slane %v728, 2
    %v733 = vperm.slane %v728, 3
    %v738 = vmul.f32 %v725, %v730
    %v739 = vmul.f32 %v724, %v731
    %v740 = vmul.f32 %v723, %v732
    %v741 = vmul.f32 %v726, %v733
    %v742 = vpack.c.bf16 %v738, %v738
    %v743 = vpack.c.bf16 %v739, %v739
    %v744 = vpack.c.bf16 %v740, %v740
    %v745 = vpack.c.bf16 %v741, %v741
    %s746 = scalar_lea.vmem %s9, 40
    %v747 = vld [vmem:[%s746] sm:$0xf]
    %v748 = vld [vmem:[%s746 + $0x4] sm:$0xf]
    %v751 = vunpack.c.l.b16 %v747
    %v752 = vunpack.c.l.b16 %v748
    %v753 = vpack.c.b16 %v752, %v751
    %v755 = vsel %vm192, %v753, 0
    %v758 = vsel %vm196, %v742, 0
    %v761 = vsel %vm196, %v743, 0
    %v764 = vsel %vm196, %v744, 0
    %v767 = vsel %vm196, %v745, 0
    %769 = vmatpush.bf16.msra.mxu0 0
    %770 = vmatpush.bf16.msra.mxu0 0
    %771 = vmatpush.bf16.msra.mxu0 0
    %772 = vmatpush.bf16.msra.mxu0 0
    %773 = vmatpush.bf16.msra.mxu0 0
    %774 = vmatpush.bf16.msra.mxu0 0
    %775 = vmatpush.bf16.msra.mxu0 0
    %776 = vmatpush.bf16.msra.mxu0 %v758
    %777 = vmatmul.bf16.gmra.mxu0 %v755
    %v778 = vpop.f32.mrf.mxu0
    %v779 = vadd.f32 0.0, %v778
    %v780 = vpop.f32.mrf.mxu0
    %v781 = vadd.f32 0.0, %v780
    %782 = vdwg.mxu0
    %783 = vmatpush.bf16.msra.mxu0 0
    %784 = vmatpush.bf16.msra.mxu0 0
    %785 = vmatpush.bf16.msra.mxu0 0
    %786 = vmatpush.bf16.msra.mxu0 0
    %787 = vmatpush.bf16.msra.mxu0 0
    %788 = vmatpush.bf16.msra.mxu0 0
    %789 = vmatpush.bf16.msra.mxu0 0
    %790 = vmatpush.bf16.msra.mxu0 %v761
    %791 = vmatmul.bf16.gmra.mxu0 %v755
    %v792 = vpop.f32.mrf.mxu0
    %v793 = vadd.f32 0.0, %v792
    %v794 = vpop.f32.mrf.mxu0
    %v795 = vadd.f32 0.0, %v794
    %796 = vdwg.mxu0
    %797 = vmatpush.bf16.msra.mxu0 0
    %798 = vmatpush.bf16.msra.mxu0 0
    %799 = vmatpush.bf16.msra.mxu0 0
    %800 = vmatpush.bf16.msra.mxu0 0
    %801 = vmatpush.bf16.msra.mxu0 0
    %802 = vmatpush.bf16.msra.mxu0 0
    %803 = vmatpush.bf16.msra.mxu0 0
    %804 = vmatpush.bf16.msra.mxu0 %v764
    %805 = vmatmul.bf16.gmra.mxu0 %v755
    %v806 = vpop.f32.mrf.mxu0
    %v807 = vadd.f32 0.0, %v806
    %v808 = vpop.f32.mrf.mxu0
    %v809 = vadd.f32 0.0, %v808
    %810 = vdwg.mxu0
    %811 = vmatpush.bf16.msra.mxu0 0
    %812 = vmatpush.bf16.msra.mxu0 0
    %813 = vmatpush.bf16.msra.mxu0 0
    %814 = vmatpush.bf16.msra.mxu0 0
    %815 = vmatpush.bf16.msra.mxu0 0
    %816 = vmatpush.bf16.msra.mxu0 0
    %817 = vmatpush.bf16.msra.mxu0 0
    %818 = vmatpush.bf16.msra.mxu0 %v767
    %819 = vmatmul.bf16.gmra.mxu0 %v755
    %v820 = vpop.f32.mrf.mxu0
    %v821 = vadd.f32 0.0, %v820
    %v822 = vpop.f32.mrf.mxu0
    %v823 = vadd.f32 0.0, %v822
    %824 = vdwg.mxu0
    %v825 = vadd.f32 %v695, %v779
    %v826 = vadd.f32 %v696, %v793
    %v827 = vadd.f32 %v697, %v807
    %v828 = vadd.f32 %v698, %v821
    %v829 = vadd.f32 %v699, %v781
    %v830 = vadd.f32 %v700, %v795
    %v831 = vadd.f32 %v701, %v809
    %v832 = vadd.f32 %v702, %v823
    %833 = vst [vmem:[#allocation1] ss:$2 sm:$0xff] %v91
    %s834 = scalar_lea.vmem [#allocation1], 16
    %835 = vst [vmem:[%s834] ss:$2 sm:$0xff] %v92
    %v836 = vld.sshfl [vmem:[#allocation1] sm:$0xff pattern:$0x75316420]
    %v837 = vld.sshfl [vmem:[#allocation1 + $0x8] sm:$0xff pattern:$0x75316420]
    %v838 = vld.sshfl [vmem:[#allocation1 + $0x10] sm:$0xff pattern:$0x75316420]
    %v839 = vld.sshfl [vmem:[#allocation1 + $0x18] sm:$0xff pattern:$0x75316420]
    %844 = vrot.lane.b32.xlu0 %v836, 113
    %v845 = vpop.permute.xlu0 %844
    %846 = vrot.lane.b32.xlu0 %v837, 113
    %v847 = vpop.permute.xlu0 %846
    %848 = vrot.lane.b32.xlu0 %v838, 113
    %v849 = vpop.permute.xlu0 %848
    %850 = vrot.lane.b32.xlu0 %v839, 113
    %v851 = vpop.permute.xlu0 %850
    %vm852 = vcmp.lt.s32.totalorder %v115, 113
    %v853 = vsel %vm852, %v849, %v851
    %v854 = vsel %vm852, %v847, %v849
    %v855 = vsel %vm852, %v845, %v847
    %v856 = vsel %vm852, %v851, %v845
    %s857 = scalar_lea.vmem [#allocation3], 24
    %v858 = vld [vmem:[%s857] sm:$0xf]
    %v860 = vperm.slane %v858, 0
    %v861 = vperm.slane %v858, 1
    %v862 = vperm.slane %v858, 2
    %v863 = vperm.slane %v858, 3
    %v868 = vmul.f32 %v855, %v860
    %v869 = vmul.f32 %v854, %v861
    %v870 = vmul.f32 %v853, %v862
    %v871 = vmul.f32 %v856, %v863
    %v872 = vpack.c.bf16 %v868, %v868
    %v873 = vpack.c.bf16 %v869, %v869
    %v874 = vpack.c.bf16 %v870, %v870
    %v875 = vpack.c.bf16 %v871, %v871
    %s876 = scalar_lea.vmem %s9, 48
    %v877 = vld [vmem:[%s876] sm:$0xf]
    %v878 = vld [vmem:[%s876 + $0x4] sm:$0xf]
    %v881 = vunpack.c.l.b16 %v877
    %v882 = vunpack.c.l.b16 %v878
    %v883 = vpack.c.b16 %v882, %v881
    %v885 = vsel %vm192, %v883, 0
    %v888 = vsel %vm196, %v872, 0
    %v891 = vsel %vm196, %v873, 0
    %v894 = vsel %vm196, %v874, 0
    %v897 = vsel %vm196, %v875, 0
    %899 = vmatpush.bf16.msra.mxu0 0
    %900 = vmatpush.bf16.msra.mxu0 0
    %901 = vmatpush.bf16.msra.mxu0 0
    %902 = vmatpush.bf16.msra.mxu0 0
    %903 = vmatpush.bf16.msra.mxu0 0
    %904 = vmatpush.bf16.msra.mxu0 0
    %905 = vmatpush.bf16.msra.mxu0 0
    %906 = vmatpush.bf16.msra.mxu0 %v888
    %907 = vmatmul.bf16.gmra.mxu0 %v885
    %v908 = vpop.f32.mrf.mxu0
    %v909 = vadd.f32 0.0, %v908
    %v910 = vpop.f32.mrf.mxu0
    %v911 = vadd.f32 0.0, %v910
    %912 = vdwg.mxu0
    %913 = vmatpush.bf16.msra.mxu0 0
    %914 = vmatpush.bf16.msra.mxu0 0
    %915 = vmatpush.bf16.msra.mxu0 0
    %916 = vmatpush.bf16.msra.mxu0 0
    %917 = vmatpush.bf16.msra.mxu0 0
    %918 = vmatpush.bf16.msra.mxu0 0
    %919 = vmatpush.bf16.msra.mxu0 0
    %920 = vmatpush.bf16.msra.mxu0 %v891
    %921 = vmatmul.bf16.gmra.mxu0 %v885
    %v922 = vpop.f32.mrf.mxu0
    %v923 = vadd.f32 0.0, %v922
    %v924 = vpop.f32.mrf.mxu0
    %v925 = vadd.f32 0.0, %v924
    %926 = vdwg.mxu0
    %927 = vmatpush.bf16.msra.mxu0 0
    %928 = vmatpush.bf16.msra.mxu0 0
    %929 = vmatpush.bf16.msra.mxu0 0
    %930 = vmatpush.bf16.msra.mxu0 0
    %931 = vmatpush.bf16.msra.mxu0 0
    %932 = vmatpush.bf16.msra.mxu0 0
    %933 = vmatpush.bf16.msra.mxu0 0
    %934 = vmatpush.bf16.msra.mxu0 %v894
    %935 = vmatmul.bf16.gmra.mxu0 %v885
    %v936 = vpop.f32.mrf.mxu0
    %v937 = vadd.f32 0.0, %v936
    %v938 = vpop.f32.mrf.mxu0
    %v939 = vadd.f32 0.0, %v938
    %940 = vdwg.mxu0
    %941 = vmatpush.bf16.msra.mxu0 0
    %942 = vmatpush.bf16.msra.mxu0 0
    %943 = vmatpush.bf16.msra.mxu0 0
    %944 = vmatpush.bf16.msra.mxu0 0
    %945 = vmatpush.bf16.msra.mxu0 0
    %946 = vmatpush.bf16.msra.mxu0 0
    %947 = vmatpush.bf16.msra.mxu0 0
    %948 = vmatpush.bf16.msra.mxu0 %v897
    %949 = vmatmul.bf16.gmra.mxu0 %v885
    %v950 = vpop.f32.mrf.mxu0
    %v951 = vadd.f32 0.0, %v950
    %v952 = vpop.f32.mrf.mxu0
    %v953 = vadd.f32 0.0, %v952
    %954 = vdwg.mxu0
    %v955 = vadd.f32 %v825, %v909
    %v956 = vadd.f32 %v826, %v923
    %v957 = vadd.f32 %v827, %v937
    %v958 = vadd.f32 %v828, %v951
    %v959 = vadd.f32 %v829, %v911
    %v960 = vadd.f32 %v830, %v925
    %v961 = vadd.f32 %v831, %v939
    %v962 = vadd.f32 %v832, %v953
    %963 = vst [vmem:[#allocation1] ss:$2 sm:$0xff] %v91
    %s964 = scalar_lea.vmem [#allocation1], 16
    %965 = vst [vmem:[%s964] ss:$2 sm:$0xff] %v92
    %v966 = vld.sshfl [vmem:[#allocation1] sm:$0xff pattern:$0x75316420]
    %v967 = vld.sshfl [vmem:[#allocation1 + $0x8] sm:$0xff pattern:$0x75316420]
    %v968 = vld.sshfl [vmem:[#allocation1 + $0x10] sm:$0xff pattern:$0x75316420]
    %v969 = vld.sshfl [vmem:[#allocation1 + $0x18] sm:$0xff pattern:$0x75316420]
    %974 = vrot.lane.b32.xlu0 %v966, 112
    %v975 = vpop.permute.xlu0 %974
    %976 = vrot.lane.b32.xlu0 %v967, 112
    %v977 = vpop.permute.xlu0 %976
    %978 = vrot.lane.b32.xlu0 %v968, 112
    %v979 = vpop.permute.xlu0 %978
    %980 = vrot.lane.b32.xlu0 %v969, 112
    %v981 = vpop.permute.xlu0 %980
    %vm982 = vcmp.lt.s32.totalorder %v115, 112
    %v983 = vsel %vm982, %v979, %v981
    %v984 = vsel %vm982, %v977, %v979
    %v985 = vsel %vm982, %v975, %v977
    %v986 = vsel %vm982, %v981, %v975
    %s987 = scalar_lea.vmem [#allocation3], 28
    %v988 = vld [vmem:[%s987] sm:$0xf]
    %v990 = vperm.slane %v988, 0
    %v991 = vperm.slane %v988, 1
    %v992 = vperm.slane %v988, 2
    %v993 = vperm.slane %v988, 3
    %v998 = vmul.f32 %v985, %v990
    %v999 = vmul.f32 %v984, %v991
    %v1000 = vmul.f32 %v983, %v992
    %v1001 = vmul.f32 %v986, %v993
    %v1002 = vpack.c.bf16 %v998, %v998
    %v1003 = vpack.c.bf16 %v999, %v999
    %v1004 = vpack.c.bf16 %v1000, %v1000
    %v1005 = vpack.c.bf16 %v1001, %v1001
    %s1006 = scalar_lea.vmem %s9, 56
    %v1007 = vld [vmem:[%s1006] sm:$0xf]
    %v1008 = vld [vmem:[%s1006 + $0x4] sm:$0xf]
    %v1011 = vunpack.c.l.b16 %v1007
    %v1012 = vunpack.c.l.b16 %v1008
    %v1013 = vpack.c.b16 %v1012, %v1011
    %v1015 = vsel %vm192, %v1013, 0
    %v1018 = vsel %vm196, %v1002, 0
    %v1021 = vsel %vm196, %v1003, 0
    %v1024 = vsel %vm196, %v1004, 0
    %v1027 = vsel %vm196, %v1005, 0
    %1029 = vmatpush.bf16.msra.mxu0 0
    %1030 = vmatpush.bf16.msra.mxu0 0
    %1031 = vmatpush.bf16.msra.mxu0 0
    %1032 = vmatpush.bf16.msra.mxu0 0
    %1033 = vmatpush.bf16.msra.mxu0 0
    %1034 = vmatpush.bf16.msra.mxu0 0
    %1035 = vmatpush.bf16.msra.mxu0 0
    %1036 = vmatpush.bf16.msra.mxu0 %v1018
    %1037 = vmatmul.bf16.gmra.mxu0 %v1015
    %v1038 = vpop.f32.mrf.mxu0
    %v1039 = vadd.f32 0.0, %v1038
    %v1040 = vpop.f32.mrf.mxu0
    %v1041 = vadd.f32 0.0, %v1040
    %1042 = vdwg.mxu0
    %1043 = vmatpush.bf16.msra.mxu0 0
    %1044 = vmatpush.bf16.msra.mxu0 0
    %1045 = vmatpush.bf16.msra.mxu0 0
    %1046 = vmatpush.bf16.msra.mxu0 0
    %1047 = vmatpush.bf16.msra.mxu0 0
    %1048 = vmatpush.bf16.msra.mxu0 0
    %1049 = vmatpush.bf16.msra.mxu0 0
    %1050 = vmatpush.bf16.msra.mxu0 %v1021
    %1051 = vmatmul.bf16.gmra.mxu0 %v1015
    %v1052 = vpop.f32.mrf.mxu0
    %v1053 = vadd.f32 0.0, %v1052
    %v1054 = vpop.f32.mrf.mxu0
    %v1055 = vadd.f32 0.0, %v1054
    %1056 = vdwg.mxu0
    %1057 = vmatpush.bf16.msra.mxu0 0
    %1058 = vmatpush.bf16.msra.mxu0 0
    %1059 = vmatpush.bf16.msra.mxu0 0
    %1060 = vmatpush.bf16.msra.mxu0 0
    %1061 = vmatpush.bf16.msra.mxu0 0
    %1062 = vmatpush.bf16.msra.mxu0 0
    %1063 = vmatpush.bf16.msra.mxu0 0
    %1064 = vmatpush.bf16.msra.mxu0 %v1024
    %1065 = vmatmul.bf16.gmra.mxu0 %v1015
    %v1066 = vpop.f32.mrf.mxu0
    %v1067 = vadd.f32 0.0, %v1066
    %v1068 = vpop.f32.mrf.mxu0
    %v1069 = vadd.f32 0.0, %v1068
    %1070 = vdwg.mxu0
    %1071 = vmatpush.bf16.msra.mxu0 0
    %1072 = vmatpush.bf16.msra.mxu0 0
    %1073 = vmatpush.bf16.msra.mxu0 0
    %1074 = vmatpush.bf16.msra.mxu0 0
    %1075 = vmatpush.bf16.msra.mxu0 0
    %1076 = vmatpush.bf16.msra.mxu0 0
    %1077 = vmatpush.bf16.msra.mxu0 0
    %1078 = vmatpush.bf16.msra.mxu0 %v1027
    %1079 = vmatmul.bf16.gmra.mxu0 %v1015
    %v1080 = vpop.f32.mrf.mxu0
    %v1081 = vadd.f32 0.0, %v1080
    %v1082 = vpop.f32.mrf.mxu0
    %v1083 = vadd.f32 0.0, %v1082
    %1084 = vdwg.mxu0
    %v1085 = vadd.f32 %v955, %v1039
    %v1086 = vadd.f32 %v956, %v1053
    %v1087 = vadd.f32 %v957, %v1067
    %v1088 = vadd.f32 %v958, %v1081
    %v1089 = vadd.f32 %v959, %v1041
    %v1090 = vadd.f32 %v960, %v1055
    %v1091 = vadd.f32 %v961, %v1069
    %v1092 = vadd.f32 %v962, %v1083
    %1093 = vst [vmem:[#allocation1] ss:$2 sm:$0xff] %v91
    %s1094 = scalar_lea.vmem [#allocation1], 16
    %1095 = vst [vmem:[%s1094] ss:$2 sm:$0xff] %v92
    %v1096 = vld.sshfl [vmem:[#allocation1] sm:$0xff pattern:$0x75316420]
    %v1097 = vld.sshfl [vmem:[#allocation1 + $0x8] sm:$0xff pattern:$0x75316420]
    %v1098 = vld.sshfl [vmem:[#allocation1 + $0x10] sm:$0xff pattern:$0x75316420]
    %v1099 = vld.sshfl [vmem:[#allocation1 + $0x18] sm:$0xff pattern:$0x75316420]
    %1104 = vrot.lane.b32.xlu0 %v1096, 111
    %v1105 = vpop.permute.xlu0 %1104
    %1106 = vrot.lane.b32.xlu0 %v1097, 111
    %v1107 = vpop.permute.xlu0 %1106
    %1108 = vrot.lane.b32.xlu0 %v1098, 111
    %v1109 = vpop.permute.xlu0 %1108
    %1110 = vrot.lane.b32.xlu0 %v1099, 111
    %v1111 = vpop.permute.xlu0 %1110
    %vm1112 = vcmp.lt.s32.totalorder %v115, 111
    %v1113 = vsel %vm1112, %v1109, %v1111
    %v1114 = vsel %vm1112, %v1107, %v1109
    %v1115 = vsel %vm1112, %v1105, %v1107
    %v1116 = vsel %vm1112, %v1111, %v1105
    %s1117 = scalar_lea.vmem [#allocation3], 32
    %v1118 = vld [vmem:[%s1117] sm:$0xf]
    %v1120 = vperm.slane %v1118, 0
    %v1121 = vperm.slane %v1118, 1
    %v1122 = vperm.slane %v1118, 2
    %v1123 = vperm.slane %v1118, 3
    %v1128 = vmul.f32 %v1115, %v1120
    %v1129 = vmul.f32 %v1114, %v1121
    %v1130 = vmul.f32 %v1113, %v1122
    %v1131 = vmul.f32 %v1116, %v1123
    %v1132 = vpack.c.bf16 %v1128, %v1128
    %v1133 = vpack.c.bf16 %v1129, %v1129
    %v1134 = vpack.c.bf16 %v1130, %v1130
    %v1135 = vpack.c.bf16 %v1131, %v1131
    %s1136 = scalar_lea.vmem %s9, 64
    %v1137 = vld [vmem:[%s1136] sm:$0xf]
    %v1138 = vld [vmem:[%s1136 + $0x4] sm:$0xf]
    %v1141 = vunpack.c.l.b16 %v1137
    %v1142 = vunpack.c.l.b16 %v1138
    %v1143 = vpack.c.b16 %v1142, %v1141
    %v1145 = vsel %vm192, %v1143, 0
    %v1148 = vsel %vm196, %v1132, 0
    %v1151 = vsel %vm196, %v1133, 0
    %v1154 = vsel %vm196, %v1134, 0
    %v1157 = vsel %vm196, %v1135, 0
    %1159 = vmatpush.bf16.msra.mxu0 0
    %1160 = vmatpush.bf16.msra.mxu0 0
    %1161 = vmatpush.bf16.msra.mxu0 0
    %1162 = vmatpush.bf16.msra.mxu0 0
    %1163 = vmatpush.bf16.msra.mxu0 0
    %1164 = vmatpush.bf16.msra.mxu0 0
    %1165 = vmatpush.bf16.msra.mxu0 0
    %1166 = vmatpush.bf16.msra.mxu0 %v1148
    %1167 = vmatmul.bf16.gmra.mxu0 %v1145
    %v1168 = vpop.f32.mrf.mxu0
    %v1169 = vadd.f32 0.0, %v1168
    %v1170 = vpop.f32.mrf.mxu0
    %v1171 = vadd.f32 0.0, %v1170
    %1172 = vdwg.mxu0
    %1173 = vmatpush.bf16.msra.mxu0 0
    %1174 = vmatpush.bf16.msra.mxu0 0
    %1175 = vmatpush.bf16.msra.mxu0 0
    %1176 = vmatpush.bf16.msra.mxu0 0
    %1177 = vmatpush.bf16.msra.mxu0 0
    %1178 = vmatpush.bf16.msra.mxu0 0
    %1179 = vmatpush.bf16.msra.mxu0 0
    %1180 = vmatpush.bf16.msra.mxu0 %v1151
    %1181 = vmatmul.bf16.gmra.mxu0 %v1145
    %v1182 = vpop.f32.mrf.mxu0
    %v1183 = vadd.f32 0.0, %v1182
    %v1184 = vpop.f32.mrf.mxu0
    %v1185 = vadd.f32 0.0, %v1184
    %1186 = vdwg.mxu0
    %1187 = vmatpush.bf16.msra.mxu0 0
    %1188 = vmatpush.bf16.msra.mxu0 0
    %1189 = vmatpush.bf16.msra.mxu0 0
    %1190 = vmatpush.bf16.msra.mxu0 0
    %1191 = vmatpush.bf16.msra.mxu0 0
    %1192 = vmatpush.bf16.msra.mxu0 0
    %1193 = vmatpush.bf16.msra.mxu0 0
    %1194 = vmatpush.bf16.msra.mxu0 %v1154
    %1195 = vmatmul.bf16.gmra.mxu0 %v1145
    %v1196 = vpop.f32.mrf.mxu0
    %v1197 = vadd.f32 0.0, %v1196
    %v1198 = vpop.f32.mrf.mxu0
    %v1199 = vadd.f32 0.0, %v1198
    %1200 = vdwg.mxu0
    %1201 = vmatpush.bf16.msra.mxu0 0
    %1202 = vmatpush.bf16.msra.mxu0 0
    %1203 = vmatpush.bf16.msra.mxu0 0
    %1204 = vmatpush.bf16.msra.mxu0 0
    %1205 = vmatpush.bf16.msra.mxu0 0
    %1206 = vmatpush.bf16.msra.mxu0 0
    %1207 = vmatpush.bf16.msra.mxu0 0
    %1208 = vmatpush.bf16.msra.mxu0 %v1157
    %1209 = vmatmul.bf16.gmra.mxu0 %v1145
    %v1210 = vpop.f32.mrf.mxu0
    %v1211 = vadd.f32 0.0, %v1210
    %v1212 = vpop.f32.mrf.mxu0
    %v1213 = vadd.f32 0.0, %v1212
    %1214 = vdwg.mxu0
    %v1215 = vadd.f32 %v1085, %v1169
    %v1216 = vadd.f32 %v1086, %v1183
    %v1217 = vadd.f32 %v1087, %v1197
    %v1218 = vadd.f32 %v1088, %v1211
    %v1219 = vadd.f32 %v1089, %v1171
    %v1220 = vadd.f32 %v1090, %v1185
    %v1221 = vadd.f32 %v1091, %v1199
    %v1222 = vadd.f32 %v1092, %v1213
    %v1223 = vpack.c.bf16 %v1219, %v1215
    %v1224 = vpack.c.bf16 %v1220, %v1216
    %v1225 = vpack.c.bf16 %v1221, %v1217
    %v1226 = vpack.c.bf16 %v1222, %v1218
    %v1227 = vld [vmem:[%s5] sm:$0xf]
    %v1228 = vld [vmem:[%s5 + $0x4] sm:$0xf]
    %v1229 = vld [vmem:[%s5 + $0x8] sm:$0xf]
    %v1230 = vld [vmem:[%s5 + $0xc] sm:$0xf]
    %v1231 = vld [vmem:[%s5 + $0x10] sm:$0xf]
    %v1232 = vld [vmem:[%s5 + $0x14] sm:$0xf]
    %v1233 = vld [vmem:[%s5 + $0x18] sm:$0xf]
    %v1234 = vld [vmem:[%s5 + $0x1c] sm:$0xf]
    %v1235 = vld [vmem:[%s5 + $0x20] sm:$0xf]
    %v1236 = vld [vmem:[%s5 + $0x24] sm:$0xf]
    %v1237 = vld [vmem:[%s5 + $0x28] sm:$0xf]
    %v1238 = vld [vmem:[%s5 + $0x2c] sm:$0xf]
    %v1239 = vld [vmem:[%s5 + $0x30] sm:$0xf]
    %v1240 = vld [vmem:[%s5 + $0x34] sm:$0xf]
    %v1241 = vld [vmem:[%s5 + $0x38] sm:$0xf]
    %v1242 = vld [vmem:[%s5 + $0x3c] sm:$0xf]
    %v1243 = vld [vmem:[%s5 + $0x40] sm:$0xf]
    %v1244 = vld [vmem:[%s5 + $0x44] sm:$0xf]
    %v1245 = vld [vmem:[%s5 + $0x48] sm:$0xf]
    %v1246 = vld [vmem:[%s5 + $0x4c] sm:$0xf]
    %v1247 = vld [vmem:[%s5 + $0x50] sm:$0xf]
    %v1248 = vld [vmem:[%s5 + $0x54] sm:$0xf]
    %v1249 = vld [vmem:[%s5 + $0x58] sm:$0xf]
    %v1250 = vld [vmem:[%s5 + $0x5c] sm:$0xf]
    %v1251 = vld [vmem:[%s5 + $0x60] sm:$0xf]
    %v1252 = vld [vmem:[%s5 + $0x64] sm:$0xf]
    %v1253 = vld [vmem:[%s5 + $0x68] sm:$0xf]
    %v1254 = vld [vmem:[%s5 + $0x6c] sm:$0xf]
    %v1255 = vld [vmem:[%s5 + $0x70] sm:$0xf]
    %v1256 = vld [vmem:[%s5 + $0x74] sm:$0xf]
    %v1257 = vld [vmem:[%s5 + $0x78] sm:$0xf]
    %v1258 = vld [vmem:[%s5 + $0x7c] sm:$0xf]
    %v1259 = vld [vmem:[%s5 + $0x80] sm:$0xf]
    %v1260 = vld [vmem:[%s5 + $0x84] sm:$0xf]
    %v1261 = vld [vmem:[%s5 + $0x88] sm:$0xf]
    %v1262 = vld [vmem:[%s5 + $0x8c] sm:$0xf]
    %v1263 = vld [vmem:[%s5 + $0x90] sm:$0xf]
    %v1264 = vld [vmem:[%s5 + $0x94] sm:$0xf]
    %v1265 = vld [vmem:[%s5 + $0x98] sm:$0xf]
    %v1266 = vld [vmem:[%s5 + $0x9c] sm:$0xf]
    %v1267 = vld [vmem:[%s5 + $0xa0] sm:$0xf]
    %v1268 = vld [vmem:[%s5 + $0xa4] sm:$0xf]
    %v1269 = vld [vmem:[%s5 + $0xa8] sm:$0xf]
    %v1270 = vld [vmem:[%s5 + $0xac] sm:$0xf]
    %v1271 = vld [vmem:[%s5 + $0xb0] sm:$0xf]
    %v1272 = vld [vmem:[%s5 + $0xb4] sm:$0xf]
    %v1273 = vld [vmem:[%s5 + $0xb8] sm:$0xf]
    %v1274 = vld [vmem:[%s5 + $0xbc] sm:$0xf]
    %v1275 = vld [vmem:[%s5 + $0xc0] sm:$0xf]
    %v1276 = vld [vmem:[%s5 + $0xc4] sm:$0xf]
    %v1277 = vld [vmem:[%s5 + $0xc8] sm:$0xf]
    %v1278 = vld [vmem:[%s5 + $0xcc] sm:$0xf]
    %v1279 = vld [vmem:[%s5 + $0xd0] sm:$0xf]
    %v1280 = vld [vmem:[%s5 + $0xd4] sm:$0xf]
    %v1281 = vld [vmem:[%s5 + $0xd8] sm:$0xf]
    %v1282 = vld [vmem:[%s5 + $0xdc] sm:$0xf]
    %v1283 = vld [vmem:[%s5 + $0xe0] sm:$0xf]
    %v1284 = vld [vmem:[%s5 + $0xe4] sm:$0xf]
    %v1285 = vld [vmem:[%s5 + $0xe8] sm:$0xf]
    %v1286 = vld [vmem:[%s5 + $0xec] sm:$0xf]
    %v1287 = vld [vmem:[%s5 + $0xf0] sm:$0xf]
    %v1288 = vld [vmem:[%s5 + $0xf4] sm:$0xf]
    %v1289 = vld [vmem:[%s5 + $0xf8] sm:$0xf]
    %v1290 = vld [vmem:[%s5 + $0xfc] sm:$0xf]
    %v1355 = vunpack.c.l.b16 %v1227
    %v1356 = vunpack.c.l.b16 %v1228
    %v1357 = vunpack.c.l.b16 %v1229
    %v1358 = vunpack.c.l.b16 %v1230
    %v1359 = vunpack.c.l.b16 %v1231
    %v1360 = vunpack.c.l.b16 %v1232
    %v1361 = vunpack.c.l.b16 %v1233
    %v1362 = vunpack.c.l.b16 %v1234
    %v1363 = vunpack.c.l.b16 %v1235
    %v1364 = vunpack.c.l.b16 %v1236
    %v1365 = vunpack.c.l.b16 %v1237
    %v1366 = vunpack.c.l.b16 %v1238
    %v1367 = vunpack.c.l.b16 %v1239
    %v1368 = vunpack.c.l.b16 %v1240
    %v1369 = vunpack.c.l.b16 %v1241
    %v1370 = vunpack.c.l.b16 %v1242
    %v1371 = vunpack.c.l.b16 %v1243
    %v1372 = vunpack.c.l.b16 %v1244
    %v1373 = vunpack.c.l.b16 %v1245
    %v1374 = vunpack.c.l.b16 %v1246
    %v1375 = vunpack.c.l.b16 %v1247
    %v1376 = vunpack.c.l.b16 %v1248
    %v1377 = vunpack.c.l.b16 %v1249
    %v1378 = vunpack.c.l.b16 %v1250
    %v1379 = vunpack.c.l.b16 %v1251
    %v1380 = vunpack.c.l.b16 %v1252
    %v1381 = vunpack.c.l.b16 %v1253
    %v1382 = vunpack.c.l.b16 %v1254
    %v1383 = vunpack.c.l.b16 %v1255
    %v1384 = vunpack.c.l.b16 %v1256
    %v1385 = vunpack.c.l.b16 %v1257
    %v1386 = vunpack.c.l.b16 %v1258
    %v1387 = vunpack.c.l.b16 %v1259
    %v1388 = vunpack.c.l.b16 %v1260
    %v1389 = vunpack.c.l.b16 %v1261
    %v1390 = vunpack.c.l.b16 %v1262
    %v1391 = vunpack.c.l.b16 %v1263
    %v1392 = vunpack.c.l.b16 %v1264
    %v1393 = vunpack.c.l.b16 %v1265
    %v1394 = vunpack.c.l.b16 %v1266
    %v1395 = vunpack.c.l.b16 %v1267
    %v1396 = vunpack.c.l.b16 %v1268
    %v1397 = vunpack.c.l.b16 %v1269
    %v1398 = vunpack.c.l.b16 %v1270
    %v1399 = vunpack.c.l.b16 %v1271
    %v1400 = vunpack.c.l.b16 %v1272
    %v1401 = vunpack.c.l.b16 %v1273
    %v1402 = vunpack.c.l.b16 %v1274
    %v1403 = vunpack.c.l.b16 %v1275
    %v1404 = vunpack.c.l.b16 %v1276
    %v1405 = vunpack.c.l.b16 %v1277
    %v1406 = vunpack.c.l.b16 %v1278
    %v1407 = vunpack.c.l.b16 %v1279
    %v1408 = vunpack.c.l.b16 %v1280
    %v1409 = vunpack.c.l.b16 %v1281
    %v1410 = vunpack.c.l.b16 %v1282
    %v1411 = vunpack.c.l.b16 %v1283
    %v1412 = vunpack.c.l.b16 %v1284
    %v1413 = vunpack.c.l.b16 %v1285
    %v1414 = vunpack.c.l.b16 %v1286
    %v1415 = vunpack.c.l.b16 %v1287
    %v1416 = vunpack.c.l.b16 %v1288
    %v1417 = vunpack.c.l.b16 %v1289
    %v1418 = vunpack.c.l.b16 %v1290
    %v1419 = vpack.c.b16 %v1356, %v1355
    %v1420 = vpack.c.b16 %v1358, %v1357
    %v1421 = vpack.c.b16 %v1360, %v1359
    %v1422 = vpack.c.b16 %v1362, %v1361
    %v1423 = vpack.c.b16 %v1364, %v1363
    %v1424 = vpack.c.b16 %v1366, %v1365
    %v1425 = vpack.c.b16 %v1368, %v1367
    %v1426 = vpack.c.b16 %v1370, %v1369
    %v1427 = vpack.c.b16 %v1372, %v1371
    %v1428 = vpack.c.b16 %v1374, %v1373
    %v1429 = vpack.c.b16 %v1376, %v1375
    %v1430 = vpack.c.b16 %v1378, %v1377
    %v1431 = vpack.c.b16 %v1380, %v1379
    %v1432 = vpack.c.b16 %v1382, %v1381
    %v1433 = vpack.c.b16 %v1384, %v1383
    %v1434 = vpack.c.b16 %v1386, %v1385
    %v1435 = vpack.c.b16 %v1388, %v1387
    %v1436 = vpack.c.b16 %v1390, %v1389
    %v1437 = vpack.c.b16 %v1392, %v1391
    %v1438 = vpack.c.b16 %v1394, %v1393
    %v1439 = vpack.c.b16 %v1396, %v1395
    %v1440 = vpack.c.b16 %v1398, %v1397
    %v1441 = vpack.c.b16 %v1400, %v1399
    %v1442 = vpack.c.b16 %v1402, %v1401
    %v1443 = vpack.c.b16 %v1404, %v1403
    %v1444 = vpack.c.b16 %v1406, %v1405
    %v1445 = vpack.c.b16 %v1408, %v1407
    %v1446 = vpack.c.b16 %v1410, %v1409
    %v1447 = vpack.c.b16 %v1412, %v1411
    %v1448 = vpack.c.b16 %v1414, %v1413
    %v1449 = vpack.c.b16 %v1416, %v1415
    %v1450 = vpack.c.b16 %v1418, %v1417
    %1483 = vmatpush.bf16.msra.mxu0 %v1426
    %1484 = vmatpush.bf16.msra.mxu0 %v1425
    %1485 = vmatpush.bf16.msra.mxu0 %v1424
    %1486 = vmatpush.bf16.msra.mxu0 %v1423
    %1487 = vmatpush.bf16.msra.mxu0 %v1422
    %1488 = vmatpush.bf16.msra.mxu0 %v1421
    %1489 = vmatpush.bf16.msra.mxu0 %v1420
    %1490 = vmatpush.bf16.msra.mxu0 %v1419
    %1491 = vmatmul.bf16.gmra.mxu0 %v1223
    %v1492 = vpop.f32.mrf.mxu0
    %v1493 = vadd.f32 0.0, %v1492
    %v1494 = vpop.f32.mrf.mxu0
    %v1495 = vadd.f32 0.0, %v1494
    %1496 = vdwg.mxu0
    %1497 = vmatpush.bf16.msra.mxu0 %v1434
    %1498 = vmatpush.bf16.msra.mxu0 %v1433
    %1499 = vmatpush.bf16.msra.mxu0 %v1432
    %1500 = vmatpush.bf16.msra.mxu0 %v1431
    %1501 = vmatpush.bf16.msra.mxu0 %v1430
    %1502 = vmatpush.bf16.msra.mxu0 %v1429
    %1503 = vmatpush.bf16.msra.mxu0 %v1428
    %1504 = vmatpush.bf16.msra.mxu0 %v1427
    %1505 = vmatmul.bf16.gmra.mxu0 %v1224
    %v1506 = vpop.f32.mrf.mxu0
    %v1507 = vadd.f32 %v1493, %v1506
    %v1508 = vpop.f32.mrf.mxu0
    %v1509 = vadd.f32 %v1495, %v1508
    %1510 = vdwg.mxu0
    %1511 = vmatpush.bf16.msra.mxu0 %v1442
    %1512 = vmatpush.bf16.msra.mxu0 %v1441
    %1513 = vmatpush.bf16.msra.mxu0 %v1440
    %1514 = vmatpush.bf16.msra.mxu0 %v1439
    %1515 = vmatpush.bf16.msra.mxu0 %v1438
    %1516 = vmatpush.bf16.msra.mxu0 %v1437
    %1517 = vmatpush.bf16.msra.mxu0 %v1436
    %1518 = vmatpush.bf16.msra.mxu0 %v1435
    %1519 = vmatmul.bf16.gmra.mxu0 %v1225
    %v1520 = vpop.f32.mrf.mxu0
    %v1521 = vadd.f32 %v1507, %v1520
    %v1522 = vpop.f32.mrf.mxu0
    %v1523 = vadd.f32 %v1509, %v1522
    %1524 = vdwg.mxu0
    %1525 = vmatpush.bf16.msra.mxu0 %v1450
    %1526 = vmatpush.bf16.msra.mxu0 %v1449
    %1527 = vmatpush.bf16.msra.mxu0 %v1448
    %1528 = vmatpush.bf16.msra.mxu0 %v1447
    %1529 = vmatpush.bf16.msra.mxu0 %v1446
    %1530 = vmatpush.bf16.msra.mxu0 %v1445
    %1531 = vmatpush.bf16.msra.mxu0 %v1444
    %1532 = vmatpush.bf16.msra.mxu0 %v1443
    %1533 = vmatmul.bf16.gmra.mxu0 %v1226
    %v1534 = vpop.f32.mrf.mxu0
    %v1535 = vadd.f32 %v1521, %v1534
    %v1536 = vpop.f32.mrf.mxu0
    %v1537 = vadd.f32 %v1523, %v1536
    %1538 = vdwg.mxu0
    %1539 = vadd.xlane.f32.xlu0 %v1535
    %v1540 = vpop.xlane.xlu0 %1539
    %1541 = vadd.xlane.f32.xlu0 %v1537
    %v1542 = vpop.xlane.xlu0 %1541
    %v1543 = vmul.f32 %v1535, %v1535
    %v1544 = vmul.f32 %v1537, %v1537
    %1545 = vadd.xlane.f32.xlu0 %v1543
    %v1546 = vpop.xlane.xlu0 %1545
    %1547 = vadd.xlane.f32.xlu0 %v1544
    %v1548 = vpop.xlane.xlu0 %1547
    %v1549 = vmul.f32 %v1540, 0.0078125
    %v1550 = vmul.f32 %v1542, 0.0078125
    %v1551 = vmul.f32 %v1546, 0.0078125
    %v1552 = vmul.f32 %v1548, 0.0078125
    %v1553 = vmul.f32 %v1549, %v1549
    %v1554 = vmul.f32 %v1550, %v1550
    %v1555 = vsub.f32 %v1551, %v1553
    %v1556 = vsub.f32 %v1552, %v1554
    %v1557 = vmax.f32 %v1555, 0.0
    %v1558 = vmax.f32 %v1556, 0.0
    %v1559 = vld [vmem:[%s10] sm:$0xff]
    %v1560 = vld [vmem:[%s10 + $0x8] sm:$0xff]
    %v1561 = vadd.f32 %v1557, 1e-05
    %v1562 = vadd.f32 %v1558, 1e-05
    %v1563 = vrsqrt.pop %v1561
    %v1564 = vmul.f32 %v1563, %v1561
    %v1565 = vmul.f32 %v1564, %v1563
    %v1566 = vmul.f32 0.5, %v1565
    %v1567 = vsub.f32 1.5, %v1566
    %v1568 = vmul.f32 %v1563, %v1567
    %vm1569 = vweird.f32 %v1561
    %vm1570 = vweird.f32 %v1563
    %vm1571 = vmor %vm1569, %vm1570
    %v1572 = vsel %vm1571, %v1563, %v1568
    %v1573 = vrsqrt.pop %v1562
    %v1574 = vmul.f32 %v1573, %v1562
    %v1575 = vmul.f32 %v1574, %v1573
    %v1576 = vmul.f32 0.5, %v1575
    %v1577 = vsub.f32 1.5, %v1576
    %v1578 = vmul.f32 %v1573, %v1577
    %vm1579 = vweird.f32 %v1562
    %vm1580 = vweird.f32 %v1573
    %vm1581 = vmor %vm1579, %vm1580
    %v1582 = vsel %vm1581, %v1573, %v1578
    %v1583 = vmul.f32 %v1559, %v1572
    %v1584 = vmul.f32 %v1560, %v1582
    %v1585 = vld [vmem:[%s11] sm:$0xff]
    %v1586 = vld [vmem:[%s11 + $0x8] sm:$0xff]
    %v1587 = vmul.f32 %v1549, %v1583
    %v1588 = vmul.f32 %v1550, %v1584
    %v1589 = vsub.f32 %v1585, %v1587
    %v1590 = vsub.f32 %v1586, %v1588
    %1592 = vset.pattern.permute.xlu0 0
    %1593 = vperm.xlu0 %1592, %v1583
    %v1594 = vpop.permute.xlu0 %1593
    %1597 = vset.pattern.permute.xlu0 0
    %1598 = vperm.xlu0 %1597, %v1584
    %v1599 = vpop.permute.xlu0 %1598
    %v1601 = vmul.f32 %v1535, %v1594
    %v1602 = vmul.f32 %v1537, %v1599
    %1604 = vset.pattern.permute.xlu0 0
    %1605 = vperm.xlu0 %1604, %v1589
    %v1606 = vpop.permute.xlu0 %1605
    %1609 = vset.pattern.permute.xlu0 0
    %1610 = vperm.xlu0 %1609, %v1590
    %v1611 = vpop.permute.xlu0 %1610
    %v1613 = vadd.f32 %v1601, %v1606
    %v1614 = vadd.f32 %v1602, %v1611
    %v1615 = vmax.f32 %v1613, 0.0
    %v1616 = vmax.f32 %v1614, 0.0
    %1617 = vrot.lane.b32.xlu0 %v1615, 9
    %v1618 = vpop.permute.xlu0 %1617
    %1619 = vrot.lane.b32.xlu0 %v1616, 9
    %v1620 = vpop.permute.xlu0 %1619
    %v1621 = vld [vmem:[%s2] sm:$0x1]
    %v1623 = vperm.slane %v1621, 0
    %v1625 = vmul.f32 %v1618, %v1623
    %v1626 = vmul.f32 %v1620, %v1623
    %v1627 = vpack.c.bf16 %v1626, %v1625
    %v1628 = vld [vmem:[%s12] sm:$0xf]
    %v1629 = vld [vmem:[%s12 + $0x4] sm:$0xf]
    %v1630 = vld [vmem:[%s12 + $0x8] sm:$0xf]
    %v1631 = vld [vmem:[%s12 + $0xc] sm:$0xf]
    %v1632 = vld [vmem:[%s12 + $0x10] sm:$0xf]
    %v1633 = vld [vmem:[%s12 + $0x14] sm:$0xf]
    %v1634 = vld [vmem:[%s12 + $0x18] sm:$0xf]
    %v1635 = vld [vmem:[%s12 + $0x1c] sm:$0xf]
    %1636 = vrot.lane.b32.xlu0 %v1615, 8
    %v1637 = vpop.permute.xlu0 %1636
    %1638 = vrot.lane.b32.xlu0 %v1616, 8
    %v1639 = vpop.permute.xlu0 %1638
    %s1640 = scalar_lea.vmem %s2, 1
    %v1641 = vld [vmem:[%s1640] sm:$0x1]
    %v1643 = vperm.slane %v1641, 0
    %v1645 = vmul.f32 %v1637, %v1643
    %v1646 = vmul.f32 %v1639, %v1643
    %v1647 = vpack.c.bf16 %v1646, %v1645
    %s1648 = scalar_lea.vmem %s12, 32
    %v1649 = vld [vmem:[%s1648] sm:$0xf]
    %v1650 = vld [vmem:[%s1648 + $0x4] sm:$0xf]
    %v1651 = vld [vmem:[%s1648 + $0x8] sm:$0xf]
    %v1652 = vld [vmem:[%s1648 + $0xc] sm:$0xf]
    %v1653 = vld [vmem:[%s1648 + $0x10] sm:$0xf]
    %v1654 = vld [vmem:[%s1648 + $0x14] sm:$0xf]
    %v1655 = vld [vmem:[%s1648 + $0x18] sm:$0xf]
    %v1656 = vld [vmem:[%s1648 + $0x1c] sm:$0xf]
    %v1665 = vunpack.c.l.b16 %v1649
    %v1666 = vunpack.c.l.b16 %v1650
    %v1667 = vunpack.c.l.b16 %v1651
    %v1668 = vunpack.c.l.b16 %v1652
    %v1669 = vunpack.c.l.b16 %v1653
    %v1670 = vunpack.c.l.b16 %v1654
    %v1671 = vunpack.c.l.b16 %v1655
    %v1672 = vunpack.c.l.b16 %v1656
    %v1673 = vpack.c.b16 %v1666, %v1665
    %v1674 = vpack.c.b16 %v1668, %v1667
    %v1675 = vpack.c.b16 %v1670, %v1669
    %v1676 = vpack.c.b16 %v1672, %v1671
    %vm1677 = vcmask 130048
    %v1679 = vsel %vm1677, %v1673, 0
    %v1682 = vsel %vm1677, %v1674, 0
    %v1685 = vsel %vm1677, %v1675, 0
    %v1688 = vsel %vm1677, %v1676, 0
    %1690 = vmatpush.bf16.msra.mxu0 0
    %1691 = vmatpush.bf16.msra.mxu0 0
    %1692 = vmatpush.bf16.msra.mxu0 0
    %1693 = vmatpush.bf16.msra.mxu0 0
    %1694 = vmatpush.bf16.msra.mxu0 0
    %1695 = vmatpush.bf16.msra.mxu0 0
    %1696 = vmatpush.bf16.msra.mxu0 0
    %1697 = vmatpush.bf16.msra.mxu0 %v1647
    %1698 = vmatmul.bf16.gmra.mxu0 %v1679
    %v1699 = vpop.f32.mrf.mxu0
    %v1700 = vadd.f32 0.0, %v1699
    %v1701 = vpop.f32.mrf.mxu0
    %v1702 = vadd.f32 0.0, %v1701
    %1703 = vmatmul.bf16.gmra.mxu0 %v1682
    %v1704 = vpop.f32.mrf.mxu0
    %v1705 = vadd.f32 0.0, %v1704
    %v1706 = vpop.f32.mrf.mxu0
    %v1707 = vadd.f32 0.0, %v1706
    %1708 = vmatmul.bf16.gmra.mxu0 %v1685
    %v1709 = vpop.f32.mrf.mxu0
    %v1710 = vadd.f32 0.0, %v1709
    %v1711 = vpop.f32.mrf.mxu0
    %v1712 = vadd.f32 0.0, %v1711
    %1713 = vmatmul.bf16.gmra.mxu0 %v1688
    %v1714 = vpop.f32.mrf.mxu0
    %v1715 = vadd.f32 0.0, %v1714
    %v1716 = vpop.f32.mrf.mxu0
    %v1717 = vadd.f32 0.0, %v1716
    %1718 = vdwg.mxu0
    %v1727 = vunpack.c.l.b16 %v1628
    %v1728 = vunpack.c.l.b16 %v1629
    %v1729 = vunpack.c.l.b16 %v1630
    %v1730 = vunpack.c.l.b16 %v1631
    %v1731 = vunpack.c.l.b16 %v1632
    %v1732 = vunpack.c.l.b16 %v1633
    %v1733 = vunpack.c.l.b16 %v1634
    %v1734 = vunpack.c.l.b16 %v1635
    %v1735 = vpack.c.b16 %v1728, %v1727
    %v1736 = vpack.c.b16 %v1730, %v1729
    %v1737 = vpack.c.b16 %v1732, %v1731
    %v1738 = vpack.c.b16 %v1734, %v1733
    %v1740 = vsel %vm1677, %v1735, 0
    %v1743 = vsel %vm1677, %v1736, 0
    %v1746 = vsel %vm1677, %v1737, 0
    %v1749 = vsel %vm1677, %v1738, 0
    %1751 = vmatpush.bf16.msra.mxu0 0
    %1752 = vmatpush.bf16.msra.mxu0 0
    %1753 = vmatpush.bf16.msra.mxu0 0
    %1754 = vmatpush.bf16.msra.mxu0 0
    %1755 = vmatpush.bf16.msra.mxu0 0
    %1756 = vmatpush.bf16.msra.mxu0 0
    %1757 = vmatpush.bf16.msra.mxu0 0
    %1758 = vmatpush.bf16.msra.mxu0 %v1627
    %1759 = vmatmul.bf16.gmra.mxu0 %v1740
    %v1760 = vpop.f32.mrf.mxu0
    %v1761 = vadd.f32 %v1700, %v1760
    %v1762 = vpop.f32.mrf.mxu0
    %v1763 = vadd.f32 %v1702, %v1762
    %1764 = vmatmul.bf16.gmra.mxu0 %v1743
    %v1765 = vpop.f32.mrf.mxu0
    %v1766 = vadd.f32 %v1705, %v1765
    %v1767 = vpop.f32.mrf.mxu0
    %v1768 = vadd.f32 %v1707, %v1767
    %1769 = vmatmul.bf16.gmra.mxu0 %v1746
    %v1770 = vpop.f32.mrf.mxu0
    %v1771 = vadd.f32 %v1710, %v1770
    %v1772 = vpop.f32.mrf.mxu0
    %v1773 = vadd.f32 %v1712, %v1772
    %1774 = vmatmul.bf16.gmra.mxu0 %v1749
    %v1775 = vpop.f32.mrf.mxu0
    %v1776 = vadd.f32 %v1715, %v1775
    %v1777 = vpop.f32.mrf.mxu0
    %v1778 = vadd.f32 %v1717, %v1777
    %1779 = vdwg.mxu0
    %1780 = vrot.lane.b32.xlu0 %v1615, 7
    %v1781 = vpop.permute.xlu0 %1780
    %1782 = vrot.lane.b32.xlu0 %v1616, 7
    %v1783 = vpop.permute.xlu0 %1782
    %s1784 = scalar_lea.vmem %s2, 2
    %v1785 = vld [vmem:[%s1784] sm:$0x1]
    %v1787 = vperm.slane %v1785, 0
    %v1789 = vmul.f32 %v1781, %v1787
    %v1790 = vmul.f32 %v1783, %v1787
    %v1791 = vpack.c.bf16 %v1790, %v1789
    %s1792 = scalar_lea.vmem %s12, 64
    %v1793 = vld [vmem:[%s1792] sm:$0xf]
    %v1794 = vld [vmem:[%s1792 + $0x4] sm:$0xf]
    %v1795 = vld [vmem:[%s1792 + $0x8] sm:$0xf]
    %v1796 = vld [vmem:[%s1792 + $0xc] sm:$0xf]
    %v1797 = vld [vmem:[%s1792 + $0x10] sm:$0xf]
    %v1798 = vld [vmem:[%s1792 + $0x14] sm:$0xf]
    %v1799 = vld [vmem:[%s1792 + $0x18] sm:$0xf]
    %v1800 = vld [vmem:[%s1792 + $0x1c] sm:$0xf]
    %v1809 = vunpack.c.l.b16 %v1793
    %v1810 = vunpack.c.l.b16 %v1794
    %v1811 = vunpack.c.l.b16 %v1795
    %v1812 = vunpack.c.l.b16 %v1796
    %v1813 = vunpack.c.l.b16 %v1797
    %v1814 = vunpack.c.l.b16 %v1798
    %v1815 = vunpack.c.l.b16 %v1799
    %v1816 = vunpack.c.l.b16 %v1800
    %v1817 = vpack.c.b16 %v1810, %v1809
    %v1818 = vpack.c.b16 %v1812, %v1811
    %v1819 = vpack.c.b16 %v1814, %v1813
    %v1820 = vpack.c.b16 %v1816, %v1815
    %v1822 = vsel %vm1677, %v1817, 0
    %v1825 = vsel %vm1677, %v1818, 0
    %v1828 = vsel %vm1677, %v1819, 0
    %v1831 = vsel %vm1677, %v1820, 0
    %1833 = vmatpush.bf16.msra.mxu0 0
    %1834 = vmatpush.bf16.msra.mxu0 0
    %1835 = vmatpush.bf16.msra.mxu0 0
    %1836 = vmatpush.bf16.msra.mxu0 0
    %1837 = vmatpush.bf16.msra.mxu0 0
    %1838 = vmatpush.bf16.msra.mxu0 0
    %1839 = vmatpush.bf16.msra.mxu0 0
    %1840 = vmatpush.bf16.msra.mxu0 %v1791
    %1841 = vmatmul.bf16.gmra.mxu0 %v1822
    %v1842 = vpop.f32.mrf.mxu0
    %v1843 = vadd.f32 0.0, %v1842
    %v1844 = vpop.f32.mrf.mxu0
    %v1845 = vadd.f32 0.0, %v1844
    %1846 = vmatmul.bf16.gmra.mxu0 %v1825
    %v1847 = vpop.f32.mrf.mxu0
    %v1848 = vadd.f32 0.0, %v1847
    %v1849 = vpop.f32.mrf.mxu0
    %v1850 = vadd.f32 0.0, %v1849
    %1851 = vmatmul.bf16.gmra.mxu0 %v1828
    %v1852 = vpop.f32.mrf.mxu0
    %v1853 = vadd.f32 0.0, %v1852
    %v1854 = vpop.f32.mrf.mxu0
    %v1855 = vadd.f32 0.0, %v1854
    %1856 = vmatmul.bf16.gmra.mxu0 %v1831
    %v1857 = vpop.f32.mrf.mxu0
    %v1858 = vadd.f32 0.0, %v1857
    %v1859 = vpop.f32.mrf.mxu0
    %v1860 = vadd.f32 0.0, %v1859
    %1861 = vdwg.mxu0
    %v1862 = vadd.f32 %v1761, %v1843
    %v1863 = vadd.f32 %v1763, %v1845
    %v1864 = vadd.f32 %v1766, %v1848
    %v1865 = vadd.f32 %v1768, %v1850
    %v1866 = vadd.f32 %v1771, %v1853
    %v1867 = vadd.f32 %v1773, %v1855
    %v1868 = vadd.f32 %v1776, %v1858
    %v1869 = vadd.f32 %v1778, %v1860
    %1870 = vrot.lane.b32.xlu0 %v1615, 1
    %v1871 = vpop.permute.xlu0 %1870
    %1872 = vrot.lane.b32.xlu0 %v1616, 1
    %v1873 = vpop.permute.xlu0 %1872
    %s1874 = scalar_lea.vmem %s2, 3
    %v1875 = vld [vmem:[%s1874] sm:$0x1]
    %v1877 = vperm.slane %v1875, 0
    %v1879 = vmul.f32 %v1871, %v1877
    %v1880 = vmul.f32 %v1873, %v1877
    %v1881 = vpack.c.bf16 %v1880, %v1879
    %s1882 = scalar_lea.vmem %s12, 96
    %v1883 = vld [vmem:[%s1882] sm:$0xf]
    %v1884 = vld [vmem:[%s1882 + $0x4] sm:$0xf]
    %v1885 = vld [vmem:[%s1882 + $0x8] sm:$0xf]
    %v1886 = vld [vmem:[%s1882 + $0xc] sm:$0xf]
    %v1887 = vld [vmem:[%s1882 + $0x10] sm:$0xf]
    %v1888 = vld [vmem:[%s1882 + $0x14] sm:$0xf]
    %v1889 = vld [vmem:[%s1882 + $0x18] sm:$0xf]
    %v1890 = vld [vmem:[%s1882 + $0x1c] sm:$0xf]
    %v1899 = vunpack.c.l.b16 %v1883
    %v1900 = vunpack.c.l.b16 %v1884
    %v1901 = vunpack.c.l.b16 %v1885
    %v1902 = vunpack.c.l.b16 %v1886
    %v1903 = vunpack.c.l.b16 %v1887
    %v1904 = vunpack.c.l.b16 %v1888
    %v1905 = vunpack.c.l.b16 %v1889
    %v1906 = vunpack.c.l.b16 %v1890
    %v1907 = vpack.c.b16 %v1900, %v1899
    %v1908 = vpack.c.b16 %v1902, %v1901
    %v1909 = vpack.c.b16 %v1904, %v1903
    %v1910 = vpack.c.b16 %v1906, %v1905
    %v1912 = vsel %vm1677, %v1907, 0
    %v1915 = vsel %vm1677, %v1908, 0
    %v1918 = vsel %vm1677, %v1909, 0
    %v1921 = vsel %vm1677, %v1910, 0
    %1923 = vmatpush.bf16.msra.mxu0 0
    %1924 = vmatpush.bf16.msra.mxu0 0
    %1925 = vmatpush.bf16.msra.mxu0 0
    %1926 = vmatpush.bf16.msra.mxu0 0
    %1927 = vmatpush.bf16.msra.mxu0 0
    %1928 = vmatpush.bf16.msra.mxu0 0
    %1929 = vmatpush.bf16.msra.mxu0 0
    %1930 = vmatpush.bf16.msra.mxu0 %v1881
    %1931 = vmatmul.bf16.gmra.mxu0 %v1912
    %v1932 = vpop.f32.mrf.mxu0
    %v1933 = vadd.f32 0.0, %v1932
    %v1934 = vpop.f32.mrf.mxu0
    %v1935 = vadd.f32 0.0, %v1934
    %1936 = vmatmul.bf16.gmra.mxu0 %v1915
    %v1937 = vpop.f32.mrf.mxu0
    %v1938 = vadd.f32 0.0, %v1937
    %v1939 = vpop.f32.mrf.mxu0
    %v1940 = vadd.f32 0.0, %v1939
    %1941 = vmatmul.bf16.gmra.mxu0 %v1918
    %v1942 = vpop.f32.mrf.mxu0
    %v1943 = vadd.f32 0.0, %v1942
    %v1944 = vpop.f32.mrf.mxu0
    %v1945 = vadd.f32 0.0, %v1944
    %1946 = vmatmul.bf16.gmra.mxu0 %v1921
    %v1947 = vpop.f32.mrf.mxu0
    %v1948 = vadd.f32 0.0, %v1947
    %v1949 = vpop.f32.mrf.mxu0
    %v1950 = vadd.f32 0.0, %v1949
    %1951 = vdwg.mxu0
    %v1952 = vadd.f32 %v1862, %v1933
    %v1953 = vadd.f32 %v1863, %v1935
    %v1954 = vadd.f32 %v1864, %v1938
    %v1955 = vadd.f32 %v1865, %v1940
    %v1956 = vadd.f32 %v1866, %v1943
    %v1957 = vadd.f32 %v1867, %v1945
    %v1958 = vadd.f32 %v1868, %v1948
    %v1959 = vadd.f32 %v1869, %v1950
    %v1960 = vpack.c.bf16 %v1616, %v1615
    %s1961 = scalar_lea.vmem %s12, 128
    %v1962 = vld [vmem:[%s1961] sm:$0xf]
    %v1963 = vld [vmem:[%s1961 + $0x4] sm:$0xf]
    %v1964 = vld [vmem:[%s1961 + $0x8] sm:$0xf]
    %v1965 = vld [vmem:[%s1961 + $0xc] sm:$0xf]
    %v1966 = vld [vmem:[%s1961 + $0x10] sm:$0xf]
    %v1967 = vld [vmem:[%s1961 + $0x14] sm:$0xf]
    %v1968 = vld [vmem:[%s1961 + $0x18] sm:$0xf]
    %v1969 = vld [vmem:[%s1961 + $0x1c] sm:$0xf]
    %v1978 = vunpack.c.l.b16 %v1962
    %v1979 = vunpack.c.l.b16 %v1963
    %v1980 = vunpack.c.l.b16 %v1964
    %v1981 = vunpack.c.l.b16 %v1965
    %v1982 = vunpack.c.l.b16 %v1966
    %v1983 = vunpack.c.l.b16 %v1967
    %v1984 = vunpack.c.l.b16 %v1968
    %v1985 = vunpack.c.l.b16 %v1969
    %v1986 = vpack.c.b16 %v1979, %v1978
    %v1987 = vpack.c.b16 %v1981, %v1980
    %v1988 = vpack.c.b16 %v1983, %v1982
    %v1989 = vpack.c.b16 %v1985, %v1984
    %v1991 = vsel %vm1677, %v1986, 0
    %v1994 = vsel %vm1677, %v1987, 0
    %v1997 = vsel %vm1677, %v1988, 0
    %v2000 = vsel %vm1677, %v1989, 0
    %2002 = vmatpush.bf16.msra.mxu0 0
    %2003 = vmatpush.bf16.msra.mxu0 0
    %2004 = vmatpush.bf16.msra.mxu0 0
    %2005 = vmatpush.bf16.msra.mxu0 0
    %2006 = vmatpush.bf16.msra.mxu0 0
    %2007 = vmatpush.bf16.msra.mxu0 0
    %2008 = vmatpush.bf16.msra.mxu0 0
    %2009 = vmatpush.bf16.msra.mxu0 %v1960
    %2010 = vmatmul.bf16.gmra.mxu0 %v1991
    %v2011 = vpop.f32.mrf.mxu0
    %v2012 = vadd.f32 0.0, %v2011
    %v2013 = vpop.f32.mrf.mxu0
    %v2014 = vadd.f32 0.0, %v2013
    %2015 = vmatmul.bf16.gmra.mxu0 %v1994
    %v2016 = vpop.f32.mrf.mxu0
    %v2017 = vadd.f32 0.0, %v2016
    %v2018 = vpop.f32.mrf.mxu0
    %v2019 = vadd.f32 0.0, %v2018
    %2020 = vmatmul.bf16.gmra.mxu0 %v1997
    %v2021 = vpop.f32.mrf.mxu0
    %v2022 = vadd.f32 0.0, %v2021
    %v2023 = vpop.f32.mrf.mxu0
    %v2024 = vadd.f32 0.0, %v2023
    %2025 = vmatmul.bf16.gmra.mxu0 %v2000
    %v2026 = vpop.f32.mrf.mxu0
    %v2027 = vadd.f32 0.0, %v2026
    %v2028 = vpop.f32.mrf.mxu0
    %v2029 = vadd.f32 0.0, %v2028
    %2030 = vdwg.mxu0
    %v2031 = vadd.f32 %v1952, %v2012
    %v2032 = vadd.f32 %v1953, %v2014
    %v2033 = vadd.f32 %v1954, %v2017
    %v2034 = vadd.f32 %v1955, %v2019
    %v2035 = vadd.f32 %v1956, %v2022
    %v2036 = vadd.f32 %v1957, %v2024
    %v2037 = vadd.f32 %v1958, %v2027
    %v2038 = vadd.f32 %v1959, %v2029
    %2039 = vrot.lane.b32.xlu0 %v1615, 127
    %v2040 = vpop.permute.xlu0 %2039
    %2041 = vrot.lane.b32.xlu0 %v1616, 127
    %v2042 = vpop.permute.xlu0 %2041
    %s2043 = scalar_lea.vmem %s2, 5
    %v2044 = vld [vmem:[%s2043] sm:$0x1]
    %v2046 = vperm.slane %v2044, 0
    %v2048 = vmul.f32 %v2040, %v2046
    %v2049 = vmul.f32 %v2042, %v2046
    %v2050 = vpack.c.bf16 %v2049, %v2048
    %s2051 = scalar_lea.vmem %s12, 160
    %v2052 = vld [vmem:[%s2051] sm:$0xf]
    %v2053 = vld [vmem:[%s2051 + $0x4] sm:$0xf]
    %v2054 = vld [vmem:[%s2051 + $0x8] sm:$0xf]
    %v2055 = vld [vmem:[%s2051 + $0xc] sm:$0xf]
    %v2056 = vld [vmem:[%s2051 + $0x10] sm:$0xf]
    %v2057 = vld [vmem:[%s2051 + $0x14] sm:$0xf]
    %v2058 = vld [vmem:[%s2051 + $0x18] sm:$0xf]
    %v2059 = vld [vmem:[%s2051 + $0x1c] sm:$0xf]
    %v2068 = vunpack.c.l.b16 %v2052
    %v2069 = vunpack.c.l.b16 %v2053
    %v2070 = vunpack.c.l.b16 %v2054
    %v2071 = vunpack.c.l.b16 %v2055
    %v2072 = vunpack.c.l.b16 %v2056
    %v2073 = vunpack.c.l.b16 %v2057
    %v2074 = vunpack.c.l.b16 %v2058
    %v2075 = vunpack.c.l.b16 %v2059
    %v2076 = vpack.c.b16 %v2069, %v2068
    %v2077 = vpack.c.b16 %v2071, %v2070
    %v2078 = vpack.c.b16 %v2073, %v2072
    %v2079 = vpack.c.b16 %v2075, %v2074
    %v2081 = vsel %vm1677, %v2076, 0
    %v2084 = vsel %vm1677, %v2077, 0
    %v2087 = vsel %vm1677, %v2078, 0
    %v2090 = vsel %vm1677, %v2079, 0
    %2092 = vmatpush.bf16.msra.mxu0 0
    %2093 = vmatpush.bf16.msra.mxu0 0
    %2094 = vmatpush.bf16.msra.mxu0 0
    %2095 = vmatpush.bf16.msra.mxu0 0
    %2096 = vmatpush.bf16.msra.mxu0 0
    %2097 = vmatpush.bf16.msra.mxu0 0
    %2098 = vmatpush.bf16.msra.mxu0 0
    %2099 = vmatpush.bf16.msra.mxu0 %v2050
    %2100 = vmatmul.bf16.gmra.mxu0 %v2081
    %v2101 = vpop.f32.mrf.mxu0
    %v2102 = vadd.f32 0.0, %v2101
    %v2103 = vpop.f32.mrf.mxu0
    %v2104 = vadd.f32 0.0, %v2103
    %2105 = vmatmul.bf16.gmra.mxu0 %v2084
    %v2106 = vpop.f32.mrf.mxu0
    %v2107 = vadd.f32 0.0, %v2106
    %v2108 = vpop.f32.mrf.mxu0
    %v2109 = vadd.f32 0.0, %v2108
    %2110 = vmatmul.bf16.gmra.mxu0 %v2087
    %v2111 = vpop.f32.mrf.mxu0
    %v2112 = vadd.f32 0.0, %v2111
    %v2113 = vpop.f32.mrf.mxu0
    %v2114 = vadd.f32 0.0, %v2113
    %2115 = vmatmul.bf16.gmra.mxu0 %v2090
    %v2116 = vpop.f32.mrf.mxu0
    %v2117 = vadd.f32 0.0, %v2116
    %v2118 = vpop.f32.mrf.mxu0
    %v2119 = vadd.f32 0.0, %v2118
    %2120 = vdwg.mxu0
    %v2121 = vadd.f32 %v2031, %v2102
    %v2122 = vadd.f32 %v2032, %v2104
    %v2123 = vadd.f32 %v2033, %v2107
    %v2124 = vadd.f32 %v2034, %v2109
    %v2125 = vadd.f32 %v2035, %v2112
    %v2126 = vadd.f32 %v2036, %v2114
    %v2127 = vadd.f32 %v2037, %v2117
    %v2128 = vadd.f32 %v2038, %v2119
    %2129 = vrot.lane.b32.xlu0 %v1615, 121
    %v2130 = vpop.permute.xlu0 %2129
    %2131 = vrot.lane.b32.xlu0 %v1616, 121
    %v2132 = vpop.permute.xlu0 %2131
    %s2133 = scalar_lea.vmem %s2, 6
    %v2134 = vld [vmem:[%s2133] sm:$0x1]
    %v2136 = vperm.slane %v2134, 0
    %v2138 = vmul.f32 %v2130, %v2136
    %v2139 = vmul.f32 %v2132, %v2136
    %v2140 = vpack.c.bf16 %v2139, %v2138
    %s2141 = scalar_lea.vmem %s12, 192
    %v2142 = vld [vmem:[%s2141] sm:$0xf]
    %v2143 = vld [vmem:[%s2141 + $0x4] sm:$0xf]
    %v2144 = vld [vmem:[%s2141 + $0x8] sm:$0xf]
    %v2145 = vld [vmem:[%s2141 + $0xc] sm:$0xf]
    %v2146 = vld [vmem:[%s2141 + $0x10] sm:$0xf]
    %v2147 = vld [vmem:[%s2141 + $0x14] sm:$0xf]
    %v2148 = vld [vmem:[%s2141 + $0x18] sm:$0xf]
    %v2149 = vld [vmem:[%s2141 + $0x1c] sm:$0xf]
    %v2158 = vunpack.c.l.b16 %v2142
    %v2159 = vunpack.c.l.b16 %v2143
    %v2160 = vunpack.c.l.b16 %v2144
    %v2161 = vunpack.c.l.b16 %v2145
    %v2162 = vunpack.c.l.b16 %v2146
    %v2163 = vunpack.c.l.b16 %v2147
    %v2164 = vunpack.c.l.b16 %v2148
    %v2165 = vunpack.c.l.b16 %v2149
    %v2166 = vpack.c.b16 %v2159, %v2158
    %v2167 = vpack.c.b16 %v2161, %v2160
    %v2168 = vpack.c.b16 %v2163, %v2162
    %v2169 = vpack.c.b16 %v2165, %v2164
    %v2171 = vsel %vm1677, %v2166, 0
    %v2174 = vsel %vm1677, %v2167, 0
    %v2177 = vsel %vm1677, %v2168, 0
    %v2180 = vsel %vm1677, %v2169, 0
    %2182 = vmatpush.bf16.msra.mxu0 0
    %2183 = vmatpush.bf16.msra.mxu0 0
    %2184 = vmatpush.bf16.msra.mxu0 0
    %2185 = vmatpush.bf16.msra.mxu0 0
    %2186 = vmatpush.bf16.msra.mxu0 0
    %2187 = vmatpush.bf16.msra.mxu0 0
    %2188 = vmatpush.bf16.msra.mxu0 0
    %2189 = vmatpush.bf16.msra.mxu0 %v2140
    %2190 = vmatmul.bf16.gmra.mxu0 %v2171
    %v2191 = vpop.f32.mrf.mxu0
    %v2192 = vadd.f32 0.0, %v2191
    %v2193 = vpop.f32.mrf.mxu0
    %v2194 = vadd.f32 0.0, %v2193
    %2195 = vmatmul.bf16.gmra.mxu0 %v2174
    %v2196 = vpop.f32.mrf.mxu0
    %v2197 = vadd.f32 0.0, %v2196
    %v2198 = vpop.f32.mrf.mxu0
    %v2199 = vadd.f32 0.0, %v2198
    %2200 = vmatmul.bf16.gmra.mxu0 %v2177
    %v2201 = vpop.f32.mrf.mxu0
    %v2202 = vadd.f32 0.0, %v2201
    %v2203 = vpop.f32.mrf.mxu0
    %v2204 = vadd.f32 0.0, %v2203
    %2205 = vmatmul.bf16.gmra.mxu0 %v2180
    %v2206 = vpop.f32.mrf.mxu0
    %v2207 = vadd.f32 0.0, %v2206
    %v2208 = vpop.f32.mrf.mxu0
    %v2209 = vadd.f32 0.0, %v2208
    %2210 = vdwg.mxu0
    %v2211 = vadd.f32 %v2121, %v2192
    %v2212 = vadd.f32 %v2122, %v2194
    %v2213 = vadd.f32 %v2123, %v2197
    %v2214 = vadd.f32 %v2124, %v2199
    %v2215 = vadd.f32 %v2125, %v2202
    %v2216 = vadd.f32 %v2126, %v2204
    %v2217 = vadd.f32 %v2127, %v2207
    %v2218 = vadd.f32 %v2128, %v2209
    %2219 = vrot.lane.b32.xlu0 %v1615, 120
    %v2220 = vpop.permute.xlu0 %2219
    %2221 = vrot.lane.b32.xlu0 %v1616, 120
    %v2222 = vpop.permute.xlu0 %2221
    %s2223 = scalar_lea.vmem %s2, 7
    %v2224 = vld [vmem:[%s2223] sm:$0x1]
    %v2226 = vperm.slane %v2224, 0
    %v2228 = vmul.f32 %v2220, %v2226
    %v2229 = vmul.f32 %v2222, %v2226
    %v2230 = vpack.c.bf16 %v2229, %v2228
    %s2231 = scalar_lea.vmem %s12, 224
    %v2232 = vld [vmem:[%s2231] sm:$0xf]
    %v2233 = vld [vmem:[%s2231 + $0x4] sm:$0xf]
    %v2234 = vld [vmem:[%s2231 + $0x8] sm:$0xf]
    %v2235 = vld [vmem:[%s2231 + $0xc] sm:$0xf]
    %v2236 = vld [vmem:[%s2231 + $0x10] sm:$0xf]
    %v2237 = vld [vmem:[%s2231 + $0x14] sm:$0xf]
    %v2238 = vld [vmem:[%s2231 + $0x18] sm:$0xf]
    %v2239 = vld [vmem:[%s2231 + $0x1c] sm:$0xf]
    %v2248 = vunpack.c.l.b16 %v2232
    %v2249 = vunpack.c.l.b16 %v2233
    %v2250 = vunpack.c.l.b16 %v2234
    %v2251 = vunpack.c.l.b16 %v2235
    %v2252 = vunpack.c.l.b16 %v2236
    %v2253 = vunpack.c.l.b16 %v2237
    %v2254 = vunpack.c.l.b16 %v2238
    %v2255 = vunpack.c.l.b16 %v2239
    %v2256 = vpack.c.b16 %v2249, %v2248
    %v2257 = vpack.c.b16 %v2251, %v2250
    %v2258 = vpack.c.b16 %v2253, %v2252
    %v2259 = vpack.c.b16 %v2255, %v2254
    %v2261 = vsel %vm1677, %v2256, 0
    %v2264 = vsel %vm1677, %v2257, 0
    %v2267 = vsel %vm1677, %v2258, 0
    %v2270 = vsel %vm1677, %v2259, 0
    %2272 = vmatpush.bf16.msra.mxu0 0
    %2273 = vmatpush.bf16.msra.mxu0 0
    %2274 = vmatpush.bf16.msra.mxu0 0
    %2275 = vmatpush.bf16.msra.mxu0 0
    %2276 = vmatpush.bf16.msra.mxu0 0
    %2277 = vmatpush.bf16.msra.mxu0 0
    %2278 = vmatpush.bf16.msra.mxu0 0
    %2279 = vmatpush.bf16.msra.mxu0 %v2230
    %2280 = vmatmul.bf16.gmra.mxu0 %v2261
    %v2281 = vpop.f32.mrf.mxu0
    %v2282 = vadd.f32 0.0, %v2281
    %v2283 = vpop.f32.mrf.mxu0
    %v2284 = vadd.f32 0.0, %v2283
    %2285 = vmatmul.bf16.gmra.mxu0 %v2264
    %v2286 = vpop.f32.mrf.mxu0
    %v2287 = vadd.f32 0.0, %v2286
    %v2288 = vpop.f32.mrf.mxu0
    %v2289 = vadd.f32 0.0, %v2288
    %2290 = vmatmul.bf16.gmra.mxu0 %v2267
    %v2291 = vpop.f32.mrf.mxu0
    %v2292 = vadd.f32 0.0, %v2291
    %v2293 = vpop.f32.mrf.mxu0
    %v2294 = vadd.f32 0.0, %v2293
    %2295 = vmatmul.bf16.gmra.mxu0 %v2270
    %v2296 = vpop.f32.mrf.mxu0
    %v2297 = vadd.f32 0.0, %v2296
    %v2298 = vpop.f32.mrf.mxu0
    %v2299 = vadd.f32 0.0, %v2298
    %2300 = vdwg.mxu0
    %v2301 = vadd.f32 %v2211, %v2282
    %v2302 = vadd.f32 %v2212, %v2284
    %v2303 = vadd.f32 %v2213, %v2287
    %v2304 = vadd.f32 %v2214, %v2289
    %v2305 = vadd.f32 %v2215, %v2292
    %v2306 = vadd.f32 %v2216, %v2294
    %v2307 = vadd.f32 %v2217, %v2297
    %v2308 = vadd.f32 %v2218, %v2299
    %2309 = vrot.lane.b32.xlu0 %v1615, 119
    %v2310 = vpop.permute.xlu0 %2309
    %2311 = vrot.lane.b32.xlu0 %v1616, 119
    %v2312 = vpop.permute.xlu0 %2311
    %s2313 = scalar_lea.vmem %s2, 8
    %v2314 = vld [vmem:[%s2313] sm:$0x1]
    %v2316 = vperm.slane %v2314, 0
    %v2318 = vmul.f32 %v2310, %v2316
    %v2319 = vmul.f32 %v2312, %v2316
    %v2320 = vpack.c.bf16 %v2319, %v2318
    %s2321 = scalar_lea.vmem %s12, 256
    %v2322 = vld [vmem:[%s2321] sm:$0xf]
    %v2323 = vld [vmem:[%s2321 + $0x4] sm:$0xf]
    %v2324 = vld [vmem:[%s2321 + $0x8] sm:$0xf]
    %v2325 = vld [vmem:[%s2321 + $0xc] sm:$0xf]
    %v2326 = vld [vmem:[%s2321 + $0x10] sm:$0xf]
    %v2327 = vld [vmem:[%s2321 + $0x14] sm:$0xf]
    %v2328 = vld [vmem:[%s2321 + $0x18] sm:$0xf]
    %v2329 = vld [vmem:[%s2321 + $0x1c] sm:$0xf]
    %v2338 = vunpack.c.l.b16 %v2322
    %v2339 = vunpack.c.l.b16 %v2323
    %v2340 = vunpack.c.l.b16 %v2324
    %v2341 = vunpack.c.l.b16 %v2325
    %v2342 = vunpack.c.l.b16 %v2326
    %v2343 = vunpack.c.l.b16 %v2327
    %v2344 = vunpack.c.l.b16 %v2328
    %v2345 = vunpack.c.l.b16 %v2329
    %v2346 = vpack.c.b16 %v2339, %v2338
    %v2347 = vpack.c.b16 %v2341, %v2340
    %v2348 = vpack.c.b16 %v2343, %v2342
    %v2349 = vpack.c.b16 %v2345, %v2344
    %v2351 = vsel %vm1677, %v2346, 0
    %v2354 = vsel %vm1677, %v2347, 0
    %v2357 = vsel %vm1677, %v2348, 0
    %v2360 = vsel %vm1677, %v2349, 0
    %2362 = vmatpush.bf16.msra.mxu0 0
    %2363 = vmatpush.bf16.msra.mxu0 0
    %2364 = vmatpush.bf16.msra.mxu0 0
    %2365 = vmatpush.bf16.msra.mxu0 0
    %2366 = vmatpush.bf16.msra.mxu0 0
    %2367 = vmatpush.bf16.msra.mxu0 0
    %2368 = vmatpush.bf16.msra.mxu0 0
    %2369 = vmatpush.bf16.msra.mxu0 %v2320
    %2370 = vmatmul.bf16.gmra.mxu0 %v2351
    %v2371 = vpop.f32.mrf.mxu0
    %v2372 = vadd.f32 0.0, %v2371
    %v2373 = vpop.f32.mrf.mxu0
    %v2374 = vadd.f32 0.0, %v2373
    %2375 = vmatmul.bf16.gmra.mxu0 %v2354
    %v2376 = vpop.f32.mrf.mxu0
    %v2377 = vadd.f32 0.0, %v2376
    %v2378 = vpop.f32.mrf.mxu0
    %v2379 = vadd.f32 0.0, %v2378
    %2380 = vmatmul.bf16.gmra.mxu0 %v2357
    %v2381 = vpop.f32.mrf.mxu0
    %v2382 = vadd.f32 0.0, %v2381
    %v2383 = vpop.f32.mrf.mxu0
    %v2384 = vadd.f32 0.0, %v2383
    %2385 = vmatmul.bf16.gmra.mxu0 %v2360
    %v2386 = vpop.f32.mrf.mxu0
    %v2387 = vadd.f32 0.0, %v2386
    %v2388 = vpop.f32.mrf.mxu0
    %v2389 = vadd.f32 0.0, %v2388
    %2390 = vdwg.mxu0
    %v2391 = vadd.f32 %v2301, %v2372
    %v2392 = vadd.f32 %v2302, %v2374
    %v2393 = vadd.f32 %v2303, %v2377
    %v2394 = vadd.f32 %v2304, %v2379
    %v2395 = vadd.f32 %v2305, %v2382
    %v2396 = vadd.f32 %v2306, %v2384
    %v2397 = vadd.f32 %v2307, %v2387
    %v2398 = vadd.f32 %v2308, %v2389
    %v2399 = vpack.c.bf16 %v2392, %v2391
    %v2400 = vpack.c.bf16 %v2394, %v2393
    %v2401 = vpack.c.bf16 %v2396, %v2395
    %v2402 = vpack.c.bf16 %v2398, %v2397
    %v2403 = vld [vmem:[%s6] sm:$0xf]
    %v2404 = vld [vmem:[%s6 + $0x4] sm:$0xf]
    %v2405 = vld [vmem:[%s6 + $0x8] sm:$0xf]
    %v2406 = vld [vmem:[%s6 + $0xc] sm:$0xf]
    %v2407 = vld [vmem:[%s6 + $0x10] sm:$0xf]
    %v2408 = vld [vmem:[%s6 + $0x14] sm:$0xf]
    %v2409 = vld [vmem:[%s6 + $0x18] sm:$0xf]
    %v2410 = vld [vmem:[%s6 + $0x1c] sm:$0xf]
    %v2411 = vld [vmem:[%s6 + $0x20] sm:$0xf]
    %v2412 = vld [vmem:[%s6 + $0x24] sm:$0xf]
    %v2413 = vld [vmem:[%s6 + $0x28] sm:$0xf]
    %v2414 = vld [vmem:[%s6 + $0x2c] sm:$0xf]
    %v2415 = vld [vmem:[%s6 + $0x30] sm:$0xf]
    %v2416 = vld [vmem:[%s6 + $0x34] sm:$0xf]
    %v2417 = vld [vmem:[%s6 + $0x38] sm:$0xf]
    %v2418 = vld [vmem:[%s6 + $0x3c] sm:$0xf]
    %v2435 = vunpack.c.l.b16 %v2403
    %v2436 = vunpack.c.l.b16 %v2404
    %v2437 = vunpack.c.l.b16 %v2405
    %v2438 = vunpack.c.l.b16 %v2406
    %v2439 = vunpack.c.l.b16 %v2407
    %v2440 = vunpack.c.l.b16 %v2408
    %v2441 = vunpack.c.l.b16 %v2409
    %v2442 = vunpack.c.l.b16 %v2410
    %v2443 = vunpack.c.l.b16 %v2411
    %v2444 = vunpack.c.l.b16 %v2412
    %v2445 = vunpack.c.l.b16 %v2413
    %v2446 = vunpack.c.l.b16 %v2414
    %v2447 = vunpack.c.l.b16 %v2415
    %v2448 = vunpack.c.l.b16 %v2416
    %v2449 = vunpack.c.l.b16 %v2417
    %v2450 = vunpack.c.l.b16 %v2418
    %v2451 = vpack.c.b16 %v2436, %v2435
    %v2452 = vpack.c.b16 %v2438, %v2437
    %v2453 = vpack.c.b16 %v2440, %v2439
    %v2454 = vpack.c.b16 %v2442, %v2441
    %v2455 = vpack.c.b16 %v2444, %v2443
    %v2456 = vpack.c.b16 %v2446, %v2445
    %v2457 = vpack.c.b16 %v2448, %v2447
    %v2458 = vpack.c.b16 %v2450, %v2449
    %2467 = vmatpush.bf16.msra.mxu0 %v2458
    %2468 = vmatpush.bf16.msra.mxu0 %v2457
    %2469 = vmatpush.bf16.msra.mxu0 %v2456
    %2470 = vmatpush.bf16.msra.mxu0 %v2455
    %2471 = vmatpush.bf16.msra.mxu0 %v2454
    %2472 = vmatpush.bf16.msra.mxu0 %v2453
    %2473 = vmatpush.bf16.msra.mxu0 %v2452
    %2474 = vmatpush.bf16.msra.mxu0 %v2451
    %2475 = vmatmul.bf16.gmra.mxu0 %v2399
    %v2476 = vpop.f32.mrf.mxu0
    %v2477 = vadd.f32 0.0, %v2476
    %v2478 = vpop.f32.mrf.mxu0
    %v2479 = vadd.f32 0.0, %v2478
    %2480 = vmatmul.bf16.gmra.mxu0 %v2400
    %v2481 = vpop.f32.mrf.mxu0
    %v2482 = vadd.f32 0.0, %v2481
    %v2483 = vpop.f32.mrf.mxu0
    %v2484 = vadd.f32 0.0, %v2483
    %2485 = vmatmul.bf16.gmra.mxu0 %v2401
    %v2486 = vpop.f32.mrf.mxu0
    %v2487 = vadd.f32 0.0, %v2486
    %v2488 = vpop.f32.mrf.mxu0
    %v2489 = vadd.f32 0.0, %v2488
    %2490 = vmatmul.bf16.gmra.mxu0 %v2402
    %v2491 = vpop.f32.mrf.mxu0
    %v2492 = vadd.f32 0.0, %v2491
    %v2493 = vpop.f32.mrf.mxu0
    %v2494 = vadd.f32 0.0, %v2493
    %2495 = vdwg.mxu0
    %vm2496 = vcmask 261120
    %v2497 = vsel %vm2496, %v2477, 0.0
    %2498 = vadd.xlane.f32.xlu0 %v2497
    %v2499 = vpop.xlane.xlu0 %2498
    %v2500 = vsel %vm2496, %v2479, 0.0
    %2501 = vadd.xlane.f32.xlu0 %v2500
    %v2502 = vpop.xlane.xlu0 %2501
    %v2503 = vsel %vm2496, %v2482, 0.0
    %2504 = vadd.xlane.f32.xlu0 %v2503
    %v2505 = vpop.xlane.xlu0 %2504
    %v2506 = vsel %vm2496, %v2484, 0.0
    %2507 = vadd.xlane.f32.xlu0 %v2506
    %v2508 = vpop.xlane.xlu0 %2507
    %v2509 = vsel %vm2496, %v2487, 0.0
    %2510 = vadd.xlane.f32.xlu0 %v2509
    %v2511 = vpop.xlane.xlu0 %2510
    %v2512 = vsel %vm2496, %v2489, 0.0
    %2513 = vadd.xlane.f32.xlu0 %v2512
    %v2514 = vpop.xlane.xlu0 %2513
    %v2515 = vsel %vm2496, %v2492, 0.0
    %2516 = vadd.xlane.f32.xlu0 %v2515
    %v2517 = vpop.xlane.xlu0 %2516
    %v2518 = vsel %vm2496, %v2494, 0.0
    %2519 = vadd.xlane.f32.xlu0 %v2518
    %v2520 = vpop.xlane.xlu0 %2519
    %v2521 = vmul.f32 %v2477, %v2477
    %v2522 = vmul.f32 %v2479, %v2479
    %v2523 = vmul.f32 %v2482, %v2482
    %v2524 = vmul.f32 %v2484, %v2484
    %v2525 = vmul.f32 %v2487, %v2487
    %v2526 = vmul.f32 %v2489, %v2489
    %v2527 = vmul.f32 %v2492, %v2492
    %v2528 = vmul.f32 %v2494, %v2494
    %v2529 = vsel %vm2496, %v2521, 0.0
    %2530 = vadd.xlane.f32.xlu0 %v2529
    %v2531 = vpop.xlane.xlu0 %2530
    %v2532 = vsel %vm2496, %v2522, 0.0
    %2533 = vadd.xlane.f32.xlu0 %v2532
    %v2534 = vpop.xlane.xlu0 %2533
    %v2535 = vsel %vm2496, %v2523, 0.0
    %2536 = vadd.xlane.f32.xlu0 %v2535
    %v2537 = vpop.xlane.xlu0 %2536
    %v2538 = vsel %vm2496, %v2524, 0.0
    %2539 = vadd.xlane.f32.xlu0 %v2538
    %v2540 = vpop.xlane.xlu0 %2539
    %v2541 = vsel %vm2496, %v2525, 0.0
    %2542 = vadd.xlane.f32.xlu0 %v2541
    %v2543 = vpop.xlane.xlu0 %2542
    %v2544 = vsel %vm2496, %v2526, 0.0
    %2545 = vadd.xlane.f32.xlu0 %v2544
    %v2546 = vpop.xlane.xlu0 %2545
    %v2547 = vsel %vm2496, %v2527, 0.0
    %2548 = vadd.xlane.f32.xlu0 %v2547
    %v2549 = vpop.xlane.xlu0 %2548
    %v2550 = vsel %vm2496, %v2528, 0.0
    %2551 = vadd.xlane.f32.xlu0 %v2550
    %v2552 = vpop.xlane.xlu0 %2551
    %v2553 = vmul.f32 %v2499, 0.03125
    %v2554 = vmul.f32 %v2502, 0.03125
    %v2555 = vmul.f32 %v2505, 0.03125
    %v2556 = vmul.f32 %v2508, 0.03125
    %v2557 = vmul.f32 %v2511, 0.03125
    %v2558 = vmul.f32 %v2514, 0.03125
    %v2559 = vmul.f32 %v2517, 0.03125
    %v2560 = vmul.f32 %v2520, 0.03125
    %v2561 = vmul.f32 %v2531, 0.03125
    %v2562 = vmul.f32 %v2534, 0.03125
    %v2563 = vmul.f32 %v2537, 0.03125
    %v2564 = vmul.f32 %v2540, 0.03125
    %v2565 = vmul.f32 %v2543, 0.03125
    %v2566 = vmul.f32 %v2546, 0.03125
    %v2567 = vmul.f32 %v2549, 0.03125
    %v2568 = vmul.f32 %v2552, 0.03125
    %v2569 = vmul.f32 %v2553, %v2553
    %v2570 = vmul.f32 %v2554, %v2554
    %v2571 = vmul.f32 %v2555, %v2555
    %v2572 = vmul.f32 %v2556, %v2556
    %v2573 = vmul.f32 %v2557, %v2557
    %v2574 = vmul.f32 %v2558, %v2558
    %v2575 = vmul.f32 %v2559, %v2559
    %v2576 = vmul.f32 %v2560, %v2560
    %v2577 = vsub.f32 %v2561, %v2569
    %v2578 = vsub.f32 %v2562, %v2570
    %v2579 = vsub.f32 %v2563, %v2571
    %v2580 = vsub.f32 %v2564, %v2572
    %v2581 = vsub.f32 %v2565, %v2573
    %v2582 = vsub.f32 %v2566, %v2574
    %v2583 = vsub.f32 %v2567, %v2575
    %v2584 = vsub.f32 %v2568, %v2576
    %v2585 = vmax.f32 %v2577, 0.0
    %v2586 = vmax.f32 %v2578, 0.0
    %v2587 = vmax.f32 %v2579, 0.0
    %v2588 = vmax.f32 %v2580, 0.0
    %v2589 = vmax.f32 %v2581, 0.0
    %v2590 = vmax.f32 %v2582, 0.0
    %v2591 = vmax.f32 %v2583, 0.0
    %v2592 = vmax.f32 %v2584, 0.0
    %v2593 = vld [vmem:[%s13] sm:$0xff]
    %v2594 = vld [vmem:[%s13 + $0x8] sm:$0xff]
    %v2595 = vld [vmem:[%s13 + $0x10] sm:$0xff]
    %v2596 = vld [vmem:[%s13 + $0x18] sm:$0xff]
    %v2597 = vld [vmem:[%s13 + $0x20] sm:$0xff]
    %v2598 = vld [vmem:[%s13 + $0x28] sm:$0xff]
    %v2599 = vld [vmem:[%s13 + $0x30] sm:$0xff]
    %v2600 = vld [vmem:[%s13 + $0x38] sm:$0xff]
    %v2601 = vadd.f32 %v2585, 1e-05
    %v2602 = vadd.f32 %v2586, 1e-05
    %v2603 = vadd.f32 %v2587, 1e-05
    %v2604 = vadd.f32 %v2588, 1e-05
    %v2605 = vadd.f32 %v2589, 1e-05
    %v2606 = vadd.f32 %v2590, 1e-05
    %v2607 = vadd.f32 %v2591, 1e-05
    %v2608 = vadd.f32 %v2592, 1e-05
    %v2609 = vrsqrt.pop %v2601
    %v2610 = vmul.f32 %v2609, %v2601
    %v2611 = vmul.f32 %v2610, %v2609
    %v2612 = vmul.f32 0.5, %v2611
    %v2613 = vsub.f32 1.5, %v2612
    %v2614 = vmul.f32 %v2609, %v2613
    %vm2615 = vweird.f32 %v2601
    %vm2616 = vweird.f32 %v2609
    %vm2617 = vmor %vm2615, %vm2616
    %v2618 = vsel %vm2617, %v2609, %v2614
    %v2619 = vrsqrt.pop %v2602
    %v2620 = vmul.f32 %v2619, %v2602
    %v2621 = vmul.f32 %v2620, %v2619
    %v2622 = vmul.f32 0.5, %v2621
    %v2623 = vsub.f32 1.5, %v2622
    %v2624 = vmul.f32 %v2619, %v2623
    %vm2625 = vweird.f32 %v2602
    %vm2626 = vweird.f32 %v2619
    %vm2627 = vmor %vm2625, %vm2626
    %v2628 = vsel %vm2627, %v2619, %v2624
    %v2629 = vrsqrt.pop %v2603
    %v2630 = vmul.f32 %v2629, %v2603
    %v2631 = vmul.f32 %v2630, %v2629
    %v2632 = vmul.f32 0.5, %v2631
    %v2633 = vsub.f32 1.5, %v2632
    %v2634 = vmul.f32 %v2629, %v2633
    %vm2635 = vweird.f32 %v2603
    %vm2636 = vweird.f32 %v2629
    %vm2637 = vmor %vm2635, %vm2636
    %v2638 = vsel %vm2637, %v2629, %v2634
    %v2639 = vrsqrt.pop %v2604
    %v2640 = vmul.f32 %v2639, %v2604
    %v2641 = vmul.f32 %v2640, %v2639
    %v2642 = vmul.f32 0.5, %v2641
    %v2643 = vsub.f32 1.5, %v2642
    %v2644 = vmul.f32 %v2639, %v2643
    %vm2645 = vweird.f32 %v2604
    %vm2646 = vweird.f32 %v2639
    %vm2647 = vmor %vm2645, %vm2646
    %v2648 = vsel %vm2647, %v2639, %v2644
    %v2649 = vrsqrt.pop %v2605
    %v2650 = vmul.f32 %v2649, %v2605
    %v2651 = vmul.f32 %v2650, %v2649
    %v2652 = vmul.f32 0.5, %v2651
    %v2653 = vsub.f32 1.5, %v2652
    %v2654 = vmul.f32 %v2649, %v2653
    %vm2655 = vweird.f32 %v2605
    %vm2656 = vweird.f32 %v2649
    %vm2657 = vmor %vm2655, %vm2656
    %v2658 = vsel %vm2657, %v2649, %v2654
    %v2659 = vrsqrt.pop %v2606
    %v2660 = vmul.f32 %v2659, %v2606
    %v2661 = vmul.f32 %v2660, %v2659
    %v2662 = vmul.f32 0.5, %v2661
    %v2663 = vsub.f32 1.5, %v2662
    %v2664 = vmul.f32 %v2659, %v2663
    %vm2665 = vweird.f32 %v2606
    %vm2666 = vweird.f32 %v2659
    %vm2667 = vmor %vm2665, %vm2666
    %v2668 = vsel %vm2667, %v2659, %v2664
    %v2669 = vrsqrt.pop %v2607
    %v2670 = vmul.f32 %v2669, %v2607
    %v2671 = vmul.f32 %v2670, %v2669
    %v2672 = vmul.f32 0.5, %v2671
    %v2673 = vsub.f32 1.5, %v2672
    %v2674 = vmul.f32 %v2669, %v2673
    %vm2675 = vweird.f32 %v2607
    %vm2676 = vweird.f32 %v2669
    %vm2677 = vmor %vm2675, %vm2676
    %v2678 = vsel %vm2677, %v2669, %v2674
    %v2679 = vrsqrt.pop %v2608
    %v2680 = vmul.f32 %v2679, %v2608
    %v2681 = vmul.f32 %v2680, %v2679
    %v2682 = vmul.f32 0.5, %v2681
    %v2683 = vsub.f32 1.5, %v2682
    %v2684 = vmul.f32 %v2679, %v2683
    %vm2685 = vweird.f32 %v2608
    %vm2686 = vweird.f32 %v2679
    %vm2687 = vmor %vm2685, %vm2686
    %v2688 = vsel %vm2687, %v2679, %v2684
    %v2689 = vmul.f32 %v2593, %v2618
    %v2690 = vmul.f32 %v2594, %v2628
    %v2691 = vmul.f32 %v2595, %v2638
    %v2692 = vmul.f32 %v2596, %v2648
    %v2693 = vmul.f32 %v2597, %v2658
    %v2694 = vmul.f32 %v2598, %v2668
    %v2695 = vmul.f32 %v2599, %v2678
    %v2696 = vmul.f32 %v2600, %v2688
    %v2697 = vld [vmem:[%s14] sm:$0xff]
    %v2698 = vld [vmem:[%s14 + $0x8] sm:$0xff]
    %v2699 = vld [vmem:[%s14 + $0x10] sm:$0xff]
    %v2700 = vld [vmem:[%s14 + $0x18] sm:$0xff]
    %v2701 = vld [vmem:[%s14 + $0x20] sm:$0xff]
    %v2702 = vld [vmem:[%s14 + $0x28] sm:$0xff]
    %v2703 = vld [vmem:[%s14 + $0x30] sm:$0xff]
    %v2704 = vld [vmem:[%s14 + $0x38] sm:$0xff]
    %v2705 = vmul.f32 %v2553, %v2689
    %v2706 = vmul.f32 %v2554, %v2690
    %v2707 = vmul.f32 %v2555, %v2691
    %v2708 = vmul.f32 %v2556, %v2692
    %v2709 = vmul.f32 %v2557, %v2693
    %v2710 = vmul.f32 %v2558, %v2694
    %v2711 = vmul.f32 %v2559, %v2695
    %v2712 = vmul.f32 %v2560, %v2696
    %v2713 = vsub.f32 %v2697, %v2705
    %v2714 = vsub.f32 %v2698, %v2706
    %v2715 = vsub.f32 %v2699, %v2707
    %v2716 = vsub.f32 %v2700, %v2708
    %v2717 = vsub.f32 %v2701, %v2709
    %v2718 = vsub.f32 %v2702, %v2710
    %v2719 = vsub.f32 %v2703, %v2711
    %v2720 = vsub.f32 %v2704, %v2712
    %2722 = vset.pattern.permute.xlu0 0
    %2723 = vperm.xlu0 %2722, %v2689
    %v2724 = vpop.permute.xlu0 %2723
    %2727 = vset.pattern.permute.xlu0 0
    %2728 = vperm.xlu0 %2727, %v2690
    %v2729 = vpop.permute.xlu0 %2728
    %2732 = vset.pattern.permute.xlu0 0
    %2733 = vperm.xlu0 %2732, %v2691
    %v2734 = vpop.permute.xlu0 %2733
    %2737 = vset.pattern.permute.xlu0 0
    %2738 = vperm.xlu0 %2737, %v2692
    %v2739 = vpop.permute.xlu0 %2738
    %2742 = vset.pattern.permute.xlu0 0
    %2743 = vperm.xlu0 %2742, %v2693
    %v2744 = vpop.permute.xlu0 %2743
    %2747 = vset.pattern.permute.xlu0 0
    %2748 = vperm.xlu0 %2747, %v2694
    %v2749 = vpop.permute.xlu0 %2748
    %2752 = vset.pattern.permute.xlu0 0
    %2753 = vperm.xlu0 %2752, %v2695
    %v2754 = vpop.permute.xlu0 %2753
    %2757 = vset.pattern.permute.xlu0 0
    %2758 = vperm.xlu0 %2757, %v2696
    %v2759 = vpop.permute.xlu0 %2758
    %v2761 = vmul.f32 %v2477, %v2724
    %v2762 = vmul.f32 %v2479, %v2729
    %v2763 = vmul.f32 %v2482, %v2734
    %v2764 = vmul.f32 %v2484, %v2739
    %v2765 = vmul.f32 %v2487, %v2744
    %v2766 = vmul.f32 %v2489, %v2749
    %v2767 = vmul.f32 %v2492, %v2754
    %v2768 = vmul.f32 %v2494, %v2759
    %2770 = vset.pattern.permute.xlu0 0
    %2771 = vperm.xlu0 %2770, %v2713
    %v2772 = vpop.permute.xlu0 %2771
    %2775 = vset.pattern.permute.xlu0 0
    %2776 = vperm.xlu0 %2775, %v2714
    %v2777 = vpop.permute.xlu0 %2776
    %2780 = vset.pattern.permute.xlu0 0
    %2781 = vperm.xlu0 %2780, %v2715
    %v2782 = vpop.permute.xlu0 %2781
    %2785 = vset.pattern.permute.xlu0 0
    %2786 = vperm.xlu0 %2785, %v2716
    %v2787 = vpop.permute.xlu0 %2786
    %2790 = vset.pattern.permute.xlu0 0
    %2791 = vperm.xlu0 %2790, %v2717
    %v2792 = vpop.permute.xlu0 %2791
    %2795 = vset.pattern.permute.xlu0 0
    %2796 = vperm.xlu0 %2795, %v2718
    %v2797 = vpop.permute.xlu0 %2796
    %2800 = vset.pattern.permute.xlu0 0
    %2801 = vperm.xlu0 %2800, %v2719
    %v2802 = vpop.permute.xlu0 %2801
    %2805 = vset.pattern.permute.xlu0 0
    %2806 = vperm.xlu0 %2805, %v2720
    %v2807 = vpop.permute.xlu0 %2806
    %v2809 = vadd.f32 %v2761, %v2772
    %v2810 = vadd.f32 %v2762, %v2777
    %v2811 = vadd.f32 %v2763, %v2782
    %v2812 = vadd.f32 %v2764, %v2787
    %v2813 = vadd.f32 %v2765, %v2792
    %v2814 = vadd.f32 %v2766, %v2797
    %v2815 = vadd.f32 %v2767, %v2802
    %v2816 = vadd.f32 %v2768, %v2807
    %v2817 = vmax.f32 %v2809, 0.0
    %v2818 = vmax.f32 %v2810, 0.0
    %v2819 = vmax.f32 %v2811, 0.0
    %v2820 = vmax.f32 %v2812, 0.0
    %v2821 = vmax.f32 %v2813, 0.0
    %v2822 = vmax.f32 %v2814, 0.0
    %v2823 = vmax.f32 %v2815, 0.0
    %v2824 = vmax.f32 %v2816, 0.0
    %v2825 = vpack.c.bf16 %v2818, %v2817
    %v2826 = vpack.c.bf16 %v2820, %v2819
    %v2827 = vpack.c.bf16 %v2822, %v2821
    %v2828 = vpack.c.bf16 %v2824, %v2823
    %v2829 = vld [vmem:[%s7] sm:$0xf]
    %v2830 = vld [vmem:[%s7 + $0x4] sm:$0xf]
    %v2831 = vld [vmem:[%s7 + $0x8] sm:$0xf]
    %v2832 = vld [vmem:[%s7 + $0xc] sm:$0xf]
    %v2837 = vunpack.c.l.b16 %v2829
    %v2838 = vunpack.c.l.b16 %v2830
    %v2839 = vunpack.c.l.b16 %v2831
    %v2840 = vunpack.c.l.b16 %v2832
    %v2841 = vpack.c.b16 %v2838, %v2837
    %v2842 = vpack.c.b16 %v2840, %v2839
    %v2846 = vsel %vm2496, %v2825, 0
    %v2849 = vsel %vm2496, %v2826, 0
    %v2852 = vsel %vm2496, %v2827, 0
    %v2855 = vsel %vm2496, %v2828, 0
    %2857 = vmatpush.bf16.msra.mxu0 0
    %2858 = vmatpush.bf16.msra.mxu0 0
    %2859 = vmatpush.bf16.msra.mxu0 0
    %2860 = vmatpush.bf16.msra.mxu0 0
    %2861 = vmatpush.bf16.msra.mxu0 0
    %2862 = vmatpush.bf16.msra.mxu0 0
    %2863 = vmatpush.bf16.msra.mxu0 %v2842
    %2864 = vmatpush.bf16.msra.mxu0 %v2841
    %2865 = vmatmul.bf16.gmra.mxu0 %v2846
    %v2866 = vpop.f32.mrf.mxu0
    %v2867 = vadd.f32 0.0, %v2866
    %v2868 = vpop.f32.mrf.mxu0
    %v2869 = vadd.f32 0.0, %v2868
    %2870 = vmatmul.bf16.gmra.mxu0 %v2849
    %v2871 = vpop.f32.mrf.mxu0
    %v2872 = vadd.f32 0.0, %v2871
    %v2873 = vpop.f32.mrf.mxu0
    %v2874 = vadd.f32 0.0, %v2873
    %2875 = vmatmul.bf16.gmra.mxu0 %v2852
    %v2876 = vpop.f32.mrf.mxu0
    %v2877 = vadd.f32 0.0, %v2876
    %v2878 = vpop.f32.mrf.mxu0
    %v2879 = vadd.f32 0.0, %v2878
    %2880 = vmatmul.bf16.gmra.mxu0 %v2855
    %v2881 = vpop.f32.mrf.mxu0
    %v2882 = vadd.f32 0.0, %v2881
    %v2883 = vpop.f32.mrf.mxu0
    %v2884 = vadd.f32 0.0, %v2883
    %2885 = vdwg.mxu0
    %2886 = vrot.lane.b32.xlu0 %v2867, 18
    %v2887 = vpop.permute.xlu0 %2886
    %2888 = vrot.lane.b32.xlu0 %v2869, 18
    %v2889 = vpop.permute.xlu0 %2888
    %2890 = vrot.lane.b32.xlu0 %v2872, 18
    %v2891 = vpop.permute.xlu0 %2890
    %2892 = vrot.lane.b32.xlu0 %v2874, 18
    %v2893 = vpop.permute.xlu0 %2892
    %2894 = vrot.lane.b32.xlu0 %v2877, 18
    %v2895 = vpop.permute.xlu0 %2894
    %2896 = vrot.lane.b32.xlu0 %v2879, 18
    %v2897 = vpop.permute.xlu0 %2896
    %2898 = vrot.lane.b32.xlu0 %v2882, 18
    %v2899 = vpop.permute.xlu0 %2898
    %2900 = vrot.lane.b32.xlu0 %v2884, 18
    %v2901 = vpop.permute.xlu0 %2900
    %v2902 = vld [vmem:[%s4] sm:$0x1]
    %v2904 = vperm.slane %v2902, 0
    %v2906 = vmul.f32 %v2887, %v2904
    %v2907 = vmul.f32 %v2889, %v2904
    %v2908 = vmul.f32 %v2891, %v2904
    %v2909 = vmul.f32 %v2893, %v2904
    %v2910 = vmul.f32 %v2895, %v2904
    %v2911 = vmul.f32 %v2897, %v2904
    %v2912 = vmul.f32 %v2899, %v2904
    %v2913 = vmul.f32 %v2901, %v2904
    %v2914 = vpack.c.bf16 %v2907, %v2906
    %v2915 = vpack.c.bf16 %v2909, %v2908
    %v2916 = vpack.c.bf16 %v2911, %v2910
    %v2917 = vpack.c.bf16 %v2913, %v2912
    %v2918 = vld [vmem:[%s15] sm:$0xf]
    %v2919 = vld [vmem:[%s15 + $0x4] sm:$0xf]
    %2920 = vrot.lane.b32.xlu0 %v2867, 17
    %v2921 = vpop.permute.xlu0 %2920
    %2922 = vrot.lane.b32.xlu0 %v2869, 17
    %v2923 = vpop.permute.xlu0 %2922
    %2924 = vrot.lane.b32.xlu0 %v2872, 17
    %v2925 = vpop.permute.xlu0 %2924
    %2926 = vrot.lane.b32.xlu0 %v2874, 17
    %v2927 = vpop.permute.xlu0 %2926
    %2928 = vrot.lane.b32.xlu0 %v2877, 17
    %v2929 = vpop.permute.xlu0 %2928
    %2930 = vrot.lane.b32.xlu0 %v2879, 17
    %v2931 = vpop.permute.xlu0 %2930
    %2932 = vrot.lane.b32.xlu0 %v2882, 17
    %v2933 = vpop.permute.xlu0 %2932
    %2934 = vrot.lane.b32.xlu0 %v2884, 17
    %v2935 = vpop.permute.xlu0 %2934
    %s2936 = scalar_lea.vmem %s4, 1
    %v2937 = vld [vmem:[%s2936] sm:$0x1]
    %v2939 = vperm.slane %v2937, 0
    %v2941 = vmul.f32 %v2921, %v2939
    %v2942 = vmul.f32 %v2923, %v2939
    %v2943 = vmul.f32 %v2925, %v2939
    %v2944 = vmul.f32 %v2927, %v2939
    %v2945 = vmul.f32 %v2929, %v2939
    %v2946 = vmul.f32 %v2931, %v2939
    %v2947 = vmul.f32 %v2933, %v2939
    %v2948 = vmul.f32 %v2935, %v2939
    %v2949 = vpack.c.bf16 %v2942, %v2941
    %v2950 = vpack.c.bf16 %v2944, %v2943
    %v2951 = vpack.c.bf16 %v2946, %v2945
    %v2952 = vpack.c.bf16 %v2948, %v2947
    %s2953 = scalar_lea.vmem %s15, 8
    %v2954 = vld [vmem:[%s2953] sm:$0xf]
    %v2955 = vld [vmem:[%s2953 + $0x4] sm:$0xf]
    %v2958 = vunpack.c.l.b16 %v2954
    %v2959 = vunpack.c.l.b16 %v2955
    %v2960 = vpack.c.b16 %v2959, %v2958
    %vm2961 = vcmask 523264
    %v2963 = vsel %vm2961, %v2960, 0
    %2965 = vmatpush.bf16.msra.mxu0 0
    %2966 = vmatpush.bf16.msra.mxu0 0
    %2967 = vmatpush.bf16.msra.mxu0 0
    %2968 = vmatpush.bf16.msra.mxu0 0
    %2969 = vmatpush.bf16.msra.mxu0 %v2952
    %2970 = vmatpush.bf16.msra.mxu0 %v2951
    %2971 = vmatpush.bf16.msra.mxu0 %v2950
    %2972 = vmatpush.bf16.msra.mxu0 %v2949
    %2973 = vmatmul.bf16.gmra.mxu0 %v2963
    %v2974 = vpop.f32.mrf.mxu0
    %v2975 = vadd.f32 0.0, %v2974
    %v2976 = vpop.f32.mrf.mxu0
    %v2977 = vadd.f32 0.0, %v2976
    %2978 = vdwg.mxu0
    %v2981 = vunpack.c.l.b16 %v2918
    %v2982 = vunpack.c.l.b16 %v2919
    %v2983 = vpack.c.b16 %v2982, %v2981
    %v2985 = vsel %vm2961, %v2983, 0
    %2987 = vmatpush.bf16.msra.mxu0 0
    %2988 = vmatpush.bf16.msra.mxu0 0
    %2989 = vmatpush.bf16.msra.mxu0 0
    %2990 = vmatpush.bf16.msra.mxu0 0
    %2991 = vmatpush.bf16.msra.mxu0 %v2917
    %2992 = vmatpush.bf16.msra.mxu0 %v2916
    %2993 = vmatpush.bf16.msra.mxu0 %v2915
    %2994 = vmatpush.bf16.msra.mxu0 %v2914
    %2995 = vmatmul.bf16.gmra.mxu0 %v2985
    %v2996 = vpop.f32.mrf.mxu0
    %v2997 = vadd.f32 %v2975, %v2996
    %v2998 = vpop.f32.mrf.mxu0
    %v2999 = vadd.f32 %v2977, %v2998
    %3000 = vdwg.mxu0
    %3001 = vrot.lane.b32.xlu0 %v2867, 16
    %v3002 = vpop.permute.xlu0 %3001
    %3003 = vrot.lane.b32.xlu0 %v2869, 16
    %v3004 = vpop.permute.xlu0 %3003
    %3005 = vrot.lane.b32.xlu0 %v2872, 16
    %v3006 = vpop.permute.xlu0 %3005
    %3007 = vrot.lane.b32.xlu0 %v2874, 16
    %v3008 = vpop.permute.xlu0 %3007
    %3009 = vrot.lane.b32.xlu0 %v2877, 16
    %v3010 = vpop.permute.xlu0 %3009
    %3011 = vrot.lane.b32.xlu0 %v2879, 16
    %v3012 = vpop.permute.xlu0 %3011
    %3013 = vrot.lane.b32.xlu0 %v2882, 16
    %v3014 = vpop.permute.xlu0 %3013
    %3015 = vrot.lane.b32.xlu0 %v2884, 16
    %v3016 = vpop.permute.xlu0 %3015
    %s3017 = scalar_lea.vmem %s4, 2
    %v3018 = vld [vmem:[%s3017] sm:$0x1]
    %v3020 = vperm.slane %v3018, 0
    %v3022 = vmul.f32 %v3002, %v3020
    %v3023 = vmul.f32 %v3004, %v3020
    %v3024 = vmul.f32 %v3006, %v3020
    %v3025 = vmul.f32 %v3008, %v3020
    %v3026 = vmul.f32 %v3010, %v3020
    %v3027 = vmul.f32 %v3012, %v3020
    %v3028 = vmul.f32 %v3014, %v3020
    %v3029 = vmul.f32 %v3016, %v3020
    %v3030 = vpack.c.bf16 %v3023, %v3022
    %v3031 = vpack.c.bf16 %v3025, %v3024
    %v3032 = vpack.c.bf16 %v3027, %v3026
    %v3033 = vpack.c.bf16 %v3029, %v3028
    %s3034 = scalar_lea.vmem %s15, 16
    %v3035 = vld [vmem:[%s3034] sm:$0xf]
    %v3036 = vld [vmem:[%s3034 + $0x4] sm:$0xf]
    %v3039 = vunpack.c.l.b16 %v3035
    %v3040 = vunpack.c.l.b16 %v3036
    %v3041 = vpack.c.b16 %v3040, %v3039
    %v3043 = vsel %vm2961, %v3041, 0
    %3045 = vmatpush.bf16.msra.mxu0 0
    %3046 = vmatpush.bf16.msra.mxu0 0
    %3047 = vmatpush.bf16.msra.mxu0 0
    %3048 = vmatpush.bf16.msra.mxu0 0
    %3049 = vmatpush.bf16.msra.mxu0 %v3033
    %3050 = vmatpush.bf16.msra.mxu0 %v3032
    %3051 = vmatpush.bf16.msra.mxu0 %v3031
    %3052 = vmatpush.bf16.msra.mxu0 %v3030
    %3053 = vmatmul.bf16.gmra.mxu0 %v3043
    %v3054 = vpop.f32.mrf.mxu0
    %v3055 = vadd.f32 0.0, %v3054
    %v3056 = vpop.f32.mrf.mxu0
    %v3057 = vadd.f32 0.0, %v3056
    %3058 = vdwg.mxu0
    %v3059 = vadd.f32 %v2997, %v3055
    %v3060 = vadd.f32 %v2999, %v3057
    %3061 = vrot.lane.b32.xlu0 %v2867, 15
    %v3062 = vpop.permute.xlu0 %3061
    %3063 = vrot.lane.b32.xlu0 %v2869, 15
    %v3064 = vpop.permute.xlu0 %3063
    %3065 = vrot.lane.b32.xlu0 %v2872, 15
    %v3066 = vpop.permute.xlu0 %3065
    %3067 = vrot.lane.b32.xlu0 %v2874, 15
    %v3068 = vpop.permute.xlu0 %3067
    %3069 = vrot.lane.b32.xlu0 %v2877, 15
    %v3070 = vpop.permute.xlu0 %3069
    %3071 = vrot.lane.b32.xlu0 %v2879, 15
    %v3072 = vpop.permute.xlu0 %3071
    %3073 = vrot.lane.b32.xlu0 %v2882, 15
    %v3074 = vpop.permute.xlu0 %3073
    %3075 = vrot.lane.b32.xlu0 %v2884, 15
    %v3076 = vpop.permute.xlu0 %3075
    %s3077 = scalar_lea.vmem %s4, 3
    %v3078 = vld [vmem:[%s3077] sm:$0x1]
    %v3080 = vperm.slane %v3078, 0
    %v3082 = vmul.f32 %v3062, %v3080
    %v3083 = vmul.f32 %v3064, %v3080
    %v3084 = vmul.f32 %v3066, %v3080
    %v3085 = vmul.f32 %v3068, %v3080
    %v3086 = vmul.f32 %v3070, %v3080
    %v3087 = vmul.f32 %v3072, %v3080
    %v3088 = vmul.f32 %v3074, %v3080
    %v3089 = vmul.f32 %v3076, %v3080
    %v3090 = vpack.c.bf16 %v3083, %v3082
    %v3091 = vpack.c.bf16 %v3085, %v3084
    %v3092 = vpack.c.bf16 %v3087, %v3086
    %v3093 = vpack.c.bf16 %v3089, %v3088
    %s3094 = scalar_lea.vmem %s15, 24
    %v3095 = vld [vmem:[%s3094] sm:$0xf]
    %v3096 = vld [vmem:[%s3094 + $0x4] sm:$0xf]
    %v3099 = vunpack.c.l.b16 %v3095
    %v3100 = vunpack.c.l.b16 %v3096
    %v3101 = vpack.c.b16 %v3100, %v3099
    %v3103 = vsel %vm2961, %v3101, 0
    %3105 = vmatpush.bf16.msra.mxu0 0
    %3106 = vmatpush.bf16.msra.mxu0 0
    %3107 = vmatpush.bf16.msra.mxu0 0
    %3108 = vmatpush.bf16.msra.mxu0 0
    %3109 = vmatpush.bf16.msra.mxu0 %v3093
    %3110 = vmatpush.bf16.msra.mxu0 %v3092
    %3111 = vmatpush.bf16.msra.mxu0 %v3091
    %3112 = vmatpush.bf16.msra.mxu0 %v3090
    %3113 = vmatmul.bf16.gmra.mxu0 %v3103
    %v3114 = vpop.f32.mrf.mxu0
    %v3115 = vadd.f32 0.0, %v3114
    %v3116 = vpop.f32.mrf.mxu0
    %v3117 = vadd.f32 0.0, %v3116
    %3118 = vdwg.mxu0
    %v3119 = vadd.f32 %v3059, %v3115
    %v3120 = vadd.f32 %v3060, %v3117
    %3121 = vrot.lane.b32.xlu0 %v2867, 10
    %v3122 = vpop.permute.xlu0 %3121
    %3123 = vrot.lane.b32.xlu0 %v2869, 10
    %v3124 = vpop.permute.xlu0 %3123
    %3125 = vrot.lane.b32.xlu0 %v2872, 10
    %v3126 = vpop.permute.xlu0 %3125
    %3127 = vrot.lane.b32.xlu0 %v2874, 10
    %v3128 = vpop.permute.xlu0 %3127
    %3129 = vrot.lane.b32.xlu0 %v2877, 10
    %v3130 = vpop.permute.xlu0 %3129
    %3131 = vrot.lane.b32.xlu0 %v2879, 10
    %v3132 = vpop.permute.xlu0 %3131
    %3133 = vrot.lane.b32.xlu0 %v2882, 10
    %v3134 = vpop.permute.xlu0 %3133
    %3135 = vrot.lane.b32.xlu0 %v2884, 10
    %v3136 = vpop.permute.xlu0 %3135
    %s3137 = scalar_lea.vmem %s4, 4
    %v3138 = vld [vmem:[%s3137] sm:$0x1]
    %v3140 = vperm.slane %v3138, 0
    %v3142 = vmul.f32 %v3122, %v3140
    %v3143 = vmul.f32 %v3124, %v3140
    %v3144 = vmul.f32 %v3126, %v3140
    %v3145 = vmul.f32 %v3128, %v3140
    %v3146 = vmul.f32 %v3130, %v3140
    %v3147 = vmul.f32 %v3132, %v3140
    %v3148 = vmul.f32 %v3134, %v3140
    %v3149 = vmul.f32 %v3136, %v3140
    %v3150 = vpack.c.bf16 %v3143, %v3142
    %v3151 = vpack.c.bf16 %v3145, %v3144
    %v3152 = vpack.c.bf16 %v3147, %v3146
    %v3153 = vpack.c.bf16 %v3149, %v3148
    %s3154 = scalar_lea.vmem %s15, 32
    %v3155 = vld [vmem:[%s3154] sm:$0xf]
    %v3156 = vld [vmem:[%s3154 + $0x4] sm:$0xf]
    %v3159 = vunpack.c.l.b16 %v3155
    %v3160 = vunpack.c.l.b16 %v3156
    %v3161 = vpack.c.b16 %v3160, %v3159
    %v3163 = vsel %vm2961, %v3161, 0
    %3165 = vmatpush.bf16.msra.mxu0 0
    %3166 = vmatpush.bf16.msra.mxu0 0
    %3167 = vmatpush.bf16.msra.mxu0 0
    %3168 = vmatpush.bf16.msra.mxu0 0
    %3169 = vmatpush.bf16.msra.mxu0 %v3153
    %3170 = vmatpush.bf16.msra.mxu0 %v3152
    %3171 = vmatpush.bf16.msra.mxu0 %v3151
    %3172 = vmatpush.bf16.msra.mxu0 %v3150
    %3173 = vmatmul.bf16.gmra.mxu0 %v3163
    %v3174 = vpop.f32.mrf.mxu0
    %v3175 = vadd.f32 0.0, %v3174
    %v3176 = vpop.f32.mrf.mxu0
    %v3177 = vadd.f32 0.0, %v3176
    %3178 = vdwg.mxu0
    %v3179 = vadd.f32 %v3119, %v3175
    %v3180 = vadd.f32 %v3120, %v3177
    %3181 = vrot.lane.b32.xlu0 %v2867, 9
    %v3182 = vpop.permute.xlu0 %3181
    %3183 = vrot.lane.b32.xlu0 %v2869, 9
    %v3184 = vpop.permute.xlu0 %3183
    %3185 = vrot.lane.b32.xlu0 %v2872, 9
    %v3186 = vpop.permute.xlu0 %3185
    %3187 = vrot.lane.b32.xlu0 %v2874, 9
    %v3188 = vpop.permute.xlu0 %3187
    %3189 = vrot.lane.b32.xlu0 %v2877, 9
    %v3190 = vpop.permute.xlu0 %3189
    %3191 = vrot.lane.b32.xlu0 %v2879, 9
    %v3192 = vpop.permute.xlu0 %3191
    %3193 = vrot.lane.b32.xlu0 %v2882, 9
    %v3194 = vpop.permute.xlu0 %3193
    %3195 = vrot.lane.b32.xlu0 %v2884, 9
    %v3196 = vpop.permute.xlu0 %3195
    %s3197 = scalar_lea.vmem %s4, 5
    %v3198 = vld [vmem:[%s3197] sm:$0x1]
    %v3200 = vperm.slane %v3198, 0
    %v3202 = vmul.f32 %v3182, %v3200
    %v3203 = vmul.f32 %v3184, %v3200
    %v3204 = vmul.f32 %v3186, %v3200
    %v3205 = vmul.f32 %v3188, %v3200
    %v3206 = vmul.f32 %v3190, %v3200
    %v3207 = vmul.f32 %v3192, %v3200
    %v3208 = vmul.f32 %v3194, %v3200
    %v3209 = vmul.f32 %v3196, %v3200
    %v3210 = vpack.c.bf16 %v3203, %v3202
    %v3211 = vpack.c.bf16 %v3205, %v3204
    %v3212 = vpack.c.bf16 %v3207, %v3206
    %v3213 = vpack.c.bf16 %v3209, %v3208
    %s3214 = scalar_lea.vmem %s15, 40
    %v3215 = vld [vmem:[%s3214] sm:$0xf]
    %v3216 = vld [vmem:[%s3214 + $0x4] sm:$0xf]
    %v3219 = vunpack.c.l.b16 %v3215
    %v3220 = vunpack.c.l.b16 %v3216
    %v3221 = vpack.c.b16 %v3220, %v3219
    %v3223 = vsel %vm2961, %v3221, 0
    %3225 = vmatpush.bf16.msra.mxu0 0
    %3226 = vmatpush.bf16.msra.mxu0 0
    %3227 = vmatpush.bf16.msra.mxu0 0
    %3228 = vmatpush.bf16.msra.mxu0 0
    %3229 = vmatpush.bf16.msra.mxu0 %v3213
    %3230 = vmatpush.bf16.msra.mxu0 %v3212
    %3231 = vmatpush.bf16.msra.mxu0 %v3211
    %3232 = vmatpush.bf16.msra.mxu0 %v3210
    %3233 = vmatmul.bf16.gmra.mxu0 %v3223
    %v3234 = vpop.f32.mrf.mxu0
    %v3235 = vadd.f32 0.0, %v3234
    %v3236 = vpop.f32.mrf.mxu0
    %v3237 = vadd.f32 0.0, %v3236
    %3238 = vdwg.mxu0
    %v3239 = vadd.f32 %v3179, %v3235
    %v3240 = vadd.f32 %v3180, %v3237
    %3241 = vrot.lane.b32.xlu0 %v2867, 8
    %v3242 = vpop.permute.xlu0 %3241
    %3243 = vrot.lane.b32.xlu0 %v2869, 8
    %v3244 = vpop.permute.xlu0 %3243
    %3245 = vrot.lane.b32.xlu0 %v2872, 8
    %v3246 = vpop.permute.xlu0 %3245
    %3247 = vrot.lane.b32.xlu0 %v2874, 8
    %v3248 = vpop.permute.xlu0 %3247
    %3249 = vrot.lane.b32.xlu0 %v2877, 8
    %v3250 = vpop.permute.xlu0 %3249
    %3251 = vrot.lane.b32.xlu0 %v2879, 8
    %v3252 = vpop.permute.xlu0 %3251
    %3253 = vrot.lane.b32.xlu0 %v2882, 8
    %v3254 = vpop.permute.xlu0 %3253
    %3255 = vrot.lane.b32.xlu0 %v2884, 8
    %v3256 = vpop.permute.xlu0 %3255
    %s3257 = scalar_lea.vmem %s4, 6
    %v3258 = vld [vmem:[%s3257] sm:$0x1]
    %v3260 = vperm.slane %v3258, 0
    %v3262 = vmul.f32 %v3242, %v3260
    %v3263 = vmul.f32 %v3244, %v3260
    %v3264 = vmul.f32 %v3246, %v3260
    %v3265 = vmul.f32 %v3248, %v3260
    %v3266 = vmul.f32 %v3250, %v3260
    %v3267 = vmul.f32 %v3252, %v3260
    %v3268 = vmul.f32 %v3254, %v3260
    %v3269 = vmul.f32 %v3256, %v3260
    %v3270 = vpack.c.bf16 %v3263, %v3262
    %v3271 = vpack.c.bf16 %v3265, %v3264
    %v3272 = vpack.c.bf16 %v3267, %v3266
    %v3273 = vpack.c.bf16 %v3269, %v3268
    %s3274 = scalar_lea.vmem %s15, 48
    %v3275 = vld [vmem:[%s3274] sm:$0xf]
    %v3276 = vld [vmem:[%s3274 + $0x4] sm:$0xf]
    %v3279 = vunpack.c.l.b16 %v3275
    %v3280 = vunpack.c.l.b16 %v3276
    %v3281 = vpack.c.b16 %v3280, %v3279
    %v3283 = vsel %vm2961, %v3281, 0
    %3285 = vmatpush.bf16.msra.mxu0 0
    %3286 = vmatpush.bf16.msra.mxu0 0
    %3287 = vmatpush.bf16.msra.mxu0 0
    %3288 = vmatpush.bf16.msra.mxu0 0
    %3289 = vmatpush.bf16.msra.mxu0 %v3273
    %3290 = vmatpush.bf16.msra.mxu0 %v3272
    %3291 = vmatpush.bf16.msra.mxu0 %v3271
    %3292 = vmatpush.bf16.msra.mxu0 %v3270
    %3293 = vmatmul.bf16.gmra.mxu0 %v3283
    %v3294 = vpop.f32.mrf.mxu0
    %v3295 = vadd.f32 0.0, %v3294
    %v3296 = vpop.f32.mrf.mxu0
    %v3297 = vadd.f32 0.0, %v3296
    %3298 = vdwg.mxu0
    %v3299 = vadd.f32 %v3239, %v3295
    %v3300 = vadd.f32 %v3240, %v3297
    %3301 = vrot.lane.b32.xlu0 %v2867, 7
    %v3302 = vpop.permute.xlu0 %3301
    %3303 = vrot.lane.b32.xlu0 %v2869, 7
    %v3304 = vpop.permute.xlu0 %3303
    %3305 = vrot.lane.b32.xlu0 %v2872, 7
    %v3306 = vpop.permute.xlu0 %3305
    %3307 = vrot.lane.b32.xlu0 %v2874, 7
    %v3308 = vpop.permute.xlu0 %3307
    %3309 = vrot.lane.b32.xlu0 %v2877, 7
    %v3310 = vpop.permute.xlu0 %3309
    %3311 = vrot.lane.b32.xlu0 %v2879, 7
    %v3312 = vpop.permute.xlu0 %3311
    %3313 = vrot.lane.b32.xlu0 %v2882, 7
    %v3314 = vpop.permute.xlu0 %3313
    %3315 = vrot.lane.b32.xlu0 %v2884, 7
    %v3316 = vpop.permute.xlu0 %3315
    %s3317 = scalar_lea.vmem %s4, 7
    %v3318 = vld [vmem:[%s3317] sm:$0x1]
    %v3320 = vperm.slane %v3318, 0
    %v3322 = vmul.f32 %v3302, %v3320
    %v3323 = vmul.f32 %v3304, %v3320
    %v3324 = vmul.f32 %v3306, %v3320
    %v3325 = vmul.f32 %v3308, %v3320
    %v3326 = vmul.f32 %v3310, %v3320
    %v3327 = vmul.f32 %v3312, %v3320
    %v3328 = vmul.f32 %v3314, %v3320
    %v3329 = vmul.f32 %v3316, %v3320
    %v3330 = vpack.c.bf16 %v3323, %v3322
    %v3331 = vpack.c.bf16 %v3325, %v3324
    %v3332 = vpack.c.bf16 %v3327, %v3326
    %v3333 = vpack.c.bf16 %v3329, %v3328
    %s3334 = scalar_lea.vmem %s15, 56
    %v3335 = vld [vmem:[%s3334] sm:$0xf]
    %v3336 = vld [vmem:[%s3334 + $0x4] sm:$0xf]
    %v3339 = vunpack.c.l.b16 %v3335
    %v3340 = vunpack.c.l.b16 %v3336
    %v3341 = vpack.c.b16 %v3340, %v3339
    %v3343 = vsel %vm2961, %v3341, 0
    %3345 = vmatpush.bf16.msra.mxu0 0
    %3346 = vmatpush.bf16.msra.mxu0 0
    %3347 = vmatpush.bf16.msra.mxu0 0
    %3348 = vmatpush.bf16.msra.mxu0 0
    %3349 = vmatpush.bf16.msra.mxu0 %v3333
    %3350 = vmatpush.bf16.msra.mxu0 %v3332
    %3351 = vmatpush.bf16.msra.mxu0 %v3331
    %3352 = vmatpush.bf16.msra.mxu0 %v3330
    %3353 = vmatmul.bf16.gmra.mxu0 %v3343
    %v3354 = vpop.f32.mrf.mxu0
    %v3355 = vadd.f32 0.0, %v3354
    %v3356 = vpop.f32.mrf.mxu0
    %v3357 = vadd.f32 0.0, %v3356
    %3358 = vdwg.mxu0
    %v3359 = vadd.f32 %v3299, %v3355
    %v3360 = vadd.f32 %v3300, %v3357
    %3361 = vrot.lane.b32.xlu0 %v2867, 2
    %v3362 = vpop.permute.xlu0 %3361
    %3363 = vrot.lane.b32.xlu0 %v2869, 2
    %v3364 = vpop.permute.xlu0 %3363
    %3365 = vrot.lane.b32.xlu0 %v2872, 2
    %v3366 = vpop.permute.xlu0 %3365
    %3367 = vrot.lane.b32.xlu0 %v2874, 2
    %v3368 = vpop.permute.xlu0 %3367
    %3369 = vrot.lane.b32.xlu0 %v2877, 2
    %v3370 = vpop.permute.xlu0 %3369
    %3371 = vrot.lane.b32.xlu0 %v2879, 2
    %v3372 = vpop.permute.xlu0 %3371
    %3373 = vrot.lane.b32.xlu0 %v2882, 2
    %v3374 = vpop.permute.xlu0 %3373
    %3375 = vrot.lane.b32.xlu0 %v2884, 2
    %v3376 = vpop.permute.xlu0 %3375
    %s3377 = scalar_lea.vmem %s4, 8
    %v3378 = vld [vmem:[%s3377] sm:$0x1]
    %v3380 = vperm.slane %v3378, 0
    %v3382 = vmul.f32 %v3362, %v3380
    %v3383 = vmul.f32 %v3364, %v3380
    %v3384 = vmul.f32 %v3366, %v3380
    %v3385 = vmul.f32 %v3368, %v3380
    %v3386 = vmul.f32 %v3370, %v3380
    %v3387 = vmul.f32 %v3372, %v3380
    %v3388 = vmul.f32 %v3374, %v3380
    %v3389 = vmul.f32 %v3376, %v3380
    %v3390 = vpack.c.bf16 %v3383, %v3382
    %v3391 = vpack.c.bf16 %v3385, %v3384
    %v3392 = vpack.c.bf16 %v3387, %v3386
    %v3393 = vpack.c.bf16 %v3389, %v3388
    %s3394 = scalar_lea.vmem %s15, 64
    %v3395 = vld [vmem:[%s3394] sm:$0xf]
    %v3396 = vld [vmem:[%s3394 + $0x4] sm:$0xf]
    %v3399 = vunpack.c.l.b16 %v3395
    %v3400 = vunpack.c.l.b16 %v3396
    %v3401 = vpack.c.b16 %v3400, %v3399
    %v3403 = vsel %vm2961, %v3401, 0
    %3405 = vmatpush.bf16.msra.mxu0 0
    %3406 = vmatpush.bf16.msra.mxu0 0
    %3407 = vmatpush.bf16.msra.mxu0 0
    %3408 = vmatpush.bf16.msra.mxu0 0
    %3409 = vmatpush.bf16.msra.mxu0 %v3393
    %3410 = vmatpush.bf16.msra.mxu0 %v3392
    %3411 = vmatpush.bf16.msra.mxu0 %v3391
    %3412 = vmatpush.bf16.msra.mxu0 %v3390
    %3413 = vmatmul.bf16.gmra.mxu0 %v3403
    %v3414 = vpop.f32.mrf.mxu0
    %v3415 = vadd.f32 0.0, %v3414
    %v3416 = vpop.f32.mrf.mxu0
    %v3417 = vadd.f32 0.0, %v3416
    %3418 = vdwg.mxu0
    %v3419 = vadd.f32 %v3359, %v3415
    %v3420 = vadd.f32 %v3360, %v3417
    %3421 = vrot.lane.b32.xlu0 %v2867, 1
    %v3422 = vpop.permute.xlu0 %3421
    %3423 = vrot.lane.b32.xlu0 %v2869, 1
    %v3424 = vpop.permute.xlu0 %3423
    %3425 = vrot.lane.b32.xlu0 %v2872, 1
    %v3426 = vpop.permute.xlu0 %3425
    %3427 = vrot.lane.b32.xlu0 %v2874, 1
    %v3428 = vpop.permute.xlu0 %3427
    %3429 = vrot.lane.b32.xlu0 %v2877, 1
    %v3430 = vpop.permute.xlu0 %3429
    %3431 = vrot.lane.b32.xlu0 %v2879, 1
    %v3432 = vpop.permute.xlu0 %3431
    %3433 = vrot.lane.b32.xlu0 %v2882, 1
    %v3434 = vpop.permute.xlu0 %3433
    %3435 = vrot.lane.b32.xlu0 %v2884, 1
    %v3436 = vpop.permute.xlu0 %3435
    %s3437 = scalar_lea.vmem %s4, 9
    %v3438 = vld [vmem:[%s3437] sm:$0x1]
    %v3440 = vperm.slane %v3438, 0
    %v3442 = vmul.f32 %v3422, %v3440
    %v3443 = vmul.f32 %v3424, %v3440
    %v3444 = vmul.f32 %v3426, %v3440
    %v3445 = vmul.f32 %v3428, %v3440
    %v3446 = vmul.f32 %v3430, %v3440
    %v3447 = vmul.f32 %v3432, %v3440
    %v3448 = vmul.f32 %v3434, %v3440
    %v3449 = vmul.f32 %v3436, %v3440
    %v3450 = vpack.c.bf16 %v3443, %v3442
    %v3451 = vpack.c.bf16 %v3445, %v3444
    %v3452 = vpack.c.bf16 %v3447, %v3446
    %v3453 = vpack.c.bf16 %v3449, %v3448
    %s3454 = scalar_lea.vmem %s15, 72
    %v3455 = vld [vmem:[%s3454] sm:$0xf]
    %v3456 = vld [vmem:[%s3454 + $0x4] sm:$0xf]
    %v3459 = vunpack.c.l.b16 %v3455
    %v3460 = vunpack.c.l.b16 %v3456
    %v3461 = vpack.c.b16 %v3460, %v3459
    %v3463 = vsel %vm2961, %v3461, 0
    %3465 = vmatpush.bf16.msra.mxu0 0
    %3466 = vmatpush.bf16.msra.mxu0 0
    %3467 = vmatpush.bf16.msra.mxu0 0
    %3468 = vmatpush.bf16.msra.mxu0 0
    %3469 = vmatpush.bf16.msra.mxu0 %v3453
    %3470 = vmatpush.bf16.msra.mxu0 %v3452
    %3471 = vmatpush.bf16.msra.mxu0 %v3451
    %3472 = vmatpush.bf16.msra.mxu0 %v3450
    %3473 = vmatmul.bf16.gmra.mxu0 %v3463
    %v3474 = vpop.f32.mrf.mxu0
    %v3475 = vadd.f32 0.0, %v3474
    %v3476 = vpop.f32.mrf.mxu0
    %v3477 = vadd.f32 0.0, %v3476
    %3478 = vdwg.mxu0
    %v3479 = vadd.f32 %v3419, %v3475
    %v3480 = vadd.f32 %v3420, %v3477
    %v3481 = vpack.c.bf16 %v2869, %v2867
    %v3482 = vpack.c.bf16 %v2874, %v2872
    %v3483 = vpack.c.bf16 %v2879, %v2877
    %v3484 = vpack.c.bf16 %v2884, %v2882
    %s3485 = scalar_lea.vmem %s15, 80
    %v3486 = vld [vmem:[%s3485] sm:$0xf]
    %v3487 = vld [vmem:[%s3485 + $0x4] sm:$0xf]
    %v3490 = vunpack.c.l.b16 %v3486
    %v3491 = vunpack.c.l.b16 %v3487
    %v3492 = vpack.c.b16 %v3491, %v3490
    %v3494 = vsel %vm2961, %v3492, 0
    %3496 = vmatpush.bf16.msra.mxu0 0
    %3497 = vmatpush.bf16.msra.mxu0 0
    %3498 = vmatpush.bf16.msra.mxu0 0
    %3499 = vmatpush.bf16.msra.mxu0 0
    %3500 = vmatpush.bf16.msra.mxu0 %v3484
    %3501 = vmatpush.bf16.msra.mxu0 %v3483
    %3502 = vmatpush.bf16.msra.mxu0 %v3482
    %3503 = vmatpush.bf16.msra.mxu0 %v3481
    %3504 = vmatmul.bf16.gmra.mxu0 %v3494
    %v3505 = vpop.f32.mrf.mxu0
    %v3506 = vadd.f32 0.0, %v3505
    %v3507 = vpop.f32.mrf.mxu0
    %v3508 = vadd.f32 0.0, %v3507
    %3509 = vdwg.mxu0
    %v3510 = vadd.f32 %v3479, %v3506
    %v3511 = vadd.f32 %v3480, %v3508
    %3512 = vrot.lane.b32.xlu0 %v2867, 127
    %v3513 = vpop.permute.xlu0 %3512
    %3514 = vrot.lane.b32.xlu0 %v2869, 127
    %v3515 = vpop.permute.xlu0 %3514
    %3516 = vrot.lane.b32.xlu0 %v2872, 127
    %v3517 = vpop.permute.xlu0 %3516
    %3518 = vrot.lane.b32.xlu0 %v2874, 127
    %v3519 = vpop.permute.xlu0 %3518
    %3520 = vrot.lane.b32.xlu0 %v2877, 127
    %v3521 = vpop.permute.xlu0 %3520
    %3522 = vrot.lane.b32.xlu0 %v2879, 127
    %v3523 = vpop.permute.xlu0 %3522
    %3524 = vrot.lane.b32.xlu0 %v2882, 127
    %v3525 = vpop.permute.xlu0 %3524
    %3526 = vrot.lane.b32.xlu0 %v2884, 127
    %v3527 = vpop.permute.xlu0 %3526
    %s3528 = scalar_lea.vmem %s4, 11
    %v3529 = vld [vmem:[%s3528] sm:$0x1]
    %v3531 = vperm.slane %v3529, 0
    %v3533 = vmul.f32 %v3513, %v3531
    %v3534 = vmul.f32 %v3515, %v3531
    %v3535 = vmul.f32 %v3517, %v3531
    %v3536 = vmul.f32 %v3519, %v3531
    %v3537 = vmul.f32 %v3521, %v3531
    %v3538 = vmul.f32 %v3523, %v3531
    %v3539 = vmul.f32 %v3525, %v3531
    %v3540 = vmul.f32 %v3527, %v3531
    %v3541 = vpack.c.bf16 %v3534, %v3533
    %v3542 = vpack.c.bf16 %v3536, %v3535
    %v3543 = vpack.c.bf16 %v3538, %v3537
    %v3544 = vpack.c.bf16 %v3540, %v3539
    %s3545 = scalar_lea.vmem %s15, 88
    %v3546 = vld [vmem:[%s3545] sm:$0xf]
    %v3547 = vld [vmem:[%s3545 + $0x4] sm:$0xf]
    %v3550 = vunpack.c.l.b16 %v3546
    %v3551 = vunpack.c.l.b16 %v3547
    %v3552 = vpack.c.b16 %v3551, %v3550
    %v3554 = vsel %vm2961, %v3552, 0
    %3556 = vmatpush.bf16.msra.mxu0 0
    %3557 = vmatpush.bf16.msra.mxu0 0
    %3558 = vmatpush.bf16.msra.mxu0 0
    %3559 = vmatpush.bf16.msra.mxu0 0
    %3560 = vmatpush.bf16.msra.mxu0 %v3544
    %3561 = vmatpush.bf16.msra.mxu0 %v3543
    %3562 = vmatpush.bf16.msra.mxu0 %v3542
    %3563 = vmatpush.bf16.msra.mxu0 %v3541
    %3564 = vmatmul.bf16.gmra.mxu0 %v3554
    %v3565 = vpop.f32.mrf.mxu0
    %v3566 = vadd.f32 0.0, %v3565
    %v3567 = vpop.f32.mrf.mxu0
    %v3568 = vadd.f32 0.0, %v3567
    %3569 = vdwg.mxu0
    %v3570 = vadd.f32 %v3510, %v3566
    %v3571 = vadd.f32 %v3511, %v3568
    %3572 = vrot.lane.b32.xlu0 %v2867, 122
    %v3573 = vpop.permute.xlu0 %3572
    %3574 = vrot.lane.b32.xlu0 %v2869, 122
    %v3575 = vpop.permute.xlu0 %3574
    %3576 = vrot.lane.b32.xlu0 %v2872, 122
    %v3577 = vpop.permute.xlu0 %3576
    %3578 = vrot.lane.b32.xlu0 %v2874, 122
    %v3579 = vpop.permute.xlu0 %3578
    %3580 = vrot.lane.b32.xlu0 %v2877, 122
    %v3581 = vpop.permute.xlu0 %3580
    %3582 = vrot.lane.b32.xlu0 %v2879, 122
    %v3583 = vpop.permute.xlu0 %3582
    %3584 = vrot.lane.b32.xlu0 %v2882, 122
    %v3585 = vpop.permute.xlu0 %3584
    %3586 = vrot.lane.b32.xlu0 %v2884, 122
    %v3587 = vpop.permute.xlu0 %3586
    %s3588 = scalar_lea.vmem %s4, 12
    %v3589 = vld [vmem:[%s3588] sm:$0x1]
    %v3591 = vperm.slane %v3589, 0
    %v3593 = vmul.f32 %v3573, %v3591
    %v3594 = vmul.f32 %v3575, %v3591
    %v3595 = vmul.f32 %v3577, %v3591
    %v3596 = vmul.f32 %v3579, %v3591
    %v3597 = vmul.f32 %v3581, %v3591
    %v3598 = vmul.f32 %v3583, %v3591
    %v3599 = vmul.f32 %v3585, %v3591
    %v3600 = vmul.f32 %v3587, %v3591
    %v3601 = vpack.c.bf16 %v3594, %v3593
    %v3602 = vpack.c.bf16 %v3596, %v3595
    %v3603 = vpack.c.bf16 %v3598, %v3597
    %v3604 = vpack.c.bf16 %v3600, %v3599
    %s3605 = scalar_lea.vmem %s15, 96
    %v3606 = vld [vmem:[%s3605] sm:$0xf]
    %v3607 = vld [vmem:[%s3605 + $0x4] sm:$0xf]
    %v3610 = vunpack.c.l.b16 %v3606
    %v3611 = vunpack.c.l.b16 %v3607
    %v3612 = vpack.c.b16 %v3611, %v3610
    %v3614 = vsel %vm2961, %v3612, 0
    %3616 = vmatpush.bf16.msra.mxu0 0
    %3617 = vmatpush.bf16.msra.mxu0 0
    %3618 = vmatpush.bf16.msra.mxu0 0
    %3619 = vmatpush.bf16.msra.mxu0 0
    %3620 = vmatpush.bf16.msra.mxu0 %v3604
    %3621 = vmatpush.bf16.msra.mxu0 %v3603
    %3622 = vmatpush.bf16.msra.mxu0 %v3602
    %3623 = vmatpush.bf16.msra.mxu0 %v3601
    %3624 = vmatmul.bf16.gmra.mxu0 %v3614
    %v3625 = vpop.f32.mrf.mxu0
    %v3626 = vadd.f32 0.0, %v3625
    %v3627 = vpop.f32.mrf.mxu0
    %v3628 = vadd.f32 0.0, %v3627
    %3629 = vdwg.mxu0
    %v3630 = vadd.f32 %v3570, %v3626
    %v3631 = vadd.f32 %v3571, %v3628
    %3632 = vrot.lane.b32.xlu0 %v2867, 121
    %v3633 = vpop.permute.xlu0 %3632
    %3634 = vrot.lane.b32.xlu0 %v2869, 121
    %v3635 = vpop.permute.xlu0 %3634
    %3636 = vrot.lane.b32.xlu0 %v2872, 121
    %v3637 = vpop.permute.xlu0 %3636
    %3638 = vrot.lane.b32.xlu0 %v2874, 121
    %v3639 = vpop.permute.xlu0 %3638
    %3640 = vrot.lane.b32.xlu0 %v2877, 121
    %v3641 = vpop.permute.xlu0 %3640
    %3642 = vrot.lane.b32.xlu0 %v2879, 121
    %v3643 = vpop.permute.xlu0 %3642
    %3644 = vrot.lane.b32.xlu0 %v2882, 121
    %v3645 = vpop.permute.xlu0 %3644
    %3646 = vrot.lane.b32.xlu0 %v2884, 121
    %v3647 = vpop.permute.xlu0 %3646
    %s3648 = scalar_lea.vmem %s4, 13
    %v3649 = vld [vmem:[%s3648] sm:$0x1]
    %v3651 = vperm.slane %v3649, 0
    %v3653 = vmul.f32 %v3633, %v3651
    %v3654 = vmul.f32 %v3635, %v3651
    %v3655 = vmul.f32 %v3637, %v3651
    %v3656 = vmul.f32 %v3639, %v3651
    %v3657 = vmul.f32 %v3641, %v3651
    %v3658 = vmul.f32 %v3643, %v3651
    %v3659 = vmul.f32 %v3645, %v3651
    %v3660 = vmul.f32 %v3647, %v3651
    %v3661 = vpack.c.bf16 %v3654, %v3653
    %v3662 = vpack.c.bf16 %v3656, %v3655
    %v3663 = vpack.c.bf16 %v3658, %v3657
    %v3664 = vpack.c.bf16 %v3660, %v3659
    %s3665 = scalar_lea.vmem %s15, 104
    %v3666 = vld [vmem:[%s3665] sm:$0xf]
    %v3667 = vld [vmem:[%s3665 + $0x4] sm:$0xf]
    %v3670 = vunpack.c.l.b16 %v3666
    %v3671 = vunpack.c.l.b16 %v3667
    %v3672 = vpack.c.b16 %v3671, %v3670
    %v3674 = vsel %vm2961, %v3672, 0
    %3676 = vmatpush.bf16.msra.mxu0 0
    %3677 = vmatpush.bf16.msra.mxu0 0
    %3678 = vmatpush.bf16.msra.mxu0 0
    %3679 = vmatpush.bf16.msra.mxu0 0
    %3680 = vmatpush.bf16.msra.mxu0 %v3664
    %3681 = vmatpush.bf16.msra.mxu0 %v3663
    %3682 = vmatpush.bf16.msra.mxu0 %v3662
    %3683 = vmatpush.bf16.msra.mxu0 %v3661
    %3684 = vmatmul.bf16.gmra.mxu0 %v3674
    %v3685 = vpop.f32.mrf.mxu0
    %v3686 = vadd.f32 0.0, %v3685
    %v3687 = vpop.f32.mrf.mxu0
    %v3688 = vadd.f32 0.0, %v3687
    %3689 = vdwg.mxu0
    %v3690 = vadd.f32 %v3630, %v3686
    %v3691 = vadd.f32 %v3631, %v3688
    %3692 = vrot.lane.b32.xlu0 %v2867, 120
    %v3693 = vpop.permute.xlu0 %3692
    %3694 = vrot.lane.b32.xlu0 %v2869, 120
    %v3695 = vpop.permute.xlu0 %3694
    %3696 = vrot.lane.b32.xlu0 %v2872, 120
    %v3697 = vpop.permute.xlu0 %3696
    %3698 = vrot.lane.b32.xlu0 %v2874, 120
    %v3699 = vpop.permute.xlu0 %3698
    %3700 = vrot.lane.b32.xlu0 %v2877, 120
    %v3701 = vpop.permute.xlu0 %3700
    %3702 = vrot.lane.b32.xlu0 %v2879, 120
    %v3703 = vpop.permute.xlu0 %3702
    %3704 = vrot.lane.b32.xlu0 %v2882, 120
    %v3705 = vpop.permute.xlu0 %3704
    %3706 = vrot.lane.b32.xlu0 %v2884, 120
    %v3707 = vpop.permute.xlu0 %3706
    %s3708 = scalar_lea.vmem %s4, 14
    %v3709 = vld [vmem:[%s3708] sm:$0x1]
    %v3711 = vperm.slane %v3709, 0
    %v3713 = vmul.f32 %v3693, %v3711
    %v3714 = vmul.f32 %v3695, %v3711
    %v3715 = vmul.f32 %v3697, %v3711
    %v3716 = vmul.f32 %v3699, %v3711
    %v3717 = vmul.f32 %v3701, %v3711
    %v3718 = vmul.f32 %v3703, %v3711
    %v3719 = vmul.f32 %v3705, %v3711
    %v3720 = vmul.f32 %v3707, %v3711
    %v3721 = vpack.c.bf16 %v3714, %v3713
    %v3722 = vpack.c.bf16 %v3716, %v3715
    %v3723 = vpack.c.bf16 %v3718, %v3717
    %v3724 = vpack.c.bf16 %v3720, %v3719
    %s3725 = scalar_lea.vmem %s15, 112
    %v3726 = vld [vmem:[%s3725] sm:$0xf]
    %v3727 = vld [vmem:[%s3725 + $0x4] sm:$0xf]
    %v3730 = vunpack.c.l.b16 %v3726
    %v3731 = vunpack.c.l.b16 %v3727
    %v3732 = vpack.c.b16 %v3731, %v3730
    %v3734 = vsel %vm2961, %v3732, 0
    %3736 = vmatpush.bf16.msra.mxu0 0
    %3737 = vmatpush.bf16.msra.mxu0 0
    %3738 = vmatpush.bf16.msra.mxu0 0
    %3739 = vmatpush.bf16.msra.mxu0 0
    %3740 = vmatpush.bf16.msra.mxu0 %v3724
    %3741 = vmatpush.bf16.msra.mxu0 %v3723
    %3742 = vmatpush.bf16.msra.mxu0 %v3722
    %3743 = vmatpush.bf16.msra.mxu0 %v3721
    %3744 = vmatmul.bf16.gmra.mxu0 %v3734
    %v3745 = vpop.f32.mrf.mxu0
    %v3746 = vadd.f32 0.0, %v3745
    %v3747 = vpop.f32.mrf.mxu0
    %v3748 = vadd.f32 0.0, %v3747
    %3749 = vdwg.mxu0
    %v3750 = vadd.f32 %v3690, %v3746
    %v3751 = vadd.f32 %v3691, %v3748
    %3752 = vrot.lane.b32.xlu0 %v2867, 119
    %v3753 = vpop.permute.xlu0 %3752
    %3754 = vrot.lane.b32.xlu0 %v2869, 119
    %v3755 = vpop.permute.xlu0 %3754
    %3756 = vrot.lane.b32.xlu0 %v2872, 119
    %v3757 = vpop.permute.xlu0 %3756
    %3758 = vrot.lane.b32.xlu0 %v2874, 119
    %v3759 = vpop.permute.xlu0 %3758
    %3760 = vrot.lane.b32.xlu0 %v2877, 119
    %v3761 = vpop.permute.xlu0 %3760
    %3762 = vrot.lane.b32.xlu0 %v2879, 119
    %v3763 = vpop.permute.xlu0 %3762
    %3764 = vrot.lane.b32.xlu0 %v2882, 119
    %v3765 = vpop.permute.xlu0 %3764
    %3766 = vrot.lane.b32.xlu0 %v2884, 119
    %v3767 = vpop.permute.xlu0 %3766
    %s3768 = scalar_lea.vmem %s4, 15
    %v3769 = vld [vmem:[%s3768] sm:$0x1]
    %v3771 = vperm.slane %v3769, 0
    %v3773 = vmul.f32 %v3753, %v3771
    %v3774 = vmul.f32 %v3755, %v3771
    %v3775 = vmul.f32 %v3757, %v3771
    %v3776 = vmul.f32 %v3759, %v3771
    %v3777 = vmul.f32 %v3761, %v3771
    %v3778 = vmul.f32 %v3763, %v3771
    %v3779 = vmul.f32 %v3765, %v3771
    %v3780 = vmul.f32 %v3767, %v3771
    %v3781 = vpack.c.bf16 %v3774, %v3773
    %v3782 = vpack.c.bf16 %v3776, %v3775
    %v3783 = vpack.c.bf16 %v3778, %v3777
    %v3784 = vpack.c.bf16 %v3780, %v3779
    %s3785 = scalar_lea.vmem %s15, 120
    %v3786 = vld [vmem:[%s3785] sm:$0xf]
    %v3787 = vld [vmem:[%s3785 + $0x4] sm:$0xf]
    %v3790 = vunpack.c.l.b16 %v3786
    %v3791 = vunpack.c.l.b16 %v3787
    %v3792 = vpack.c.b16 %v3791, %v3790
    %v3794 = vsel %vm2961, %v3792, 0
    %3796 = vmatpush.bf16.msra.mxu0 0
    %3797 = vmatpush.bf16.msra.mxu0 0
    %3798 = vmatpush.bf16.msra.mxu0 0
    %3799 = vmatpush.bf16.msra.mxu0 0
    %3800 = vmatpush.bf16.msra.mxu0 %v3784
    %3801 = vmatpush.bf16.msra.mxu0 %v3783
    %3802 = vmatpush.bf16.msra.mxu0 %v3782
    %3803 = vmatpush.bf16.msra.mxu0 %v3781
    %3804 = vmatmul.bf16.gmra.mxu0 %v3794
    %v3805 = vpop.f32.mrf.mxu0
    %v3806 = vadd.f32 0.0, %v3805
    %v3807 = vpop.f32.mrf.mxu0
    %v3808 = vadd.f32 0.0, %v3807
    %3809 = vdwg.mxu0
    %v3810 = vadd.f32 %v3750, %v3806
    %v3811 = vadd.f32 %v3751, %v3808
    %3812 = vadd.xlane.f32.xlu0 %v3810
    %v3813 = vpop.xlane.xlu0 %3812
    %3814 = vadd.xlane.f32.xlu0 %v3811
    %v3815 = vpop.xlane.xlu0 %3814
    %v3816 = vmul.f32 %v3810, %v3810
    %v3817 = vmul.f32 %v3811, %v3811
    %3818 = vadd.xlane.f32.xlu0 %v3816
    %v3819 = vpop.xlane.xlu0 %3818
    %3820 = vadd.xlane.f32.xlu0 %v3817
    %v3821 = vpop.xlane.xlu0 %3820
    %v3822 = vmul.f32 %v3813, 0.0078125
    %v3823 = vmul.f32 %v3815, 0.0078125
    %v3824 = vmul.f32 %v3819, 0.0078125
    %v3825 = vmul.f32 %v3821, 0.0078125
    %v3826 = vmul.f32 %v3822, %v3822
    %v3827 = vmul.f32 %v3823, %v3823
    %v3828 = vsub.f32 %v3824, %v3826
    %v3829 = vsub.f32 %v3825, %v3827
    %v3830 = vmax.f32 %v3828, 0.0
    %v3831 = vmax.f32 %v3829, 0.0
    %v3832 = vld [vmem:[%s16] sm:$0xff]
    %v3833 = vld [vmem:[%s16 + $0x8] sm:$0xff]
    %v3834 = vadd.f32 %v3830, 1e-05
    %v3835 = vadd.f32 %v3831, 1e-05
    %v3836 = vrsqrt.pop %v3834
    %v3837 = vmul.f32 %v3836, %v3834
    %v3838 = vmul.f32 %v3837, %v3836
    %v3839 = vmul.f32 0.5, %v3838
    %v3840 = vsub.f32 1.5, %v3839
    %v3841 = vmul.f32 %v3836, %v3840
    %vm3842 = vweird.f32 %v3834
    %vm3843 = vweird.f32 %v3836
    %vm3844 = vmor %vm3842, %vm3843
    %v3845 = vsel %vm3844, %v3836, %v3841
    %v3846 = vrsqrt.pop %v3835
    %v3847 = vmul.f32 %v3846, %v3835
    %v3848 = vmul.f32 %v3847, %v3846
    %v3849 = vmul.f32 0.5, %v3848
    %v3850 = vsub.f32 1.5, %v3849
    %v3851 = vmul.f32 %v3846, %v3850
    %vm3852 = vweird.f32 %v3835
    %vm3853 = vweird.f32 %v3846
    %vm3854 = vmor %vm3852, %vm3853
    %v3855 = vsel %vm3854, %v3846, %v3851
    %v3856 = vmul.f32 %v3832, %v3845
    %v3857 = vmul.f32 %v3833, %v3855
    %v3858 = vld [vmem:[%s17] sm:$0xff]
    %v3859 = vld [vmem:[%s17 + $0x8] sm:$0xff]
    %v3860 = vmul.f32 %v3822, %v3856
    %v3861 = vmul.f32 %v3823, %v3857
    %v3862 = vsub.f32 %v3858, %v3860
    %v3863 = vsub.f32 %v3859, %v3861
    %3865 = vset.pattern.permute.xlu0 0
    %3866 = vperm.xlu0 %3865, %v3856
    %v3867 = vpop.permute.xlu0 %3866
    %3870 = vset.pattern.permute.xlu0 0
    %3871 = vperm.xlu0 %3870, %v3857
    %v3872 = vpop.permute.xlu0 %3871
    %v3874 = vmul.f32 %v3810, %v3867
    %v3875 = vmul.f32 %v3811, %v3872
    %3877 = vset.pattern.permute.xlu0 0
    %3878 = vperm.xlu0 %3877, %v3862
    %v3879 = vpop.permute.xlu0 %3878
    %3882 = vset.pattern.permute.xlu0 0
    %3883 = vperm.xlu0 %3882, %v3863
    %v3884 = vpop.permute.xlu0 %3883
    %v3886 = vadd.f32 %v3874, %v3879
    %v3887 = vadd.f32 %v3875, %v3884
    %v3888 = vmax.f32 %v3886, 0.0
    %v3889 = vmax.f32 %v3887, 0.0
    %3890 = vst [vmem:[#allocation2] sm:$0xff] %v3888
    %3891 = vst [vmem:[#allocation2 + $0x8] sm:$0xff] %v3889
    %3892 = vst [vmem:[#allocation2 + $0x10] sm:$0xff] %v1615
    %3893 = vst [vmem:[#allocation2 + $0x18] sm:$0xff] %v1616
    %v3894 = vld [vmem:[#allocation2] sm:$0xff]
    %v3895 = vld [vmem:[#allocation2 + $0x8] sm:$0xff]
    %v3896 = vld [vmem:[#allocation2 + $0x10] sm:$0xff]
    %v3897 = vld [vmem:[#allocation2 + $0x18] sm:$0xff]
    %v3898 = vpack.c.bf16 %v3895, %v3894
    %v3899 = vpack.c.bf16 %v3897, %v3896
    %v3900 = vld [vmem:[%s8] sm:$0xff]
    %v3901 = vld [vmem:[%s8 + $0x8] sm:$0xff]
    %v3902 = vld [vmem:[%s8 + $0x10] sm:$0xff]
    %v3903 = vld [vmem:[%s8 + $0x18] sm:$0xff]
    %v3904 = vld [vmem:[%s8 + $0x20] sm:$0xff]
    %v3905 = vld [vmem:[%s8 + $0x28] sm:$0xff]
    %v3906 = vld [vmem:[%s8 + $0x30] sm:$0xff]
    %v3907 = vld [vmem:[%s8 + $0x38] sm:$0xff]
    %v3908 = vld [vmem:[%s8 + $0x40] sm:$0xff]
    %v3909 = vld [vmem:[%s8 + $0x48] sm:$0xff]
    %v3910 = vld [vmem:[%s8 + $0x50] sm:$0xff]
    %v3911 = vld [vmem:[%s8 + $0x58] sm:$0xff]
    %v3912 = vld [vmem:[%s8 + $0x60] sm:$0xff]
    %v3913 = vld [vmem:[%s8 + $0x68] sm:$0xff]
    %v3914 = vld [vmem:[%s8 + $0x70] sm:$0xff]
    %v3915 = vld [vmem:[%s8 + $0x78] sm:$0xff]
    %v3916 = vld [vmem:[%s8 + $0x80] sm:$0xff]
    %v3917 = vld [vmem:[%s8 + $0x88] sm:$0xff]
    %v3918 = vld [vmem:[%s8 + $0x90] sm:$0xff]
    %v3919 = vld [vmem:[%s8 + $0x98] sm:$0xff]
    %v3920 = vld [vmem:[%s8 + $0xa0] sm:$0xff]
    %v3921 = vld [vmem:[%s8 + $0xa8] sm:$0xff]
    %v3922 = vld [vmem:[%s8 + $0xb0] sm:$0xff]
    %v3923 = vld [vmem:[%s8 + $0xb8] sm:$0xff]
    %v3924 = vld [vmem:[%s8 + $0xc0] sm:$0xff]
    %v3925 = vld [vmem:[%s8 + $0xc8] sm:$0xff]
    %v3926 = vld [vmem:[%s8 + $0xd0] sm:$0xff]
    %v3927 = vld [vmem:[%s8 + $0xd8] sm:$0xff]
    %v3928 = vld [vmem:[%s8 + $0xe0] sm:$0xff]
    %v3929 = vld [vmem:[%s8 + $0xe8] sm:$0xff]
    %v3930 = vld [vmem:[%s8 + $0xf0] sm:$0xff]
    %v3931 = vld [vmem:[%s8 + $0xf8] sm:$0xff]
    %v3964 = vunpack.c.l.b16 %v3900
    %v3965 = vunpack.c.h.b16 %v3900
    %v3966 = vunpack.c.l.b16 %v3901
    %v3967 = vunpack.c.h.b16 %v3901
    %v3968 = vunpack.c.l.b16 %v3902
    %v3969 = vunpack.c.h.b16 %v3902
    %v3970 = vunpack.c.l.b16 %v3903
    %v3971 = vunpack.c.h.b16 %v3903
    %v3972 = vunpack.c.l.b16 %v3904
    %v3973 = vunpack.c.h.b16 %v3904
    %v3974 = vunpack.c.l.b16 %v3905
    %v3975 = vunpack.c.h.b16 %v3905
    %v3976 = vunpack.c.l.b16 %v3906
    %v3977 = vunpack.c.h.b16 %v3906
    %v3978 = vunpack.c.l.b16 %v3907
    %v3979 = vunpack.c.h.b16 %v3907
    %v3980 = vunpack.c.l.b16 %v3908
    %v3981 = vunpack.c.h.b16 %v3908
    %v3982 = vunpack.c.l.b16 %v3909
    %v3983 = vunpack.c.h.b16 %v3909
    %v3984 = vunpack.c.l.b16 %v3910
    %v3985 = vunpack.c.h.b16 %v3910
    %v3986 = vunpack.c.l.b16 %v3911
    %v3987 = vunpack.c.h.b16 %v3911
    %v3988 = vunpack.c.l.b16 %v3912
    %v3989 = vunpack.c.h.b16 %v3912
    %v3990 = vunpack.c.l.b16 %v3913
    %v3991 = vunpack.c.h.b16 %v3913
    %v3992 = vunpack.c.l.b16 %v3914
    %v3993 = vunpack.c.h.b16 %v3914
    %v3994 = vunpack.c.l.b16 %v3915
    %v3995 = vunpack.c.h.b16 %v3915
    %v3996 = vunpack.c.l.b16 %v3916
    %v3997 = vunpack.c.h.b16 %v3916
    %v3998 = vunpack.c.l.b16 %v3917
    %v3999 = vunpack.c.h.b16 %v3917
    %v4000 = vunpack.c.l.b16 %v3918
    %v4001 = vunpack.c.h.b16 %v3918
    %v4002 = vunpack.c.l.b16 %v3919
    %v4003 = vunpack.c.h.b16 %v3919
    %v4004 = vunpack.c.l.b16 %v3920
    %v4005 = vunpack.c.h.b16 %v3920
    %v4006 = vunpack.c.l.b16 %v3921
    %v4007 = vunpack.c.h.b16 %v3921
    %v4008 = vunpack.c.l.b16 %v3922
    %v4009 = vunpack.c.h.b16 %v3922
    %v4010 = vunpack.c.l.b16 %v3923
    %v4011 = vunpack.c.h.b16 %v3923
    %v4012 = vunpack.c.l.b16 %v3924
    %v4013 = vunpack.c.h.b16 %v3924
    %v4014 = vunpack.c.l.b16 %v3925
    %v4015 = vunpack.c.h.b16 %v3925
    %v4016 = vunpack.c.l.b16 %v3926
    %v4017 = vunpack.c.h.b16 %v3926
    %v4018 = vunpack.c.l.b16 %v3927
    %v4019 = vunpack.c.h.b16 %v3927
    %v4020 = vunpack.c.l.b16 %v3928
    %v4021 = vunpack.c.h.b16 %v3928
    %v4022 = vunpack.c.l.b16 %v3929
    %v4023 = vunpack.c.h.b16 %v3929
    %v4024 = vunpack.c.l.b16 %v3930
    %v4025 = vunpack.c.h.b16 %v3930
    %v4026 = vunpack.c.l.b16 %v3931
    %v4027 = vunpack.c.h.b16 %v3931
    %v4028 = vpack.c.b16 %v3968, %v3964
    %v4029 = vpack.c.b16 %v3969, %v3965
    %v4030 = vpack.c.b16 %v3970, %v3966
    %v4031 = vpack.c.b16 %v3971, %v3967
    %v4032 = vpack.c.b16 %v3976, %v3972
    %v4033 = vpack.c.b16 %v3977, %v3973
    %v4034 = vpack.c.b16 %v3978, %v3974
    %v4035 = vpack.c.b16 %v3979, %v3975
    %v4036 = vpack.c.b16 %v3984, %v3980
    %v4037 = vpack.c.b16 %v3985, %v3981
    %v4038 = vpack.c.b16 %v3986, %v3982
    %v4039 = vpack.c.b16 %v3987, %v3983
    %v4040 = vpack.c.b16 %v3992, %v3988
    %v4041 = vpack.c.b16 %v3993, %v3989
    %v4042 = vpack.c.b16 %v3994, %v3990
    %v4043 = vpack.c.b16 %v3995, %v3991
    %v4044 = vpack.c.b16 %v4000, %v3996
    %v4045 = vpack.c.b16 %v4001, %v3997
    %v4046 = vpack.c.b16 %v4002, %v3998
    %v4047 = vpack.c.b16 %v4003, %v3999
    %v4048 = vpack.c.b16 %v4008, %v4004
    %v4049 = vpack.c.b16 %v4009, %v4005
    %v4050 = vpack.c.b16 %v4010, %v4006
    %v4051 = vpack.c.b16 %v4011, %v4007
    %v4052 = vpack.c.b16 %v4016, %v4012
    %v4053 = vpack.c.b16 %v4017, %v4013
    %v4054 = vpack.c.b16 %v4018, %v4014
    %v4055 = vpack.c.b16 %v4019, %v4015
    %v4056 = vpack.c.b16 %v4024, %v4020
    %v4057 = vpack.c.b16 %v4025, %v4021
    %v4058 = vpack.c.b16 %v4026, %v4022
    %v4059 = vpack.c.b16 %v4027, %v4023
    %4092 = vmatpush.bf16.msra.mxu0 %v4056
    %4093 = vmatpush.bf16.msra.mxu0 %v4052
    %4094 = vmatpush.bf16.msra.mxu0 %v4048
    %4095 = vmatpush.bf16.msra.mxu0 %v4044
    %4096 = vmatpush.bf16.msra.mxu0 %v4040
    %4097 = vmatpush.bf16.msra.mxu0 %v4036
    %4098 = vmatpush.bf16.msra.mxu0 %v4032
    %4099 = vmatpush.bf16.msra.mxu0 %v4028
    %4100 = vmatmul.bf16.gmra.mxu0 %v3898
    %v4101 = vpop.f32.mrf.mxu0
    %v4102 = vadd.f32 0.0, %v4101
    %v4103 = vpop.f32.mrf.mxu0
    %v4104 = vadd.f32 0.0, %v4103
    %4105 = vmatmul.bf16.gmra.mxu0 %v3899
    %v4106 = vpop.f32.mrf.mxu0
    %v4107 = vadd.f32 0.0, %v4106
    %v4108 = vpop.f32.mrf.mxu0
    %v4109 = vadd.f32 0.0, %v4108
    %4110 = vdwg.mxu0
    %4111 = vmatpush.bf16.msra.mxu0 %v4057
    %4112 = vmatpush.bf16.msra.mxu0 %v4053
    %4113 = vmatpush.bf16.msra.mxu0 %v4049
    %4114 = vmatpush.bf16.msra.mxu0 %v4045
    %4115 = vmatpush.bf16.msra.mxu0 %v4041
    %4116 = vmatpush.bf16.msra.mxu0 %v4037
    %4117 = vmatpush.bf16.msra.mxu0 %v4033
    %4118 = vmatpush.bf16.msra.mxu0 %v4029
    %4119 = vmatmul.bf16.gmra.mxu0 %v3898
    %v4120 = vpop.f32.mrf.mxu0
    %v4121 = vadd.f32 0.0, %v4120
    %v4122 = vpop.f32.mrf.mxu0
    %v4123 = vadd.f32 0.0, %v4122
    %4124 = vmatmul.bf16.gmra.mxu0 %v3899
    %v4125 = vpop.f32.mrf.mxu0
    %v4126 = vadd.f32 0.0, %v4125
    %v4127 = vpop.f32.mrf.mxu0
    %v4128 = vadd.f32 0.0, %v4127
    %4129 = vdwg.mxu0
    %4130 = vmatpush.bf16.msra.mxu0 %v4058
    %4131 = vmatpush.bf16.msra.mxu0 %v4054
    %4132 = vmatpush.bf16.msra.mxu0 %v4050
    %4133 = vmatpush.bf16.msra.mxu0 %v4046
    %4134 = vmatpush.bf16.msra.mxu0 %v4042
    %4135 = vmatpush.bf16.msra.mxu0 %v4038
    %4136 = vmatpush.bf16.msra.mxu0 %v4034
    %4137 = vmatpush.bf16.msra.mxu0 %v4030
    %4138 = vmatmul.bf16.gmra.mxu0 %v3898
    %v4139 = vpop.f32.mrf.mxu0
    %v4140 = vadd.f32 0.0, %v4139
    %v4141 = vpop.f32.mrf.mxu0
    %v4142 = vadd.f32 0.0, %v4141
    %4143 = vmatmul.bf16.gmra.mxu0 %v3899
    %v4144 = vpop.f32.mrf.mxu0
    %v4145 = vadd.f32 0.0, %v4144
    %v4146 = vpop.f32.mrf.mxu0
    %v4147 = vadd.f32 0.0, %v4146
    %4148 = vdwg.mxu0
    %4149 = vmatpush.bf16.msra.mxu0 %v4059
    %4150 = vmatpush.bf16.msra.mxu0 %v4055
    %4151 = vmatpush.bf16.msra.mxu0 %v4051
    %4152 = vmatpush.bf16.msra.mxu0 %v4047
    %4153 = vmatpush.bf16.msra.mxu0 %v4043
    %4154 = vmatpush.bf16.msra.mxu0 %v4039
    %4155 = vmatpush.bf16.msra.mxu0 %v4035
    %4156 = vmatpush.bf16.msra.mxu0 %v4031
    %4157 = vmatmul.bf16.gmra.mxu0 %v3898
    %v4158 = vpop.f32.mrf.mxu0
    %v4159 = vadd.f32 0.0, %v4158
    %v4160 = vpop.f32.mrf.mxu0
    %v4161 = vadd.f32 0.0, %v4160
    %4162 = vmatmul.bf16.gmra.mxu0 %v3899
    %v4163 = vpop.f32.mrf.mxu0
    %v4164 = vadd.f32 0.0, %v4163
    %v4165 = vpop.f32.mrf.mxu0
    %v4166 = vadd.f32 0.0, %v4165
    %4167 = vdwg.mxu0
    %4168 = vrot.lane.b32.xlu0 %v4102, 34
    %v4169 = vpop.permute.xlu0 %4168
    %4170 = vrot.lane.b32.xlu0 %v4104, 34
    %v4171 = vpop.permute.xlu0 %4170
    %4172 = vrot.lane.b32.xlu0 %v4107, 34
    %v4173 = vpop.permute.xlu0 %4172
    %4174 = vrot.lane.b32.xlu0 %v4109, 34
    %v4175 = vpop.permute.xlu0 %4174
    %4176 = vrot.lane.b32.xlu0 %v4121, 34
    %v4177 = vpop.permute.xlu0 %4176
    %4178 = vrot.lane.b32.xlu0 %v4123, 34
    %v4179 = vpop.permute.xlu0 %4178
    %4180 = vrot.lane.b32.xlu0 %v4126, 34
    %v4181 = vpop.permute.xlu0 %4180
    %4182 = vrot.lane.b32.xlu0 %v4128, 34
    %v4183 = vpop.permute.xlu0 %4182
    %4184 = vrot.lane.b32.xlu0 %v4140, 34
    %v4185 = vpop.permute.xlu0 %4184
    %4186 = vrot.lane.b32.xlu0 %v4142, 34
    %v4187 = vpop.permute.xlu0 %4186
    %4188 = vrot.lane.b32.xlu0 %v4145, 34
    %v4189 = vpop.permute.xlu0 %4188
    %4190 = vrot.lane.b32.xlu0 %v4147, 34
    %v4191 = vpop.permute.xlu0 %4190
    %4192 = vrot.lane.b32.xlu0 %v4159, 34
    %v4193 = vpop.permute.xlu0 %4192
    %4194 = vrot.lane.b32.xlu0 %v4161, 34
    %v4195 = vpop.permute.xlu0 %4194
    %4196 = vrot.lane.b32.xlu0 %v4164, 34
    %v4197 = vpop.permute.xlu0 %4196
    %4198 = vrot.lane.b32.xlu0 %v4166, 34
    %v4199 = vpop.permute.xlu0 %4198
    %vm4200 = vcmp.lt.s32.totalorder %v115, 34
    %v4201 = vsel %vm4200, %v4185, %v4193
    %v4202 = vsel %vm4200, %v4187, %v4195
    %v4203 = vsel %vm4200, %v4189, %v4197
    %v4204 = vsel %vm4200, %v4191, %v4199
    %v4205 = vsel %vm4200, %v4177, %v4185
    %v4206 = vsel %vm4200, %v4179, %v4187
    %v4207 = vsel %vm4200, %v4181, %v4189
    %v4208 = vsel %vm4200, %v4183, %v4191
    %v4209 = vsel %vm4200, %v4169, %v4177
    %v4210 = vsel %vm4200, %v4171, %v4179
    %v4211 = vsel %vm4200, %v4173, %v4181
    %v4212 = vsel %vm4200, %v4175, %v4183
    %v4213 = vsel %vm4200, %v4193, %v4169
    %v4214 = vsel %vm4200, %v4195, %v4171
    %v4215 = vsel %vm4200, %v4197, %v4173
    %v4216 = vsel %vm4200, %v4199, %v4175
    %v4217 = vld [vmem:[%s3] sm:$0xf]
    %v4219 = vperm.slane %v4217, 0
    %v4220 = vperm.slane %v4217, 1
    %v4221 = vperm.slane %v4217, 2
    %v4222 = vperm.slane %v4217, 3
    %v4227 = vmul.f32 %v4213, %v4219
    %v4228 = vmul.f32 %v4209, %v4220
    %v4229 = vmul.f32 %v4205, %v4221
    %v4230 = vmul.f32 %v4201, %v4222
    %v4231 = vmul.f32 %v4214, %v4219
    %v4232 = vmul.f32 %v4210, %v4220
    %v4233 = vmul.f32 %v4206, %v4221
    %v4234 = vmul.f32 %v4202, %v4222
    %v4235 = vmul.f32 %v4215, %v4219
    %v4236 = vmul.f32 %v4211, %v4220
    %v4237 = vmul.f32 %v4207, %v4221
    %v4238 = vmul.f32 %v4203, %v4222
    %v4239 = vmul.f32 %v4216, %v4219
    %v4240 = vmul.f32 %v4212, %v4220
    %v4241 = vmul.f32 %v4208, %v4221
    %v4242 = vmul.f32 %v4204, %v4222
    %v4243 = vpack.c.bf16 %v4231, %v4227
    %v4244 = vpack.c.bf16 %v4232, %v4228
    %v4245 = vpack.c.bf16 %v4233, %v4229
    %v4246 = vpack.c.bf16 %v4234, %v4230
    %v4247 = vpack.c.bf16 %v4239, %v4235
    %v4248 = vpack.c.bf16 %v4240, %v4236
    %v4249 = vpack.c.bf16 %v4241, %v4237
    %v4250 = vpack.c.bf16 %v4242, %v4238
    %v4251 = vld [vmem:[%s18] sm:$0xf]
    %v4252 = vld [vmem:[%s18 + $0x4] sm:$0xf]
    %4253 = vrot.lane.b32.xlu0 %v4102, 33
    %v4254 = vpop.permute.xlu0 %4253
    %4255 = vrot.lane.b32.xlu0 %v4104, 33
    %v4256 = vpop.permute.xlu0 %4255
    %4257 = vrot.lane.b32.xlu0 %v4107, 33
    %v4258 = vpop.permute.xlu0 %4257
    %4259 = vrot.lane.b32.xlu0 %v4109, 33
    %v4260 = vpop.permute.xlu0 %4259
    %4261 = vrot.lane.b32.xlu0 %v4121, 33
    %v4262 = vpop.permute.xlu0 %4261
    %4263 = vrot.lane.b32.xlu0 %v4123, 33
    %v4264 = vpop.permute.xlu0 %4263
    %4265 = vrot.lane.b32.xlu0 %v4126, 33
    %v4266 = vpop.permute.xlu0 %4265
    %4267 = vrot.lane.b32.xlu0 %v4128, 33
    %v4268 = vpop.permute.xlu0 %4267
    %4269 = vrot.lane.b32.xlu0 %v4140, 33
    %v4270 = vpop.permute.xlu0 %4269
    %4271 = vrot.lane.b32.xlu0 %v4142, 33
    %v4272 = vpop.permute.xlu0 %4271
    %4273 = vrot.lane.b32.xlu0 %v4145, 33
    %v4274 = vpop.permute.xlu0 %4273
    %4275 = vrot.lane.b32.xlu0 %v4147, 33
    %v4276 = vpop.permute.xlu0 %4275
    %4277 = vrot.lane.b32.xlu0 %v4159, 33
    %v4278 = vpop.permute.xlu0 %4277
    %4279 = vrot.lane.b32.xlu0 %v4161, 33
    %v4280 = vpop.permute.xlu0 %4279
    %4281 = vrot.lane.b32.xlu0 %v4164, 33
    %v4282 = vpop.permute.xlu0 %4281
    %4283 = vrot.lane.b32.xlu0 %v4166, 33
    %v4284 = vpop.permute.xlu0 %4283
    %vm4285 = vcmp.lt.s32.totalorder %v115, 33
    %v4286 = vsel %vm4285, %v4270, %v4278
    %v4287 = vsel %vm4285, %v4272, %v4280
    %v4288 = vsel %vm4285, %v4274, %v4282
    %v4289 = vsel %vm4285, %v4276, %v4284
    %v4290 = vsel %vm4285, %v4262, %v4270
    %v4291 = vsel %vm4285, %v4264, %v4272
    %v4292 = vsel %vm4285, %v4266, %v4274
    %v4293 = vsel %vm4285, %v4268, %v4276
    %v4294 = vsel %vm4285, %v4254, %v4262
    %v4295 = vsel %vm4285, %v4256, %v4264
    %v4296 = vsel %vm4285, %v4258, %v4266
    %v4297 = vsel %vm4285, %v4260, %v4268
    %v4298 = vsel %vm4285, %v4278, %v4254
    %v4299 = vsel %vm4285, %v4280, %v4256
    %v4300 = vsel %vm4285, %v4282, %v4258
    %v4301 = vsel %vm4285, %v4284, %v4260
    %s4302 = scalar_lea.vmem %s3, 4
    %v4303 = vld [vmem:[%s4302] sm:$0xf]
    %v4305 = vperm.slane %v4303, 0
    %v4306 = vperm.slane %v4303, 1
    %v4307 = vperm.slane %v4303, 2
    %v4308 = vperm.slane %v4303, 3
    %v4313 = vmul.f32 %v4298, %v4305
    %v4314 = vmul.f32 %v4294, %v4306
    %v4315 = vmul.f32 %v4290, %v4307
    %v4316 = vmul.f32 %v4286, %v4308
    %v4317 = vmul.f32 %v4299, %v4305
    %v4318 = vmul.f32 %v4295, %v4306
    %v4319 = vmul.f32 %v4291, %v4307
    %v4320 = vmul.f32 %v4287, %v4308
    %v4321 = vmul.f32 %v4300, %v4305
    %v4322 = vmul.f32 %v4296, %v4306
    %v4323 = vmul.f32 %v4292, %v4307
    %v4324 = vmul.f32 %v4288, %v4308
    %v4325 = vmul.f32 %v4301, %v4305
    %v4326 = vmul.f32 %v4297, %v4306
    %v4327 = vmul.f32 %v4293, %v4307
    %v4328 = vmul.f32 %v4289, %v4308
    %v4329 = vpack.c.bf16 %v4317, %v4313
    %v4330 = vpack.c.bf16 %v4318, %v4314
    %v4331 = vpack.c.bf16 %v4319, %v4315
    %v4332 = vpack.c.bf16 %v4320, %v4316
    %v4333 = vpack.c.bf16 %v4325, %v4321
    %v4334 = vpack.c.bf16 %v4326, %v4322
    %v4335 = vpack.c.bf16 %v4327, %v4323
    %v4336 = vpack.c.bf16 %v4328, %v4324
    %s4337 = scalar_lea.vmem %s18, 8
    %v4338 = vld [vmem:[%s4337] sm:$0xf]
    %v4339 = vld [vmem:[%s4337 + $0x4] sm:$0xf]
    %v4342 = vunpack.c.l.b16 %v4338
    %v4343 = vunpack.c.l.b16 %v4339
    %v4344 = vpack.c.b16 %v4343, %v4342
    %v4346 = vsel %vm2496, %v4344, 0
    %4348 = vmatpush.bf16.msra.mxu0 0
    %4349 = vmatpush.bf16.msra.mxu0 0
    %4350 = vmatpush.bf16.msra.mxu0 0
    %4351 = vmatpush.bf16.msra.mxu0 0
    %4352 = vmatpush.bf16.msra.mxu0 0
    %4353 = vmatpush.bf16.msra.mxu0 0
    %4354 = vmatpush.bf16.msra.mxu0 %v4333
    %4355 = vmatpush.bf16.msra.mxu0 %v4329
    %4356 = vmatmul.bf16.gmra.mxu0 %v4346
    %v4357 = vpop.f32.mrf.mxu0
    %v4358 = vadd.f32 0.0, %v4357
    %v4359 = vpop.f32.mrf.mxu0
    %v4360 = vadd.f32 0.0, %v4359
    %4361 = vdwg.mxu0
    %4362 = vmatpush.bf16.msra.mxu0 0
    %4363 = vmatpush.bf16.msra.mxu0 0
    %4364 = vmatpush.bf16.msra.mxu0 0
    %4365 = vmatpush.bf16.msra.mxu0 0
    %4366 = vmatpush.bf16.msra.mxu0 0
    %4367 = vmatpush.bf16.msra.mxu0 0
    %4368 = vmatpush.bf16.msra.mxu0 %v4334
    %4369 = vmatpush.bf16.msra.mxu0 %v4330
    %4370 = vmatmul.bf16.gmra.mxu0 %v4346
    %v4371 = vpop.f32.mrf.mxu0
    %v4372 = vadd.f32 0.0, %v4371
    %v4373 = vpop.f32.mrf.mxu0
    %v4374 = vadd.f32 0.0, %v4373
    %4375 = vdwg.mxu0
    %4376 = vmatpush.bf16.msra.mxu0 0
    %4377 = vmatpush.bf16.msra.mxu0 0
    %4378 = vmatpush.bf16.msra.mxu0 0
    %4379 = vmatpush.bf16.msra.mxu0 0
    %4380 = vmatpush.bf16.msra.mxu0 0
    %4381 = vmatpush.bf16.msra.mxu0 0
    %4382 = vmatpush.bf16.msra.mxu0 %v4335
    %4383 = vmatpush.bf16.msra.mxu0 %v4331
    %4384 = vmatmul.bf16.gmra.mxu0 %v4346
    %v4385 = vpop.f32.mrf.mxu0
    %v4386 = vadd.f32 0.0, %v4385
    %v4387 = vpop.f32.mrf.mxu0
    %v4388 = vadd.f32 0.0, %v4387
    %4389 = vdwg.mxu0
    %4390 = vmatpush.bf16.msra.mxu0 0
    %4391 = vmatpush.bf16.msra.mxu0 0
    %4392 = vmatpush.bf16.msra.mxu0 0
    %4393 = vmatpush.bf16.msra.mxu0 0
    %4394 = vmatpush.bf16.msra.mxu0 0
    %4395 = vmatpush.bf16.msra.mxu0 0
    %4396 = vmatpush.bf16.msra.mxu0 %v4336
    %4397 = vmatpush.bf16.msra.mxu0 %v4332
    %4398 = vmatmul.bf16.gmra.mxu0 %v4346
    %v4399 = vpop.f32.mrf.mxu0
    %v4400 = vadd.f32 0.0, %v4399
    %v4401 = vpop.f32.mrf.mxu0
    %v4402 = vadd.f32 0.0, %v4401
    %4403 = vdwg.mxu0
    %v4406 = vunpack.c.l.b16 %v4251
    %v4407 = vunpack.c.l.b16 %v4252
    %v4408 = vpack.c.b16 %v4407, %v4406
    %v4410 = vsel %vm2496, %v4408, 0
    %4412 = vmatpush.bf16.msra.mxu0 0
    %4413 = vmatpush.bf16.msra.mxu0 0
    %4414 = vmatpush.bf16.msra.mxu0 0
    %4415 = vmatpush.bf16.msra.mxu0 0
    %4416 = vmatpush.bf16.msra.mxu0 0
    %4417 = vmatpush.bf16.msra.mxu0 0
    %4418 = vmatpush.bf16.msra.mxu0 %v4247
    %4419 = vmatpush.bf16.msra.mxu0 %v4243
    %4420 = vmatmul.bf16.gmra.mxu0 %v4410
    %v4421 = vpop.f32.mrf.mxu0
    %v4422 = vadd.f32 %v4358, %v4421
    %v4423 = vpop.f32.mrf.mxu0
    %v4424 = vadd.f32 %v4360, %v4423
    %4425 = vdwg.mxu0
    %4426 = vmatpush.bf16.msra.mxu0 0
    %4427 = vmatpush.bf16.msra.mxu0 0
    %4428 = vmatpush.bf16.msra.mxu0 0
    %4429 = vmatpush.bf16.msra.mxu0 0
    %4430 = vmatpush.bf16.msra.mxu0 0
    %4431 = vmatpush.bf16.msra.mxu0 0
    %4432 = vmatpush.bf16.msra.mxu0 %v4248
    %4433 = vmatpush.bf16.msra.mxu0 %v4244
    %4434 = vmatmul.bf16.gmra.mxu0 %v4410
    %v4435 = vpop.f32.mrf.mxu0
    %v4436 = vadd.f32 %v4372, %v4435
    %v4437 = vpop.f32.mrf.mxu0
    %v4438 = vadd.f32 %v4374, %v4437
    %4439 = vdwg.mxu0
    %4440 = vmatpush.bf16.msra.mxu0 0
    %4441 = vmatpush.bf16.msra.mxu0 0
    %4442 = vmatpush.bf16.msra.mxu0 0
    %4443 = vmatpush.bf16.msra.mxu0 0
    %4444 = vmatpush.bf16.msra.mxu0 0
    %4445 = vmatpush.bf16.msra.mxu0 0
    %4446 = vmatpush.bf16.msra.mxu0 %v4249
    %4447 = vmatpush.bf16.msra.mxu0 %v4245
    %4448 = vmatmul.bf16.gmra.mxu0 %v4410
    %v4449 = vpop.f32.mrf.mxu0
    %v4450 = vadd.f32 %v4386, %v4449
    %v4451 = vpop.f32.mrf.mxu0
    %v4452 = vadd.f32 %v4388, %v4451
    %4453 = vdwg.mxu0
    %4454 = vmatpush.bf16.msra.mxu0 0
    %4455 = vmatpush.bf16.msra.mxu0 0
    %4456 = vmatpush.bf16.msra.mxu0 0
    %4457 = vmatpush.bf16.msra.mxu0 0
    %4458 = vmatpush.bf16.msra.mxu0 0
    %4459 = vmatpush.bf16.msra.mxu0 0
    %4460 = vmatpush.bf16.msra.mxu0 %v4250
    %4461 = vmatpush.bf16.msra.mxu0 %v4246
    %4462 = vmatmul.bf16.gmra.mxu0 %v4410
    %v4463 = vpop.f32.mrf.mxu0
    %v4464 = vadd.f32 %v4400, %v4463
    %v4465 = vpop.f32.mrf.mxu0
    %v4466 = vadd.f32 %v4402, %v4465
    %4467 = vdwg.mxu0
    %4468 = vrot.lane.b32.xlu0 %v4102, 32
    %v4469 = vpop.permute.xlu0 %4468
    %4470 = vrot.lane.b32.xlu0 %v4104, 32
    %v4471 = vpop.permute.xlu0 %4470
    %4472 = vrot.lane.b32.xlu0 %v4107, 32
    %v4473 = vpop.permute.xlu0 %4472
    %4474 = vrot.lane.b32.xlu0 %v4109, 32
    %v4475 = vpop.permute.xlu0 %4474
    %4476 = vrot.lane.b32.xlu0 %v4121, 32
    %v4477 = vpop.permute.xlu0 %4476
    %4478 = vrot.lane.b32.xlu0 %v4123, 32
    %v4479 = vpop.permute.xlu0 %4478
    %4480 = vrot.lane.b32.xlu0 %v4126, 32
    %v4481 = vpop.permute.xlu0 %4480
    %4482 = vrot.lane.b32.xlu0 %v4128, 32
    %v4483 = vpop.permute.xlu0 %4482
    %4484 = vrot.lane.b32.xlu0 %v4140, 32
    %v4485 = vpop.permute.xlu0 %4484
    %4486 = vrot.lane.b32.xlu0 %v4142, 32
    %v4487 = vpop.permute.xlu0 %4486
    %4488 = vrot.lane.b32.xlu0 %v4145, 32
    %v4489 = vpop.permute.xlu0 %4488
    %4490 = vrot.lane.b32.xlu0 %v4147, 32
    %v4491 = vpop.permute.xlu0 %4490
    %4492 = vrot.lane.b32.xlu0 %v4159, 32
    %v4493 = vpop.permute.xlu0 %4492
    %4494 = vrot.lane.b32.xlu0 %v4161, 32
    %v4495 = vpop.permute.xlu0 %4494
    %4496 = vrot.lane.b32.xlu0 %v4164, 32
    %v4497 = vpop.permute.xlu0 %4496
    %4498 = vrot.lane.b32.xlu0 %v4166, 32
    %v4499 = vpop.permute.xlu0 %4498
    %vm4500 = vcmp.lt.s32.totalorder %v115, 32
    %v4501 = vsel %vm4500, %v4485, %v4493
    %v4502 = vsel %vm4500, %v4487, %v4495
    %v4503 = vsel %vm4500, %v4489, %v4497
    %v4504 = vsel %vm4500, %v4491, %v4499
    %v4505 = vsel %vm4500, %v4477, %v4485
    %v4506 = vsel %vm4500, %v4479, %v4487
    %v4507 = vsel %vm4500, %v4481, %v4489
    %v4508 = vsel %vm4500, %v4483, %v4491
    %v4509 = vsel %vm4500, %v4469, %v4477
    %v4510 = vsel %vm4500, %v4471, %v4479
    %v4511 = vsel %vm4500, %v4473, %v4481
    %v4512 = vsel %vm4500, %v4475, %v4483
    %v4513 = vsel %vm4500, %v4493, %v4469
    %v4514 = vsel %vm4500, %v4495, %v4471
    %v4515 = vsel %vm4500, %v4497, %v4473
    %v4516 = vsel %vm4500, %v4499, %v4475
    %s4517 = scalar_lea.vmem %s3, 8
    %v4518 = vld [vmem:[%s4517] sm:$0xf]
    %v4520 = vperm.slane %v4518, 0
    %v4521 = vperm.slane %v4518, 1
    %v4522 = vperm.slane %v4518, 2
    %v4523 = vperm.slane %v4518, 3
    %v4528 = vmul.f32 %v4513, %v4520
    %v4529 = vmul.f32 %v4509, %v4521
    %v4530 = vmul.f32 %v4505, %v4522
    %v4531 = vmul.f32 %v4501, %v4523
    %v4532 = vmul.f32 %v4514, %v4520
    %v4533 = vmul.f32 %v4510, %v4521
    %v4534 = vmul.f32 %v4506, %v4522
    %v4535 = vmul.f32 %v4502, %v4523
    %v4536 = vmul.f32 %v4515, %v4520
    %v4537 = vmul.f32 %v4511, %v4521
    %v4538 = vmul.f32 %v4507, %v4522
    %v4539 = vmul.f32 %v4503, %v4523
    %v4540 = vmul.f32 %v4516, %v4520
    %v4541 = vmul.f32 %v4512, %v4521
    %v4542 = vmul.f32 %v4508, %v4522
    %v4543 = vmul.f32 %v4504, %v4523
    %v4544 = vpack.c.bf16 %v4532, %v4528
    %v4545 = vpack.c.bf16 %v4533, %v4529
    %v4546 = vpack.c.bf16 %v4534, %v4530
    %v4547 = vpack.c.bf16 %v4535, %v4531
    %v4548 = vpack.c.bf16 %v4540, %v4536
    %v4549 = vpack.c.bf16 %v4541, %v4537
    %v4550 = vpack.c.bf16 %v4542, %v4538
    %v4551 = vpack.c.bf16 %v4543, %v4539
    %s4552 = scalar_lea.vmem %s18, 16
    %v4553 = vld [vmem:[%s4552] sm:$0xf]
    %v4554 = vld [vmem:[%s4552 + $0x4] sm:$0xf]
    %v4557 = vunpack.c.l.b16 %v4553
    %v4558 = vunpack.c.l.b16 %v4554
    %v4559 = vpack.c.b16 %v4558, %v4557
    %v4561 = vsel %vm2496, %v4559, 0
    %4563 = vmatpush.bf16.msra.mxu0 0
    %4564 = vmatpush.bf16.msra.mxu0 0
    %4565 = vmatpush.bf16.msra.mxu0 0
    %4566 = vmatpush.bf16.msra.mxu0 0
    %4567 = vmatpush.bf16.msra.mxu0 0
    %4568 = vmatpush.bf16.msra.mxu0 0
    %4569 = vmatpush.bf16.msra.mxu0 %v4548
    %4570 = vmatpush.bf16.msra.mxu0 %v4544
    %4571 = vmatmul.bf16.gmra.mxu0 %v4561
    %v4572 = vpop.f32.mrf.mxu0
    %v4573 = vadd.f32 0.0, %v4572
    %v4574 = vpop.f32.mrf.mxu0
    %v4575 = vadd.f32 0.0, %v4574
    %4576 = vdwg.mxu0
    %4577 = vmatpush.bf16.msra.mxu0 0
    %4578 = vmatpush.bf16.msra.mxu0 0
    %4579 = vmatpush.bf16.msra.mxu0 0
    %4580 = vmatpush.bf16.msra.mxu0 0
    %4581 = vmatpush.bf16.msra.mxu0 0
    %4582 = vmatpush.bf16.msra.mxu0 0
    %4583 = vmatpush.bf16.msra.mxu0 %v4549
    %4584 = vmatpush.bf16.msra.mxu0 %v4545
    %4585 = vmatmul.bf16.gmra.mxu0 %v4561
    %v4586 = vpop.f32.mrf.mxu0
    %v4587 = vadd.f32 0.0, %v4586
    %v4588 = vpop.f32.mrf.mxu0
    %v4589 = vadd.f32 0.0, %v4588
    %4590 = vdwg.mxu0
    %4591 = vmatpush.bf16.msra.mxu0 0
    %4592 = vmatpush.bf16.msra.mxu0 0
    %4593 = vmatpush.bf16.msra.mxu0 0
    %4594 = vmatpush.bf16.msra.mxu0 0
    %4595 = vmatpush.bf16.msra.mxu0 0
    %4596 = vmatpush.bf16.msra.mxu0 0
    %4597 = vmatpush.bf16.msra.mxu0 %v4550
    %4598 = vmatpush.bf16.msra.mxu0 %v4546
    %4599 = vmatmul.bf16.gmra.mxu0 %v4561
    %v4600 = vpop.f32.mrf.mxu0
    %v4601 = vadd.f32 0.0, %v4600
    %v4602 = vpop.f32.mrf.mxu0
    %v4603 = vadd.f32 0.0, %v4602
    %4604 = vdwg.mxu0
    %4605 = vmatpush.bf16.msra.mxu0 0
    %4606 = vmatpush.bf16.msra.mxu0 0
    %4607 = vmatpush.bf16.msra.mxu0 0
    %4608 = vmatpush.bf16.msra.mxu0 0
    %4609 = vmatpush.bf16.msra.mxu0 0
    %4610 = vmatpush.bf16.msra.mxu0 0
    %4611 = vmatpush.bf16.msra.mxu0 %v4551
    %4612 = vmatpush.bf16.msra.mxu0 %v4547
    %4613 = vmatmul.bf16.gmra.mxu0 %v4561
    %v4614 = vpop.f32.mrf.mxu0
    %v4615 = vadd.f32 0.0, %v4614
    %v4616 = vpop.f32.mrf.mxu0
    %v4617 = vadd.f32 0.0, %v4616
    %4618 = vdwg.mxu0
    %v4619 = vadd.f32 %v4422, %v4573
    %v4620 = vadd.f32 %v4436, %v4587
    %v4621 = vadd.f32 %v4450, %v4601
    %v4622 = vadd.f32 %v4464, %v4615
    %v4623 = vadd.f32 %v4424, %v4575
    %v4624 = vadd.f32 %v4438, %v4589
    %v4625 = vadd.f32 %v4452, %v4603
    %v4626 = vadd.f32 %v4466, %v4617
    %4627 = vrot.lane.b32.xlu0 %v4102, 31
    %v4628 = vpop.permute.xlu0 %4627
    %4629 = vrot.lane.b32.xlu0 %v4104, 31
    %v4630 = vpop.permute.xlu0 %4629
    %4631 = vrot.lane.b32.xlu0 %v4107, 31
    %v4632 = vpop.permute.xlu0 %4631
    %4633 = vrot.lane.b32.xlu0 %v4109, 31
    %v4634 = vpop.permute.xlu0 %4633
    %4635 = vrot.lane.b32.xlu0 %v4121, 31
    %v4636 = vpop.permute.xlu0 %4635
    %4637 = vrot.lane.b32.xlu0 %v4123, 31
    %v4638 = vpop.permute.xlu0 %4637
    %4639 = vrot.lane.b32.xlu0 %v4126, 31
    %v4640 = vpop.permute.xlu0 %4639
    %4641 = vrot.lane.b32.xlu0 %v4128, 31
    %v4642 = vpop.permute.xlu0 %4641
    %4643 = vrot.lane.b32.xlu0 %v4140, 31
    %v4644 = vpop.permute.xlu0 %4643
    %4645 = vrot.lane.b32.xlu0 %v4142, 31
    %v4646 = vpop.permute.xlu0 %4645
    %4647 = vrot.lane.b32.xlu0 %v4145, 31
    %v4648 = vpop.permute.xlu0 %4647
    %4649 = vrot.lane.b32.xlu0 %v4147, 31
    %v4650 = vpop.permute.xlu0 %4649
    %4651 = vrot.lane.b32.xlu0 %v4159, 31
    %v4652 = vpop.permute.xlu0 %4651
    %4653 = vrot.lane.b32.xlu0 %v4161, 31
    %v4654 = vpop.permute.xlu0 %4653
    %4655 = vrot.lane.b32.xlu0 %v4164, 31
    %v4656 = vpop.permute.xlu0 %4655
    %4657 = vrot.lane.b32.xlu0 %v4166, 31
    %v4658 = vpop.permute.xlu0 %4657
    %vm4659 = vcmp.lt.s32.totalorder %v115, 31
    %v4660 = vsel %vm4659, %v4644, %v4652
    %v4661 = vsel %vm4659, %v4646, %v4654
    %v4662 = vsel %vm4659, %v4648, %v4656
    %v4663 = vsel %vm4659, %v4650, %v4658
    %v4664 = vsel %vm4659, %v4636, %v4644
    %v4665 = vsel %vm4659, %v4638, %v4646
    %v4666 = vsel %vm4659, %v4640, %v4648
    %v4667 = vsel %vm4659, %v4642, %v4650
    %v4668 = vsel %vm4659, %v4628, %v4636
    %v4669 = vsel %vm4659, %v4630, %v4638
    %v4670 = vsel %vm4659, %v4632, %v4640
    %v4671 = vsel %vm4659, %v4634, %v4642
    %v4672 = vsel %vm4659, %v4652, %v4628
    %v4673 = vsel %vm4659, %v4654, %v4630
    %v4674 = vsel %vm4659, %v4656, %v4632
    %v4675 = vsel %vm4659, %v4658, %v4634
    %s4676 = scalar_lea.vmem %s3, 12
    %v4677 = vld [vmem:[%s4676] sm:$0xf]
    %v4679 = vperm.slane %v4677, 0
    %v4680 = vperm.slane %v4677, 1
    %v4681 = vperm.slane %v4677, 2
    %v4682 = vperm.slane %v4677, 3
    %v4687 = vmul.f32 %v4672, %v4679
    %v4688 = vmul.f32 %v4668, %v4680
    %v4689 = vmul.f32 %v4664, %v4681
    %v4690 = vmul.f32 %v4660, %v4682
    %v4691 = vmul.f32 %v4673, %v4679
    %v4692 = vmul.f32 %v4669, %v4680
    %v4693 = vmul.f32 %v4665, %v4681
    %v4694 = vmul.f32 %v4661, %v4682
    %v4695 = vmul.f32 %v4674, %v4679
    %v4696 = vmul.f32 %v4670, %v4680
    %v4697 = vmul.f32 %v4666, %v4681
    %v4698 = vmul.f32 %v4662, %v4682
    %v4699 = vmul.f32 %v4675, %v4679
    %v4700 = vmul.f32 %v4671, %v4680
    %v4701 = vmul.f32 %v4667, %v4681
    %v4702 = vmul.f32 %v4663, %v4682
    %v4703 = vpack.c.bf16 %v4691, %v4687
    %v4704 = vpack.c.bf16 %v4692, %v4688
    %v4705 = vpack.c.bf16 %v4693, %v4689
    %v4706 = vpack.c.bf16 %v4694, %v4690
    %v4707 = vpack.c.bf16 %v4699, %v4695
    %v4708 = vpack.c.bf16 %v4700, %v4696
    %v4709 = vpack.c.bf16 %v4701, %v4697
    %v4710 = vpack.c.bf16 %v4702, %v4698
    %s4711 = scalar_lea.vmem %s18, 24
    %v4712 = vld [vmem:[%s4711] sm:$0xf]
    %v4713 = vld [vmem:[%s4711 + $0x4] sm:$0xf]
    %v4716 = vunpack.c.l.b16 %v4712
    %v4717 = vunpack.c.l.b16 %v4713
    %v4718 = vpack.c.b16 %v4717, %v4716
    %v4720 = vsel %vm2496, %v4718, 0
    %4722 = vmatpush.bf16.msra.mxu0 0
    %4723 = vmatpush.bf16.msra.mxu0 0
    %4724 = vmatpush.bf16.msra.mxu0 0
    %4725 = vmatpush.bf16.msra.mxu0 0
    %4726 = vmatpush.bf16.msra.mxu0 0
    %4727 = vmatpush.bf16.msra.mxu0 0
    %4728 = vmatpush.bf16.msra.mxu0 %v4707
    %4729 = vmatpush.bf16.msra.mxu0 %v4703
    %4730 = vmatmul.bf16.gmra.mxu0 %v4720
    %v4731 = vpop.f32.mrf.mxu0
    %v4732 = vadd.f32 0.0, %v4731
    %v4733 = vpop.f32.mrf.mxu0
    %v4734 = vadd.f32 0.0, %v4733
    %4735 = vdwg.mxu0
    %4736 = vmatpush.bf16.msra.mxu0 0
    %4737 = vmatpush.bf16.msra.mxu0 0
    %4738 = vmatpush.bf16.msra.mxu0 0
    %4739 = vmatpush.bf16.msra.mxu0 0
    %4740 = vmatpush.bf16.msra.mxu0 0
    %4741 = vmatpush.bf16.msra.mxu0 0
    %4742 = vmatpush.bf16.msra.mxu0 %v4708
    %4743 = vmatpush.bf16.msra.mxu0 %v4704
    %4744 = vmatmul.bf16.gmra.mxu0 %v4720
    %v4745 = vpop.f32.mrf.mxu0
    %v4746 = vadd.f32 0.0, %v4745
    %v4747 = vpop.f32.mrf.mxu0
    %v4748 = vadd.f32 0.0, %v4747
    %4749 = vdwg.mxu0
    %4750 = vmatpush.bf16.msra.mxu0 0
    %4751 = vmatpush.bf16.msra.mxu0 0
    %4752 = vmatpush.bf16.msra.mxu0 0
    %4753 = vmatpush.bf16.msra.mxu0 0
    %4754 = vmatpush.bf16.msra.mxu0 0
    %4755 = vmatpush.bf16.msra.mxu0 0
    %4756 = vmatpush.bf16.msra.mxu0 %v4709
    %4757 = vmatpush.bf16.msra.mxu0 %v4705
    %4758 = vmatmul.bf16.gmra.mxu0 %v4720
    %v4759 = vpop.f32.mrf.mxu0
    %v4760 = vadd.f32 0.0, %v4759
    %v4761 = vpop.f32.mrf.mxu0
    %v4762 = vadd.f32 0.0, %v4761
    %4763 = vdwg.mxu0
    %4764 = vmatpush.bf16.msra.mxu0 0
    %4765 = vmatpush.bf16.msra.mxu0 0
    %4766 = vmatpush.bf16.msra.mxu0 0
    %4767 = vmatpush.bf16.msra.mxu0 0
    %4768 = vmatpush.bf16.msra.mxu0 0
    %4769 = vmatpush.bf16.msra.mxu0 0
    %4770 = vmatpush.bf16.msra.mxu0 %v4710
    %4771 = vmatpush.bf16.msra.mxu0 %v4706
    %4772 = vmatmul.bf16.gmra.mxu0 %v4720
    %v4773 = vpop.f32.mrf.mxu0
    %v4774 = vadd.f32 0.0, %v4773
    %v4775 = vpop.f32.mrf.mxu0
    %v4776 = vadd.f32 0.0, %v4775
    %4777 = vdwg.mxu0
    %v4778 = vadd.f32 %v4619, %v4732
    %v4779 = vadd.f32 %v4620, %v4746
    %v4780 = vadd.f32 %v4621, %v4760
    %v4781 = vadd.f32 %v4622, %v4774
    %v4782 = vadd.f32 %v4623, %v4734
    %v4783 = vadd.f32 %v4624, %v4748
    %v4784 = vadd.f32 %v4625, %v4762
    %v4785 = vadd.f32 %v4626, %v4776
    %4786 = vrot.lane.b32.xlu0 %v4102, 18
    %v4787 = vpop.permute.xlu0 %4786
    %4788 = vrot.lane.b32.xlu0 %v4104, 18
    %v4789 = vpop.permute.xlu0 %4788
    %4790 = vrot.lane.b32.xlu0 %v4107, 18
    %v4791 = vpop.permute.xlu0 %4790
    %4792 = vrot.lane.b32.xlu0 %v4109, 18
    %v4793 = vpop.permute.xlu0 %4792
    %4794 = vrot.lane.b32.xlu0 %v4121, 18
    %v4795 = vpop.permute.xlu0 %4794
    %4796 = vrot.lane.b32.xlu0 %v4123, 18
    %v4797 = vpop.permute.xlu0 %4796
    %4798 = vrot.lane.b32.xlu0 %v4126, 18
    %v4799 = vpop.permute.xlu0 %4798
    %4800 = vrot.lane.b32.xlu0 %v4128, 18
    %v4801 = vpop.permute.xlu0 %4800
    %4802 = vrot.lane.b32.xlu0 %v4140, 18
    %v4803 = vpop.permute.xlu0 %4802
    %4804 = vrot.lane.b32.xlu0 %v4142, 18
    %v4805 = vpop.permute.xlu0 %4804
    %4806 = vrot.lane.b32.xlu0 %v4145, 18
    %v4807 = vpop.permute.xlu0 %4806
    %4808 = vrot.lane.b32.xlu0 %v4147, 18
    %v4809 = vpop.permute.xlu0 %4808
    %4810 = vrot.lane.b32.xlu0 %v4159, 18
    %v4811 = vpop.permute.xlu0 %4810
    %4812 = vrot.lane.b32.xlu0 %v4161, 18
    %v4813 = vpop.permute.xlu0 %4812
    %4814 = vrot.lane.b32.xlu0 %v4164, 18
    %v4815 = vpop.permute.xlu0 %4814
    %4816 = vrot.lane.b32.xlu0 %v4166, 18
    %v4817 = vpop.permute.xlu0 %4816
    %vm4818 = vcmp.lt.s32.totalorder %v115, 18
    %v4819 = vsel %vm4818, %v4803, %v4811
    %v4820 = vsel %vm4818, %v4805, %v4813
    %v4821 = vsel %vm4818, %v4807, %v4815
    %v4822 = vsel %vm4818, %v4809, %v4817
    %v4823 = vsel %vm4818, %v4795, %v4803
    %v4824 = vsel %vm4818, %v4797, %v4805
    %v4825 = vsel %vm4818, %v4799, %v4807
    %v4826 = vsel %vm4818, %v4801, %v4809
    %v4827 = vsel %vm4818, %v4787, %v4795
    %v4828 = vsel %vm4818, %v4789, %v4797
    %v4829 = vsel %vm4818, %v4791, %v4799
    %v4830 = vsel %vm4818, %v4793, %v4801
    %v4831 = vsel %vm4818, %v4811, %v4787
    %v4832 = vsel %vm4818, %v4813, %v4789
    %v4833 = vsel %vm4818, %v4815, %v4791
    %v4834 = vsel %vm4818, %v4817, %v4793
    %s4835 = scalar_lea.vmem %s3, 16
    %v4836 = vld [vmem:[%s4835] sm:$0xf]
    %v4838 = vperm.slane %v4836, 0
    %v4839 = vperm.slane %v4836, 1
    %v4840 = vperm.slane %v4836, 2
    %v4841 = vperm.slane %v4836, 3
    %v4846 = vmul.f32 %v4831, %v4838
    %v4847 = vmul.f32 %v4827, %v4839
    %v4848 = vmul.f32 %v4823, %v4840
    %v4849 = vmul.f32 %v4819, %v4841
    %v4850 = vmul.f32 %v4832, %v4838
    %v4851 = vmul.f32 %v4828, %v4839
    %v4852 = vmul.f32 %v4824, %v4840
    %v4853 = vmul.f32 %v4820, %v4841
    %v4854 = vmul.f32 %v4833, %v4838
    %v4855 = vmul.f32 %v4829, %v4839
    %v4856 = vmul.f32 %v4825, %v4840
    %v4857 = vmul.f32 %v4821, %v4841
    %v4858 = vmul.f32 %v4834, %v4838
    %v4859 = vmul.f32 %v4830, %v4839
    %v4860 = vmul.f32 %v4826, %v4840
    %v4861 = vmul.f32 %v4822, %v4841
    %v4862 = vpack.c.bf16 %v4850, %v4846
    %v4863 = vpack.c.bf16 %v4851, %v4847
    %v4864 = vpack.c.bf16 %v4852, %v4848
    %v4865 = vpack.c.bf16 %v4853, %v4849
    %v4866 = vpack.c.bf16 %v4858, %v4854
    %v4867 = vpack.c.bf16 %v4859, %v4855
    %v4868 = vpack.c.bf16 %v4860, %v4856
    %v4869 = vpack.c.bf16 %v4861, %v4857
    %s4870 = scalar_lea.vmem %s18, 32
    %v4871 = vld [vmem:[%s4870] sm:$0xf]
    %v4872 = vld [vmem:[%s4870 + $0x4] sm:$0xf]
    %v4875 = vunpack.c.l.b16 %v4871
    %v4876 = vunpack.c.l.b16 %v4872
    %v4877 = vpack.c.b16 %v4876, %v4875
    %v4879 = vsel %vm2496, %v4877, 0
    %4881 = vmatpush.bf16.msra.mxu0 0
    %4882 = vmatpush.bf16.msra.mxu0 0
    %4883 = vmatpush.bf16.msra.mxu0 0
    %4884 = vmatpush.bf16.msra.mxu0 0
    %4885 = vmatpush.bf16.msra.mxu0 0
    %4886 = vmatpush.bf16.msra.mxu0 0
    %4887 = vmatpush.bf16.msra.mxu0 %v4866
    %4888 = vmatpush.bf16.msra.mxu0 %v4862
    %4889 = vmatmul.bf16.gmra.mxu0 %v4879
    %v4890 = vpop.f32.mrf.mxu0
    %v4891 = vadd.f32 0.0, %v4890
    %v4892 = vpop.f32.mrf.mxu0
    %v4893 = vadd.f32 0.0, %v4892
    %4894 = vdwg.mxu0
    %4895 = vmatpush.bf16.msra.mxu0 0
    %4896 = vmatpush.bf16.msra.mxu0 0
    %4897 = vmatpush.bf16.msra.mxu0 0
    %4898 = vmatpush.bf16.msra.mxu0 0
    %4899 = vmatpush.bf16.msra.mxu0 0
    %4900 = vmatpush.bf16.msra.mxu0 0
    %4901 = vmatpush.bf16.msra.mxu0 %v4867
    %4902 = vmatpush.bf16.msra.mxu0 %v4863
    %4903 = vmatmul.bf16.gmra.mxu0 %v4879
    %v4904 = vpop.f32.mrf.mxu0
    %v4905 = vadd.f32 0.0, %v4904
    %v4906 = vpop.f32.mrf.mxu0
    %v4907 = vadd.f32 0.0, %v4906
    %4908 = vdwg.mxu0
    %4909 = vmatpush.bf16.msra.mxu0 0
    %4910 = vmatpush.bf16.msra.mxu0 0
    %4911 = vmatpush.bf16.msra.mxu0 0
    %4912 = vmatpush.bf16.msra.mxu0 0
    %4913 = vmatpush.bf16.msra.mxu0 0
    %4914 = vmatpush.bf16.msra.mxu0 0
    %4915 = vmatpush.bf16.msra.mxu0 %v4868
    %4916 = vmatpush.bf16.msra.mxu0 %v4864
    %4917 = vmatmul.bf16.gmra.mxu0 %v4879
    %v4918 = vpop.f32.mrf.mxu0
    %v4919 = vadd.f32 0.0, %v4918
    %v4920 = vpop.f32.mrf.mxu0
    %v4921 = vadd.f32 0.0, %v4920
    %4922 = vdwg.mxu0
    %4923 = vmatpush.bf16.msra.mxu0 0
    %4924 = vmatpush.bf16.msra.mxu0 0
    %4925 = vmatpush.bf16.msra.mxu0 0
    %4926 = vmatpush.bf16.msra.mxu0 0
    %4927 = vmatpush.bf16.msra.mxu0 0
    %4928 = vmatpush.bf16.msra.mxu0 0
    %4929 = vmatpush.bf16.msra.mxu0 %v4869
    %4930 = vmatpush.bf16.msra.mxu0 %v4865
    %4931 = vmatmul.bf16.gmra.mxu0 %v4879
    %v4932 = vpop.f32.mrf.mxu0
    %v4933 = vadd.f32 0.0, %v4932
    %v4934 = vpop.f32.mrf.mxu0
    %v4935 = vadd.f32 0.0, %v4934
    %4936 = vdwg.mxu0
    %v4937 = vadd.f32 %v4778, %v4891
    %v4938 = vadd.f32 %v4779, %v4905
    %v4939 = vadd.f32 %v4780, %v4919
    %v4940 = vadd.f32 %v4781, %v4933
    %v4941 = vadd.f32 %v4782, %v4893
    %v4942 = vadd.f32 %v4783, %v4907
    %v4943 = vadd.f32 %v4784, %v4921
    %v4944 = vadd.f32 %v4785, %v4935
    %4945 = vrot.lane.b32.xlu0 %v4102, 17
    %v4946 = vpop.permute.xlu0 %4945
    %4947 = vrot.lane.b32.xlu0 %v4104, 17
    %v4948 = vpop.permute.xlu0 %4947
    %4949 = vrot.lane.b32.xlu0 %v4107, 17
    %v4950 = vpop.permute.xlu0 %4949
    %4951 = vrot.lane.b32.xlu0 %v4109, 17
    %v4952 = vpop.permute.xlu0 %4951
    %4953 = vrot.lane.b32.xlu0 %v4121, 17
    %v4954 = vpop.permute.xlu0 %4953
    %4955 = vrot.lane.b32.xlu0 %v4123, 17
    %v4956 = vpop.permute.xlu0 %4955
    %4957 = vrot.lane.b32.xlu0 %v4126, 17
    %v4958 = vpop.permute.xlu0 %4957
    %4959 = vrot.lane.b32.xlu0 %v4128, 17
    %v4960 = vpop.permute.xlu0 %4959
    %4961 = vrot.lane.b32.xlu0 %v4140, 17
    %v4962 = vpop.permute.xlu0 %4961
    %4963 = vrot.lane.b32.xlu0 %v4142, 17
    %v4964 = vpop.permute.xlu0 %4963
    %4965 = vrot.lane.b32.xlu0 %v4145, 17
    %v4966 = vpop.permute.xlu0 %4965
    %4967 = vrot.lane.b32.xlu0 %v4147, 17
    %v4968 = vpop.permute.xlu0 %4967
    %4969 = vrot.lane.b32.xlu0 %v4159, 17
    %v4970 = vpop.permute.xlu0 %4969
    %4971 = vrot.lane.b32.xlu0 %v4161, 17
    %v4972 = vpop.permute.xlu0 %4971
    %4973 = vrot.lane.b32.xlu0 %v4164, 17
    %v4974 = vpop.permute.xlu0 %4973
    %4975 = vrot.lane.b32.xlu0 %v4166, 17
    %v4976 = vpop.permute.xlu0 %4975
    %v4977 = vsel %vm116, %v4962, %v4970
    %v4978 = vsel %vm116, %v4964, %v4972
    %v4979 = vsel %vm116, %v4966, %v4974
    %v4980 = vsel %vm116, %v4968, %v4976
    %v4981 = vsel %vm116, %v4954, %v4962
    %v4982 = vsel %vm116, %v4956, %v4964
    %v4983 = vsel %vm116, %v4958, %v4966
    %v4984 = vsel %vm116, %v4960, %v4968
    %v4985 = vsel %vm116, %v4946, %v4954
    %v4986 = vsel %vm116, %v4948, %v4956
    %v4987 = vsel %vm116, %v4950, %v4958
    %v4988 = vsel %vm116, %v4952, %v4960
    %v4989 = vsel %vm116, %v4970, %v4946
    %v4990 = vsel %vm116, %v4972, %v4948
    %v4991 = vsel %vm116, %v4974, %v4950
    %v4992 = vsel %vm116, %v4976, %v4952
    %s4993 = scalar_lea.vmem %s3, 20
    %v4994 = vld [vmem:[%s4993] sm:$0xf]
    %v4996 = vperm.slane %v4994, 0
    %v4997 = vperm.slane %v4994, 1
    %v4998 = vperm.slane %v4994, 2
    %v4999 = vperm.slane %v4994, 3
    %v5004 = vmul.f32 %v4989, %v4996
    %v5005 = vmul.f32 %v4985, %v4997
    %v5006 = vmul.f32 %v4981, %v4998
    %v5007 = vmul.f32 %v4977, %v4999
    %v5008 = vmul.f32 %v4990, %v4996
    %v5009 = vmul.f32 %v4986, %v4997
    %v5010 = vmul.f32 %v4982, %v4998
    %v5011 = vmul.f32 %v4978, %v4999
    %v5012 = vmul.f32 %v4991, %v4996
    %v5013 = vmul.f32 %v4987, %v4997
    %v5014 = vmul.f32 %v4983, %v4998
    %v5015 = vmul.f32 %v4979, %v4999
    %v5016 = vmul.f32 %v4992, %v4996
    %v5017 = vmul.f32 %v4988, %v4997
    %v5018 = vmul.f32 %v4984, %v4998
    %v5019 = vmul.f32 %v4980, %v4999
    %v5020 = vpack.c.bf16 %v5008, %v5004
    %v5021 = vpack.c.bf16 %v5009, %v5005
    %v5022 = vpack.c.bf16 %v5010, %v5006
    %v5023 = vpack.c.bf16 %v5011, %v5007
    %v5024 = vpack.c.bf16 %v5016, %v5012
    %v5025 = vpack.c.bf16 %v5017, %v5013
    %v5026 = vpack.c.bf16 %v5018, %v5014
    %v5027 = vpack.c.bf16 %v5019, %v5015
    %s5028 = scalar_lea.vmem %s18, 40
    %v5029 = vld [vmem:[%s5028] sm:$0xf]
    %v5030 = vld [vmem:[%s5028 + $0x4] sm:$0xf]
    %v5033 = vunpack.c.l.b16 %v5029
    %v5034 = vunpack.c.l.b16 %v5030
    %v5035 = vpack.c.b16 %v5034, %v5033
    %v5037 = vsel %vm2496, %v5035, 0
    %5039 = vmatpush.bf16.msra.mxu0 0
    %5040 = vmatpush.bf16.msra.mxu0 0
    %5041 = vmatpush.bf16.msra.mxu0 0
    %5042 = vmatpush.bf16.msra.mxu0 0
    %5043 = vmatpush.bf16.msra.mxu0 0
    %5044 = vmatpush.bf16.msra.mxu0 0
    %5045 = vmatpush.bf16.msra.mxu0 %v5024
    %5046 = vmatpush.bf16.msra.mxu0 %v5020
    %5047 = vmatmul.bf16.gmra.mxu0 %v5037
    %v5048 = vpop.f32.mrf.mxu0
    %v5049 = vadd.f32 0.0, %v5048
    %v5050 = vpop.f32.mrf.mxu0
    %v5051 = vadd.f32 0.0, %v5050
    %5052 = vdwg.mxu0
    %5053 = vmatpush.bf16.msra.mxu0 0
    %5054 = vmatpush.bf16.msra.mxu0 0
    %5055 = vmatpush.bf16.msra.mxu0 0
    %5056 = vmatpush.bf16.msra.mxu0 0
    %5057 = vmatpush.bf16.msra.mxu0 0
    %5058 = vmatpush.bf16.msra.mxu0 0
    %5059 = vmatpush.bf16.msra.mxu0 %v5025
    %5060 = vmatpush.bf16.msra.mxu0 %v5021
    %5061 = vmatmul.bf16.gmra.mxu0 %v5037
    %v5062 = vpop.f32.mrf.mxu0
    %v5063 = vadd.f32 0.0, %v5062
    %v5064 = vpop.f32.mrf.mxu0
    %v5065 = vadd.f32 0.0, %v5064
    %5066 = vdwg.mxu0
    %5067 = vmatpush.bf16.msra.mxu0 0
    %5068 = vmatpush.bf16.msra.mxu0 0
    %5069 = vmatpush.bf16.msra.mxu0 0
    %5070 = vmatpush.bf16.msra.mxu0 0
    %5071 = vmatpush.bf16.msra.mxu0 0
    %5072 = vmatpush.bf16.msra.mxu0 0
    %5073 = vmatpush.bf16.msra.mxu0 %v5026
    %5074 = vmatpush.bf16.msra.mxu0 %v5022
    %5075 = vmatmul.bf16.gmra.mxu0 %v5037
    %v5076 = vpop.f32.mrf.mxu0
    %v5077 = vadd.f32 0.0, %v5076
    %v5078 = vpop.f32.mrf.mxu0
    %v5079 = vadd.f32 0.0, %v5078
    %5080 = vdwg.mxu0
    %5081 = vmatpush.bf16.msra.mxu0 0
    %5082 = vmatpush.bf16.msra.mxu0 0
    %5083 = vmatpush.bf16.msra.mxu0 0
    %5084 = vmatpush.bf16.msra.mxu0 0
    %5085 = vmatpush.bf16.msra.mxu0 0
    %5086 = vmatpush.bf16.msra.mxu0 0
    %5087 = vmatpush.bf16.msra.mxu0 %v5027
    %5088 = vmatpush.bf16.msra.mxu0 %v5023
    %5089 = vmatmul.bf16.gmra.mxu0 %v5037
    %v5090 = vpop.f32.mrf.mxu0
    %v5091 = vadd.f32 0.0, %v5090
    %v5092 = vpop.f32.mrf.mxu0
    %v5093 = vadd.f32 0.0, %v5092
    %5094 = vdwg.mxu0
    %v5095 = vadd.f32 %v4937, %v5049
    %v5096 = vadd.f32 %v4938, %v5063
    %v5097 = vadd.f32 %v4939, %v5077
    %v5098 = vadd.f32 %v4940, %v5091
    %v5099 = vadd.f32 %v4941, %v5051
    %v5100 = vadd.f32 %v4942, %v5065
    %v5101 = vadd.f32 %v4943, %v5079
    %v5102 = vadd.f32 %v4944, %v5093
    %5103 = vrot.lane.b32.xlu0 %v4102, 16
    %v5104 = vpop.permute.xlu0 %5103
    %5105 = vrot.lane.b32.xlu0 %v4104, 16
    %v5106 = vpop.permute.xlu0 %5105
    %5107 = vrot.lane.b32.xlu0 %v4107, 16
    %v5108 = vpop.permute.xlu0 %5107
    %5109 = vrot.lane.b32.xlu0 %v4109, 16
    %v5110 = vpop.permute.xlu0 %5109
    %5111 = vrot.lane.b32.xlu0 %v4121, 16
    %v5112 = vpop.permute.xlu0 %5111
    %5113 = vrot.lane.b32.xlu0 %v4123, 16
    %v5114 = vpop.permute.xlu0 %5113
    %5115 = vrot.lane.b32.xlu0 %v4126, 16
    %v5116 = vpop.permute.xlu0 %5115
    %5117 = vrot.lane.b32.xlu0 %v4128, 16
    %v5118 = vpop.permute.xlu0 %5117
    %5119 = vrot.lane.b32.xlu0 %v4140, 16
    %v5120 = vpop.permute.xlu0 %5119
    %5121 = vrot.lane.b32.xlu0 %v4142, 16
    %v5122 = vpop.permute.xlu0 %5121
    %5123 = vrot.lane.b32.xlu0 %v4145, 16
    %v5124 = vpop.permute.xlu0 %5123
    %5125 = vrot.lane.b32.xlu0 %v4147, 16
    %v5126 = vpop.permute.xlu0 %5125
    %5127 = vrot.lane.b32.xlu0 %v4159, 16
    %v5128 = vpop.permute.xlu0 %5127
    %5129 = vrot.lane.b32.xlu0 %v4161, 16
    %v5130 = vpop.permute.xlu0 %5129
    %5131 = vrot.lane.b32.xlu0 %v4164, 16
    %v5132 = vpop.permute.xlu0 %5131
    %5133 = vrot.lane.b32.xlu0 %v4166, 16
    %v5134 = vpop.permute.xlu0 %5133
    %v5135 = vsel %vm160, %v5120, %v5128
    %v5136 = vsel %vm160, %v5122, %v5130
    %v5137 = vsel %vm160, %v5124, %v5132
    %v5138 = vsel %vm160, %v5126, %v5134
    %v5139 = vsel %vm160, %v5112, %v5120
    %v5140 = vsel %vm160, %v5114, %v5122
    %v5141 = vsel %vm160, %v5116, %v5124
    %v5142 = vsel %vm160, %v5118, %v5126
    %v5143 = vsel %vm160, %v5104, %v5112
    %v5144 = vsel %vm160, %v5106, %v5114
    %v5145 = vsel %vm160, %v5108, %v5116
    %v5146 = vsel %vm160, %v5110, %v5118
    %v5147 = vsel %vm160, %v5128, %v5104
    %v5148 = vsel %vm160, %v5130, %v5106
    %v5149 = vsel %vm160, %v5132, %v5108
    %v5150 = vsel %vm160, %v5134, %v5110
    %s5151 = scalar_lea.vmem %s3, 24
    %v5152 = vld [vmem:[%s5151] sm:$0xf]
    %v5154 = vperm.slane %v5152, 0
    %v5155 = vperm.slane %v5152, 1
    %v5156 = vperm.slane %v5152, 2
    %v5157 = vperm.slane %v5152, 3
    %v5162 = vmul.f32 %v5147, %v5154
    %v5163 = vmul.f32 %v5143, %v5155
    %v5164 = vmul.f32 %v5139, %v5156
    %v5165 = vmul.f32 %v5135, %v5157
    %v5166 = vmul.f32 %v5148, %v5154
    %v5167 = vmul.f32 %v5144, %v5155
    %v5168 = vmul.f32 %v5140, %v5156
    %v5169 = vmul.f32 %v5136, %v5157
    %v5170 = vmul.f32 %v5149, %v5154
    %v5171 = vmul.f32 %v5145, %v5155
    %v5172 = vmul.f32 %v5141, %v5156
    %v5173 = vmul.f32 %v5137, %v5157
    %v5174 = vmul.f32 %v5150, %v5154
    %v5175 = vmul.f32 %v5146, %v5155
    %v5176 = vmul.f32 %v5142, %v5156
    %v5177 = vmul.f32 %v5138, %v5157
    %v5178 = vpack.c.bf16 %v5166, %v5162
    %v5179 = vpack.c.bf16 %v5167, %v5163
    %v5180 = vpack.c.bf16 %v5168, %v5164
    %v5181 = vpack.c.bf16 %v5169, %v5165
    %v5182 = vpack.c.bf16 %v5174, %v5170
    %v5183 = vpack.c.bf16 %v5175, %v5171
    %v5184 = vpack.c.bf16 %v5176, %v5172
    %v5185 = vpack.c.bf16 %v5177, %v5173
    %s5186 = scalar_lea.vmem %s18, 48
    %v5187 = vld [vmem:[%s5186] sm:$0xf]
    %v5188 = vld [vmem:[%s5186 + $0x4] sm:$0xf]
    %v5191 = vunpack.c.l.b16 %v5187
    %v5192 = vunpack.c.l.b16 %v5188
    %v5193 = vpack.c.b16 %v5192, %v5191
    %v5195 = vsel %vm2496, %v5193, 0
    %5197 = vmatpush.bf16.msra.mxu0 0
    %5198 = vmatpush.bf16.msra.mxu0 0
    %5199 = vmatpush.bf16.msra.mxu0 0
    %5200 = vmatpush.bf16.msra.mxu0 0
    %5201 = vmatpush.bf16.msra.mxu0 0
    %5202 = vmatpush.bf16.msra.mxu0 0
    %5203 = vmatpush.bf16.msra.mxu0 %v5182
    %5204 = vmatpush.bf16.msra.mxu0 %v5178
    %5205 = vmatmul.bf16.gmra.mxu0 %v5195
    %v5206 = vpop.f32.mrf.mxu0
    %v5207 = vadd.f32 0.0, %v5206
    %v5208 = vpop.f32.mrf.mxu0
    %v5209 = vadd.f32 0.0, %v5208
    %5210 = vdwg.mxu0
    %5211 = vmatpush.bf16.msra.mxu0 0
    %5212 = vmatpush.bf16.msra.mxu0 0
    %5213 = vmatpush.bf16.msra.mxu0 0
    %5214 = vmatpush.bf16.msra.mxu0 0
    %5215 = vmatpush.bf16.msra.mxu0 0
    %5216 = vmatpush.bf16.msra.mxu0 0
    %5217 = vmatpush.bf16.msra.mxu0 %v5183
    %5218 = vmatpush.bf16.msra.mxu0 %v5179
    %5219 = vmatmul.bf16.gmra.mxu0 %v5195
    %v5220 = vpop.f32.mrf.mxu0
    %v5221 = vadd.f32 0.0, %v5220
    %v5222 = vpop.f32.mrf.mxu0
    %v5223 = vadd.f32 0.0, %v5222
    %5224 = vdwg.mxu0
    %5225 = vmatpush.bf16.msra.mxu0 0
    %5226 = vmatpush.bf16.msra.mxu0 0
    %5227 = vmatpush.bf16.msra.mxu0 0
    %5228 = vmatpush.bf16.msra.mxu0 0
    %5229 = vmatpush.bf16.msra.mxu0 0
    %5230 = vmatpush.bf16.msra.mxu0 0
    %5231 = vmatpush.bf16.msra.mxu0 %v5184
    %5232 = vmatpush.bf16.msra.mxu0 %v5180
    %5233 = vmatmul.bf16.gmra.mxu0 %v5195
    %v5234 = vpop.f32.mrf.mxu0
    %v5235 = vadd.f32 0.0, %v5234
    %v5236 = vpop.f32.mrf.mxu0
    %v5237 = vadd.f32 0.0, %v5236
    %5238 = vdwg.mxu0
    %5239 = vmatpush.bf16.msra.mxu0 0
    %5240 = vmatpush.bf16.msra.mxu0 0
    %5241 = vmatpush.bf16.msra.mxu0 0
    %5242 = vmatpush.bf16.msra.mxu0 0
    %5243 = vmatpush.bf16.msra.mxu0 0
    %5244 = vmatpush.bf16.msra.mxu0 0
    %5245 = vmatpush.bf16.msra.mxu0 %v5185
    %5246 = vmatpush.bf16.msra.mxu0 %v5181
    %5247 = vmatmul.bf16.gmra.mxu0 %v5195
    %v5248 = vpop.f32.mrf.mxu0
    %v5249 = vadd.f32 0.0, %v5248
    %v5250 = vpop.f32.mrf.mxu0
    %v5251 = vadd.f32 0.0, %v5250
    %5252 = vdwg.mxu0
    %v5253 = vadd.f32 %v5095, %v5207
    %v5254 = vadd.f32 %v5096, %v5221
    %v5255 = vadd.f32 %v5097, %v5235
    %v5256 = vadd.f32 %v5098, %v5249
    %v5257 = vadd.f32 %v5099, %v5209
    %v5258 = vadd.f32 %v5100, %v5223
    %v5259 = vadd.f32 %v5101, %v5237
    %v5260 = vadd.f32 %v5102, %v5251
    %5261 = vrot.lane.b32.xlu0 %v4102, 15
    %v5262 = vpop.permute.xlu0 %5261
    %5263 = vrot.lane.b32.xlu0 %v4104, 15
    %v5264 = vpop.permute.xlu0 %5263
    %5265 = vrot.lane.b32.xlu0 %v4107, 15
    %v5266 = vpop.permute.xlu0 %5265
    %5267 = vrot.lane.b32.xlu0 %v4109, 15
    %v5268 = vpop.permute.xlu0 %5267
    %5269 = vrot.lane.b32.xlu0 %v4121, 15
    %v5270 = vpop.permute.xlu0 %5269
    %5271 = vrot.lane.b32.xlu0 %v4123, 15
    %v5272 = vpop.permute.xlu0 %5271
    %5273 = vrot.lane.b32.xlu0 %v4126, 15
    %v5274 = vpop.permute.xlu0 %5273
    %5275 = vrot.lane.b32.xlu0 %v4128, 15
    %v5276 = vpop.permute.xlu0 %5275
    %5277 = vrot.lane.b32.xlu0 %v4140, 15
    %v5278 = vpop.permute.xlu0 %5277
    %5279 = vrot.lane.b32.xlu0 %v4142, 15
    %v5280 = vpop.permute.xlu0 %5279
    %5281 = vrot.lane.b32.xlu0 %v4145, 15
    %v5282 = vpop.permute.xlu0 %5281
    %5283 = vrot.lane.b32.xlu0 %v4147, 15
    %v5284 = vpop.permute.xlu0 %5283
    %5285 = vrot.lane.b32.xlu0 %v4159, 15
    %v5286 = vpop.permute.xlu0 %5285
    %5287 = vrot.lane.b32.xlu0 %v4161, 15
    %v5288 = vpop.permute.xlu0 %5287
    %5289 = vrot.lane.b32.xlu0 %v4164, 15
    %v5290 = vpop.permute.xlu0 %5289
    %5291 = vrot.lane.b32.xlu0 %v4166, 15
    %v5292 = vpop.permute.xlu0 %5291
    %v5293 = vsel %vm360, %v5278, %v5286
    %v5294 = vsel %vm360, %v5280, %v5288
    %v5295 = vsel %vm360, %v5282, %v5290
    %v5296 = vsel %vm360, %v5284, %v5292
    %v5297 = vsel %vm360, %v5270, %v5278
    %v5298 = vsel %vm360, %v5272, %v5280
    %v5299 = vsel %vm360, %v5274, %v5282
    %v5300 = vsel %vm360, %v5276, %v5284
    %v5301 = vsel %vm360, %v5262, %v5270
    %v5302 = vsel %vm360, %v5264, %v5272
    %v5303 = vsel %vm360, %v5266, %v5274
    %v5304 = vsel %vm360, %v5268, %v5276
    %v5305 = vsel %vm360, %v5286, %v5262
    %v5306 = vsel %vm360, %v5288, %v5264
    %v5307 = vsel %vm360, %v5290, %v5266
    %v5308 = vsel %vm360, %v5292, %v5268
    %s5309 = scalar_lea.vmem %s3, 28
    %v5310 = vld [vmem:[%s5309] sm:$0xf]
    %v5312 = vperm.slane %v5310, 0
    %v5313 = vperm.slane %v5310, 1
    %v5314 = vperm.slane %v5310, 2
    %v5315 = vperm.slane %v5310, 3
    %v5320 = vmul.f32 %v5305, %v5312
    %v5321 = vmul.f32 %v5301, %v5313
    %v5322 = vmul.f32 %v5297, %v5314
    %v5323 = vmul.f32 %v5293, %v5315
    %v5324 = vmul.f32 %v5306, %v5312
    %v5325 = vmul.f32 %v5302, %v5313
    %v5326 = vmul.f32 %v5298, %v5314
    %v5327 = vmul.f32 %v5294, %v5315
    %v5328 = vmul.f32 %v5307, %v5312
    %v5329 = vmul.f32 %v5303, %v5313
    %v5330 = vmul.f32 %v5299, %v5314
    %v5331 = vmul.f32 %v5295, %v5315
    %v5332 = vmul.f32 %v5308, %v5312
    %v5333 = vmul.f32 %v5304, %v5313
    %v5334 = vmul.f32 %v5300, %v5314
    %v5335 = vmul.f32 %v5296, %v5315
    %v5336 = vpack.c.bf16 %v5324, %v5320
    %v5337 = vpack.c.bf16 %v5325, %v5321
    %v5338 = vpack.c.bf16 %v5326, %v5322
    %v5339 = vpack.c.bf16 %v5327, %v5323
    %v5340 = vpack.c.bf16 %v5332, %v5328
    %v5341 = vpack.c.bf16 %v5333, %v5329
    %v5342 = vpack.c.bf16 %v5334, %v5330
    %v5343 = vpack.c.bf16 %v5335, %v5331
    %s5344 = scalar_lea.vmem %s18, 56
    %v5345 = vld [vmem:[%s5344] sm:$0xf]
    %v5346 = vld [vmem:[%s5344 + $0x4] sm:$0xf]
    %v5349 = vunpack.c.l.b16 %v5345
    %v5350 = vunpack.c.l.b16 %v5346
    %v5351 = vpack.c.b16 %v5350, %v5349
    %v5353 = vsel %vm2496, %v5351, 0
    %5355 = vmatpush.bf16.msra.mxu0 0
    %5356 = vmatpush.bf16.msra.mxu0 0
    %5357 = vmatpush.bf16.msra.mxu0 0
    %5358 = vmatpush.bf16.msra.mxu0 0
    %5359 = vmatpush.bf16.msra.mxu0 0
    %5360 = vmatpush.bf16.msra.mxu0 0
    %5361 = vmatpush.bf16.msra.mxu0 %v5340
    %5362 = vmatpush.bf16.msra.mxu0 %v5336
    %5363 = vmatmul.bf16.gmra.mxu0 %v5353
    %v5364 = vpop.f32.mrf.mxu0
    %v5365 = vadd.f32 0.0, %v5364
    %v5366 = vpop.f32.mrf.mxu0
    %v5367 = vadd.f32 0.0, %v5366
    %5368 = vdwg.mxu0
    %5369 = vmatpush.bf16.msra.mxu0 0
    %5370 = vmatpush.bf16.msra.mxu0 0
    %5371 = vmatpush.bf16.msra.mxu0 0
    %5372 = vmatpush.bf16.msra.mxu0 0
    %5373 = vmatpush.bf16.msra.mxu0 0
    %5374 = vmatpush.bf16.msra.mxu0 0
    %5375 = vmatpush.bf16.msra.mxu0 %v5341
    %5376 = vmatpush.bf16.msra.mxu0 %v5337
    %5377 = vmatmul.bf16.gmra.mxu0 %v5353
    %v5378 = vpop.f32.mrf.mxu0
    %v5379 = vadd.f32 0.0, %v5378
    %v5380 = vpop.f32.mrf.mxu0
    %v5381 = vadd.f32 0.0, %v5380
    %5382 = vdwg.mxu0
    %5383 = vmatpush.bf16.msra.mxu0 0
    %5384 = vmatpush.bf16.msra.mxu0 0
    %5385 = vmatpush.bf16.msra.mxu0 0
    %5386 = vmatpush.bf16.msra.mxu0 0
    %5387 = vmatpush.bf16.msra.mxu0 0
    %5388 = vmatpush.bf16.msra.mxu0 0
    %5389 = vmatpush.bf16.msra.mxu0 %v5342
    %5390 = vmatpush.bf16.msra.mxu0 %v5338
    %5391 = vmatmul.bf16.gmra.mxu0 %v5353
    %v5392 = vpop.f32.mrf.mxu0
    %v5393 = vadd.f32 0.0, %v5392
    %v5394 = vpop.f32.mrf.mxu0
    %v5395 = vadd.f32 0.0, %v5394
    %5396 = vdwg.mxu0
    %5397 = vmatpush.bf16.msra.mxu0 0
    %5398 = vmatpush.bf16.msra.mxu0 0
    %5399 = vmatpush.bf16.msra.mxu0 0
    %5400 = vmatpush.bf16.msra.mxu0 0
    %5401 = vmatpush.bf16.msra.mxu0 0
    %5402 = vmatpush.bf16.msra.mxu0 0
    %5403 = vmatpush.bf16.msra.mxu0 %v5343
    %5404 = vmatpush.bf16.msra.mxu0 %v5339
    %5405 = vmatmul.bf16.gmra.mxu0 %v5353
    %v5406 = vpop.f32.mrf.mxu0
    %v5407 = vadd.f32 0.0, %v5406
    %v5408 = vpop.f32.mrf.mxu0
    %v5409 = vadd.f32 0.0, %v5408
    %5410 = vdwg.mxu0
    %v5411 = vadd.f32 %v5253, %v5365
    %v5412 = vadd.f32 %v5254, %v5379
    %v5413 = vadd.f32 %v5255, %v5393
    %v5414 = vadd.f32 %v5256, %v5407
    %v5415 = vadd.f32 %v5257, %v5367
    %v5416 = vadd.f32 %v5258, %v5381
    %v5417 = vadd.f32 %v5259, %v5395
    %v5418 = vadd.f32 %v5260, %v5409
    %5419 = vrot.lane.b32.xlu0 %v4102, 2
    %v5420 = vpop.permute.xlu0 %5419
    %5421 = vrot.lane.b32.xlu0 %v4104, 2
    %v5422 = vpop.permute.xlu0 %5421
    %5423 = vrot.lane.b32.xlu0 %v4107, 2
    %v5424 = vpop.permute.xlu0 %5423
    %5425 = vrot.lane.b32.xlu0 %v4109, 2
    %v5426 = vpop.permute.xlu0 %5425
    %5427 = vrot.lane.b32.xlu0 %v4121, 2
    %v5428 = vpop.permute.xlu0 %5427
    %5429 = vrot.lane.b32.xlu0 %v4123, 2
    %v5430 = vpop.permute.xlu0 %5429
    %5431 = vrot.lane.b32.xlu0 %v4126, 2
    %v5432 = vpop.permute.xlu0 %5431
    %5433 = vrot.lane.b32.xlu0 %v4128, 2
    %v5434 = vpop.permute.xlu0 %5433
    %5435 = vrot.lane.b32.xlu0 %v4140, 2
    %v5436 = vpop.permute.xlu0 %5435
    %5437 = vrot.lane.b32.xlu0 %v4142, 2
    %v5438 = vpop.permute.xlu0 %5437
    %5439 = vrot.lane.b32.xlu0 %v4145, 2
    %v5440 = vpop.permute.xlu0 %5439
    %5441 = vrot.lane.b32.xlu0 %v4147, 2
    %v5442 = vpop.permute.xlu0 %5441
    %5443 = vrot.lane.b32.xlu0 %v4159, 2
    %v5444 = vpop.permute.xlu0 %5443
    %5445 = vrot.lane.b32.xlu0 %v4161, 2
    %v5446 = vpop.permute.xlu0 %5445
    %5447 = vrot.lane.b32.xlu0 %v4164, 2
    %v5448 = vpop.permute.xlu0 %5447
    %5449 = vrot.lane.b32.xlu0 %v4166, 2
    %v5450 = vpop.permute.xlu0 %5449
    %vm5451 = vcmp.lt.s32.totalorder %v115, 2
    %v5452 = vsel %vm5451, %v5436, %v5444
    %v5453 = vsel %vm5451, %v5438, %v5446
    %v5454 = vsel %vm5451, %v5440, %v5448
    %v5455 = vsel %vm5451, %v5442, %v5450
    %v5456 = vsel %vm5451, %v5428, %v5436
    %v5457 = vsel %vm5451, %v5430, %v5438
    %v5458 = vsel %vm5451, %v5432, %v5440
    %v5459 = vsel %vm5451, %v5434, %v5442
    %v5460 = vsel %vm5451, %v5420, %v5428
    %v5461 = vsel %vm5451, %v5422, %v5430
    %v5462 = vsel %vm5451, %v5424, %v5432
    %v5463 = vsel %vm5451, %v5426, %v5434
    %v5464 = vsel %vm5451, %v5444, %v5420
    %v5465 = vsel %vm5451, %v5446, %v5422
    %v5466 = vsel %vm5451, %v5448, %v5424
    %v5467 = vsel %vm5451, %v5450, %v5426
    %s5468 = scalar_lea.vmem %s3, 32
    %v5469 = vld [vmem:[%s5468] sm:$0xf]
    %v5471 = vperm.slane %v5469, 0
    %v5472 = vperm.slane %v5469, 1
    %v5473 = vperm.slane %v5469, 2
    %v5474 = vperm.slane %v5469, 3
    %v5479 = vmul.f32 %v5464, %v5471
    %v5480 = vmul.f32 %v5460, %v5472
    %v5481 = vmul.f32 %v5456, %v5473
    %v5482 = vmul.f32 %v5452, %v5474
    %v5483 = vmul.f32 %v5465, %v5471
    %v5484 = vmul.f32 %v5461, %v5472
    %v5485 = vmul.f32 %v5457, %v5473
    %v5486 = vmul.f32 %v5453, %v5474
    %v5487 = vmul.f32 %v5466, %v5471
    %v5488 = vmul.f32 %v5462, %v5472
    %v5489 = vmul.f32 %v5458, %v5473
    %v5490 = vmul.f32 %v5454, %v5474
    %v5491 = vmul.f32 %v5467, %v5471
    %v5492 = vmul.f32 %v5463, %v5472
    %v5493 = vmul.f32 %v5459, %v5473
    %v5494 = vmul.f32 %v5455, %v5474
    %v5495 = vpack.c.bf16 %v5483, %v5479
    %v5496 = vpack.c.bf16 %v5484, %v5480
    %v5497 = vpack.c.bf16 %v5485, %v5481
    %v5498 = vpack.c.bf16 %v5486, %v5482
    %v5499 = vpack.c.bf16 %v5491, %v5487
    %v5500 = vpack.c.bf16 %v5492, %v5488
    %v5501 = vpack.c.bf16 %v5493, %v5489
    %v5502 = vpack.c.bf16 %v5494, %v5490
    %s5503 = scalar_lea.vmem %s18, 64
    %v5504 = vld [vmem:[%s5503] sm:$0xf]
    %v5505 = vld [vmem:[%s5503 + $0x4] sm:$0xf]
    %v5508 = vunpack.c.l.b16 %v5504
    %v5509 = vunpack.c.l.b16 %v5505
    %v5510 = vpack.c.b16 %v5509, %v5508
    %v5512 = vsel %vm2496, %v5510, 0
    %5514 = vmatpush.bf16.msra.mxu0 0
    %5515 = vmatpush.bf16.msra.mxu0 0
    %5516 = vmatpush.bf16.msra.mxu0 0
    %5517 = vmatpush.bf16.msra.mxu0 0
    %5518 = vmatpush.bf16.msra.mxu0 0
    %5519 = vmatpush.bf16.msra.mxu0 0
    %5520 = vmatpush.bf16.msra.mxu0 %v5499
    %5521 = vmatpush.bf16.msra.mxu0 %v5495
    %5522 = vmatmul.bf16.gmra.mxu0 %v5512
    %v5523 = vpop.f32.mrf.mxu0
    %v5524 = vadd.f32 0.0, %v5523
    %v5525 = vpop.f32.mrf.mxu0
    %v5526 = vadd.f32 0.0, %v5525
    %5527 = vdwg.mxu0
    %5528 = vmatpush.bf16.msra.mxu0 0
    %5529 = vmatpush.bf16.msra.mxu0 0
    %5530 = vmatpush.bf16.msra.mxu0 0
    %5531 = vmatpush.bf16.msra.mxu0 0
    %5532 = vmatpush.bf16.msra.mxu0 0
    %5533 = vmatpush.bf16.msra.mxu0 0
    %5534 = vmatpush.bf16.msra.mxu0 %v5500
    %5535 = vmatpush.bf16.msra.mxu0 %v5496
    %5536 = vmatmul.bf16.gmra.mxu0 %v5512
    %v5537 = vpop.f32.mrf.mxu0
    %v5538 = vadd.f32 0.0, %v5537
    %v5539 = vpop.f32.mrf.mxu0
    %v5540 = vadd.f32 0.0, %v5539
    %5541 = vdwg.mxu0
    %5542 = vmatpush.bf16.msra.mxu0 0
    %5543 = vmatpush.bf16.msra.mxu0 0
    %5544 = vmatpush.bf16.msra.mxu0 0
    %5545 = vmatpush.bf16.msra.mxu0 0
    %5546 = vmatpush.bf16.msra.mxu0 0
    %5547 = vmatpush.bf16.msra.mxu0 0
    %5548 = vmatpush.bf16.msra.mxu0 %v5501
    %5549 = vmatpush.bf16.msra.mxu0 %v5497
    %5550 = vmatmul.bf16.gmra.mxu0 %v5512
    %v5551 = vpop.f32.mrf.mxu0
    %v5552 = vadd.f32 0.0, %v5551
    %v5553 = vpop.f32.mrf.mxu0
    %v5554 = vadd.f32 0.0, %v5553
    %5555 = vdwg.mxu0
    %5556 = vmatpush.bf16.msra.mxu0 0
    %5557 = vmatpush.bf16.msra.mxu0 0
    %5558 = vmatpush.bf16.msra.mxu0 0
    %5559 = vmatpush.bf16.msra.mxu0 0
    %5560 = vmatpush.bf16.msra.mxu0 0
    %5561 = vmatpush.bf16.msra.mxu0 0
    %5562 = vmatpush.bf16.msra.mxu0 %v5502
    %5563 = vmatpush.bf16.msra.mxu0 %v5498
    %5564 = vmatmul.bf16.gmra.mxu0 %v5512
    %v5565 = vpop.f32.mrf.mxu0
    %v5566 = vadd.f32 0.0, %v5565
    %v5567 = vpop.f32.mrf.mxu0
    %v5568 = vadd.f32 0.0, %v5567
    %5569 = vdwg.mxu0
    %v5570 = vadd.f32 %v5411, %v5524
    %v5571 = vadd.f32 %v5412, %v5538
    %v5572 = vadd.f32 %v5413, %v5552
    %v5573 = vadd.f32 %v5414, %v5566
    %v5574 = vadd.f32 %v5415, %v5526
    %v5575 = vadd.f32 %v5416, %v5540
    %v5576 = vadd.f32 %v5417, %v5554
    %v5577 = vadd.f32 %v5418, %v5568
    %5578 = vrot.lane.b32.xlu0 %v4102, 1
    %v5579 = vpop.permute.xlu0 %5578
    %5580 = vrot.lane.b32.xlu0 %v4104, 1
    %v5581 = vpop.permute.xlu0 %5580
    %5582 = vrot.lane.b32.xlu0 %v4107, 1
    %v5583 = vpop.permute.xlu0 %5582
    %5584 = vrot.lane.b32.xlu0 %v4109, 1
    %v5585 = vpop.permute.xlu0 %5584
    %5586 = vrot.lane.b32.xlu0 %v4121, 1
    %v5587 = vpop.permute.xlu0 %5586
    %5588 = vrot.lane.b32.xlu0 %v4123, 1
    %v5589 = vpop.permute.xlu0 %5588
    %5590 = vrot.lane.b32.xlu0 %v4126, 1
    %v5591 = vpop.permute.xlu0 %5590
    %5592 = vrot.lane.b32.xlu0 %v4128, 1
    %v5593 = vpop.permute.xlu0 %5592
    %5594 = vrot.lane.b32.xlu0 %v4140, 1
    %v5595 = vpop.permute.xlu0 %5594
    %5596 = vrot.lane.b32.xlu0 %v4142, 1
    %v5597 = vpop.permute.xlu0 %5596
    %5598 = vrot.lane.b32.xlu0 %v4145, 1
    %v5599 = vpop.permute.xlu0 %5598
    %5600 = vrot.lane.b32.xlu0 %v4147, 1
    %v5601 = vpop.permute.xlu0 %5600
    %5602 = vrot.lane.b32.xlu0 %v4159, 1
    %v5603 = vpop.permute.xlu0 %5602
    %5604 = vrot.lane.b32.xlu0 %v4161, 1
    %v5605 = vpop.permute.xlu0 %5604
    %5606 = vrot.lane.b32.xlu0 %v4164, 1
    %v5607 = vpop.permute.xlu0 %5606
    %5608 = vrot.lane.b32.xlu0 %v4166, 1
    %v5609 = vpop.permute.xlu0 %5608
    %v5610 = vsel %vm490, %v5595, %v5603
    %v5611 = vsel %vm490, %v5597, %v5605
    %v5612 = vsel %vm490, %v5599, %v5607
    %v5613 = vsel %vm490, %v5601, %v5609
    %v5614 = vsel %vm490, %v5587, %v5595
    %v5615 = vsel %vm490, %v5589, %v5597
    %v5616 = vsel %vm490, %v5591, %v5599
    %v5617 = vsel %vm490, %v5593, %v5601
    %v5618 = vsel %vm490, %v5579, %v5587
    %v5619 = vsel %vm490, %v5581, %v5589
    %v5620 = vsel %vm490, %v5583, %v5591
    %v5621 = vsel %vm490, %v5585, %v5593
    %v5622 = vsel %vm490, %v5603, %v5579
    %v5623 = vsel %vm490, %v5605, %v5581
    %v5624 = vsel %vm490, %v5607, %v5583
    %v5625 = vsel %vm490, %v5609, %v5585
    %s5626 = scalar_lea.vmem %s3, 36
    %v5627 = vld [vmem:[%s5626] sm:$0xf]
    %v5629 = vperm.slane %v5627, 0
    %v5630 = vperm.slane %v5627, 1
    %v5631 = vperm.slane %v5627, 2
    %v5632 = vperm.slane %v5627, 3
    %v5637 = vmul.f32 %v5622, %v5629
    %v5638 = vmul.f32 %v5618, %v5630
    %v5639 = vmul.f32 %v5614, %v5631
    %v5640 = vmul.f32 %v5610, %v5632
    %v5641 = vmul.f32 %v5623, %v5629
    %v5642 = vmul.f32 %v5619, %v5630
    %v5643 = vmul.f32 %v5615, %v5631
    %v5644 = vmul.f32 %v5611, %v5632
    %v5645 = vmul.f32 %v5624, %v5629
    %v5646 = vmul.f32 %v5620, %v5630
    %v5647 = vmul.f32 %v5616, %v5631
    %v5648 = vmul.f32 %v5612, %v5632
    %v5649 = vmul.f32 %v5625, %v5629
    %v5650 = vmul.f32 %v5621, %v5630
    %v5651 = vmul.f32 %v5617, %v5631
    %v5652 = vmul.f32 %v5613, %v5632
    %v5653 = vpack.c.bf16 %v5641, %v5637
    %v5654 = vpack.c.bf16 %v5642, %v5638
    %v5655 = vpack.c.bf16 %v5643, %v5639
    %v5656 = vpack.c.bf16 %v5644, %v5640
    %v5657 = vpack.c.bf16 %v5649, %v5645
    %v5658 = vpack.c.bf16 %v5650, %v5646
    %v5659 = vpack.c.bf16 %v5651, %v5647
    %v5660 = vpack.c.bf16 %v5652, %v5648
    %s5661 = scalar_lea.vmem %s18, 72
    %v5662 = vld [vmem:[%s5661] sm:$0xf]
    %v5663 = vld [vmem:[%s5661 + $0x4] sm:$0xf]
    %v5666 = vunpack.c.l.b16 %v5662
    %v5667 = vunpack.c.l.b16 %v5663
    %v5668 = vpack.c.b16 %v5667, %v5666
    %v5670 = vsel %vm2496, %v5668, 0
    %5672 = vmatpush.bf16.msra.mxu0 0
    %5673 = vmatpush.bf16.msra.mxu0 0
    %5674 = vmatpush.bf16.msra.mxu0 0
    %5675 = vmatpush.bf16.msra.mxu0 0
    %5676 = vmatpush.bf16.msra.mxu0 0
    %5677 = vmatpush.bf16.msra.mxu0 0
    %5678 = vmatpush.bf16.msra.mxu0 %v5657
    %5679 = vmatpush.bf16.msra.mxu0 %v5653
    %5680 = vmatmul.bf16.gmra.mxu0 %v5670
    %v5681 = vpop.f32.mrf.mxu0
    %v5682 = vadd.f32 0.0, %v5681
    %v5683 = vpop.f32.mrf.mxu0
    %v5684 = vadd.f32 0.0, %v5683
    %5685 = vdwg.mxu0
    %5686 = vmatpush.bf16.msra.mxu0 0
    %5687 = vmatpush.bf16.msra.mxu0 0
    %5688 = vmatpush.bf16.msra.mxu0 0
    %5689 = vmatpush.bf16.msra.mxu0 0
    %5690 = vmatpush.bf16.msra.mxu0 0
    %5691 = vmatpush.bf16.msra.mxu0 0
    %5692 = vmatpush.bf16.msra.mxu0 %v5658
    %5693 = vmatpush.bf16.msra.mxu0 %v5654
    %5694 = vmatmul.bf16.gmra.mxu0 %v5670
    %v5695 = vpop.f32.mrf.mxu0
    %v5696 = vadd.f32 0.0, %v5695
    %v5697 = vpop.f32.mrf.mxu0
    %v5698 = vadd.f32 0.0, %v5697
    %5699 = vdwg.mxu0
    %5700 = vmatpush.bf16.msra.mxu0 0
    %5701 = vmatpush.bf16.msra.mxu0 0
    %5702 = vmatpush.bf16.msra.mxu0 0
    %5703 = vmatpush.bf16.msra.mxu0 0
    %5704 = vmatpush.bf16.msra.mxu0 0
    %5705 = vmatpush.bf16.msra.mxu0 0
    %5706 = vmatpush.bf16.msra.mxu0 %v5659
    %5707 = vmatpush.bf16.msra.mxu0 %v5655
    %5708 = vmatmul.bf16.gmra.mxu0 %v5670
    %v5709 = vpop.f32.mrf.mxu0
    %v5710 = vadd.f32 0.0, %v5709
    %v5711 = vpop.f32.mrf.mxu0
    %v5712 = vadd.f32 0.0, %v5711
    %5713 = vdwg.mxu0
    %5714 = vmatpush.bf16.msra.mxu0 0
    %5715 = vmatpush.bf16.msra.mxu0 0
    %5716 = vmatpush.bf16.msra.mxu0 0
    %5717 = vmatpush.bf16.msra.mxu0 0
    %5718 = vmatpush.bf16.msra.mxu0 0
    %5719 = vmatpush.bf16.msra.mxu0 0
    %5720 = vmatpush.bf16.msra.mxu0 %v5660
    %5721 = vmatpush.bf16.msra.mxu0 %v5656
    %5722 = vmatmul.bf16.gmra.mxu0 %v5670
    %v5723 = vpop.f32.mrf.mxu0
    %v5724 = vadd.f32 0.0, %v5723
    %v5725 = vpop.f32.mrf.mxu0
    %v5726 = vadd.f32 0.0, %v5725
    %5727 = vdwg.mxu0
    %v5728 = vadd.f32 %v5570, %v5682
    %v5729 = vadd.f32 %v5571, %v5696
    %v5730 = vadd.f32 %v5572, %v5710
    %v5731 = vadd.f32 %v5573, %v5724
    %v5732 = vadd.f32 %v5574, %v5684
    %v5733 = vadd.f32 %v5575, %v5698
    %v5734 = vadd.f32 %v5576, %v5712
    %v5735 = vadd.f32 %v5577, %v5726
    %v5736 = vpack.c.bf16 %v4104, %v4102
    %v5737 = vpack.c.bf16 %v4123, %v4121
    %v5738 = vpack.c.bf16 %v4142, %v4140
    %v5739 = vpack.c.bf16 %v4161, %v4159
    %v5740 = vpack.c.bf16 %v4109, %v4107
    %v5741 = vpack.c.bf16 %v4128, %v4126
    %v5742 = vpack.c.bf16 %v4147, %v4145
    %v5743 = vpack.c.bf16 %v4166, %v4164
    %s5744 = scalar_lea.vmem %s18, 80
    %v5745 = vld [vmem:[%s5744] sm:$0xf]
    %v5746 = vld [vmem:[%s5744 + $0x4] sm:$0xf]
    %v5749 = vunpack.c.l.b16 %v5745
    %v5750 = vunpack.c.l.b16 %v5746
    %v5751 = vpack.c.b16 %v5750, %v5749
    %v5753 = vsel %vm2496, %v5751, 0
    %5755 = vmatpush.bf16.msra.mxu0 0
    %5756 = vmatpush.bf16.msra.mxu0 0
    %5757 = vmatpush.bf16.msra.mxu0 0
    %5758 = vmatpush.bf16.msra.mxu0 0
    %5759 = vmatpush.bf16.msra.mxu0 0
    %5760 = vmatpush.bf16.msra.mxu0 0
    %5761 = vmatpush.bf16.msra.mxu0 %v5740
    %5762 = vmatpush.bf16.msra.mxu0 %v5736
    %5763 = vmatmul.bf16.gmra.mxu0 %v5753
    %v5764 = vpop.f32.mrf.mxu0
    %v5765 = vadd.f32 0.0, %v5764
    %v5766 = vpop.f32.mrf.mxu0
    %v5767 = vadd.f32 0.0, %v5766
    %5768 = vdwg.mxu0
    %5769 = vmatpush.bf16.msra.mxu0 0
    %5770 = vmatpush.bf16.msra.mxu0 0
    %5771 = vmatpush.bf16.msra.mxu0 0
    %5772 = vmatpush.bf16.msra.mxu0 0
    %5773 = vmatpush.bf16.msra.mxu0 0
    %5774 = vmatpush.bf16.msra.mxu0 0
    %5775 = vmatpush.bf16.msra.mxu0 %v5741
    %5776 = vmatpush.bf16.msra.mxu0 %v5737
    %5777 = vmatmul.bf16.gmra.mxu0 %v5753
    %v5778 = vpop.f32.mrf.mxu0
    %v5779 = vadd.f32 0.0, %v5778
    %v5780 = vpop.f32.mrf.mxu0
    %v5781 = vadd.f32 0.0, %v5780
    %5782 = vdwg.mxu0
    %5783 = vmatpush.bf16.msra.mxu0 0
    %5784 = vmatpush.bf16.msra.mxu0 0
    %5785 = vmatpush.bf16.msra.mxu0 0
    %5786 = vmatpush.bf16.msra.mxu0 0
    %5787 = vmatpush.bf16.msra.mxu0 0
    %5788 = vmatpush.bf16.msra.mxu0 0
    %5789 = vmatpush.bf16.msra.mxu0 %v5742
    %5790 = vmatpush.bf16.msra.mxu0 %v5738
    %5791 = vmatmul.bf16.gmra.mxu0 %v5753
    %v5792 = vpop.f32.mrf.mxu0
    %v5793 = vadd.f32 0.0, %v5792
    %v5794 = vpop.f32.mrf.mxu0
    %v5795 = vadd.f32 0.0, %v5794
    %5796 = vdwg.mxu0
    %5797 = vmatpush.bf16.msra.mxu0 0
    %5798 = vmatpush.bf16.msra.mxu0 0
    %5799 = vmatpush.bf16.msra.mxu0 0
    %5800 = vmatpush.bf16.msra.mxu0 0
    %5801 = vmatpush.bf16.msra.mxu0 0
    %5802 = vmatpush.bf16.msra.mxu0 0
    %5803 = vmatpush.bf16.msra.mxu0 %v5743
    %5804 = vmatpush.bf16.msra.mxu0 %v5739
    %5805 = vmatmul.bf16.gmra.mxu0 %v5753
    %v5806 = vpop.f32.mrf.mxu0
    %v5807 = vadd.f32 0.0, %v5806
    %v5808 = vpop.f32.mrf.mxu0
    %v5809 = vadd.f32 0.0, %v5808
    %5810 = vdwg.mxu0
    %v5811 = vadd.f32 %v5728, %v5765
    %v5812 = vadd.f32 %v5729, %v5779
    %v5813 = vadd.f32 %v5730, %v5793
    %v5814 = vadd.f32 %v5731, %v5807
    %v5815 = vadd.f32 %v5732, %v5767
    %v5816 = vadd.f32 %v5733, %v5781
    %v5817 = vadd.f32 %v5734, %v5795
    %v5818 = vadd.f32 %v5735, %v5809
    %5819 = vrot.lane.b32.xlu0 %v4102, 127
    %v5820 = vpop.permute.xlu0 %5819
    %5821 = vrot.lane.b32.xlu0 %v4104, 127
    %v5822 = vpop.permute.xlu0 %5821
    %5823 = vrot.lane.b32.xlu0 %v4107, 127
    %v5824 = vpop.permute.xlu0 %5823
    %5825 = vrot.lane.b32.xlu0 %v4109, 127
    %v5826 = vpop.permute.xlu0 %5825
    %5827 = vrot.lane.b32.xlu0 %v4121, 127
    %v5828 = vpop.permute.xlu0 %5827
    %5829 = vrot.lane.b32.xlu0 %v4123, 127
    %v5830 = vpop.permute.xlu0 %5829
    %5831 = vrot.lane.b32.xlu0 %v4126, 127
    %v5832 = vpop.permute.xlu0 %5831
    %5833 = vrot.lane.b32.xlu0 %v4128, 127
    %v5834 = vpop.permute.xlu0 %5833
    %5835 = vrot.lane.b32.xlu0 %v4140, 127
    %v5836 = vpop.permute.xlu0 %5835
    %5837 = vrot.lane.b32.xlu0 %v4142, 127
    %v5838 = vpop.permute.xlu0 %5837
    %5839 = vrot.lane.b32.xlu0 %v4145, 127
    %v5840 = vpop.permute.xlu0 %5839
    %5841 = vrot.lane.b32.xlu0 %v4147, 127
    %v5842 = vpop.permute.xlu0 %5841
    %5843 = vrot.lane.b32.xlu0 %v4159, 127
    %v5844 = vpop.permute.xlu0 %5843
    %5845 = vrot.lane.b32.xlu0 %v4161, 127
    %v5846 = vpop.permute.xlu0 %5845
    %5847 = vrot.lane.b32.xlu0 %v4164, 127
    %v5848 = vpop.permute.xlu0 %5847
    %5849 = vrot.lane.b32.xlu0 %v4166, 127
    %v5850 = vpop.permute.xlu0 %5849
    %v5851 = vsel %vm722, %v5836, %v5844
    %v5852 = vsel %vm722, %v5838, %v5846
    %v5853 = vsel %vm722, %v5840, %v5848
    %v5854 = vsel %vm722, %v5842, %v5850
    %v5855 = vsel %vm722, %v5828, %v5836
    %v5856 = vsel %vm722, %v5830, %v5838
    %v5857 = vsel %vm722, %v5832, %v5840
    %v5858 = vsel %vm722, %v5834, %v5842
    %v5859 = vsel %vm722, %v5820, %v5828
    %v5860 = vsel %vm722, %v5822, %v5830
    %v5861 = vsel %vm722, %v5824, %v5832
    %v5862 = vsel %vm722, %v5826, %v5834
    %v5863 = vsel %vm722, %v5844, %v5820
    %v5864 = vsel %vm722, %v5846, %v5822
    %v5865 = vsel %vm722, %v5848, %v5824
    %v5866 = vsel %vm722, %v5850, %v5826
    %s5867 = scalar_lea.vmem %s3, 44
    %v5868 = vld [vmem:[%s5867] sm:$0xf]
    %v5870 = vperm.slane %v5868, 0
    %v5871 = vperm.slane %v5868, 1
    %v5872 = vperm.slane %v5868, 2
    %v5873 = vperm.slane %v5868, 3
    %v5878 = vmul.f32 %v5859, %v5870
    %v5879 = vmul.f32 %v5855, %v5871
    %v5880 = vmul.f32 %v5851, %v5872
    %v5881 = vmul.f32 %v5863, %v5873
    %v5882 = vmul.f32 %v5860, %v5870
    %v5883 = vmul.f32 %v5856, %v5871
    %v5884 = vmul.f32 %v5852, %v5872
    %v5885 = vmul.f32 %v5864, %v5873
    %v5886 = vmul.f32 %v5861, %v5870
    %v5887 = vmul.f32 %v5857, %v5871
    %v5888 = vmul.f32 %v5853, %v5872
    %v5889 = vmul.f32 %v5865, %v5873
    %v5890 = vmul.f32 %v5862, %v5870
    %v5891 = vmul.f32 %v5858, %v5871
    %v5892 = vmul.f32 %v5854, %v5872
    %v5893 = vmul.f32 %v5866, %v5873
    %v5894 = vpack.c.bf16 %v5882, %v5878
    %v5895 = vpack.c.bf16 %v5883, %v5879
    %v5896 = vpack.c.bf16 %v5884, %v5880
    %v5897 = vpack.c.bf16 %v5885, %v5881
    %v5898 = vpack.c.bf16 %v5890, %v5886
    %v5899 = vpack.c.bf16 %v5891, %v5887
    %v5900 = vpack.c.bf16 %v5892, %v5888
    %v5901 = vpack.c.bf16 %v5893, %v5889
    %s5902 = scalar_lea.vmem %s18, 88
    %v5903 = vld [vmem:[%s5902] sm:$0xf]
    %v5904 = vld [vmem:[%s5902 + $0x4] sm:$0xf]
    %v5907 = vunpack.c.l.b16 %v5903
    %v5908 = vunpack.c.l.b16 %v5904
    %v5909 = vpack.c.b16 %v5908, %v5907
    %v5911 = vsel %vm2496, %v5909, 0
    %5913 = vmatpush.bf16.msra.mxu0 0
    %5914 = vmatpush.bf16.msra.mxu0 0
    %5915 = vmatpush.bf16.msra.mxu0 0
    %5916 = vmatpush.bf16.msra.mxu0 0
    %5917 = vmatpush.bf16.msra.mxu0 0
    %5918 = vmatpush.bf16.msra.mxu0 0
    %5919 = vmatpush.bf16.msra.mxu0 %v5898
    %5920 = vmatpush.bf16.msra.mxu0 %v5894
    %5921 = vmatmul.bf16.gmra.mxu0 %v5911
    %v5922 = vpop.f32.mrf.mxu0
    %v5923 = vadd.f32 0.0, %v5922
    %v5924 = vpop.f32.mrf.mxu0
    %v5925 = vadd.f32 0.0, %v5924
    %5926 = vdwg.mxu0
    %5927 = vmatpush.bf16.msra.mxu0 0
    %5928 = vmatpush.bf16.msra.mxu0 0
    %5929 = vmatpush.bf16.msra.mxu0 0
    %5930 = vmatpush.bf16.msra.mxu0 0
    %5931 = vmatpush.bf16.msra.mxu0 0
    %5932 = vmatpush.bf16.msra.mxu0 0
    %5933 = vmatpush.bf16.msra.mxu0 %v5899
    %5934 = vmatpush.bf16.msra.mxu0 %v5895
    %5935 = vmatmul.bf16.gmra.mxu0 %v5911
    %v5936 = vpop.f32.mrf.mxu0
    %v5937 = vadd.f32 0.0, %v5936
    %v5938 = vpop.f32.mrf.mxu0
    %v5939 = vadd.f32 0.0, %v5938
    %5940 = vdwg.mxu0
    %5941 = vmatpush.bf16.msra.mxu0 0
    %5942 = vmatpush.bf16.msra.mxu0 0
    %5943 = vmatpush.bf16.msra.mxu0 0
    %5944 = vmatpush.bf16.msra.mxu0 0
    %5945 = vmatpush.bf16.msra.mxu0 0
    %5946 = vmatpush.bf16.msra.mxu0 0
    %5947 = vmatpush.bf16.msra.mxu0 %v5900
    %5948 = vmatpush.bf16.msra.mxu0 %v5896
    %5949 = vmatmul.bf16.gmra.mxu0 %v5911
    %v5950 = vpop.f32.mrf.mxu0
    %v5951 = vadd.f32 0.0, %v5950
    %v5952 = vpop.f32.mrf.mxu0
    %v5953 = vadd.f32 0.0, %v5952
    %5954 = vdwg.mxu0
    %5955 = vmatpush.bf16.msra.mxu0 0
    %5956 = vmatpush.bf16.msra.mxu0 0
    %5957 = vmatpush.bf16.msra.mxu0 0
    %5958 = vmatpush.bf16.msra.mxu0 0
    %5959 = vmatpush.bf16.msra.mxu0 0
    %5960 = vmatpush.bf16.msra.mxu0 0
    %5961 = vmatpush.bf16.msra.mxu0 %v5901
    %5962 = vmatpush.bf16.msra.mxu0 %v5897
    %5963 = vmatmul.bf16.gmra.mxu0 %v5911
    %v5964 = vpop.f32.mrf.mxu0
    %v5965 = vadd.f32 0.0, %v5964
    %v5966 = vpop.f32.mrf.mxu0
    %v5967 = vadd.f32 0.0, %v5966
    %5968 = vdwg.mxu0
    %v5969 = vadd.f32 %v5811, %v5923
    %v5970 = vadd.f32 %v5812, %v5937
    %v5971 = vadd.f32 %v5813, %v5951
    %v5972 = vadd.f32 %v5814, %v5965
    %v5973 = vadd.f32 %v5815, %v5925
    %v5974 = vadd.f32 %v5816, %v5939
    %v5975 = vadd.f32 %v5817, %v5953
    %v5976 = vadd.f32 %v5818, %v5967
    %5977 = vrot.lane.b32.xlu0 %v4102, 114
    %v5978 = vpop.permute.xlu0 %5977
    %5979 = vrot.lane.b32.xlu0 %v4104, 114
    %v5980 = vpop.permute.xlu0 %5979
    %5981 = vrot.lane.b32.xlu0 %v4107, 114
    %v5982 = vpop.permute.xlu0 %5981
    %5983 = vrot.lane.b32.xlu0 %v4109, 114
    %v5984 = vpop.permute.xlu0 %5983
    %5985 = vrot.lane.b32.xlu0 %v4121, 114
    %v5986 = vpop.permute.xlu0 %5985
    %5987 = vrot.lane.b32.xlu0 %v4123, 114
    %v5988 = vpop.permute.xlu0 %5987
    %5989 = vrot.lane.b32.xlu0 %v4126, 114
    %v5990 = vpop.permute.xlu0 %5989
    %5991 = vrot.lane.b32.xlu0 %v4128, 114
    %v5992 = vpop.permute.xlu0 %5991
    %5993 = vrot.lane.b32.xlu0 %v4140, 114
    %v5994 = vpop.permute.xlu0 %5993
    %5995 = vrot.lane.b32.xlu0 %v4142, 114
    %v5996 = vpop.permute.xlu0 %5995
    %5997 = vrot.lane.b32.xlu0 %v4145, 114
    %v5998 = vpop.permute.xlu0 %5997
    %5999 = vrot.lane.b32.xlu0 %v4147, 114
    %v6000 = vpop.permute.xlu0 %5999
    %6001 = vrot.lane.b32.xlu0 %v4159, 114
    %v6002 = vpop.permute.xlu0 %6001
    %6003 = vrot.lane.b32.xlu0 %v4161, 114
    %v6004 = vpop.permute.xlu0 %6003
    %6005 = vrot.lane.b32.xlu0 %v4164, 114
    %v6006 = vpop.permute.xlu0 %6005
    %6007 = vrot.lane.b32.xlu0 %v4166, 114
    %v6008 = vpop.permute.xlu0 %6007
    %vm6009 = vcmp.lt.s32.totalorder %v115, 114
    %v6010 = vsel %vm6009, %v5994, %v6002
    %v6011 = vsel %vm6009, %v5996, %v6004
    %v6012 = vsel %vm6009, %v5998, %v6006
    %v6013 = vsel %vm6009, %v6000, %v6008
    %v6014 = vsel %vm6009, %v5986, %v5994
    %v6015 = vsel %vm6009, %v5988, %v5996
    %v6016 = vsel %vm6009, %v5990, %v5998
    %v6017 = vsel %vm6009, %v5992, %v6000
    %v6018 = vsel %vm6009, %v5978, %v5986
    %v6019 = vsel %vm6009, %v5980, %v5988
    %v6020 = vsel %vm6009, %v5982, %v5990
    %v6021 = vsel %vm6009, %v5984, %v5992
    %v6022 = vsel %vm6009, %v6002, %v5978
    %v6023 = vsel %vm6009, %v6004, %v5980
    %v6024 = vsel %vm6009, %v6006, %v5982
    %v6025 = vsel %vm6009, %v6008, %v5984
    %s6026 = scalar_lea.vmem %s3, 48
    %v6027 = vld [vmem:[%s6026] sm:$0xf]
    %v6029 = vperm.slane %v6027, 0
    %v6030 = vperm.slane %v6027, 1
    %v6031 = vperm.slane %v6027, 2
    %v6032 = vperm.slane %v6027, 3
    %v6037 = vmul.f32 %v6018, %v6029
    %v6038 = vmul.f32 %v6014, %v6030
    %v6039 = vmul.f32 %v6010, %v6031
    %v6040 = vmul.f32 %v6022, %v6032
    %v6041 = vmul.f32 %v6019, %v6029
    %v6042 = vmul.f32 %v6015, %v6030
    %v6043 = vmul.f32 %v6011, %v6031
    %v6044 = vmul.f32 %v6023, %v6032
    %v6045 = vmul.f32 %v6020, %v6029
    %v6046 = vmul.f32 %v6016, %v6030
    %v6047 = vmul.f32 %v6012, %v6031
    %v6048 = vmul.f32 %v6024, %v6032
    %v6049 = vmul.f32 %v6021, %v6029
    %v6050 = vmul.f32 %v6017, %v6030
    %v6051 = vmul.f32 %v6013, %v6031
    %v6052 = vmul.f32 %v6025, %v6032
    %v6053 = vpack.c.bf16 %v6041, %v6037
    %v6054 = vpack.c.bf16 %v6042, %v6038
    %v6055 = vpack.c.bf16 %v6043, %v6039
    %v6056 = vpack.c.bf16 %v6044, %v6040
    %v6057 = vpack.c.bf16 %v6049, %v6045
    %v6058 = vpack.c.bf16 %v6050, %v6046
    %v6059 = vpack.c.bf16 %v6051, %v6047
    %v6060 = vpack.c.bf16 %v6052, %v6048
    %s6061 = scalar_lea.vmem %s18, 96
    %v6062 = vld [vmem:[%s6061] sm:$0xf]
    %v6063 = vld [vmem:[%s6061 + $0x4] sm:$0xf]
    %v6066 = vunpack.c.l.b16 %v6062
    %v6067 = vunpack.c.l.b16 %v6063
    %v6068 = vpack.c.b16 %v6067, %v6066
    %v6070 = vsel %vm2496, %v6068, 0
    %6072 = vmatpush.bf16.msra.mxu0 0
    %6073 = vmatpush.bf16.msra.mxu0 0
    %6074 = vmatpush.bf16.msra.mxu0 0
    %6075 = vmatpush.bf16.msra.mxu0 0
    %6076 = vmatpush.bf16.msra.mxu0 0
    %6077 = vmatpush.bf16.msra.mxu0 0
    %6078 = vmatpush.bf16.msra.mxu0 %v6057
    %6079 = vmatpush.bf16.msra.mxu0 %v6053
    %6080 = vmatmul.bf16.gmra.mxu0 %v6070
    %v6081 = vpop.f32.mrf.mxu0
    %v6082 = vadd.f32 0.0, %v6081
    %v6083 = vpop.f32.mrf.mxu0
    %v6084 = vadd.f32 0.0, %v6083
    %6085 = vdwg.mxu0
    %6086 = vmatpush.bf16.msra.mxu0 0
    %6087 = vmatpush.bf16.msra.mxu0 0
    %6088 = vmatpush.bf16.msra.mxu0 0
    %6089 = vmatpush.bf16.msra.mxu0 0
    %6090 = vmatpush.bf16.msra.mxu0 0
    %6091 = vmatpush.bf16.msra.mxu0 0
    %6092 = vmatpush.bf16.msra.mxu0 %v6058
    %6093 = vmatpush.bf16.msra.mxu0 %v6054
    %6094 = vmatmul.bf16.gmra.mxu0 %v6070
    %v6095 = vpop.f32.mrf.mxu0
    %v6096 = vadd.f32 0.0, %v6095
    %v6097 = vpop.f32.mrf.mxu0
    %v6098 = vadd.f32 0.0, %v6097
    %6099 = vdwg.mxu0
    %6100 = vmatpush.bf16.msra.mxu0 0
    %6101 = vmatpush.bf16.msra.mxu0 0
    %6102 = vmatpush.bf16.msra.mxu0 0
    %6103 = vmatpush.bf16.msra.mxu0 0
    %6104 = vmatpush.bf16.msra.mxu0 0
    %6105 = vmatpush.bf16.msra.mxu0 0
    %6106 = vmatpush.bf16.msra.mxu0 %v6059
    %6107 = vmatpush.bf16.msra.mxu0 %v6055
    %6108 = vmatmul.bf16.gmra.mxu0 %v6070
    %v6109 = vpop.f32.mrf.mxu0
    %v6110 = vadd.f32 0.0, %v6109
    %v6111 = vpop.f32.mrf.mxu0
    %v6112 = vadd.f32 0.0, %v6111
    %6113 = vdwg.mxu0
    %6114 = vmatpush.bf16.msra.mxu0 0
    %6115 = vmatpush.bf16.msra.mxu0 0
    %6116 = vmatpush.bf16.msra.mxu0 0
    %6117 = vmatpush.bf16.msra.mxu0 0
    %6118 = vmatpush.bf16.msra.mxu0 0
    %6119 = vmatpush.bf16.msra.mxu0 0
    %6120 = vmatpush.bf16.msra.mxu0 %v6060
    %6121 = vmatpush.bf16.msra.mxu0 %v6056
    %6122 = vmatmul.bf16.gmra.mxu0 %v6070
    %v6123 = vpop.f32.mrf.mxu0
    %v6124 = vadd.f32 0.0, %v6123
    %v6125 = vpop.f32.mrf.mxu0
    %v6126 = vadd.f32 0.0, %v6125
    %6127 = vdwg.mxu0
    %v6128 = vadd.f32 %v5969, %v6082
    %v6129 = vadd.f32 %v5970, %v6096
    %v6130 = vadd.f32 %v5971, %v6110
    %v6131 = vadd.f32 %v5972, %v6124
    %v6132 = vadd.f32 %v5973, %v6084
    %v6133 = vadd.f32 %v5974, %v6098
    %v6134 = vadd.f32 %v5975, %v6112
    %v6135 = vadd.f32 %v5976, %v6126
    %6136 = vrot.lane.b32.xlu0 %v4102, 113
    %v6137 = vpop.permute.xlu0 %6136
    %6138 = vrot.lane.b32.xlu0 %v4104, 113
    %v6139 = vpop.permute.xlu0 %6138
    %6140 = vrot.lane.b32.xlu0 %v4107, 113
    %v6141 = vpop.permute.xlu0 %6140
    %6142 = vrot.lane.b32.xlu0 %v4109, 113
    %v6143 = vpop.permute.xlu0 %6142
    %6144 = vrot.lane.b32.xlu0 %v4121, 113
    %v6145 = vpop.permute.xlu0 %6144
    %6146 = vrot.lane.b32.xlu0 %v4123, 113
    %v6147 = vpop.permute.xlu0 %6146
    %6148 = vrot.lane.b32.xlu0 %v4126, 113
    %v6149 = vpop.permute.xlu0 %6148
    %6150 = vrot.lane.b32.xlu0 %v4128, 113
    %v6151 = vpop.permute.xlu0 %6150
    %6152 = vrot.lane.b32.xlu0 %v4140, 113
    %v6153 = vpop.permute.xlu0 %6152
    %6154 = vrot.lane.b32.xlu0 %v4142, 113
    %v6155 = vpop.permute.xlu0 %6154
    %6156 = vrot.lane.b32.xlu0 %v4145, 113
    %v6157 = vpop.permute.xlu0 %6156
    %6158 = vrot.lane.b32.xlu0 %v4147, 113
    %v6159 = vpop.permute.xlu0 %6158
    %6160 = vrot.lane.b32.xlu0 %v4159, 113
    %v6161 = vpop.permute.xlu0 %6160
    %6162 = vrot.lane.b32.xlu0 %v4161, 113
    %v6163 = vpop.permute.xlu0 %6162
    %6164 = vrot.lane.b32.xlu0 %v4164, 113
    %v6165 = vpop.permute.xlu0 %6164
    %6166 = vrot.lane.b32.xlu0 %v4166, 113
    %v6167 = vpop.permute.xlu0 %6166
    %v6168 = vsel %vm852, %v6153, %v6161
    %v6169 = vsel %vm852, %v6155, %v6163
    %v6170 = vsel %vm852, %v6157, %v6165
    %v6171 = vsel %vm852, %v6159, %v6167
    %v6172 = vsel %vm852, %v6145, %v6153
    %v6173 = vsel %vm852, %v6147, %v6155
    %v6174 = vsel %vm852, %v6149, %v6157
    %v6175 = vsel %vm852, %v6151, %v6159
    %v6176 = vsel %vm852, %v6137, %v6145
    %v6177 = vsel %vm852, %v6139, %v6147
    %v6178 = vsel %vm852, %v6141, %v6149
    %v6179 = vsel %vm852, %v6143, %v6151
    %v6180 = vsel %vm852, %v6161, %v6137
    %v6181 = vsel %vm852, %v6163, %v6139
    %v6182 = vsel %vm852, %v6165, %v6141
    %v6183 = vsel %vm852, %v6167, %v6143
    %s6184 = scalar_lea.vmem %s3, 52
    %v6185 = vld [vmem:[%s6184] sm:$0xf]
    %v6187 = vperm.slane %v6185, 0
    %v6188 = vperm.slane %v6185, 1
    %v6189 = vperm.slane %v6185, 2
    %v6190 = vperm.slane %v6185, 3
    %v6195 = vmul.f32 %v6176, %v6187
    %v6196 = vmul.f32 %v6172, %v6188
    %v6197 = vmul.f32 %v6168, %v6189
    %v6198 = vmul.f32 %v6180, %v6190
    %v6199 = vmul.f32 %v6177, %v6187
    %v6200 = vmul.f32 %v6173, %v6188
    %v6201 = vmul.f32 %v6169, %v6189
    %v6202 = vmul.f32 %v6181, %v6190
    %v6203 = vmul.f32 %v6178, %v6187
    %v6204 = vmul.f32 %v6174, %v6188
    %v6205 = vmul.f32 %v6170, %v6189
    %v6206 = vmul.f32 %v6182, %v6190
    %v6207 = vmul.f32 %v6179, %v6187
    %v6208 = vmul.f32 %v6175, %v6188
    %v6209 = vmul.f32 %v6171, %v6189
    %v6210 = vmul.f32 %v6183, %v6190
    %v6211 = vpack.c.bf16 %v6199, %v6195
    %v6212 = vpack.c.bf16 %v6200, %v6196
    %v6213 = vpack.c.bf16 %v6201, %v6197
    %v6214 = vpack.c.bf16 %v6202, %v6198
    %v6215 = vpack.c.bf16 %v6207, %v6203
    %v6216 = vpack.c.bf16 %v6208, %v6204
    %v6217 = vpack.c.bf16 %v6209, %v6205
    %v6218 = vpack.c.bf16 %v6210, %v6206
    %s6219 = scalar_lea.vmem %s18, 104
    %v6220 = vld [vmem:[%s6219] sm:$0xf]
    %v6221 = vld [vmem:[%s6219 + $0x4] sm:$0xf]
    %v6224 = vunpack.c.l.b16 %v6220
    %v6225 = vunpack.c.l.b16 %v6221
    %v6226 = vpack.c.b16 %v6225, %v6224
    %v6228 = vsel %vm2496, %v6226, 0
    %6230 = vmatpush.bf16.msra.mxu0 0
    %6231 = vmatpush.bf16.msra.mxu0 0
    %6232 = vmatpush.bf16.msra.mxu0 0
    %6233 = vmatpush.bf16.msra.mxu0 0
    %6234 = vmatpush.bf16.msra.mxu0 0
    %6235 = vmatpush.bf16.msra.mxu0 0
    %6236 = vmatpush.bf16.msra.mxu0 %v6215
    %6237 = vmatpush.bf16.msra.mxu0 %v6211
    %6238 = vmatmul.bf16.gmra.mxu0 %v6228
    %v6239 = vpop.f32.mrf.mxu0
    %v6240 = vadd.f32 0.0, %v6239
    %v6241 = vpop.f32.mrf.mxu0
    %v6242 = vadd.f32 0.0, %v6241
    %6243 = vdwg.mxu0
    %6244 = vmatpush.bf16.msra.mxu0 0
    %6245 = vmatpush.bf16.msra.mxu0 0
    %6246 = vmatpush.bf16.msra.mxu0 0
    %6247 = vmatpush.bf16.msra.mxu0 0
    %6248 = vmatpush.bf16.msra.mxu0 0
    %6249 = vmatpush.bf16.msra.mxu0 0
    %6250 = vmatpush.bf16.msra.mxu0 %v6216
    %6251 = vmatpush.bf16.msra.mxu0 %v6212
    %6252 = vmatmul.bf16.gmra.mxu0 %v6228
    %v6253 = vpop.f32.mrf.mxu0
    %v6254 = vadd.f32 0.0, %v6253
    %v6255 = vpop.f32.mrf.mxu0
    %v6256 = vadd.f32 0.0, %v6255
    %6257 = vdwg.mxu0
    %6258 = vmatpush.bf16.msra.mxu0 0
    %6259 = vmatpush.bf16.msra.mxu0 0
    %6260 = vmatpush.bf16.msra.mxu0 0
    %6261 = vmatpush.bf16.msra.mxu0 0
    %6262 = vmatpush.bf16.msra.mxu0 0
    %6263 = vmatpush.bf16.msra.mxu0 0
    %6264 = vmatpush.bf16.msra.mxu0 %v6217
    %6265 = vmatpush.bf16.msra.mxu0 %v6213
    %6266 = vmatmul.bf16.gmra.mxu0 %v6228
    %v6267 = vpop.f32.mrf.mxu0
    %v6268 = vadd.f32 0.0, %v6267
    %v6269 = vpop.f32.mrf.mxu0
    %v6270 = vadd.f32 0.0, %v6269
    %6271 = vdwg.mxu0
    %6272 = vmatpush.bf16.msra.mxu0 0
    %6273 = vmatpush.bf16.msra.mxu0 0
    %6274 = vmatpush.bf16.msra.mxu0 0
    %6275 = vmatpush.bf16.msra.mxu0 0
    %6276 = vmatpush.bf16.msra.mxu0 0
    %6277 = vmatpush.bf16.msra.mxu0 0
    %6278 = vmatpush.bf16.msra.mxu0 %v6218
    %6279 = vmatpush.bf16.msra.mxu0 %v6214
    %6280 = vmatmul.bf16.gmra.mxu0 %v6228
    %v6281 = vpop.f32.mrf.mxu0
    %v6282 = vadd.f32 0.0, %v6281
    %v6283 = vpop.f32.mrf.mxu0
    %v6284 = vadd.f32 0.0, %v6283
    %6285 = vdwg.mxu0
    %v6286 = vadd.f32 %v6128, %v6240
    %v6287 = vadd.f32 %v6129, %v6254
    %v6288 = vadd.f32 %v6130, %v6268
    %v6289 = vadd.f32 %v6131, %v6282
    %v6290 = vadd.f32 %v6132, %v6242
    %v6291 = vadd.f32 %v6133, %v6256
    %v6292 = vadd.f32 %v6134, %v6270
    %v6293 = vadd.f32 %v6135, %v6284
    %6294 = vrot.lane.b32.xlu0 %v4102, 112
    %v6295 = vpop.permute.xlu0 %6294
    %6296 = vrot.lane.b32.xlu0 %v4104, 112
    %v6297 = vpop.permute.xlu0 %6296
    %6298 = vrot.lane.b32.xlu0 %v4107, 112
    %v6299 = vpop.permute.xlu0 %6298
    %6300 = vrot.lane.b32.xlu0 %v4109, 112
    %v6301 = vpop.permute.xlu0 %6300
    %6302 = vrot.lane.b32.xlu0 %v4121, 112
    %v6303 = vpop.permute.xlu0 %6302
    %6304 = vrot.lane.b32.xlu0 %v4123, 112
    %v6305 = vpop.permute.xlu0 %6304
    %6306 = vrot.lane.b32.xlu0 %v4126, 112
    %v6307 = vpop.permute.xlu0 %6306
    %6308 = vrot.lane.b32.xlu0 %v4128, 112
    %v6309 = vpop.permute.xlu0 %6308
    %6310 = vrot.lane.b32.xlu0 %v4140, 112
    %v6311 = vpop.permute.xlu0 %6310
    %6312 = vrot.lane.b32.xlu0 %v4142, 112
    %v6313 = vpop.permute.xlu0 %6312
    %6314 = vrot.lane.b32.xlu0 %v4145, 112
    %v6315 = vpop.permute.xlu0 %6314
    %6316 = vrot.lane.b32.xlu0 %v4147, 112
    %v6317 = vpop.permute.xlu0 %6316
    %6318 = vrot.lane.b32.xlu0 %v4159, 112
    %v6319 = vpop.permute.xlu0 %6318
    %6320 = vrot.lane.b32.xlu0 %v4161, 112
    %v6321 = vpop.permute.xlu0 %6320
    %6322 = vrot.lane.b32.xlu0 %v4164, 112
    %v6323 = vpop.permute.xlu0 %6322
    %6324 = vrot.lane.b32.xlu0 %v4166, 112
    %v6325 = vpop.permute.xlu0 %6324
    %v6326 = vsel %vm982, %v6311, %v6319
    %v6327 = vsel %vm982, %v6313, %v6321
    %v6328 = vsel %vm982, %v6315, %v6323
    %v6329 = vsel %vm982, %v6317, %v6325
    %v6330 = vsel %vm982, %v6303, %v6311
    %v6331 = vsel %vm982, %v6305, %v6313
    %v6332 = vsel %vm982, %v6307, %v6315
    %v6333 = vsel %vm982, %v6309, %v6317
    %v6334 = vsel %vm982, %v6295, %v6303
    %v6335 = vsel %vm982, %v6297, %v6305
    %v6336 = vsel %vm982, %v6299, %v6307
    %v6337 = vsel %vm982, %v6301, %v6309
    %v6338 = vsel %vm982, %v6319, %v6295
    %v6339 = vsel %vm982, %v6321, %v6297
    %v6340 = vsel %vm982, %v6323, %v6299
    %v6341 = vsel %vm982, %v6325, %v6301
    %s6342 = scalar_lea.vmem %s3, 56
    %v6343 = vld [vmem:[%s6342] sm:$0xf]
    %v6345 = vperm.slane %v6343, 0
    %v6346 = vperm.slane %v6343, 1
    %v6347 = vperm.slane %v6343, 2
    %v6348 = vperm.slane %v6343, 3
    %v6353 = vmul.f32 %v6334, %v6345
    %v6354 = vmul.f32 %v6330, %v6346
    %v6355 = vmul.f32 %v6326, %v6347
    %v6356 = vmul.f32 %v6338, %v6348
    %v6357 = vmul.f32 %v6335, %v6345
    %v6358 = vmul.f32 %v6331, %v6346
    %v6359 = vmul.f32 %v6327, %v6347
    %v6360 = vmul.f32 %v6339, %v6348
    %v6361 = vmul.f32 %v6336, %v6345
    %v6362 = vmul.f32 %v6332, %v6346
    %v6363 = vmul.f32 %v6328, %v6347
    %v6364 = vmul.f32 %v6340, %v6348
    %v6365 = vmul.f32 %v6337, %v6345
    %v6366 = vmul.f32 %v6333, %v6346
    %v6367 = vmul.f32 %v6329, %v6347
    %v6368 = vmul.f32 %v6341, %v6348
    %v6369 = vpack.c.bf16 %v6357, %v6353
    %v6370 = vpack.c.bf16 %v6358, %v6354
    %v6371 = vpack.c.bf16 %v6359, %v6355
    %v6372 = vpack.c.bf16 %v6360, %v6356
    %v6373 = vpack.c.bf16 %v6365, %v6361
    %v6374 = vpack.c.bf16 %v6366, %v6362
    %v6375 = vpack.c.bf16 %v6367, %v6363
    %v6376 = vpack.c.bf16 %v6368, %v6364
    %s6377 = scalar_lea.vmem %s18, 112
    %v6378 = vld [vmem:[%s6377] sm:$0xf]
    %v6379 = vld [vmem:[%s6377 + $0x4] sm:$0xf]
    %v6382 = vunpack.c.l.b16 %v6378
    %v6383 = vunpack.c.l.b16 %v6379
    %v6384 = vpack.c.b16 %v6383, %v6382
    %v6386 = vsel %vm2496, %v6384, 0
    %6388 = vmatpush.bf16.msra.mxu0 0
    %6389 = vmatpush.bf16.msra.mxu0 0
    %6390 = vmatpush.bf16.msra.mxu0 0
    %6391 = vmatpush.bf16.msra.mxu0 0
    %6392 = vmatpush.bf16.msra.mxu0 0
    %6393 = vmatpush.bf16.msra.mxu0 0
    %6394 = vmatpush.bf16.msra.mxu0 %v6373
    %6395 = vmatpush.bf16.msra.mxu0 %v6369
    %6396 = vmatmul.bf16.gmra.mxu0 %v6386
    %v6397 = vpop.f32.mrf.mxu0
    %v6398 = vadd.f32 0.0, %v6397
    %v6399 = vpop.f32.mrf.mxu0
    %v6400 = vadd.f32 0.0, %v6399
    %6401 = vdwg.mxu0
    %6402 = vmatpush.bf16.msra.mxu0 0
    %6403 = vmatpush.bf16.msra.mxu0 0
    %6404 = vmatpush.bf16.msra.mxu0 0
    %6405 = vmatpush.bf16.msra.mxu0 0
    %6406 = vmatpush.bf16.msra.mxu0 0
    %6407 = vmatpush.bf16.msra.mxu0 0
    %6408 = vmatpush.bf16.msra.mxu0 %v6374
    %6409 = vmatpush.bf16.msra.mxu0 %v6370
    %6410 = vmatmul.bf16.gmra.mxu0 %v6386
    %v6411 = vpop.f32.mrf.mxu0
    %v6412 = vadd.f32 0.0, %v6411
    %v6413 = vpop.f32.mrf.mxu0
    %v6414 = vadd.f32 0.0, %v6413
    %6415 = vdwg.mxu0
    %6416 = vmatpush.bf16.msra.mxu0 0
    %6417 = vmatpush.bf16.msra.mxu0 0
    %6418 = vmatpush.bf16.msra.mxu0 0
    %6419 = vmatpush.bf16.msra.mxu0 0
    %6420 = vmatpush.bf16.msra.mxu0 0
    %6421 = vmatpush.bf16.msra.mxu0 0
    %6422 = vmatpush.bf16.msra.mxu0 %v6375
    %6423 = vmatpush.bf16.msra.mxu0 %v6371
    %6424 = vmatmul.bf16.gmra.mxu0 %v6386
    %v6425 = vpop.f32.mrf.mxu0
    %v6426 = vadd.f32 0.0, %v6425
    %v6427 = vpop.f32.mrf.mxu0
    %v6428 = vadd.f32 0.0, %v6427
    %6429 = vdwg.mxu0
    %6430 = vmatpush.bf16.msra.mxu0 0
    %6431 = vmatpush.bf16.msra.mxu0 0
    %6432 = vmatpush.bf16.msra.mxu0 0
    %6433 = vmatpush.bf16.msra.mxu0 0
    %6434 = vmatpush.bf16.msra.mxu0 0
    %6435 = vmatpush.bf16.msra.mxu0 0
    %6436 = vmatpush.bf16.msra.mxu0 %v6376
    %6437 = vmatpush.bf16.msra.mxu0 %v6372
    %6438 = vmatmul.bf16.gmra.mxu0 %v6386
    %v6439 = vpop.f32.mrf.mxu0
    %v6440 = vadd.f32 0.0, %v6439
    %v6441 = vpop.f32.mrf.mxu0
    %v6442 = vadd.f32 0.0, %v6441
    %6443 = vdwg.mxu0
    %v6444 = vadd.f32 %v6286, %v6398
    %v6445 = vadd.f32 %v6287, %v6412
    %v6446 = vadd.f32 %v6288, %v6426
    %v6447 = vadd.f32 %v6289, %v6440
    %v6448 = vadd.f32 %v6290, %v6400
    %v6449 = vadd.f32 %v6291, %v6414
    %v6450 = vadd.f32 %v6292, %v6428
    %v6451 = vadd.f32 %v6293, %v6442
    %6452 = vrot.lane.b32.xlu0 %v4102, 111
    %v6453 = vpop.permute.xlu0 %6452
    %6454 = vrot.lane.b32.xlu0 %v4104, 111
    %v6455 = vpop.permute.xlu0 %6454
    %6456 = vrot.lane.b32.xlu0 %v4107, 111
    %v6457 = vpop.permute.xlu0 %6456
    %6458 = vrot.lane.b32.xlu0 %v4109, 111
    %v6459 = vpop.permute.xlu0 %6458
    %6460 = vrot.lane.b32.xlu0 %v4121, 111
    %v6461 = vpop.permute.xlu0 %6460
    %6462 = vrot.lane.b32.xlu0 %v4123, 111
    %v6463 = vpop.permute.xlu0 %6462
    %6464 = vrot.lane.b32.xlu0 %v4126, 111
    %v6465 = vpop.permute.xlu0 %6464
    %6466 = vrot.lane.b32.xlu0 %v4128, 111
    %v6467 = vpop.permute.xlu0 %6466
    %6468 = vrot.lane.b32.xlu0 %v4140, 111
    %v6469 = vpop.permute.xlu0 %6468
    %6470 = vrot.lane.b32.xlu0 %v4142, 111
    %v6471 = vpop.permute.xlu0 %6470
    %6472 = vrot.lane.b32.xlu0 %v4145, 111
    %v6473 = vpop.permute.xlu0 %6472
    %6474 = vrot.lane.b32.xlu0 %v4147, 111
    %v6475 = vpop.permute.xlu0 %6474
    %6476 = vrot.lane.b32.xlu0 %v4159, 111
    %v6477 = vpop.permute.xlu0 %6476
    %6478 = vrot.lane.b32.xlu0 %v4161, 111
    %v6479 = vpop.permute.xlu0 %6478
    %6480 = vrot.lane.b32.xlu0 %v4164, 111
    %v6481 = vpop.permute.xlu0 %6480
    %6482 = vrot.lane.b32.xlu0 %v4166, 111
    %v6483 = vpop.permute.xlu0 %6482
    %v6484 = vsel %vm1112, %v6469, %v6477
    %v6485 = vsel %vm1112, %v6471, %v6479
    %v6486 = vsel %vm1112, %v6473, %v6481
    %v6487 = vsel %vm1112, %v6475, %v6483
    %v6488 = vsel %vm1112, %v6461, %v6469
    %v6489 = vsel %vm1112, %v6463, %v6471
    %v6490 = vsel %vm1112, %v6465, %v6473
    %v6491 = vsel %vm1112, %v6467, %v6475
    %v6492 = vsel %vm1112, %v6453, %v6461
    %v6493 = vsel %vm1112, %v6455, %v6463
    %v6494 = vsel %vm1112, %v6457, %v6465
    %v6495 = vsel %vm1112, %v6459, %v6467
    %v6496 = vsel %vm1112, %v6477, %v6453
    %v6497 = vsel %vm1112, %v6479, %v6455
    %v6498 = vsel %vm1112, %v6481, %v6457
    %v6499 = vsel %vm1112, %v6483, %v6459
    %s6500 = scalar_lea.vmem %s3, 60
    %v6501 = vld [vmem:[%s6500] sm:$0xf]
    %v6503 = vperm.slane %v6501, 0
    %v6504 = vperm.slane %v6501, 1
    %v6505 = vperm.slane %v6501, 2
    %v6506 = vperm.slane %v6501, 3
    %v6511 = vmul.f32 %v6492, %v6503
    %v6512 = vmul.f32 %v6488, %v6504
    %v6513 = vmul.f32 %v6484, %v6505
    %v6514 = vmul.f32 %v6496, %v6506
    %v6515 = vmul.f32 %v6493, %v6503
    %v6516 = vmul.f32 %v6489, %v6504
    %v6517 = vmul.f32 %v6485, %v6505
    %v6518 = vmul.f32 %v6497, %v6506
    %v6519 = vmul.f32 %v6494, %v6503
    %v6520 = vmul.f32 %v6490, %v6504
    %v6521 = vmul.f32 %v6486, %v6505
    %v6522 = vmul.f32 %v6498, %v6506
    %v6523 = vmul.f32 %v6495, %v6503
    %v6524 = vmul.f32 %v6491, %v6504
    %v6525 = vmul.f32 %v6487, %v6505
    %v6526 = vmul.f32 %v6499, %v6506
    %v6527 = vpack.c.bf16 %v6515, %v6511
    %v6528 = vpack.c.bf16 %v6516, %v6512
    %v6529 = vpack.c.bf16 %v6517, %v6513
    %v6530 = vpack.c.bf16 %v6518, %v6514
    %v6531 = vpack.c.bf16 %v6523, %v6519
    %v6532 = vpack.c.bf16 %v6524, %v6520
    %v6533 = vpack.c.bf16 %v6525, %v6521
    %v6534 = vpack.c.bf16 %v6526, %v6522
    %s6535 = scalar_lea.vmem %s18, 120
    %v6536 = vld [vmem:[%s6535] sm:$0xf]
    %v6537 = vld [vmem:[%s6535 + $0x4] sm:$0xf]
    %v6540 = vunpack.c.l.b16 %v6536
    %v6541 = vunpack.c.l.b16 %v6537
    %v6542 = vpack.c.b16 %v6541, %v6540
    %v6544 = vsel %vm2496, %v6542, 0
    %6546 = vmatpush.bf16.msra.mxu0 0
    %6547 = vmatpush.bf16.msra.mxu0 0
    %6548 = vmatpush.bf16.msra.mxu0 0
    %6549 = vmatpush.bf16.msra.mxu0 0
    %6550 = vmatpush.bf16.msra.mxu0 0
    %6551 = vmatpush.bf16.msra.mxu0 0
    %6552 = vmatpush.bf16.msra.mxu0 %v6531
    %6553 = vmatpush.bf16.msra.mxu0 %v6527
    %6554 = vmatmul.bf16.gmra.mxu0 %v6544
    %v6555 = vpop.f32.mrf.mxu0
    %v6556 = vadd.f32 0.0, %v6555
    %v6557 = vpop.f32.mrf.mxu0
    %v6558 = vadd.f32 0.0, %v6557
    %6559 = vdwg.mxu0
    %6560 = vmatpush.bf16.msra.mxu0 0
    %6561 = vmatpush.bf16.msra.mxu0 0
    %6562 = vmatpush.bf16.msra.mxu0 0
    %6563 = vmatpush.bf16.msra.mxu0 0
    %6564 = vmatpush.bf16.msra.mxu0 0
    %6565 = vmatpush.bf16.msra.mxu0 0
    %6566 = vmatpush.bf16.msra.mxu0 %v6532
    %6567 = vmatpush.bf16.msra.mxu0 %v6528
    %6568 = vmatmul.bf16.gmra.mxu0 %v6544
    %v6569 = vpop.f32.mrf.mxu0
    %v6570 = vadd.f32 0.0, %v6569
    %v6571 = vpop.f32.mrf.mxu0
    %v6572 = vadd.f32 0.0, %v6571
    %6573 = vdwg.mxu0
    %6574 = vmatpush.bf16.msra.mxu0 0
    %6575 = vmatpush.bf16.msra.mxu0 0
    %6576 = vmatpush.bf16.msra.mxu0 0
    %6577 = vmatpush.bf16.msra.mxu0 0
    %6578 = vmatpush.bf16.msra.mxu0 0
    %6579 = vmatpush.bf16.msra.mxu0 0
    %6580 = vmatpush.bf16.msra.mxu0 %v6533
    %6581 = vmatpush.bf16.msra.mxu0 %v6529
    %6582 = vmatmul.bf16.gmra.mxu0 %v6544
    %v6583 = vpop.f32.mrf.mxu0
    %v6584 = vadd.f32 0.0, %v6583
    %v6585 = vpop.f32.mrf.mxu0
    %v6586 = vadd.f32 0.0, %v6585
    %6587 = vdwg.mxu0
    %6588 = vmatpush.bf16.msra.mxu0 0
    %6589 = vmatpush.bf16.msra.mxu0 0
    %6590 = vmatpush.bf16.msra.mxu0 0
    %6591 = vmatpush.bf16.msra.mxu0 0
    %6592 = vmatpush.bf16.msra.mxu0 0
    %6593 = vmatpush.bf16.msra.mxu0 0
    %6594 = vmatpush.bf16.msra.mxu0 %v6534
    %6595 = vmatpush.bf16.msra.mxu0 %v6530
    %6596 = vmatmul.bf16.gmra.mxu0 %v6544
    %v6597 = vpop.f32.mrf.mxu0
    %v6598 = vadd.f32 0.0, %v6597
    %v6599 = vpop.f32.mrf.mxu0
    %v6600 = vadd.f32 0.0, %v6599
    %6601 = vdwg.mxu0
    %v6602 = vadd.f32 %v6444, %v6556
    %v6603 = vadd.f32 %v6445, %v6570
    %v6604 = vadd.f32 %v6446, %v6584
    %v6605 = vadd.f32 %v6447, %v6598
    %v6606 = vadd.f32 %v6448, %v6558
    %v6607 = vadd.f32 %v6449, %v6572
    %v6608 = vadd.f32 %v6450, %v6586
    %v6609 = vadd.f32 %v6451, %v6600
    %v6610 = vadd.f32 %v6602, %v6603
    %v6611 = vadd.f32 %v6610, %v6604
    %v6612 = vadd.f32 %v6611, %v6605
    %6613 = vadd.xlane.f32.xlu0 %v6612
    %v6614 = vpop.xlane.xlu0 %6613
    %v6615 = vadd.f32 %v6606, %v6607
    %v6616 = vadd.f32 %v6615, %v6608
    %v6617 = vadd.f32 %v6616, %v6609
    %6618 = vadd.xlane.f32.xlu0 %v6617
    %v6619 = vpop.xlane.xlu0 %6618
    %v6620 = vmul.f32 %v6602, %v6602
    %v6621 = vmul.f32 %v6603, %v6603
    %v6622 = vmul.f32 %v6604, %v6604
    %v6623 = vmul.f32 %v6605, %v6605
    %v6624 = vmul.f32 %v6606, %v6606
    %v6625 = vmul.f32 %v6607, %v6607
    %v6626 = vmul.f32 %v6608, %v6608
    %v6627 = vmul.f32 %v6609, %v6609
    %v6628 = vadd.f32 %v6620, %v6621
    %v6629 = vadd.f32 %v6628, %v6622
    %v6630 = vadd.f32 %v6629, %v6623
    %6631 = vadd.xlane.f32.xlu0 %v6630
    %v6632 = vpop.xlane.xlu0 %6631
    %v6633 = vadd.f32 %v6624, %v6625
    %v6634 = vadd.f32 %v6633, %v6626
    %v6635 = vadd.f32 %v6634, %v6627
    %6636 = vadd.xlane.f32.xlu0 %v6635
    %v6637 = vpop.xlane.xlu0 %6636
    %v6638 = vmul.f32 %v6614, 0.001953125
    %v6639 = vmul.f32 %v6619, 0.001953125
    %v6640 = vmul.f32 %v6632, 0.001953125
    %v6641 = vmul.f32 %v6637, 0.001953125
    %v6642 = vmul.f32 %v6638, %v6638
    %v6643 = vmul.f32 %v6639, %v6639
    %v6644 = vsub.f32 %v6640, %v6642
    %v6645 = vsub.f32 %v6641, %v6643
    %v6646 = vmax.f32 %v6644, 0.0
    %v6647 = vmax.f32 %v6645, 0.0
    %v6648 = vld [vmem:[%s19] sm:$0xff]
    %v6649 = vld [vmem:[%s19 + $0x8] sm:$0xff]
    %v6650 = vadd.f32 %v6646, 1e-05
    %v6651 = vadd.f32 %v6647, 1e-05
    %v6652 = vrsqrt.pop %v6650
    %v6653 = vmul.f32 %v6652, %v6650
    %v6654 = vmul.f32 %v6653, %v6652
    %v6655 = vmul.f32 0.5, %v6654
    %v6656 = vsub.f32 1.5, %v6655
    %v6657 = vmul.f32 %v6652, %v6656
    %vm6658 = vweird.f32 %v6650
    %vm6659 = vweird.f32 %v6652
    %vm6660 = vmor %vm6658, %vm6659
    %v6661 = vsel %vm6660, %v6652, %v6657
    %v6662 = vrsqrt.pop %v6651
    %v6663 = vmul.f32 %v6662, %v6651
    %v6664 = vmul.f32 %v6663, %v6662
    %v6665 = vmul.f32 0.5, %v6664
    %v6666 = vsub.f32 1.5, %v6665
    %v6667 = vmul.f32 %v6662, %v6666
    %vm6668 = vweird.f32 %v6651
    %vm6669 = vweird.f32 %v6662
    %vm6670 = vmor %vm6668, %vm6669
    %v6671 = vsel %vm6670, %v6662, %v6667
    %v6672 = vmul.f32 %v6648, %v6661
    %v6673 = vmul.f32 %v6649, %v6671
    %v6674 = vld [vmem:[%s20] sm:$0xff]
    %v6675 = vld [vmem:[%s20 + $0x8] sm:$0xff]
    %v6676 = vmul.f32 %v6638, %v6672
    %v6677 = vmul.f32 %v6639, %v6673
    %v6678 = vsub.f32 %v6674, %v6676
    %v6679 = vsub.f32 %v6675, %v6677
    %6681 = vset.pattern.permute.xlu0 0
    %6682 = vperm.xlu0 %6681, %v6672
    %v6683 = vpop.permute.xlu0 %6682
    %6686 = vset.pattern.permute.xlu0 0
    %6687 = vperm.xlu0 %6686, %v6673
    %v6688 = vpop.permute.xlu0 %6687
    %v6690 = vmul.f32 %v6602, %v6683
    %v6691 = vmul.f32 %v6603, %v6683
    %v6692 = vmul.f32 %v6604, %v6683
    %v6693 = vmul.f32 %v6605, %v6683
    %v6694 = vmul.f32 %v6606, %v6688
    %v6695 = vmul.f32 %v6607, %v6688
    %v6696 = vmul.f32 %v6608, %v6688
    %v6697 = vmul.f32 %v6609, %v6688
    %6699 = vset.pattern.permute.xlu0 0
    %6700 = vperm.xlu0 %6699, %v6678
    %v6701 = vpop.permute.xlu0 %6700
    %6704 = vset.pattern.permute.xlu0 0
    %6705 = vperm.xlu0 %6704, %v6679
    %v6706 = vpop.permute.xlu0 %6705
    %v6708 = vadd.f32 %v6690, %v6701
    %v6709 = vadd.f32 %v6691, %v6701
    %v6710 = vadd.f32 %v6692, %v6701
    %v6711 = vadd.f32 %v6693, %v6701
    %v6712 = vadd.f32 %v6694, %v6706
    %v6713 = vadd.f32 %v6695, %v6706
    %v6714 = vadd.f32 %v6696, %v6706
    %v6715 = vadd.f32 %v6697, %v6706
    %v6716 = vmax.f32 %v6708, 0.0
    %v6717 = vmax.f32 %v6709, 0.0
    %v6718 = vmax.f32 %v6710, 0.0
    %v6719 = vmax.f32 %v6711, 0.0
    %v6720 = vmax.f32 %v6712, 0.0
    %v6721 = vmax.f32 %v6713, 0.0
    %v6722 = vmax.f32 %v6714, 0.0
    %v6723 = vmax.f32 %v6715, 0.0
    %6724 = vrot.lane.b32.xlu0 %v6716, 17
    %v6725 = vpop.permute.xlu0 %6724
    %6726 = vrot.lane.b32.xlu0 %v6720, 17
    %v6727 = vpop.permute.xlu0 %6726
    %6728 = vrot.lane.b32.xlu0 %v6717, 17
    %v6729 = vpop.permute.xlu0 %6728
    %6730 = vrot.lane.b32.xlu0 %v6721, 17
    %v6731 = vpop.permute.xlu0 %6730
    %6732 = vrot.lane.b32.xlu0 %v6718, 17
    %v6733 = vpop.permute.xlu0 %6732
    %6734 = vrot.lane.b32.xlu0 %v6722, 17
    %v6735 = vpop.permute.xlu0 %6734
    %6736 = vrot.lane.b32.xlu0 %v6719, 17
    %v6737 = vpop.permute.xlu0 %6736
    %6738 = vrot.lane.b32.xlu0 %v6723, 17
    %v6739 = vpop.permute.xlu0 %6738
    %v6740 = vsel %vm116, %v6733, %v6737
    %v6741 = vsel %vm116, %v6735, %v6739
    %v6742 = vsel %vm116, %v6729, %v6733
    %v6743 = vsel %vm116, %v6731, %v6735
    %v6744 = vsel %vm116, %v6725, %v6729
    %v6745 = vsel %vm116, %v6727, %v6731
    %v6746 = vsel %vm116, %v6737, %v6725
    %v6747 = vsel %vm116, %v6739, %v6727
    %v6748 = vld [vmem:[#allocation3] sm:$0xf]
    %v6750 = vperm.slane %v6748, 0
    %v6751 = vperm.slane %v6748, 1
    %v6752 = vperm.slane %v6748, 2
    %v6753 = vperm.slane %v6748, 3
    %v6758 = vmul.f32 %v6746, %v6750
    %v6759 = vmul.f32 %v6744, %v6751
    %v6760 = vmul.f32 %v6742, %v6752
    %v6761 = vmul.f32 %v6740, %v6753
    %v6762 = vmul.f32 %v6747, %v6750
    %v6763 = vmul.f32 %v6745, %v6751
    %v6764 = vmul.f32 %v6743, %v6752
    %v6765 = vmul.f32 %v6741, %v6753
    %v6766 = vpack.c.bf16 %v6762, %v6758
    %v6767 = vpack.c.bf16 %v6763, %v6759
    %v6768 = vpack.c.bf16 %v6764, %v6760
    %v6769 = vpack.c.bf16 %v6765, %v6761
    %v6770 = vld [vmem:[%s21] sm:$0x3]
    %6771 = vrot.lane.b32.xlu0 %v6716, 16
    %v6772 = vpop.permute.xlu0 %6771
    %6773 = vrot.lane.b32.xlu0 %v6720, 16
    %v6774 = vpop.permute.xlu0 %6773
    %6775 = vrot.lane.b32.xlu0 %v6717, 16
    %v6776 = vpop.permute.xlu0 %6775
    %6777 = vrot.lane.b32.xlu0 %v6721, 16
    %v6778 = vpop.permute.xlu0 %6777
    %6779 = vrot.lane.b32.xlu0 %v6718, 16
    %v6780 = vpop.permute.xlu0 %6779
    %6781 = vrot.lane.b32.xlu0 %v6722, 16
    %v6782 = vpop.permute.xlu0 %6781
    %6783 = vrot.lane.b32.xlu0 %v6719, 16
    %v6784 = vpop.permute.xlu0 %6783
    %6785 = vrot.lane.b32.xlu0 %v6723, 16
    %v6786 = vpop.permute.xlu0 %6785
    %v6787 = vsel %vm160, %v6780, %v6784
    %v6788 = vsel %vm160, %v6782, %v6786
    %v6789 = vsel %vm160, %v6776, %v6780
    %v6790 = vsel %vm160, %v6778, %v6782
    %v6791 = vsel %vm160, %v6772, %v6776
    %v6792 = vsel %vm160, %v6774, %v6778
    %v6793 = vsel %vm160, %v6784, %v6772
    %v6794 = vsel %vm160, %v6786, %v6774
    %v6795 = vld [vmem:[%s165] sm:$0xf]
    %v6797 = vperm.slane %v6795, 0
    %v6798 = vperm.slane %v6795, 1
    %v6799 = vperm.slane %v6795, 2
    %v6800 = vperm.slane %v6795, 3
    %v6805 = vmul.f32 %v6793, %v6797
    %v6806 = vmul.f32 %v6791, %v6798
    %v6807 = vmul.f32 %v6789, %v6799
    %v6808 = vmul.f32 %v6787, %v6800
    %v6809 = vmul.f32 %v6794, %v6797
    %v6810 = vmul.f32 %v6792, %v6798
    %v6811 = vmul.f32 %v6790, %v6799
    %v6812 = vmul.f32 %v6788, %v6800
    %v6813 = vpack.c.bf16 %v6809, %v6805
    %v6814 = vpack.c.bf16 %v6810, %v6806
    %v6815 = vpack.c.bf16 %v6811, %v6807
    %v6816 = vpack.c.bf16 %v6812, %v6808
    %s6817 = scalar_lea.vmem %s21, 2
    %v6818 = vld [vmem:[%s6817] sm:$0x3]
    %v6820 = vsel %vm1677, %v6818, 0
    %6822 = vmatpush.bf16.msra.mxu0 0
    %6823 = vmatpush.bf16.msra.mxu0 0
    %6824 = vmatpush.bf16.msra.mxu0 0
    %6825 = vmatpush.bf16.msra.mxu0 0
    %6826 = vmatpush.bf16.msra.mxu0 0
    %6827 = vmatpush.bf16.msra.mxu0 0
    %6828 = vmatpush.bf16.msra.mxu0 0
    %6829 = vmatpush.bf16.msra.mxu0 %v6813
    %6830 = vmatmul.bf16.gmra.mxu0 %v6820
    %v6831 = vpop.f32.mrf.mxu0
    %v6832 = vadd.f32 0.0, %v6831
    %v6833 = vpop.f32.mrf.mxu0
    %6834 = vdwg.mxu0
    %6835 = vmatpush.bf16.msra.mxu0 0
    %6836 = vmatpush.bf16.msra.mxu0 0
    %6837 = vmatpush.bf16.msra.mxu0 0
    %6838 = vmatpush.bf16.msra.mxu0 0
    %6839 = vmatpush.bf16.msra.mxu0 0
    %6840 = vmatpush.bf16.msra.mxu0 0
    %6841 = vmatpush.bf16.msra.mxu0 0
    %6842 = vmatpush.bf16.msra.mxu0 %v6814
    %6843 = vmatmul.bf16.gmra.mxu0 %v6820
    %v6844 = vpop.f32.mrf.mxu0
    %v6845 = vadd.f32 0.0, %v6844
    %v6846 = vpop.f32.mrf.mxu0
    %6847 = vdwg.mxu0
    %6848 = vmatpush.bf16.msra.mxu0 0
    %6849 = vmatpush.bf16.msra.mxu0 0
    %6850 = vmatpush.bf16.msra.mxu0 0
    %6851 = vmatpush.bf16.msra.mxu0 0
    %6852 = vmatpush.bf16.msra.mxu0 0
    %6853 = vmatpush.bf16.msra.mxu0 0
    %6854 = vmatpush.bf16.msra.mxu0 0
    %6855 = vmatpush.bf16.msra.mxu0 %v6815
    %6856 = vmatmul.bf16.gmra.mxu0 %v6820
    %v6857 = vpop.f32.mrf.mxu0
    %v6858 = vadd.f32 0.0, %v6857
    %v6859 = vpop.f32.mrf.mxu0
    %6860 = vdwg.mxu0
    %6861 = vmatpush.bf16.msra.mxu0 0
    %6862 = vmatpush.bf16.msra.mxu0 0
    %6863 = vmatpush.bf16.msra.mxu0 0
    %6864 = vmatpush.bf16.msra.mxu0 0
    %6865 = vmatpush.bf16.msra.mxu0 0
    %6866 = vmatpush.bf16.msra.mxu0 0
    %6867 = vmatpush.bf16.msra.mxu0 0
    %6868 = vmatpush.bf16.msra.mxu0 %v6816
    %6869 = vmatmul.bf16.gmra.mxu0 %v6820
    %v6870 = vpop.f32.mrf.mxu0
    %v6871 = vadd.f32 0.0, %v6870
    %v6872 = vpop.f32.mrf.mxu0
    %6873 = vdwg.mxu0
    %v6875 = vsel %vm1677, %v6770, 0
    %6877 = vmatpush.bf16.msra.mxu0 0
    %6878 = vmatpush.bf16.msra.mxu0 0
    %6879 = vmatpush.bf16.msra.mxu0 0
    %6880 = vmatpush.bf16.msra.mxu0 0
    %6881 = vmatpush.bf16.msra.mxu0 0
    %6882 = vmatpush.bf16.msra.mxu0 0
    %6883 = vmatpush.bf16.msra.mxu0 0
    %6884 = vmatpush.bf16.msra.mxu0 %v6766
    %6885 = vmatmul.bf16.gmra.mxu0 %v6875
    %v6886 = vpop.f32.mrf.mxu0
    %v6887 = vadd.f32 %v6832, %v6886
    %v6888 = vpop.f32.mrf.mxu0
    %6889 = vdwg.mxu0
    %6890 = vmatpush.bf16.msra.mxu0 0
    %6891 = vmatpush.bf16.msra.mxu0 0
    %6892 = vmatpush.bf16.msra.mxu0 0
    %6893 = vmatpush.bf16.msra.mxu0 0
    %6894 = vmatpush.bf16.msra.mxu0 0
    %6895 = vmatpush.bf16.msra.mxu0 0
    %6896 = vmatpush.bf16.msra.mxu0 0
    %6897 = vmatpush.bf16.msra.mxu0 %v6767
    %6898 = vmatmul.bf16.gmra.mxu0 %v6875
    %v6899 = vpop.f32.mrf.mxu0
    %v6900 = vadd.f32 %v6845, %v6899
    %v6901 = vpop.f32.mrf.mxu0
    %6902 = vdwg.mxu0
    %6903 = vmatpush.bf16.msra.mxu0 0
    %6904 = vmatpush.bf16.msra.mxu0 0
    %6905 = vmatpush.bf16.msra.mxu0 0
    %6906 = vmatpush.bf16.msra.mxu0 0
    %6907 = vmatpush.bf16.msra.mxu0 0
    %6908 = vmatpush.bf16.msra.mxu0 0
    %6909 = vmatpush.bf16.msra.mxu0 0
    %6910 = vmatpush.bf16.msra.mxu0 %v6768
    %6911 = vmatmul.bf16.gmra.mxu0 %v6875
    %v6912 = vpop.f32.mrf.mxu0
    %v6913 = vadd.f32 %v6858, %v6912
    %v6914 = vpop.f32.mrf.mxu0
    %6915 = vdwg.mxu0
    %6916 = vmatpush.bf16.msra.mxu0 0
    %6917 = vmatpush.bf16.msra.mxu0 0
    %6918 = vmatpush.bf16.msra.mxu0 0
    %6919 = vmatpush.bf16.msra.mxu0 0
    %6920 = vmatpush.bf16.msra.mxu0 0
    %6921 = vmatpush.bf16.msra.mxu0 0
    %6922 = vmatpush.bf16.msra.mxu0 0
    %6923 = vmatpush.bf16.msra.mxu0 %v6769
    %6924 = vmatmul.bf16.gmra.mxu0 %v6875
    %v6925 = vpop.f32.mrf.mxu0
    %v6926 = vadd.f32 %v6871, %v6925
    %v6927 = vpop.f32.mrf.mxu0
    %6928 = vdwg.mxu0
    %6929 = vrot.lane.b32.xlu0 %v6716, 15
    %v6930 = vpop.permute.xlu0 %6929
    %6931 = vrot.lane.b32.xlu0 %v6720, 15
    %v6932 = vpop.permute.xlu0 %6931
    %6933 = vrot.lane.b32.xlu0 %v6717, 15
    %v6934 = vpop.permute.xlu0 %6933
    %6935 = vrot.lane.b32.xlu0 %v6721, 15
    %v6936 = vpop.permute.xlu0 %6935
    %6937 = vrot.lane.b32.xlu0 %v6718, 15
    %v6938 = vpop.permute.xlu0 %6937
    %6939 = vrot.lane.b32.xlu0 %v6722, 15
    %v6940 = vpop.permute.xlu0 %6939
    %6941 = vrot.lane.b32.xlu0 %v6719, 15
    %v6942 = vpop.permute.xlu0 %6941
    %6943 = vrot.lane.b32.xlu0 %v6723, 15
    %v6944 = vpop.permute.xlu0 %6943
    %v6945 = vsel %vm360, %v6938, %v6942
    %v6946 = vsel %vm360, %v6940, %v6944
    %v6947 = vsel %vm360, %v6934, %v6938
    %v6948 = vsel %vm360, %v6936, %v6940
    %v6949 = vsel %vm360, %v6930, %v6934
    %v6950 = vsel %vm360, %v6932, %v6936
    %v6951 = vsel %vm360, %v6942, %v6930
    %v6952 = vsel %vm360, %v6944, %v6932
    %v6953 = vld [vmem:[%s365] sm:$0xf]
    %v6955 = vperm.slane %v6953, 0
    %v6956 = vperm.slane %v6953, 1
    %v6957 = vperm.slane %v6953, 2
    %v6958 = vperm.slane %v6953, 3
    %v6963 = vmul.f32 %v6951, %v6955
    %v6964 = vmul.f32 %v6949, %v6956
    %v6965 = vmul.f32 %v6947, %v6957
    %v6966 = vmul.f32 %v6945, %v6958
    %v6967 = vmul.f32 %v6952, %v6955
    %v6968 = vmul.f32 %v6950, %v6956
    %v6969 = vmul.f32 %v6948, %v6957
    %v6970 = vmul.f32 %v6946, %v6958
    %v6971 = vpack.c.bf16 %v6967, %v6963
    %v6972 = vpack.c.bf16 %v6968, %v6964
    %v6973 = vpack.c.bf16 %v6969, %v6965
    %v6974 = vpack.c.bf16 %v6970, %v6966
    %s6975 = scalar_lea.vmem %s21, 4
    %v6976 = vld [vmem:[%s6975] sm:$0x3]
    %v6978 = vsel %vm1677, %v6976, 0
    %6980 = vmatpush.bf16.msra.mxu0 0
    %6981 = vmatpush.bf16.msra.mxu0 0
    %6982 = vmatpush.bf16.msra.mxu0 0
    %6983 = vmatpush.bf16.msra.mxu0 0
    %6984 = vmatpush.bf16.msra.mxu0 0
    %6985 = vmatpush.bf16.msra.mxu0 0
    %6986 = vmatpush.bf16.msra.mxu0 0
    %6987 = vmatpush.bf16.msra.mxu0 %v6971
    %6988 = vmatmul.bf16.gmra.mxu0 %v6978
    %v6989 = vpop.f32.mrf.mxu0
    %v6990 = vadd.f32 0.0, %v6989
    %v6991 = vpop.f32.mrf.mxu0
    %6992 = vdwg.mxu0
    %6993 = vmatpush.bf16.msra.mxu0 0
    %6994 = vmatpush.bf16.msra.mxu0 0
    %6995 = vmatpush.bf16.msra.mxu0 0
    %6996 = vmatpush.bf16.msra.mxu0 0
    %6997 = vmatpush.bf16.msra.mxu0 0
    %6998 = vmatpush.bf16.msra.mxu0 0
    %6999 = vmatpush.bf16.msra.mxu0 0
    %7000 = vmatpush.bf16.msra.mxu0 %v6972
    %7001 = vmatmul.bf16.gmra.mxu0 %v6978
    %v7002 = vpop.f32.mrf.mxu0
    %v7003 = vadd.f32 0.0, %v7002
    %v7004 = vpop.f32.mrf.mxu0
    %7005 = vdwg.mxu0
    %7006 = vmatpush.bf16.msra.mxu0 0
    %7007 = vmatpush.bf16.msra.mxu0 0
    %7008 = vmatpush.bf16.msra.mxu0 0
    %7009 = vmatpush.bf16.msra.mxu0 0
    %7010 = vmatpush.bf16.msra.mxu0 0
    %7011 = vmatpush.bf16.msra.mxu0 0
    %7012 = vmatpush.bf16.msra.mxu0 0
    %7013 = vmatpush.bf16.msra.mxu0 %v6973
    %7014 = vmatmul.bf16.gmra.mxu0 %v6978
    %v7015 = vpop.f32.mrf.mxu0
    %v7016 = vadd.f32 0.0, %v7015
    %v7017 = vpop.f32.mrf.mxu0
    %7018 = vdwg.mxu0
    %7019 = vmatpush.bf16.msra.mxu0 0
    %7020 = vmatpush.bf16.msra.mxu0 0
    %7021 = vmatpush.bf16.msra.mxu0 0
    %7022 = vmatpush.bf16.msra.mxu0 0
    %7023 = vmatpush.bf16.msra.mxu0 0
    %7024 = vmatpush.bf16.msra.mxu0 0
    %7025 = vmatpush.bf16.msra.mxu0 0
    %7026 = vmatpush.bf16.msra.mxu0 %v6974
    %7027 = vmatmul.bf16.gmra.mxu0 %v6978
    %v7028 = vpop.f32.mrf.mxu0
    %v7029 = vadd.f32 0.0, %v7028
    %v7030 = vpop.f32.mrf.mxu0
    %7031 = vdwg.mxu0
    %v7032 = vadd.f32 %v6887, %v6990
    %v7033 = vadd.f32 %v6900, %v7003
    %v7034 = vadd.f32 %v6913, %v7016
    %v7035 = vadd.f32 %v6926, %v7029
    %7036 = vrot.lane.b32.xlu0 %v6716, 1
    %v7037 = vpop.permute.xlu0 %7036
    %7038 = vrot.lane.b32.xlu0 %v6720, 1
    %v7039 = vpop.permute.xlu0 %7038
    %7040 = vrot.lane.b32.xlu0 %v6717, 1
    %v7041 = vpop.permute.xlu0 %7040
    %7042 = vrot.lane.b32.xlu0 %v6721, 1
    %v7043 = vpop.permute.xlu0 %7042
    %7044 = vrot.lane.b32.xlu0 %v6718, 1
    %v7045 = vpop.permute.xlu0 %7044
    %7046 = vrot.lane.b32.xlu0 %v6722, 1
    %v7047 = vpop.permute.xlu0 %7046
    %7048 = vrot.lane.b32.xlu0 %v6719, 1
    %v7049 = vpop.permute.xlu0 %7048
    %7050 = vrot.lane.b32.xlu0 %v6723, 1
    %v7051 = vpop.permute.xlu0 %7050
    %v7052 = vsel %vm490, %v7045, %v7049
    %v7053 = vsel %vm490, %v7047, %v7051
    %v7054 = vsel %vm490, %v7041, %v7045
    %v7055 = vsel %vm490, %v7043, %v7047
    %v7056 = vsel %vm490, %v7037, %v7041
    %v7057 = vsel %vm490, %v7039, %v7043
    %v7058 = vsel %vm490, %v7049, %v7037
    %v7059 = vsel %vm490, %v7051, %v7039
    %v7060 = vld [vmem:[%s495] sm:$0xf]
    %v7062 = vperm.slane %v7060, 0
    %v7063 = vperm.slane %v7060, 1
    %v7064 = vperm.slane %v7060, 2
    %v7065 = vperm.slane %v7060, 3
    %v7070 = vmul.f32 %v7058, %v7062
    %v7071 = vmul.f32 %v7056, %v7063
    %v7072 = vmul.f32 %v7054, %v7064
    %v7073 = vmul.f32 %v7052, %v7065
    %v7074 = vmul.f32 %v7059, %v7062
    %v7075 = vmul.f32 %v7057, %v7063
    %v7076 = vmul.f32 %v7055, %v7064
    %v7077 = vmul.f32 %v7053, %v7065
    %v7078 = vpack.c.bf16 %v7074, %v7070
    %v7079 = vpack.c.bf16 %v7075, %v7071
    %v7080 = vpack.c.bf16 %v7076, %v7072
    %v7081 = vpack.c.bf16 %v7077, %v7073
    %s7082 = scalar_lea.vmem %s21, 6
    %v7083 = vld [vmem:[%s7082] sm:$0x3]
    %v7085 = vsel %vm1677, %v7083, 0
    %7087 = vmatpush.bf16.msra.mxu0 0
    %7088 = vmatpush.bf16.msra.mxu0 0
    %7089 = vmatpush.bf16.msra.mxu0 0
    %7090 = vmatpush.bf16.msra.mxu0 0
    %7091 = vmatpush.bf16.msra.mxu0 0
    %7092 = vmatpush.bf16.msra.mxu0 0
    %7093 = vmatpush.bf16.msra.mxu0 0
    %7094 = vmatpush.bf16.msra.mxu0 %v7078
    %7095 = vmatmul.bf16.gmra.mxu0 %v7085
    %v7096 = vpop.f32.mrf.mxu0
    %v7097 = vadd.f32 0.0, %v7096
    %v7098 = vpop.f32.mrf.mxu0
    %7099 = vdwg.mxu0
    %7100 = vmatpush.bf16.msra.mxu0 0
    %7101 = vmatpush.bf16.msra.mxu0 0
    %7102 = vmatpush.bf16.msra.mxu0 0
    %7103 = vmatpush.bf16.msra.mxu0 0
    %7104 = vmatpush.bf16.msra.mxu0 0
    %7105 = vmatpush.bf16.msra.mxu0 0
    %7106 = vmatpush.bf16.msra.mxu0 0
    %7107 = vmatpush.bf16.msra.mxu0 %v7079
    %7108 = vmatmul.bf16.gmra.mxu0 %v7085
    %v7109 = vpop.f32.mrf.mxu0
    %v7110 = vadd.f32 0.0, %v7109
    %v7111 = vpop.f32.mrf.mxu0
    %7112 = vdwg.mxu0
    %7113 = vmatpush.bf16.msra.mxu0 0
    %7114 = vmatpush.bf16.msra.mxu0 0
    %7115 = vmatpush.bf16.msra.mxu0 0
    %7116 = vmatpush.bf16.msra.mxu0 0
    %7117 = vmatpush.bf16.msra.mxu0 0
    %7118 = vmatpush.bf16.msra.mxu0 0
    %7119 = vmatpush.bf16.msra.mxu0 0
    %7120 = vmatpush.bf16.msra.mxu0 %v7080
    %7121 = vmatmul.bf16.gmra.mxu0 %v7085
    %v7122 = vpop.f32.mrf.mxu0
    %v7123 = vadd.f32 0.0, %v7122
    %v7124 = vpop.f32.mrf.mxu0
    %7125 = vdwg.mxu0
    %7126 = vmatpush.bf16.msra.mxu0 0
    %7127 = vmatpush.bf16.msra.mxu0 0
    %7128 = vmatpush.bf16.msra.mxu0 0
    %7129 = vmatpush.bf16.msra.mxu0 0
    %7130 = vmatpush.bf16.msra.mxu0 0
    %7131 = vmatpush.bf16.msra.mxu0 0
    %7132 = vmatpush.bf16.msra.mxu0 0
    %7133 = vmatpush.bf16.msra.mxu0 %v7081
    %7134 = vmatmul.bf16.gmra.mxu0 %v7085
    %v7135 = vpop.f32.mrf.mxu0
    %v7136 = vadd.f32 0.0, %v7135
    %v7137 = vpop.f32.mrf.mxu0
    %7138 = vdwg.mxu0
    %v7139 = vadd.f32 %v7032, %v7097
    %v7140 = vadd.f32 %v7033, %v7110
    %v7141 = vadd.f32 %v7034, %v7123
    %v7142 = vadd.f32 %v7035, %v7136
    %v7143 = vpack.c.bf16 %v6720, %v6716
    %v7144 = vpack.c.bf16 %v6721, %v6717
    %v7145 = vpack.c.bf16 %v6722, %v6718
    %v7146 = vpack.c.bf16 %v6723, %v6719
    %s7147 = scalar_lea.vmem %s21, 8
    %v7148 = vld [vmem:[%s7147] sm:$0x3]
    %v7150 = vsel %vm1677, %v7148, 0
    %7152 = vmatpush.bf16.msra.mxu0 0
    %7153 = vmatpush.bf16.msra.mxu0 0
    %7154 = vmatpush.bf16.msra.mxu0 0
    %7155 = vmatpush.bf16.msra.mxu0 0
    %7156 = vmatpush.bf16.msra.mxu0 0
    %7157 = vmatpush.bf16.msra.mxu0 0
    %7158 = vmatpush.bf16.msra.mxu0 0
    %7159 = vmatpush.bf16.msra.mxu0 %v7143
    %7160 = vmatmul.bf16.gmra.mxu0 %v7150
    %v7161 = vpop.f32.mrf.mxu0
    %v7162 = vadd.f32 0.0, %v7161
    %v7163 = vpop.f32.mrf.mxu0
    %7164 = vdwg.mxu0
    %7165 = vmatpush.bf16.msra.mxu0 0
    %7166 = vmatpush.bf16.msra.mxu0 0
    %7167 = vmatpush.bf16.msra.mxu0 0
    %7168 = vmatpush.bf16.msra.mxu0 0
    %7169 = vmatpush.bf16.msra.mxu0 0
    %7170 = vmatpush.bf16.msra.mxu0 0
    %7171 = vmatpush.bf16.msra.mxu0 0
    %7172 = vmatpush.bf16.msra.mxu0 %v7144
    %7173 = vmatmul.bf16.gmra.mxu0 %v7150
    %v7174 = vpop.f32.mrf.mxu0
    %v7175 = vadd.f32 0.0, %v7174
    %v7176 = vpop.f32.mrf.mxu0
    %7177 = vdwg.mxu0
    %7178 = vmatpush.bf16.msra.mxu0 0
    %7179 = vmatpush.bf16.msra.mxu0 0
    %7180 = vmatpush.bf16.msra.mxu0 0
    %7181 = vmatpush.bf16.msra.mxu0 0
    %7182 = vmatpush.bf16.msra.mxu0 0
    %7183 = vmatpush.bf16.msra.mxu0 0
    %7184 = vmatpush.bf16.msra.mxu0 0
    %7185 = vmatpush.bf16.msra.mxu0 %v7145
    %7186 = vmatmul.bf16.gmra.mxu0 %v7150
    %v7187 = vpop.f32.mrf.mxu0
    %v7188 = vadd.f32 0.0, %v7187
    %v7189 = vpop.f32.mrf.mxu0
    %7190 = vdwg.mxu0
    %7191 = vmatpush.bf16.msra.mxu0 0
    %7192 = vmatpush.bf16.msra.mxu0 0
    %7193 = vmatpush.bf16.msra.mxu0 0
    %7194 = vmatpush.bf16.msra.mxu0 0
    %7195 = vmatpush.bf16.msra.mxu0 0
    %7196 = vmatpush.bf16.msra.mxu0 0
    %7197 = vmatpush.bf16.msra.mxu0 0
    %7198 = vmatpush.bf16.msra.mxu0 %v7146
    %7199 = vmatmul.bf16.gmra.mxu0 %v7150
    %v7200 = vpop.f32.mrf.mxu0
    %v7201 = vadd.f32 0.0, %v7200
    %v7202 = vpop.f32.mrf.mxu0
    %7203 = vdwg.mxu0
    %v7204 = vadd.f32 %v7139, %v7162
    %v7205 = vadd.f32 %v7140, %v7175
    %v7206 = vadd.f32 %v7141, %v7188
    %v7207 = vadd.f32 %v7142, %v7201
    %7208 = vrot.lane.b32.xlu0 %v6716, 127
    %v7209 = vpop.permute.xlu0 %7208
    %7210 = vrot.lane.b32.xlu0 %v6720, 127
    %v7211 = vpop.permute.xlu0 %7210
    %7212 = vrot.lane.b32.xlu0 %v6717, 127
    %v7213 = vpop.permute.xlu0 %7212
    %7214 = vrot.lane.b32.xlu0 %v6721, 127
    %v7215 = vpop.permute.xlu0 %7214
    %7216 = vrot.lane.b32.xlu0 %v6718, 127
    %v7217 = vpop.permute.xlu0 %7216
    %7218 = vrot.lane.b32.xlu0 %v6722, 127
    %v7219 = vpop.permute.xlu0 %7218
    %7220 = vrot.lane.b32.xlu0 %v6719, 127
    %v7221 = vpop.permute.xlu0 %7220
    %7222 = vrot.lane.b32.xlu0 %v6723, 127
    %v7223 = vpop.permute.xlu0 %7222
    %v7224 = vsel %vm722, %v7217, %v7221
    %v7225 = vsel %vm722, %v7219, %v7223
    %v7226 = vsel %vm722, %v7213, %v7217
    %v7227 = vsel %vm722, %v7215, %v7219
    %v7228 = vsel %vm722, %v7209, %v7213
    %v7229 = vsel %vm722, %v7211, %v7215
    %v7230 = vsel %vm722, %v7221, %v7209
    %v7231 = vsel %vm722, %v7223, %v7211
    %v7232 = vld [vmem:[%s727] sm:$0xf]
    %v7234 = vperm.slane %v7232, 0
    %v7235 = vperm.slane %v7232, 1
    %v7236 = vperm.slane %v7232, 2
    %v7237 = vperm.slane %v7232, 3
    %v7242 = vmul.f32 %v7228, %v7234
    %v7243 = vmul.f32 %v7226, %v7235
    %v7244 = vmul.f32 %v7224, %v7236
    %v7245 = vmul.f32 %v7230, %v7237
    %v7246 = vmul.f32 %v7229, %v7234
    %v7247 = vmul.f32 %v7227, %v7235
    %v7248 = vmul.f32 %v7225, %v7236
    %v7249 = vmul.f32 %v7231, %v7237
    %v7250 = vpack.c.bf16 %v7246, %v7242
    %v7251 = vpack.c.bf16 %v7247, %v7243
    %v7252 = vpack.c.bf16 %v7248, %v7244
    %v7253 = vpack.c.bf16 %v7249, %v7245
    %s7254 = scalar_lea.vmem %s21, 10
    %v7255 = vld [vmem:[%s7254] sm:$0x3]
    %v7257 = vsel %vm1677, %v7255, 0
    %7259 = vmatpush.bf16.msra.mxu0 0
    %7260 = vmatpush.bf16.msra.mxu0 0
    %7261 = vmatpush.bf16.msra.mxu0 0
    %7262 = vmatpush.bf16.msra.mxu0 0
    %7263 = vmatpush.bf16.msra.mxu0 0
    %7264 = vmatpush.bf16.msra.mxu0 0
    %7265 = vmatpush.bf16.msra.mxu0 0
    %7266 = vmatpush.bf16.msra.mxu0 %v7250
    %7267 = vmatmul.bf16.gmra.mxu0 %v7257
    %v7268 = vpop.f32.mrf.mxu0
    %v7269 = vadd.f32 0.0, %v7268
    %v7270 = vpop.f32.mrf.mxu0
    %7271 = vdwg.mxu0
    %7272 = vmatpush.bf16.msra.mxu0 0
    %7273 = vmatpush.bf16.msra.mxu0 0
    %7274 = vmatpush.bf16.msra.mxu0 0
    %7275 = vmatpush.bf16.msra.mxu0 0
    %7276 = vmatpush.bf16.msra.mxu0 0
    %7277 = vmatpush.bf16.msra.mxu0 0
    %7278 = vmatpush.bf16.msra.mxu0 0
    %7279 = vmatpush.bf16.msra.mxu0 %v7251
    %7280 = vmatmul.bf16.gmra.mxu0 %v7257
    %v7281 = vpop.f32.mrf.mxu0
    %v7282 = vadd.f32 0.0, %v7281
    %v7283 = vpop.f32.mrf.mxu0
    %7284 = vdwg.mxu0
    %7285 = vmatpush.bf16.msra.mxu0 0
    %7286 = vmatpush.bf16.msra.mxu0 0
    %7287 = vmatpush.bf16.msra.mxu0 0
    %7288 = vmatpush.bf16.msra.mxu0 0
    %7289 = vmatpush.bf16.msra.mxu0 0
    %7290 = vmatpush.bf16.msra.mxu0 0
    %7291 = vmatpush.bf16.msra.mxu0 0
    %7292 = vmatpush.bf16.msra.mxu0 %v7252
    %7293 = vmatmul.bf16.gmra.mxu0 %v7257
    %v7294 = vpop.f32.mrf.mxu0
    %v7295 = vadd.f32 0.0, %v7294
    %v7296 = vpop.f32.mrf.mxu0
    %7297 = vdwg.mxu0
    %7298 = vmatpush.bf16.msra.mxu0 0
    %7299 = vmatpush.bf16.msra.mxu0 0
    %7300 = vmatpush.bf16.msra.mxu0 0
    %7301 = vmatpush.bf16.msra.mxu0 0
    %7302 = vmatpush.bf16.msra.mxu0 0
    %7303 = vmatpush.bf16.msra.mxu0 0
    %7304 = vmatpush.bf16.msra.mxu0 0
    %7305 = vmatpush.bf16.msra.mxu0 %v7253
    %7306 = vmatmul.bf16.gmra.mxu0 %v7257
    %v7307 = vpop.f32.mrf.mxu0
    %v7308 = vadd.f32 0.0, %v7307
    %v7309 = vpop.f32.mrf.mxu0
    %7310 = vdwg.mxu0
    %v7311 = vadd.f32 %v7204, %v7269
    %v7312 = vadd.f32 %v7205, %v7282
    %v7313 = vadd.f32 %v7206, %v7295
    %v7314 = vadd.f32 %v7207, %v7308
    %7315 = vrot.lane.b32.xlu0 %v6716, 113
    %v7316 = vpop.permute.xlu0 %7315
    %7317 = vrot.lane.b32.xlu0 %v6720, 113
    %v7318 = vpop.permute.xlu0 %7317
    %7319 = vrot.lane.b32.xlu0 %v6717, 113
    %v7320 = vpop.permute.xlu0 %7319
    %7321 = vrot.lane.b32.xlu0 %v6721, 113
    %v7322 = vpop.permute.xlu0 %7321
    %7323 = vrot.lane.b32.xlu0 %v6718, 113
    %v7324 = vpop.permute.xlu0 %7323
    %7325 = vrot.lane.b32.xlu0 %v6722, 113
    %v7326 = vpop.permute.xlu0 %7325
    %7327 = vrot.lane.b32.xlu0 %v6719, 113
    %v7328 = vpop.permute.xlu0 %7327
    %7329 = vrot.lane.b32.xlu0 %v6723, 113
    %v7330 = vpop.permute.xlu0 %7329
    %v7331 = vsel %vm852, %v7324, %v7328
    %v7332 = vsel %vm852, %v7326, %v7330
    %v7333 = vsel %vm852, %v7320, %v7324
    %v7334 = vsel %vm852, %v7322, %v7326
    %v7335 = vsel %vm852, %v7316, %v7320
    %v7336 = vsel %vm852, %v7318, %v7322
    %v7337 = vsel %vm852, %v7328, %v7316
    %v7338 = vsel %vm852, %v7330, %v7318
    %v7339 = vld [vmem:[%s857] sm:$0xf]
    %v7341 = vperm.slane %v7339, 0
    %v7342 = vperm.slane %v7339, 1
    %v7343 = vperm.slane %v7339, 2
    %v7344 = vperm.slane %v7339, 3
    %v7349 = vmul.f32 %v7335, %v7341
    %v7350 = vmul.f32 %v7333, %v7342
    %v7351 = vmul.f32 %v7331, %v7343
    %v7352 = vmul.f32 %v7337, %v7344
    %v7353 = vmul.f32 %v7336, %v7341
    %v7354 = vmul.f32 %v7334, %v7342
    %v7355 = vmul.f32 %v7332, %v7343
    %v7356 = vmul.f32 %v7338, %v7344
    %v7357 = vpack.c.bf16 %v7353, %v7349
    %v7358 = vpack.c.bf16 %v7354, %v7350
    %v7359 = vpack.c.bf16 %v7355, %v7351
    %v7360 = vpack.c.bf16 %v7356, %v7352
    %s7361 = scalar_lea.vmem %s21, 12
    %v7362 = vld [vmem:[%s7361] sm:$0x3]
    %v7364 = vsel %vm1677, %v7362, 0
    %7366 = vmatpush.bf16.msra.mxu0 0
    %7367 = vmatpush.bf16.msra.mxu0 0
    %7368 = vmatpush.bf16.msra.mxu0 0
    %7369 = vmatpush.bf16.msra.mxu0 0
    %7370 = vmatpush.bf16.msra.mxu0 0
    %7371 = vmatpush.bf16.msra.mxu0 0
    %7372 = vmatpush.bf16.msra.mxu0 0
    %7373 = vmatpush.bf16.msra.mxu0 %v7357
    %7374 = vmatmul.bf16.gmra.mxu0 %v7364
    %v7375 = vpop.f32.mrf.mxu0
    %v7376 = vadd.f32 0.0, %v7375
    %v7377 = vpop.f32.mrf.mxu0
    %7378 = vdwg.mxu0
    %7379 = vmatpush.bf16.msra.mxu0 0
    %7380 = vmatpush.bf16.msra.mxu0 0
    %7381 = vmatpush.bf16.msra.mxu0 0
    %7382 = vmatpush.bf16.msra.mxu0 0
    %7383 = vmatpush.bf16.msra.mxu0 0
    %7384 = vmatpush.bf16.msra.mxu0 0
    %7385 = vmatpush.bf16.msra.mxu0 0
    %7386 = vmatpush.bf16.msra.mxu0 %v7358
    %7387 = vmatmul.bf16.gmra.mxu0 %v7364
    %v7388 = vpop.f32.mrf.mxu0
    %v7389 = vadd.f32 0.0, %v7388
    %v7390 = vpop.f32.mrf.mxu0
    %7391 = vdwg.mxu0
    %7392 = vmatpush.bf16.msra.mxu0 0
    %7393 = vmatpush.bf16.msra.mxu0 0
    %7394 = vmatpush.bf16.msra.mxu0 0
    %7395 = vmatpush.bf16.msra.mxu0 0
    %7396 = vmatpush.bf16.msra.mxu0 0
    %7397 = vmatpush.bf16.msra.mxu0 0
    %7398 = vmatpush.bf16.msra.mxu0 0
    %7399 = vmatpush.bf16.msra.mxu0 %v7359
    %7400 = vmatmul.bf16.gmra.mxu0 %v7364
    %v7401 = vpop.f32.mrf.mxu0
    %v7402 = vadd.f32 0.0, %v7401
    %v7403 = vpop.f32.mrf.mxu0
    %7404 = vdwg.mxu0
    %7405 = vmatpush.bf16.msra.mxu0 0
    %7406 = vmatpush.bf16.msra.mxu0 0
    %7407 = vmatpush.bf16.msra.mxu0 0
    %7408 = vmatpush.bf16.msra.mxu0 0
    %7409 = vmatpush.bf16.msra.mxu0 0
    %7410 = vmatpush.bf16.msra.mxu0 0
    %7411 = vmatpush.bf16.msra.mxu0 0
    %7412 = vmatpush.bf16.msra.mxu0 %v7360
    %7413 = vmatmul.bf16.gmra.mxu0 %v7364
    %v7414 = vpop.f32.mrf.mxu0
    %v7415 = vadd.f32 0.0, %v7414
    %v7416 = vpop.f32.mrf.mxu0
    %7417 = vdwg.mxu0
    %v7418 = vadd.f32 %v7311, %v7376
    %v7419 = vadd.f32 %v7312, %v7389
    %v7420 = vadd.f32 %v7313, %v7402
    %v7421 = vadd.f32 %v7314, %v7415
    %7422 = vrot.lane.b32.xlu0 %v6716, 112
    %v7423 = vpop.permute.xlu0 %7422
    %7424 = vrot.lane.b32.xlu0 %v6720, 112
    %v7425 = vpop.permute.xlu0 %7424
    %7426 = vrot.lane.b32.xlu0 %v6717, 112
    %v7427 = vpop.permute.xlu0 %7426
    %7428 = vrot.lane.b32.xlu0 %v6721, 112
    %v7429 = vpop.permute.xlu0 %7428
    %7430 = vrot.lane.b32.xlu0 %v6718, 112
    %v7431 = vpop.permute.xlu0 %7430
    %7432 = vrot.lane.b32.xlu0 %v6722, 112
    %v7433 = vpop.permute.xlu0 %7432
    %7434 = vrot.lane.b32.xlu0 %v6719, 112
    %v7435 = vpop.permute.xlu0 %7434
    %7436 = vrot.lane.b32.xlu0 %v6723, 112
    %v7437 = vpop.permute.xlu0 %7436
    %v7438 = vsel %vm982, %v7431, %v7435
    %v7439 = vsel %vm982, %v7433, %v7437
    %v7440 = vsel %vm982, %v7427, %v7431
    %v7441 = vsel %vm982, %v7429, %v7433
    %v7442 = vsel %vm982, %v7423, %v7427
    %v7443 = vsel %vm982, %v7425, %v7429
    %v7444 = vsel %vm982, %v7435, %v7423
    %v7445 = vsel %vm982, %v7437, %v7425
    %v7446 = vld [vmem:[%s987] sm:$0xf]
    %v7448 = vperm.slane %v7446, 0
    %v7449 = vperm.slane %v7446, 1
    %v7450 = vperm.slane %v7446, 2
    %v7451 = vperm.slane %v7446, 3
    %v7456 = vmul.f32 %v7442, %v7448
    %v7457 = vmul.f32 %v7440, %v7449
    %v7458 = vmul.f32 %v7438, %v7450
    %v7459 = vmul.f32 %v7444, %v7451
    %v7460 = vmul.f32 %v7443, %v7448
    %v7461 = vmul.f32 %v7441, %v7449
    %v7462 = vmul.f32 %v7439, %v7450
    %v7463 = vmul.f32 %v7445, %v7451
    %v7464 = vpack.c.bf16 %v7460, %v7456
    %v7465 = vpack.c.bf16 %v7461, %v7457
    %v7466 = vpack.c.bf16 %v7462, %v7458
    %v7467 = vpack.c.bf16 %v7463, %v7459
    %s7468 = scalar_lea.vmem %s21, 14
    %v7469 = vld [vmem:[%s7468] sm:$0x3]
    %v7471 = vsel %vm1677, %v7469, 0
    %7473 = vmatpush.bf16.msra.mxu0 0
    %7474 = vmatpush.bf16.msra.mxu0 0
    %7475 = vmatpush.bf16.msra.mxu0 0
    %7476 = vmatpush.bf16.msra.mxu0 0
    %7477 = vmatpush.bf16.msra.mxu0 0
    %7478 = vmatpush.bf16.msra.mxu0 0
    %7479 = vmatpush.bf16.msra.mxu0 0
    %7480 = vmatpush.bf16.msra.mxu0 %v7464
    %7481 = vmatmul.bf16.gmra.mxu0 %v7471
    %v7482 = vpop.f32.mrf.mxu0
    %v7483 = vadd.f32 0.0, %v7482
    %v7484 = vpop.f32.mrf.mxu0
    %7485 = vdwg.mxu0
    %7486 = vmatpush.bf16.msra.mxu0 0
    %7487 = vmatpush.bf16.msra.mxu0 0
    %7488 = vmatpush.bf16.msra.mxu0 0
    %7489 = vmatpush.bf16.msra.mxu0 0
    %7490 = vmatpush.bf16.msra.mxu0 0
    %7491 = vmatpush.bf16.msra.mxu0 0
    %7492 = vmatpush.bf16.msra.mxu0 0
    %7493 = vmatpush.bf16.msra.mxu0 %v7465
    %7494 = vmatmul.bf16.gmra.mxu0 %v7471
    %v7495 = vpop.f32.mrf.mxu0
    %v7496 = vadd.f32 0.0, %v7495
    %v7497 = vpop.f32.mrf.mxu0
    %7498 = vdwg.mxu0
    %7499 = vmatpush.bf16.msra.mxu0 0
    %7500 = vmatpush.bf16.msra.mxu0 0
    %7501 = vmatpush.bf16.msra.mxu0 0
    %7502 = vmatpush.bf16.msra.mxu0 0
    %7503 = vmatpush.bf16.msra.mxu0 0
    %7504 = vmatpush.bf16.msra.mxu0 0
    %7505 = vmatpush.bf16.msra.mxu0 0
    %7506 = vmatpush.bf16.msra.mxu0 %v7466
    %7507 = vmatmul.bf16.gmra.mxu0 %v7471
    %v7508 = vpop.f32.mrf.mxu0
    %v7509 = vadd.f32 0.0, %v7508
    %v7510 = vpop.f32.mrf.mxu0
    %7511 = vdwg.mxu0
    %7512 = vmatpush.bf16.msra.mxu0 0
    %7513 = vmatpush.bf16.msra.mxu0 0
    %7514 = vmatpush.bf16.msra.mxu0 0
    %7515 = vmatpush.bf16.msra.mxu0 0
    %7516 = vmatpush.bf16.msra.mxu0 0
    %7517 = vmatpush.bf16.msra.mxu0 0
    %7518 = vmatpush.bf16.msra.mxu0 0
    %7519 = vmatpush.bf16.msra.mxu0 %v7467
    %7520 = vmatmul.bf16.gmra.mxu0 %v7471
    %v7521 = vpop.f32.mrf.mxu0
    %v7522 = vadd.f32 0.0, %v7521
    %v7523 = vpop.f32.mrf.mxu0
    %7524 = vdwg.mxu0
    %v7525 = vadd.f32 %v7418, %v7483
    %v7526 = vadd.f32 %v7419, %v7496
    %v7527 = vadd.f32 %v7420, %v7509
    %v7528 = vadd.f32 %v7421, %v7522
    %7529 = vrot.lane.b32.xlu0 %v6716, 111
    %v7530 = vpop.permute.xlu0 %7529
    %7531 = vrot.lane.b32.xlu0 %v6720, 111
    %v7532 = vpop.permute.xlu0 %7531
    %7533 = vrot.lane.b32.xlu0 %v6717, 111
    %v7534 = vpop.permute.xlu0 %7533
    %7535 = vrot.lane.b32.xlu0 %v6721, 111
    %v7536 = vpop.permute.xlu0 %7535
    %7537 = vrot.lane.b32.xlu0 %v6718, 111
    %v7538 = vpop.permute.xlu0 %7537
    %7539 = vrot.lane.b32.xlu0 %v6722, 111
    %v7540 = vpop.permute.xlu0 %7539
    %7541 = vrot.lane.b32.xlu0 %v6719, 111
    %v7542 = vpop.permute.xlu0 %7541
    %7543 = vrot.lane.b32.xlu0 %v6723, 111
    %v7544 = vpop.permute.xlu0 %7543
    %v7545 = vsel %vm1112, %v7538, %v7542
    %v7546 = vsel %vm1112, %v7540, %v7544
    %v7547 = vsel %vm1112, %v7534, %v7538
    %v7548 = vsel %vm1112, %v7536, %v7540
    %v7549 = vsel %vm1112, %v7530, %v7534
    %v7550 = vsel %vm1112, %v7532, %v7536
    %v7551 = vsel %vm1112, %v7542, %v7530
    %v7552 = vsel %vm1112, %v7544, %v7532
    %v7553 = vld [vmem:[%s1117] sm:$0xf]
    %v7555 = vperm.slane %v7553, 0
    %v7556 = vperm.slane %v7553, 1
    %v7557 = vperm.slane %v7553, 2
    %v7558 = vperm.slane %v7553, 3
    %v7563 = vmul.f32 %v7549, %v7555
    %v7564 = vmul.f32 %v7547, %v7556
    %v7565 = vmul.f32 %v7545, %v7557
    %v7566 = vmul.f32 %v7551, %v7558
    %v7567 = vmul.f32 %v7550, %v7555
    %v7568 = vmul.f32 %v7548, %v7556
    %v7569 = vmul.f32 %v7546, %v7557
    %v7570 = vmul.f32 %v7552, %v7558
    %v7571 = vpack.c.bf16 %v7567, %v7563
    %v7572 = vpack.c.bf16 %v7568, %v7564
    %v7573 = vpack.c.bf16 %v7569, %v7565
    %v7574 = vpack.c.bf16 %v7570, %v7566
    %s7575 = scalar_lea.vmem %s21, 16
    %v7576 = vld [vmem:[%s7575] sm:$0x3]
    %v7578 = vsel %vm1677, %v7576, 0
    %7580 = vmatpush.bf16.msra.mxu0 0
    %7581 = vmatpush.bf16.msra.mxu0 0
    %7582 = vmatpush.bf16.msra.mxu0 0
    %7583 = vmatpush.bf16.msra.mxu0 0
    %7584 = vmatpush.bf16.msra.mxu0 0
    %7585 = vmatpush.bf16.msra.mxu0 0
    %7586 = vmatpush.bf16.msra.mxu0 0
    %7587 = vmatpush.bf16.msra.mxu0 %v7571
    %7588 = vmatmul.bf16.gmra.mxu0 %v7578
    %v7589 = vpop.f32.mrf.mxu0
    %v7590 = vadd.f32 0.0, %v7589
    %v7591 = vpop.f32.mrf.mxu0
    %7592 = vdwg.mxu0
    %7593 = vmatpush.bf16.msra.mxu0 0
    %7594 = vmatpush.bf16.msra.mxu0 0
    %7595 = vmatpush.bf16.msra.mxu0 0
    %7596 = vmatpush.bf16.msra.mxu0 0
    %7597 = vmatpush.bf16.msra.mxu0 0
    %7598 = vmatpush.bf16.msra.mxu0 0
    %7599 = vmatpush.bf16.msra.mxu0 0
    %7600 = vmatpush.bf16.msra.mxu0 %v7572
    %7601 = vmatmul.bf16.gmra.mxu0 %v7578
    %v7602 = vpop.f32.mrf.mxu0
    %v7603 = vadd.f32 0.0, %v7602
    %v7604 = vpop.f32.mrf.mxu0
    %7605 = vdwg.mxu0
    %7606 = vmatpush.bf16.msra.mxu0 0
    %7607 = vmatpush.bf16.msra.mxu0 0
    %7608 = vmatpush.bf16.msra.mxu0 0
    %7609 = vmatpush.bf16.msra.mxu0 0
    %7610 = vmatpush.bf16.msra.mxu0 0
    %7611 = vmatpush.bf16.msra.mxu0 0
    %7612 = vmatpush.bf16.msra.mxu0 0
    %7613 = vmatpush.bf16.msra.mxu0 %v7573
    %7614 = vmatmul.bf16.gmra.mxu0 %v7578
    %v7615 = vpop.f32.mrf.mxu0
    %v7616 = vadd.f32 0.0, %v7615
    %v7617 = vpop.f32.mrf.mxu0
    %7618 = vdwg.mxu0
    %7619 = vmatpush.bf16.msra.mxu0 0
    %7620 = vmatpush.bf16.msra.mxu0 0
    %7621 = vmatpush.bf16.msra.mxu0 0
    %7622 = vmatpush.bf16.msra.mxu0 0
    %7623 = vmatpush.bf16.msra.mxu0 0
    %7624 = vmatpush.bf16.msra.mxu0 0
    %7625 = vmatpush.bf16.msra.mxu0 0
    %7626 = vmatpush.bf16.msra.mxu0 %v7574
    %7627 = vmatmul.bf16.gmra.mxu0 %v7578
    %v7628 = vpop.f32.mrf.mxu0
    %v7629 = vadd.f32 0.0, %v7628
    %v7630 = vpop.f32.mrf.mxu0
    %7631 = vdwg.mxu0
    %v7632 = vadd.f32 %v7525, %v7590
    %v7633 = vadd.f32 %v7526, %v7603
    %v7634 = vadd.f32 %v7527, %v7616
    %v7635 = vadd.f32 %v7528, %v7629
    %v7636 = vld [vmem:[%s22] sm:$0x7]
    %7638 = vset.pattern.permute.xlu0 0
    %7639 = vperm.xlu0 %7638, %v7636
    %v7640 = vpop.permute.xlu0 %7639
    %v7642 = vadd.f32 %v7632, %v7640
    %v7643 = vadd.f32 %v7633, %v7640
    %v7644 = vadd.f32 %v7634, %v7640
    %v7645 = vadd.f32 %v7635, %v7640
    %v7646 = vtanh.pop %v7642
    %v7647 = vtanh.pop %v7643
    %v7648 = vtanh.pop %v7644
    %v7649 = vtanh.pop %v7645
    %v7654 = vrot.slane %v7647, 4
    %v7655 = vrot.slane %v7649, 4
    %vm7656 = vcmask 1043456
    %v7657 = vsel %vm7656, %v7646, %v7654
    %v7658 = vsel %vm7656, %v7648, %v7655
    %7661 = vst [vmem:[%s23] sm:$0x77] %v7657
    %7662 = vst [vmem:[%s23 + $0x8] sm:$0x77] %v7658
    // Predicated region
    $region98: #{shading_forward.1} parent=1 // pred_check
      _
    $region99: #{shading_forward.1} parent=1 // pred_check_branch
      %7664 = sbr.rel (0) target = $region101
    $region100: #{shading_forward.1} parent=1 // pred_region
      _
    $region101: #{shading_forward.1} parent=1 // pred_fallthru
      _
    // Predicated region
    $region102: #{shading_forward.1} parent=1 // pred_check
      _
    $region103: #{shading_forward.1} parent=1 // pred_check_branch
      %7666 = sbr.rel (0) target = $region105
    $region104: #{shading_forward.1} parent=1 // pred_region
      _
    $region105: #{shading_forward.1} parent=1 // pred_fallthru
      _
    %7667 = vsyncpa [#allocation4], 1

</llo_original>
